<compile_context>
chip_gen: v7x
topology: tpu7x:2x2x1
jax: 0.10.0
libtpu: 0.0.40
codegen_flags: <defaults>
</compile_context>

<pallas_src>
import math

import jax
import jax.numpy as jnp
from jax.experimental import pallas as pl
from jax.experimental.pallas import tpu as pltpu

# --- hyper-parameters (module constructor; small hidden for the demo) ---
INPUT_DIM = 4
HIDDEN = 32          # d_model
HEADS = 4            # nhead
LAYERS = 2           # num_layers
FFN = 2048           # nn.TransformerEncoderLayer default dim_feedforward
MAX_DEPTH = 1000     # positional-encoding table length
LN_EPS = 1e-5

_LAYER_KEYS = ('in_w', 'in_b', 'out_w', 'out_b', 'ln1_g', 'ln1_b',
               'ff1_w', 'ff1_b', 'ff2_w', 'ff2_b', 'ln2_g', 'ln2_b')


# ------------------- in-kernel helpers (pure jnp on VMEM values) -------------------

def _layernorm(x, g, b):
    mu = jnp.mean(x, axis=-1, keepdims=True)
    xc = x - mu
    var = jnp.mean(xc * xc, axis=-1, keepdims=True)
    return xc * jax.lax.rsqrt(var + LN_EPS) * g + b


def _encoder_layer(x, in_w, in_b, out_w, out_b, ln1_g, ln1_b,
                   ff1_w, ff1_b, ff2_w, ff2_b, ln2_g, ln2_b):
    """One post-norm TransformerEncoderLayer on a [S, E] slab, fully in VMEM."""
    s_len, e = x.shape
    dh = e // HEADS

    # fused QKV projection (bf16 weights on the MXU, f32 accumulation).
    # The 1/sqrt(dh) attention scale is pre-folded into the Q rows of in_w/in_b.
    qkv = jnp.dot(x.astype(jnp.bfloat16), in_w,
                  preferred_element_type=jnp.float32) + in_b          # [S, 3E]
    q = qkv[:, 0:e]
    k = qkv[:, e:2 * e]
    v = qkv[:, 2 * e:3 * e]

    # head-batched attention: [HEADS, S, dh] operands, two batched einsums.
    def split_heads(t):
        return jnp.stack([t[:, h * dh:(h + 1) * dh] for h in range(HEADS)], axis=0)

    qh = split_heads(q)                                               # [H, S, dh]
    kh = split_heads(k)
    vh = split_heads(v)

    scores = jnp.einsum('hqd,hkd->hqk', qh, kh,
                        preferred_element_type=jnp.float32)           # [H, S, S]
    scores = scores - jnp.max(scores, axis=-1, keepdims=True)
    p = jnp.exp(scores)
    p = p / jnp.sum(p, axis=-1, keepdims=True)                        # exact divide
    ctx = jnp.einsum('hqk,hkd->hqd', p, vh,
                     preferred_element_type=jnp.float32)              # [H, S, dh]

    # concatenate heads once, then a single ExE out-projection.
    ctx = jnp.concatenate([ctx[h] for h in range(HEADS)], axis=-1)    # [S, E]
    attn = jnp.dot(ctx, out_w, preferred_element_type=jnp.float32) + out_b

    # residual + LayerNorm fused with the attention epilogue
    h1 = _layernorm(x + attn, ln1_g, ln1_b)

    # FFN: the [S, 2048] intermediate stays in VMEM / vregs (never touches HBM)
    ff = jnp.dot(h1.astype(jnp.bfloat16), ff1_w,
                 preferred_element_type=jnp.float32) + ff1_b
    ff = jnp.maximum(ff, 0.0)
    ff = jnp.dot(ff.astype(jnp.bfloat16), ff2_w,
                 preferred_element_type=jnp.float32) + ff2_b
    return _layernorm(h1 + ff, ln2_g, ln2_b)


# ----------------------------- fused Pallas kernel -----------------------------

def _fused_forward_kernel(feats_ref, pe_ref, fe_w, fe_b,
                          in_w, in_b, out_w, out_b, ln1_g, ln1_b,
                          ff1_w, ff1_b, ff2_w, ff2_b, ln2_g, ln2_b,
                          reg_w, reg_b, o_ref):
    # embed: feature_encoder linear + pre-gathered positional-encoding rows
    h = (jnp.dot(feats_ref[0], fe_w[...], preferred_element_type=jnp.float32)
         + fe_b[...] + pe_ref[0])                                     # [S, E]

    # encoder stack: static unroll, all stacked layer weights VMEM-resident
    for li in range(LAYERS):
        h = _encoder_layer(h, in_w[li], in_b[li], out_w[li], out_b[li],
                           ln1_g[li], ln1_b[li], ff1_w[li], ff1_b[li],
                           ff2_w[li], ff2_b[li], ln2_g[li], ln2_b[li])

    # regressor: VPU multiply + lane reduction (no N=1 MXU matmul)
    y = jnp.sum(h * reg_w[...], axis=-1, keepdims=True) + reg_b[...]  # [S, 1]
    o_ref[0] = y.astype(o_ref.dtype)


# ----------------------------- Pallas wrapper -----------------------------

def _w_spec(a):
    zeros = (0,) * a.ndim
    return pl.BlockSpec(a.shape, lambda b, _z=zeros: _z)


def _act_spec(a):
    return pl.BlockSpec((1,) + tuple(a.shape[1:]), lambda b: (b, 0, 0))


def pallas_transformer(feats, pe_rows, params):
    B, S, _ = feats.shape
    L = params['layers']
    weights = (params['fe_w'], params['fe_b'],
               L['in_w'], L['in_b'], L['out_w'], L['out_b'],
               L['ln1_g'], L['ln1_b'], L['ff1_w'], L['ff1_b'],
               L['ff2_w'], L['ff2_b'], L['ln2_g'], L['ln2_b'],
               params['reg_w'], params['reg_b'])
    return pl.pallas_call(
        _fused_forward_kernel,
        out_shape=jax.ShapeDtypeStruct((B, S, 1), jnp.float32),
        grid=(B,),
        in_specs=[_act_spec(feats), _act_spec(pe_rows)]
                 + [_w_spec(w) for w in weights],
        out_specs=pl.BlockSpec((1, S, 1), lambda b: (b, 0, 0)),
        compiler_params=pltpu.CompilerParams(
            dimension_semantics=("parallel",)),
    )(feats, pe_rows, *weights)


# ----------------------------- model pieces -----------------------------

def build_pe(max_len, d_model):
    position = jnp.arange(max_len, dtype=jnp.float32)[:, None]
    div_term = jnp.exp(jnp.arange(0, d_model, 2, dtype=jnp.float32)
                       * (-math.log(10000.0) / d_model))
    pe = jnp.zeros((max_len, d_model), jnp.float32)
    pe = pe.at[:, 0::2].set(jnp.sin(position * div_term))
    pe = pe.at[:, 1::2].set(jnp.cos(position * div_term))
    return pe


def init_params(key):
    def dense(k, fan_in, fan_out):
        k1, k2 = jax.random.split(k)
        w = jax.random.normal(k1, (fan_in, fan_out), jnp.float32) / math.sqrt(fan_in)
        b = jax.random.normal(k2, (1, fan_out), jnp.float32) * 0.01
        return w, b

    keys = jax.random.split(key, 2 + LAYERS)
    p = {}
    p['fe_w'], p['fe_b'] = dense(keys[0], INPUT_DIM - 1, HIDDEN)   # feature_encoder
    reg_w, reg_b = dense(keys[1], HIDDEN, 1)                        # regressor
    p['reg_w'] = reg_w.T                                            # [1, HIDDEN] row
    p['reg_b'] = reg_b                                              # [1, 1]
    p['pe'] = build_pe(MAX_DEPTH, HIDDEN)

    scale = 1.0 / math.sqrt(HIDDEN // HEADS)
    stacks = {k: [] for k in _LAYER_KEYS}
    for li in range(LAYERS):
        k = jax.random.split(keys[2 + li], 4)
        in_w, in_b = dense(k[0], HIDDEN, 3 * HIDDEN)
        # fold the attention scale into the Q rows (one-time host-side transform)
        in_w = in_w.at[:, :HIDDEN].multiply(scale)
        in_b = in_b.at[:, :HIDDEN].multiply(scale)
        out_w, out_b = dense(k[1], HIDDEN, HIDDEN)
        ff1_w, ff1_b = dense(k[2], HIDDEN, FFN)
        ff2_w, ff2_b = dense(k[3], FFN, HIDDEN)
        vals = dict(
            in_w=in_w.astype(jnp.bfloat16), in_b=in_b,
            out_w=out_w, out_b=out_b,
            ln1_g=jnp.ones((1, HIDDEN), jnp.float32),
            ln1_b=jnp.zeros((1, HIDDEN), jnp.float32),
            ff1_w=ff1_w.astype(jnp.bfloat16), ff1_b=ff1_b,
            ff2_w=ff2_w.astype(jnp.bfloat16), ff2_b=ff2_b,
            ln2_g=jnp.ones((1, HIDDEN), jnp.float32),
            ln2_b=jnp.zeros((1, HIDDEN), jnp.float32))
        for kk in _LAYER_KEYS:
            stacks[kk].append(vals[kk])
    p['layers'] = {kk: jnp.stack(stacks[kk], axis=0) for kk in _LAYER_KEYS}
    return p


@jax.jit
def transformer_forward(x, params):
    # x: [B, S, INPUT_DIM]; last column is depth
    feats = x[:, :, :-1]                                   # [B, S, INPUT_DIM-1]
    depth = x[:, :, -1]                                    # [B, S]
    max_len = params['pe'].shape[0]
    # == torch: clamp(depth / depth.max() * (max_len-1), 0, max_len-1).long()
    idx = jnp.clip(depth / jnp.max(depth) * (max_len - 1),
                   0, max_len - 1).astype(jnp.int32)       # [B, S]
    # tiny XLA gather outside the kernel; kernel receives the [B, S, E] rows
    pe_rows = jnp.take(params['pe'], idx, axis=0)          # [B, S, HIDDEN]
    # batch-first layout kept throughout (identical math to torch's [S,B,E])
    return pallas_transformer(feats, pe_rows, params)


# ----------------------------- demo -----------------------------

if __name__ == "__main__":
    key = jax.random.PRNGKey(0)
    k_feat, k_depth, k_param = jax.random.split(key, 3)

    B, S = 2, 8
    feats = jax.random.normal(k_feat, (B, S, INPUT_DIM - 1), jnp.float32)
    depth = jax.random.uniform(k_depth, (B, S), jnp.float32, 0.0, 500.0)
    x = jnp.concatenate([feats, depth[..., None]], axis=-1)    # [B, S, 4]

    params = init_params(k_param)
    out = transformer_forward(x, params)
    out = jax.block_until_ready(out)
    assert out.shape == (B, S, 1), out.shape
    assert bool(jnp.all(jnp.isfinite(out)))
    print("KERNEL_OK")
</pallas_src>

<mosaic_0001>
module attributes {stable_mosaic.version = 11 : i64} {
  func.func @_fused_forward_kernel(%arg0: i32, %arg1: memref<1x8x3xf32, #tpu.memory_space<vmem>>, %arg2: memref<1x8x32xf32, #tpu.memory_space<vmem>>, %arg3: memref<3x32xf32, #tpu.memory_space<vmem>>, %arg4: memref<1x32xf32, #tpu.memory_space<vmem>>, %arg5: memref<2x32x96xbf16, #tpu.memory_space<vmem>>, %arg6: memref<2x1x96xf32, #tpu.memory_space<vmem>>, %arg7: memref<2x32x32xf32, #tpu.memory_space<vmem>>, %arg8: memref<2x1x32xf32, #tpu.memory_space<vmem>>, %arg9: memref<2x1x32xf32, #tpu.memory_space<vmem>>, %arg10: memref<2x1x32xf32, #tpu.memory_space<vmem>>, %arg11: memref<2x32x2048xbf16, #tpu.memory_space<vmem>>, %arg12: memref<2x1x2048xf32, #tpu.memory_space<vmem>>, %arg13: memref<2x2048x32xbf16, #tpu.memory_space<vmem>>, %arg14: memref<2x1x32xf32, #tpu.memory_space<vmem>>, %arg15: memref<2x1x32xf32, #tpu.memory_space<vmem>>, %arg16: memref<2x1x32xf32, #tpu.memory_space<vmem>>, %arg17: memref<1x32xf32, #tpu.memory_space<vmem>>, %arg18: memref<1x1xf32, #tpu.memory_space<vmem>>, %arg19: memref<1x8x1xf32, #tpu.memory_space<vmem>>) attributes {dimension_semantics = [#tpu.dimension_semantics<parallel>], iteration_bounds = array<i64: 2>, scalar_prefetch = 0 : i64, scratch_operands = 0 : i64, tpu.core_type = #tpu.core_type<tc>, window_params = [{transform_indices = @transform_0, window_bounds = array<i64: 1, 8, 3>}, {transform_indices = @transform_1, window_bounds = array<i64: 1, 8, 32>}, {pipeline_mode = #tpu.pipeline_mode<synchronous>, transform_indices = @transform_2, window_bounds = array<i64: 3, 32>}, {pipeline_mode = #tpu.pipeline_mode<synchronous>, transform_indices = @transform_3, window_bounds = array<i64: 1, 32>}, {pipeline_mode = #tpu.pipeline_mode<synchronous>, transform_indices = @transform_4, window_bounds = array<i64: 2, 32, 96>}, {pipeline_mode = #tpu.pipeline_mode<synchronous>, transform_indices = @transform_5, window_bounds = array<i64: 2, 1, 96>}, {pipeline_mode = #tpu.pipeline_mode<synchronous>, transform_indices = @transform_6, window_bounds = array<i64: 2, 32, 32>}, {pipeline_mode = #tpu.pipeline_mode<synchronous>, transform_indices = @transform_7, window_bounds = array<i64: 2, 1, 32>}, {pipeline_mode = #tpu.pipeline_mode<synchronous>, transform_indices = @transform_8, window_bounds = array<i64: 2, 1, 32>}, {pipeline_mode = #tpu.pipeline_mode<synchronous>, transform_indices = @transform_9, window_bounds = array<i64: 2, 1, 32>}, {pipeline_mode = #tpu.pipeline_mode<synchronous>, transform_indices = @transform_10, window_bounds = array<i64: 2, 32, 2048>}, {pipeline_mode = #tpu.pipeline_mode<synchronous>, transform_indices = @transform_11, window_bounds = array<i64: 2, 1, 2048>}, {pipeline_mode = #tpu.pipeline_mode<synchronous>, transform_indices = @transform_12, window_bounds = array<i64: 2, 2048, 32>}, {pipeline_mode = #tpu.pipeline_mode<synchronous>, transform_indices = @transform_13, window_bounds = array<i64: 2, 1, 32>}, {pipeline_mode = #tpu.pipeline_mode<synchronous>, transform_indices = @transform_14, window_bounds = array<i64: 2, 1, 32>}, {pipeline_mode = #tpu.pipeline_mode<synchronous>, transform_indices = @transform_15, window_bounds = array<i64: 2, 1, 32>}, {pipeline_mode = #tpu.pipeline_mode<synchronous>, transform_indices = @transform_16, window_bounds = array<i64: 1, 32>}, {pipeline_mode = #tpu.pipeline_mode<synchronous>, transform_indices = @transform_17, window_bounds = array<i64: 1, 1>}, {transform_indices = @transform_18, window_bounds = array<i64: 1, 8, 1>}]} {
    %c0 = arith.constant 0 : index
    %c0_0 = arith.constant 0 : index
    %c0_1 = arith.constant 0 : index
    %0 = vector.load %arg1[%c0, %c0_0, %c0_1] : memref<1x8x3xf32, #tpu.memory_space<vmem>>, vector<1x8x3xf32>
    %1 = vector.shape_cast %0 : vector<1x8x3xf32> to vector<8x3xf32>
    %c0_2 = arith.constant 0 : index
    %c0_3 = arith.constant 0 : index
    %2 = vector.load %arg3[%c0_2, %c0_3] : memref<3x32xf32, #tpu.memory_space<vmem>>, vector<3x32xf32>
    %cst = arith.constant dense<0.000000e+00> : vector<8x32xf32>
    %3 = tpu.matmul %1, %2, %cst {dimension_numbers = #tpu.dot_dimension_numbers<[1], [0], [0], [1], [0, 0, 1, 1], [], []>} : vector<8x3xf32>, vector<3x32xf32>, vector<8x32xf32> -> vector<8x32xf32>
    %c0_4 = arith.constant 0 : index
    %c0_5 = arith.constant 0 : index
    %4 = vector.load %arg4[%c0_4, %c0_5] : memref<1x32xf32, #tpu.memory_space<vmem>>, vector<1x32xf32>
    %5 = vector.broadcast %4 : vector<1x32xf32> to vector<8x32xf32>
    %6 = arith.addf %3, %5 : vector<8x32xf32>
    %c0_6 = arith.constant 0 : index
    %c0_7 = arith.constant 0 : index
    %c0_8 = arith.constant 0 : index
    %7 = vector.load %arg2[%c0_6, %c0_7, %c0_8] : memref<1x8x32xf32, #tpu.memory_space<vmem>>, vector<1x8x32xf32>
    %8 = vector.shape_cast %7 : vector<1x8x32xf32> to vector<8x32xf32>
    %9 = arith.addf %6, %8 : vector<8x32xf32>
    %c0_9 = arith.constant 0 : index
    %c0_10 = arith.constant 0 : index
    %c0_11 = arith.constant 0 : index
    %10 = vector.load %arg5[%c0_9, %c0_10, %c0_11] : memref<2x32x96xbf16, #tpu.memory_space<vmem>>, vector<1x32x96xbf16>
    %11 = vector.shape_cast %10 : vector<1x32x96xbf16> to vector<32x96xbf16>
    %c0_12 = arith.constant 0 : index
    %c0_13 = arith.constant 0 : index
    %c0_14 = arith.constant 0 : index
    %12 = vector.load %arg6[%c0_12, %c0_13, %c0_14] : memref<2x1x96xf32, #tpu.memory_space<vmem>>, vector<1x1x96xf32>
    %13 = vector.shape_cast %12 : vector<1x1x96xf32> to vector<1x96xf32>
    %c0_15 = arith.constant 0 : index
    %c0_16 = arith.constant 0 : index
    %c0_17 = arith.constant 0 : index
    %14 = vector.load %arg7[%c0_15, %c0_16, %c0_17] : memref<2x32x32xf32, #tpu.memory_space<vmem>>, vector<1x32x32xf32>
    %15 = vector.shape_cast %14 : vector<1x32x32xf32> to vector<32x32xf32>
    %c0_18 = arith.constant 0 : index
    %c0_19 = arith.constant 0 : index
    %c0_20 = arith.constant 0 : index
    %16 = vector.load %arg8[%c0_18, %c0_19, %c0_20] : memref<2x1x32xf32, #tpu.memory_space<vmem>>, vector<1x1x32xf32>
    %17 = vector.shape_cast %16 : vector<1x1x32xf32> to vector<1x32xf32>
    %c0_21 = arith.constant 0 : index
    %c0_22 = arith.constant 0 : index
    %c0_23 = arith.constant 0 : index
    %18 = vector.load %arg9[%c0_21, %c0_22, %c0_23] : memref<2x1x32xf32, #tpu.memory_space<vmem>>, vector<1x1x32xf32>
    %19 = vector.shape_cast %18 : vector<1x1x32xf32> to vector<1x32xf32>
    %c0_24 = arith.constant 0 : index
    %c0_25 = arith.constant 0 : index
    %c0_26 = arith.constant 0 : index
    %20 = vector.load %arg10[%c0_24, %c0_25, %c0_26] : memref<2x1x32xf32, #tpu.memory_space<vmem>>, vector<1x1x32xf32>
    %21 = vector.shape_cast %20 : vector<1x1x32xf32> to vector<1x32xf32>
    %c0_27 = arith.constant 0 : index
    %c0_28 = arith.constant 0 : index
    %c0_29 = arith.constant 0 : index
    %22 = vector.load %arg11[%c0_27, %c0_28, %c0_29] : memref<2x32x2048xbf16, #tpu.memory_space<vmem>>, vector<1x32x2048xbf16>
    %23 = vector.shape_cast %22 : vector<1x32x2048xbf16> to vector<32x2048xbf16>
    %c0_30 = arith.constant 0 : index
    %c0_31 = arith.constant 0 : index
    %c0_32 = arith.constant 0 : index
    %24 = vector.load %arg12[%c0_30, %c0_31, %c0_32] : memref<2x1x2048xf32, #tpu.memory_space<vmem>>, vector<1x1x2048xf32>
    %25 = vector.shape_cast %24 : vector<1x1x2048xf32> to vector<1x2048xf32>
    %c0_33 = arith.constant 0 : index
    %c0_34 = arith.constant 0 : index
    %c0_35 = arith.constant 0 : index
    %26 = vector.load %arg13[%c0_33, %c0_34, %c0_35] : memref<2x2048x32xbf16, #tpu.memory_space<vmem>>, vector<1x2048x32xbf16>
    %27 = vector.shape_cast %26 : vector<1x2048x32xbf16> to vector<2048x32xbf16>
    %c0_36 = arith.constant 0 : index
    %c0_37 = arith.constant 0 : index
    %c0_38 = arith.constant 0 : index
    %28 = vector.load %arg14[%c0_36, %c0_37, %c0_38] : memref<2x1x32xf32, #tpu.memory_space<vmem>>, vector<1x1x32xf32>
    %29 = vector.shape_cast %28 : vector<1x1x32xf32> to vector<1x32xf32>
    %c0_39 = arith.constant 0 : index
    %c0_40 = arith.constant 0 : index
    %c0_41 = arith.constant 0 : index
    %30 = vector.load %arg15[%c0_39, %c0_40, %c0_41] : memref<2x1x32xf32, #tpu.memory_space<vmem>>, vector<1x1x32xf32>
    %31 = vector.shape_cast %30 : vector<1x1x32xf32> to vector<1x32xf32>
    %c0_42 = arith.constant 0 : index
    %c0_43 = arith.constant 0 : index
    %c0_44 = arith.constant 0 : index
    %32 = vector.load %arg16[%c0_42, %c0_43, %c0_44] : memref<2x1x32xf32, #tpu.memory_space<vmem>>, vector<1x1x32xf32>
    %33 = vector.shape_cast %32 : vector<1x1x32xf32> to vector<1x32xf32>
    %34 = arith.truncf %9 : vector<8x32xf32> to vector<8x32xbf16>
    %cst_45 = arith.constant dense<0.000000e+00> : vector<8x96xf32>
    %35 = tpu.matmul %34, %11, %cst_45 {dimension_numbers = #tpu.dot_dimension_numbers<[1], [0], [0], [1], [0, 0, 1, 1], [], []>} : vector<8x32xbf16>, vector<32x96xbf16>, vector<8x96xf32> -> vector<8x96xf32>
    %36 = vector.broadcast %13 : vector<1x96xf32> to vector<8x96xf32>
    %37 = arith.addf %35, %36 : vector<8x96xf32>
    %38 = vector.extract_strided_slice %37 {offsets = [0, 0], sizes = [8, 32], strides = [1, 1]} : vector<8x96xf32> to vector<8x32xf32>
    %39 = vector.extract_strided_slice %37 {offsets = [0, 32], sizes = [8, 32], strides = [1, 1]} : vector<8x96xf32> to vector<8x32xf32>
    %40 = vector.extract_strided_slice %37 {offsets = [0, 64], sizes = [8, 32], strides = [1, 1]} : vector<8x96xf32> to vector<8x32xf32>
    %41 = vector.extract_strided_slice %38 {offsets = [0, 0], sizes = [8, 8], strides = [1, 1]} : vector<8x32xf32> to vector<8x8xf32>
    %42 = vector.extract_strided_slice %38 {offsets = [0, 8], sizes = [8, 8], strides = [1, 1]} : vector<8x32xf32> to vector<8x8xf32>
    %43 = vector.extract_strided_slice %38 {offsets = [0, 16], sizes = [8, 8], strides = [1, 1]} : vector<8x32xf32> to vector<8x8xf32>
    %44 = vector.extract_strided_slice %38 {offsets = [0, 24], sizes = [8, 8], strides = [1, 1]} : vector<8x32xf32> to vector<8x8xf32>
    %45 = vector.shape_cast %41 : vector<8x8xf32> to vector<1x8x8xf32>
    %46 = vector.shape_cast %42 : vector<8x8xf32> to vector<1x8x8xf32>
    %47 = vector.shape_cast %43 : vector<8x8xf32> to vector<1x8x8xf32>
    %48 = vector.shape_cast %44 : vector<8x8xf32> to vector<1x8x8xf32>
    %49 = tpu.concatenate %45, %46, %47, %48 in 0 : vector<1x8x8xf32>, vector<1x8x8xf32>, vector<1x8x8xf32>, vector<1x8x8xf32> -> vector<4x8x8xf32>
    %50 = vector.extract_strided_slice %39 {offsets = [0, 0], sizes = [8, 8], strides = [1, 1]} : vector<8x32xf32> to vector<8x8xf32>
    %51 = vector.extract_strided_slice %39 {offsets = [0, 8], sizes = [8, 8], strides = [1, 1]} : vector<8x32xf32> to vector<8x8xf32>
    %52 = vector.extract_strided_slice %39 {offsets = [0, 16], sizes = [8, 8], strides = [1, 1]} : vector<8x32xf32> to vector<8x8xf32>
    %53 = vector.extract_strided_slice %39 {offsets = [0, 24], sizes = [8, 8], strides = [1, 1]} : vector<8x32xf32> to vector<8x8xf32>
    %54 = vector.shape_cast %50 : vector<8x8xf32> to vector<1x8x8xf32>
    %55 = vector.shape_cast %51 : vector<8x8xf32> to vector<1x8x8xf32>
    %56 = vector.shape_cast %52 : vector<8x8xf32> to vector<1x8x8xf32>
    %57 = vector.shape_cast %53 : vector<8x8xf32> to vector<1x8x8xf32>
    %58 = tpu.concatenate %54, %55, %56, %57 in 0 : vector<1x8x8xf32>, vector<1x8x8xf32>, vector<1x8x8xf32>, vector<1x8x8xf32> -> vector<4x8x8xf32>
    %59 = vector.extract_strided_slice %40 {offsets = [0, 0], sizes = [8, 8], strides = [1, 1]} : vector<8x32xf32> to vector<8x8xf32>
    %60 = vector.extract_strided_slice %40 {offsets = [0, 8], sizes = [8, 8], strides = [1, 1]} : vector<8x32xf32> to vector<8x8xf32>
    %61 = vector.extract_strided_slice %40 {offsets = [0, 16], sizes = [8, 8], strides = [1, 1]} : vector<8x32xf32> to vector<8x8xf32>
    %62 = vector.extract_strided_slice %40 {offsets = [0, 24], sizes = [8, 8], strides = [1, 1]} : vector<8x32xf32> to vector<8x8xf32>
    %63 = vector.shape_cast %59 : vector<8x8xf32> to vector<1x8x8xf32>
    %64 = vector.shape_cast %60 : vector<8x8xf32> to vector<1x8x8xf32>
    %65 = vector.shape_cast %61 : vector<8x8xf32> to vector<1x8x8xf32>
    %66 = vector.shape_cast %62 : vector<8x8xf32> to vector<1x8x8xf32>
    %67 = tpu.concatenate %63, %64, %65, %66 in 0 : vector<1x8x8xf32>, vector<1x8x8xf32>, vector<1x8x8xf32>, vector<1x8x8xf32> -> vector<4x8x8xf32>
    "tpu.trace_start"() <{level = 10 : i32, message = "hqd,hkd->hqk"}> : () -> ()
    %cst_46 = arith.constant dense<0.000000e+00> : vector<4x8x8xf32>
    %68 = tpu.matmul %49, %58, %cst_46 {dimension_numbers = #tpu.dot_dimension_numbers<[2], [2], [1], [1], [0, 0, 0, 1, 1, 1], [0], [0]>} : vector<4x8x8xf32>, vector<4x8x8xf32>, vector<4x8x8xf32> -> vector<4x8x8xf32>
    "tpu.trace_stop"() : () -> ()
    %cst_47 = arith.constant dense<0xFF800000> : vector<4x8xf32>
    %69 = vector.multi_reduction <maximumf>, %68, %cst_47 [2] : vector<4x8x8xf32> to vector<4x8xf32>
    %70 = vector.shape_cast %69 : vector<4x8xf32> to vector<4x8x1xf32>
    %71 = vector.broadcast %70 : vector<4x8x1xf32> to vector<4x8x8xf32>
    %72 = arith.subf %68, %71 : vector<4x8x8xf32>
    %73 = math.exp %72 : vector<4x8x8xf32>
    %cst_48 = arith.constant dense<0.000000e+00> : vector<4x8xf32>
    %74 = vector.multi_reduction <add>, %73, %cst_48 [2] : vector<4x8x8xf32> to vector<4x8xf32>
    %75 = vector.shape_cast %74 : vector<4x8xf32> to vector<4x8x1xf32>
    %76 = vector.broadcast %75 : vector<4x8x1xf32> to vector<4x8x8xf32>
    %77 = arith.divf %73, %76 : vector<4x8x8xf32>
    "tpu.trace_start"() <{level = 10 : i32, message = "hqk,hkd->hqd"}> : () -> ()
    %cst_49 = arith.constant dense<0.000000e+00> : vector<4x8x8xf32>
    %78 = tpu.matmul %77, %67, %cst_49 {dimension_numbers = #tpu.dot_dimension_numbers<[2], [1], [1], [2], [0, 0, 0, 1, 1, 2], [0], [0]>} : vector<4x8x8xf32>, vector<4x8x8xf32>, vector<4x8x8xf32> -> vector<4x8x8xf32>
    "tpu.trace_stop"() : () -> ()
    %79 = vector.extract_strided_slice %78 {offsets = [0, 0, 0], sizes = [1, 8, 8], strides = [1, 1, 1]} : vector<4x8x8xf32> to vector<1x8x8xf32>
    %80 = vector.shape_cast %79 : vector<1x8x8xf32> to vector<8x8xf32>
    %81 = vector.extract_strided_slice %78 {offsets = [1, 0, 0], sizes = [1, 8, 8], strides = [1, 1, 1]} : vector<4x8x8xf32> to vector<1x8x8xf32>
    %82 = vector.shape_cast %81 : vector<1x8x8xf32> to vector<8x8xf32>
    %83 = vector.extract_strided_slice %78 {offsets = [2, 0, 0], sizes = [1, 8, 8], strides = [1, 1, 1]} : vector<4x8x8xf32> to vector<1x8x8xf32>
    %84 = vector.shape_cast %83 : vector<1x8x8xf32> to vector<8x8xf32>
    %85 = vector.extract_strided_slice %78 {offsets = [3, 0, 0], sizes = [1, 8, 8], strides = [1, 1, 1]} : vector<4x8x8xf32> to vector<1x8x8xf32>
    %86 = vector.shape_cast %85 : vector<1x8x8xf32> to vector<8x8xf32>
    %87 = tpu.concatenate %80, %82, %84, %86 in 1 : vector<8x8xf32>, vector<8x8xf32>, vector<8x8xf32>, vector<8x8xf32> -> vector<8x32xf32>
    %cst_50 = arith.constant dense<0.000000e+00> : vector<8x32xf32>
    %88 = tpu.matmul %87, %15, %cst_50 {dimension_numbers = #tpu.dot_dimension_numbers<[1], [0], [0], [1], [0, 0, 1, 1], [], []>} : vector<8x32xf32>, vector<32x32xf32>, vector<8x32xf32> -> vector<8x32xf32>
    %89 = vector.broadcast %17 : vector<1x32xf32> to vector<8x32xf32>
    %90 = arith.addf %88, %89 : vector<8x32xf32>
    %91 = arith.addf %9, %90 : vector<8x32xf32>
    %cst_51 = arith.constant dense<0.000000e+00> : vector<8xf32>
    %92 = vector.multi_reduction <add>, %91, %cst_51 [1] : vector<8x32xf32> to vector<8xf32>
    %93 = vector.shape_cast %92 : vector<8xf32> to vector<8x1xf32>
    %cst_52 = arith.constant 3.200000e+01 : f32
    %94 = vector.broadcast %cst_52 : f32 to vector<8x1xf32>
    %95 = arith.divf %93, %94 : vector<8x1xf32>
    %96 = vector.broadcast %95 : vector<8x1xf32> to vector<8x32xf32>
    %97 = arith.subf %91, %96 : vector<8x32xf32>
    %98 = arith.mulf %97, %97 : vector<8x32xf32>
    %cst_53 = arith.constant dense<0.000000e+00> : vector<8xf32>
    %99 = vector.multi_reduction <add>, %98, %cst_53 [1] : vector<8x32xf32> to vector<8xf32>
    %100 = vector.shape_cast %99 : vector<8xf32> to vector<8x1xf32>
    %cst_54 = arith.constant 3.200000e+01 : f32
    %101 = vector.broadcast %cst_54 : f32 to vector<8x1xf32>
    %102 = arith.divf %100, %101 : vector<8x1xf32>
    %cst_55 = arith.constant 9.99999974E-6 : f32
    %103 = vector.broadcast %cst_55 : f32 to vector<8x1xf32>
    %104 = arith.addf %102, %103 : vector<8x1xf32>
    %105 = math.rsqrt %104 : vector<8x1xf32>
    %106 = vector.broadcast %105 : vector<8x1xf32> to vector<8x32xf32>
    %107 = arith.mulf %97, %106 : vector<8x32xf32>
    %108 = vector.broadcast %19 : vector<1x32xf32> to vector<8x32xf32>
    %109 = arith.mulf %107, %108 : vector<8x32xf32>
    %110 = vector.broadcast %21 : vector<1x32xf32> to vector<8x32xf32>
    %111 = arith.addf %109, %110 : vector<8x32xf32>
    %112 = arith.truncf %111 : vector<8x32xf32> to vector<8x32xbf16>
    %cst_56 = arith.constant dense<0.000000e+00> : vector<8x2048xf32>
    %113 = tpu.matmul %112, %23, %cst_56 {dimension_numbers = #tpu.dot_dimension_numbers<[1], [0], [0], [1], [0, 0, 1, 1], [], []>} : vector<8x32xbf16>, vector<32x2048xbf16>, vector<8x2048xf32> -> vector<8x2048xf32>
    %114 = vector.broadcast %25 : vector<1x2048xf32> to vector<8x2048xf32>
    %115 = arith.addf %113, %114 : vector<8x2048xf32>
    %cst_57 = arith.constant 0.000000e+00 : f32
    %116 = vector.broadcast %cst_57 : f32 to vector<8x2048xf32>
    %117 = arith.maximumf %115, %116 : vector<8x2048xf32>
    %118 = arith.truncf %117 : vector<8x2048xf32> to vector<8x2048xbf16>
    %cst_58 = arith.constant dense<0.000000e+00> : vector<8x32xf32>
    %119 = tpu.matmul %118, %27, %cst_58 {dimension_numbers = #tpu.dot_dimension_numbers<[1], [0], [0], [1], [0, 0, 1, 1], [], []>} : vector<8x2048xbf16>, vector<2048x32xbf16>, vector<8x32xf32> -> vector<8x32xf32>
    %120 = vector.broadcast %29 : vector<1x32xf32> to vector<8x32xf32>
    %121 = arith.addf %119, %120 : vector<8x32xf32>
    %122 = arith.addf %111, %121 : vector<8x32xf32>
    %cst_59 = arith.constant dense<0.000000e+00> : vector<8xf32>
    %123 = vector.multi_reduction <add>, %122, %cst_59 [1] : vector<8x32xf32> to vector<8xf32>
    %124 = vector.shape_cast %123 : vector<8xf32> to vector<8x1xf32>
    %cst_60 = arith.constant 3.200000e+01 : f32
    %125 = vector.broadcast %cst_60 : f32 to vector<8x1xf32>
    %126 = arith.divf %124, %125 : vector<8x1xf32>
    %127 = vector.broadcast %126 : vector<8x1xf32> to vector<8x32xf32>
    %128 = arith.subf %122, %127 : vector<8x32xf32>
    %129 = arith.mulf %128, %128 : vector<8x32xf32>
    %cst_61 = arith.constant dense<0.000000e+00> : vector<8xf32>
    %130 = vector.multi_reduction <add>, %129, %cst_61 [1] : vector<8x32xf32> to vector<8xf32>
    %131 = vector.shape_cast %130 : vector<8xf32> to vector<8x1xf32>
    %cst_62 = arith.constant 3.200000e+01 : f32
    %132 = vector.broadcast %cst_62 : f32 to vector<8x1xf32>
    %133 = arith.divf %131, %132 : vector<8x1xf32>
    %cst_63 = arith.constant 9.99999974E-6 : f32
    %134 = vector.broadcast %cst_63 : f32 to vector<8x1xf32>
    %135 = arith.addf %133, %134 : vector<8x1xf32>
    %136 = math.rsqrt %135 : vector<8x1xf32>
    %137 = vector.broadcast %136 : vector<8x1xf32> to vector<8x32xf32>
    %138 = arith.mulf %128, %137 : vector<8x32xf32>
    %139 = vector.broadcast %31 : vector<1x32xf32> to vector<8x32xf32>
    %140 = arith.mulf %138, %139 : vector<8x32xf32>
    %141 = vector.broadcast %33 : vector<1x32xf32> to vector<8x32xf32>
    %142 = arith.addf %140, %141 : vector<8x32xf32>
    %c1 = arith.constant 1 : index
    %c0_64 = arith.constant 0 : index
    %c0_65 = arith.constant 0 : index
    %143 = vector.load %arg5[%c1, %c0_64, %c0_65] : memref<2x32x96xbf16, #tpu.memory_space<vmem>>, vector<1x32x96xbf16>
    %144 = vector.shape_cast %143 : vector<1x32x96xbf16> to vector<32x96xbf16>
    %c1_66 = arith.constant 1 : index
    %c0_67 = arith.constant 0 : index
    %c0_68 = arith.constant 0 : index
    %145 = vector.load %arg6[%c1_66, %c0_67, %c0_68] : memref<2x1x96xf32, #tpu.memory_space<vmem>>, vector<1x1x96xf32>
    %146 = vector.shape_cast %145 : vector<1x1x96xf32> to vector<1x96xf32>
    %c1_69 = arith.constant 1 : index
    %c0_70 = arith.constant 0 : index
    %c0_71 = arith.constant 0 : index
    %147 = vector.load %arg7[%c1_69, %c0_70, %c0_71] : memref<2x32x32xf32, #tpu.memory_space<vmem>>, vector<1x32x32xf32>
    %148 = vector.shape_cast %147 : vector<1x32x32xf32> to vector<32x32xf32>
    %c1_72 = arith.constant 1 : index
    %c0_73 = arith.constant 0 : index
    %c0_74 = arith.constant 0 : index
    %149 = vector.load %arg8[%c1_72, %c0_73, %c0_74] : memref<2x1x32xf32, #tpu.memory_space<vmem>>, vector<1x1x32xf32>
    %150 = vector.shape_cast %149 : vector<1x1x32xf32> to vector<1x32xf32>
    %c1_75 = arith.constant 1 : index
    %c0_76 = arith.constant 0 : index
    %c0_77 = arith.constant 0 : index
    %151 = vector.load %arg9[%c1_75, %c0_76, %c0_77] : memref<2x1x32xf32, #tpu.memory_space<vmem>>, vector<1x1x32xf32>
    %152 = vector.shape_cast %151 : vector<1x1x32xf32> to vector<1x32xf32>
    %c1_78 = arith.constant 1 : index
    %c0_79 = arith.constant 0 : index
    %c0_80 = arith.constant 0 : index
    %153 = vector.load %arg10[%c1_78, %c0_79, %c0_80] : memref<2x1x32xf32, #tpu.memory_space<vmem>>, vector<1x1x32xf32>
    %154 = vector.shape_cast %153 : vector<1x1x32xf32> to vector<1x32xf32>
    %c1_81 = arith.constant 1 : index
    %c0_82 = arith.constant 0 : index
    %c0_83 = arith.constant 0 : index
    %155 = vector.load %arg11[%c1_81, %c0_82, %c0_83] : memref<2x32x2048xbf16, #tpu.memory_space<vmem>>, vector<1x32x2048xbf16>
    %156 = vector.shape_cast %155 : vector<1x32x2048xbf16> to vector<32x2048xbf16>
    %c1_84 = arith.constant 1 : index
    %c0_85 = arith.constant 0 : index
    %c0_86 = arith.constant 0 : index
    %157 = vector.load %arg12[%c1_84, %c0_85, %c0_86] : memref<2x1x2048xf32, #tpu.memory_space<vmem>>, vector<1x1x2048xf32>
    %158 = vector.shape_cast %157 : vector<1x1x2048xf32> to vector<1x2048xf32>
    %c1_87 = arith.constant 1 : index
    %c0_88 = arith.constant 0 : index
    %c0_89 = arith.constant 0 : index
    %159 = vector.load %arg13[%c1_87, %c0_88, %c0_89] : memref<2x2048x32xbf16, #tpu.memory_space<vmem>>, vector<1x2048x32xbf16>
    %160 = vector.shape_cast %159 : vector<1x2048x32xbf16> to vector<2048x32xbf16>
    %c1_90 = arith.constant 1 : index
    %c0_91 = arith.constant 0 : index
    %c0_92 = arith.constant 0 : index
    %161 = vector.load %arg14[%c1_90, %c0_91, %c0_92] : memref<2x1x32xf32, #tpu.memory_space<vmem>>, vector<1x1x32xf32>
    %162 = vector.shape_cast %161 : vector<1x1x32xf32> to vector<1x32xf32>
    %c1_93 = arith.constant 1 : index
    %c0_94 = arith.constant 0 : index
    %c0_95 = arith.constant 0 : index
    %163 = vector.load %arg15[%c1_93, %c0_94, %c0_95] : memref<2x1x32xf32, #tpu.memory_space<vmem>>, vector<1x1x32xf32>
    %164 = vector.shape_cast %163 : vector<1x1x32xf32> to vector<1x32xf32>
    %c1_96 = arith.constant 1 : index
    %c0_97 = arith.constant 0 : index
    %c0_98 = arith.constant 0 : index
    %165 = vector.load %arg16[%c1_96, %c0_97, %c0_98] : memref<2x1x32xf32, #tpu.memory_space<vmem>>, vector<1x1x32xf32>
    %166 = vector.shape_cast %165 : vector<1x1x32xf32> to vector<1x32xf32>
    %167 = arith.truncf %142 : vector<8x32xf32> to vector<8x32xbf16>
    %cst_99 = arith.constant dense<0.000000e+00> : vector<8x96xf32>
    %168 = tpu.matmul %167, %144, %cst_99 {dimension_numbers = #tpu.dot_dimension_numbers<[1], [0], [0], [1], [0, 0, 1, 1], [], []>} : vector<8x32xbf16>, vector<32x96xbf16>, vector<8x96xf32> -> vector<8x96xf32>
    %169 = vector.broadcast %146 : vector<1x96xf32> to vector<8x96xf32>
    %170 = arith.addf %168, %169 : vector<8x96xf32>
    %171 = vector.extract_strided_slice %170 {offsets = [0, 0], sizes = [8, 32], strides = [1, 1]} : vector<8x96xf32> to vector<8x32xf32>
    %172 = vector.extract_strided_slice %170 {offsets = [0, 32], sizes = [8, 32], strides = [1, 1]} : vector<8x96xf32> to vector<8x32xf32>
    %173 = vector.extract_strided_slice %170 {offsets = [0, 64], sizes = [8, 32], strides = [1, 1]} : vector<8x96xf32> to vector<8x32xf32>
    %174 = vector.extract_strided_slice %171 {offsets = [0, 0], sizes = [8, 8], strides = [1, 1]} : vector<8x32xf32> to vector<8x8xf32>
    %175 = vector.extract_strided_slice %171 {offsets = [0, 8], sizes = [8, 8], strides = [1, 1]} : vector<8x32xf32> to vector<8x8xf32>
    %176 = vector.extract_strided_slice %171 {offsets = [0, 16], sizes = [8, 8], strides = [1, 1]} : vector<8x32xf32> to vector<8x8xf32>
    %177 = vector.extract_strided_slice %171 {offsets = [0, 24], sizes = [8, 8], strides = [1, 1]} : vector<8x32xf32> to vector<8x8xf32>
    %178 = vector.shape_cast %174 : vector<8x8xf32> to vector<1x8x8xf32>
    %179 = vector.shape_cast %175 : vector<8x8xf32> to vector<1x8x8xf32>
    %180 = vector.shape_cast %176 : vector<8x8xf32> to vector<1x8x8xf32>
    %181 = vector.shape_cast %177 : vector<8x8xf32> to vector<1x8x8xf32>
    %182 = tpu.concatenate %178, %179, %180, %181 in 0 : vector<1x8x8xf32>, vector<1x8x8xf32>, vector<1x8x8xf32>, vector<1x8x8xf32> -> vector<4x8x8xf32>
    %183 = vector.extract_strided_slice %172 {offsets = [0, 0], sizes = [8, 8], strides = [1, 1]} : vector<8x32xf32> to vector<8x8xf32>
    %184 = vector.extract_strided_slice %172 {offsets = [0, 8], sizes = [8, 8], strides = [1, 1]} : vector<8x32xf32> to vector<8x8xf32>
    %185 = vector.extract_strided_slice %172 {offsets = [0, 16], sizes = [8, 8], strides = [1, 1]} : vector<8x32xf32> to vector<8x8xf32>
    %186 = vector.extract_strided_slice %172 {offsets = [0, 24], sizes = [8, 8], strides = [1, 1]} : vector<8x32xf32> to vector<8x8xf32>
    %187 = vector.shape_cast %183 : vector<8x8xf32> to vector<1x8x8xf32>
    %188 = vector.shape_cast %184 : vector<8x8xf32> to vector<1x8x8xf32>
    %189 = vector.shape_cast %185 : vector<8x8xf32> to vector<1x8x8xf32>
    %190 = vector.shape_cast %186 : vector<8x8xf32> to vector<1x8x8xf32>
    %191 = tpu.concatenate %187, %188, %189, %190 in 0 : vector<1x8x8xf32>, vector<1x8x8xf32>, vector<1x8x8xf32>, vector<1x8x8xf32> -> vector<4x8x8xf32>
    %192 = vector.extract_strided_slice %173 {offsets = [0, 0], sizes = [8, 8], strides = [1, 1]} : vector<8x32xf32> to vector<8x8xf32>
    %193 = vector.extract_strided_slice %173 {offsets = [0, 8], sizes = [8, 8], strides = [1, 1]} : vector<8x32xf32> to vector<8x8xf32>
    %194 = vector.extract_strided_slice %173 {offsets = [0, 16], sizes = [8, 8], strides = [1, 1]} : vector<8x32xf32> to vector<8x8xf32>
    %195 = vector.extract_strided_slice %173 {offsets = [0, 24], sizes = [8, 8], strides = [1, 1]} : vector<8x32xf32> to vector<8x8xf32>
    %196 = vector.shape_cast %192 : vector<8x8xf32> to vector<1x8x8xf32>
    %197 = vector.shape_cast %193 : vector<8x8xf32> to vector<1x8x8xf32>
    %198 = vector.shape_cast %194 : vector<8x8xf32> to vector<1x8x8xf32>
    %199 = vector.shape_cast %195 : vector<8x8xf32> to vector<1x8x8xf32>
    %200 = tpu.concatenate %196, %197, %198, %199 in 0 : vector<1x8x8xf32>, vector<1x8x8xf32>, vector<1x8x8xf32>, vector<1x8x8xf32> -> vector<4x8x8xf32>
    "tpu.trace_start"() <{level = 10 : i32, message = "hqd,hkd->hqk"}> : () -> ()
    %cst_100 = arith.constant dense<0.000000e+00> : vector<4x8x8xf32>
    %201 = tpu.matmul %182, %191, %cst_100 {dimension_numbers = #tpu.dot_dimension_numbers<[2], [2], [1], [1], [0, 0, 0, 1, 1, 1], [0], [0]>} : vector<4x8x8xf32>, vector<4x8x8xf32>, vector<4x8x8xf32> -> vector<4x8x8xf32>
    "tpu.trace_stop"() : () -> ()
    %cst_101 = arith.constant dense<0xFF800000> : vector<4x8xf32>
    %202 = vector.multi_reduction <maximumf>, %201, %cst_101 [2] : vector<4x8x8xf32> to vector<4x8xf32>
    %203 = vector.shape_cast %202 : vector<4x8xf32> to vector<4x8x1xf32>
    %204 = vector.broadcast %203 : vector<4x8x1xf32> to vector<4x8x8xf32>
    %205 = arith.subf %201, %204 : vector<4x8x8xf32>
    %206 = math.exp %205 : vector<4x8x8xf32>
    %cst_102 = arith.constant dense<0.000000e+00> : vector<4x8xf32>
    %207 = vector.multi_reduction <add>, %206, %cst_102 [2] : vector<4x8x8xf32> to vector<4x8xf32>
    %208 = vector.shape_cast %207 : vector<4x8xf32> to vector<4x8x1xf32>
    %209 = vector.broadcast %208 : vector<4x8x1xf32> to vector<4x8x8xf32>
    %210 = arith.divf %206, %209 : vector<4x8x8xf32>
    "tpu.trace_start"() <{level = 10 : i32, message = "hqk,hkd->hqd"}> : () -> ()
    %cst_103 = arith.constant dense<0.000000e+00> : vector<4x8x8xf32>
    %211 = tpu.matmul %210, %200, %cst_103 {dimension_numbers = #tpu.dot_dimension_numbers<[2], [1], [1], [2], [0, 0, 0, 1, 1, 2], [0], [0]>} : vector<4x8x8xf32>, vector<4x8x8xf32>, vector<4x8x8xf32> -> vector<4x8x8xf32>
    "tpu.trace_stop"() : () -> ()
    %212 = vector.extract_strided_slice %211 {offsets = [0, 0, 0], sizes = [1, 8, 8], strides = [1, 1, 1]} : vector<4x8x8xf32> to vector<1x8x8xf32>
    %213 = vector.shape_cast %212 : vector<1x8x8xf32> to vector<8x8xf32>
    %214 = vector.extract_strided_slice %211 {offsets = [1, 0, 0], sizes = [1, 8, 8], strides = [1, 1, 1]} : vector<4x8x8xf32> to vector<1x8x8xf32>
    %215 = vector.shape_cast %214 : vector<1x8x8xf32> to vector<8x8xf32>
    %216 = vector.extract_strided_slice %211 {offsets = [2, 0, 0], sizes = [1, 8, 8], strides = [1, 1, 1]} : vector<4x8x8xf32> to vector<1x8x8xf32>
    %217 = vector.shape_cast %216 : vector<1x8x8xf32> to vector<8x8xf32>
    %218 = vector.extract_strided_slice %211 {offsets = [3, 0, 0], sizes = [1, 8, 8], strides = [1, 1, 1]} : vector<4x8x8xf32> to vector<1x8x8xf32>
    %219 = vector.shape_cast %218 : vector<1x8x8xf32> to vector<8x8xf32>
    %220 = tpu.concatenate %213, %215, %217, %219 in 1 : vector<8x8xf32>, vector<8x8xf32>, vector<8x8xf32>, vector<8x8xf32> -> vector<8x32xf32>
    %cst_104 = arith.constant dense<0.000000e+00> : vector<8x32xf32>
    %221 = tpu.matmul %220, %148, %cst_104 {dimension_numbers = #tpu.dot_dimension_numbers<[1], [0], [0], [1], [0, 0, 1, 1], [], []>} : vector<8x32xf32>, vector<32x32xf32>, vector<8x32xf32> -> vector<8x32xf32>
    %222 = vector.broadcast %150 : vector<1x32xf32> to vector<8x32xf32>
    %223 = arith.addf %221, %222 : vector<8x32xf32>
    %224 = arith.addf %142, %223 : vector<8x32xf32>
    %cst_105 = arith.constant dense<0.000000e+00> : vector<8xf32>
    %225 = vector.multi_reduction <add>, %224, %cst_105 [1] : vector<8x32xf32> to vector<8xf32>
    %226 = vector.shape_cast %225 : vector<8xf32> to vector<8x1xf32>
    %cst_106 = arith.constant 3.200000e+01 : f32
    %227 = vector.broadcast %cst_106 : f32 to vector<8x1xf32>
    %228 = arith.divf %226, %227 : vector<8x1xf32>
    %229 = vector.broadcast %228 : vector<8x1xf32> to vector<8x32xf32>
    %230 = arith.subf %224, %229 : vector<8x32xf32>
    %231 = arith.mulf %230, %230 : vector<8x32xf32>
    %cst_107 = arith.constant dense<0.000000e+00> : vector<8xf32>
    %232 = vector.multi_reduction <add>, %231, %cst_107 [1] : vector<8x32xf32> to vector<8xf32>
    %233 = vector.shape_cast %232 : vector<8xf32> to vector<8x1xf32>
    %cst_108 = arith.constant 3.200000e+01 : f32
    %234 = vector.broadcast %cst_108 : f32 to vector<8x1xf32>
    %235 = arith.divf %233, %234 : vector<8x1xf32>
    %cst_109 = arith.constant 9.99999974E-6 : f32
    %236 = vector.broadcast %cst_109 : f32 to vector<8x1xf32>
    %237 = arith.addf %235, %236 : vector<8x1xf32>
    %238 = math.rsqrt %237 : vector<8x1xf32>
    %239 = vector.broadcast %238 : vector<8x1xf32> to vector<8x32xf32>
    %240 = arith.mulf %230, %239 : vector<8x32xf32>
    %241 = vector.broadcast %152 : vector<1x32xf32> to vector<8x32xf32>
    %242 = arith.mulf %240, %241 : vector<8x32xf32>
    %243 = vector.broadcast %154 : vector<1x32xf32> to vector<8x32xf32>
    %244 = arith.addf %242, %243 : vector<8x32xf32>
    %245 = arith.truncf %244 : vector<8x32xf32> to vector<8x32xbf16>
    %cst_110 = arith.constant dense<0.000000e+00> : vector<8x2048xf32>
    %246 = tpu.matmul %245, %156, %cst_110 {dimension_numbers = #tpu.dot_dimension_numbers<[1], [0], [0], [1], [0, 0, 1, 1], [], []>} : vector<8x32xbf16>, vector<32x2048xbf16>, vector<8x2048xf32> -> vector<8x2048xf32>
    %247 = vector.broadcast %158 : vector<1x2048xf32> to vector<8x2048xf32>
    %248 = arith.addf %246, %247 : vector<8x2048xf32>
    %cst_111 = arith.constant 0.000000e+00 : f32
    %249 = vector.broadcast %cst_111 : f32 to vector<8x2048xf32>
    %250 = arith.maximumf %248, %249 : vector<8x2048xf32>
    %251 = arith.truncf %250 : vector<8x2048xf32> to vector<8x2048xbf16>
    %cst_112 = arith.constant dense<0.000000e+00> : vector<8x32xf32>
    %252 = tpu.matmul %251, %160, %cst_112 {dimension_numbers = #tpu.dot_dimension_numbers<[1], [0], [0], [1], [0, 0, 1, 1], [], []>} : vector<8x2048xbf16>, vector<2048x32xbf16>, vector<8x32xf32> -> vector<8x32xf32>
    %253 = vector.broadcast %162 : vector<1x32xf32> to vector<8x32xf32>
    %254 = arith.addf %252, %253 : vector<8x32xf32>
    %255 = arith.addf %244, %254 : vector<8x32xf32>
    %cst_113 = arith.constant dense<0.000000e+00> : vector<8xf32>
    %256 = vector.multi_reduction <add>, %255, %cst_113 [1] : vector<8x32xf32> to vector<8xf32>
    %257 = vector.shape_cast %256 : vector<8xf32> to vector<8x1xf32>
    %cst_114 = arith.constant 3.200000e+01 : f32
    %258 = vector.broadcast %cst_114 : f32 to vector<8x1xf32>
    %259 = arith.divf %257, %258 : vector<8x1xf32>
    %260 = vector.broadcast %259 : vector<8x1xf32> to vector<8x32xf32>
    %261 = arith.subf %255, %260 : vector<8x32xf32>
    %262 = arith.mulf %261, %261 : vector<8x32xf32>
    %cst_115 = arith.constant dense<0.000000e+00> : vector<8xf32>
    %263 = vector.multi_reduction <add>, %262, %cst_115 [1] : vector<8x32xf32> to vector<8xf32>
    %264 = vector.shape_cast %263 : vector<8xf32> to vector<8x1xf32>
    %cst_116 = arith.constant 3.200000e+01 : f32
    %265 = vector.broadcast %cst_116 : f32 to vector<8x1xf32>
    %266 = arith.divf %264, %265 : vector<8x1xf32>
    %cst_117 = arith.constant 9.99999974E-6 : f32
    %267 = vector.broadcast %cst_117 : f32 to vector<8x1xf32>
    %268 = arith.addf %266, %267 : vector<8x1xf32>
    %269 = math.rsqrt %268 : vector<8x1xf32>
    %270 = vector.broadcast %269 : vector<8x1xf32> to vector<8x32xf32>
    %271 = arith.mulf %261, %270 : vector<8x32xf32>
    %272 = vector.broadcast %164 : vector<1x32xf32> to vector<8x32xf32>
    %273 = arith.mulf %271, %272 : vector<8x32xf32>
    %274 = vector.broadcast %166 : vector<1x32xf32> to vector<8x32xf32>
    %275 = arith.addf %273, %274 : vector<8x32xf32>
    %c0_118 = arith.constant 0 : index
    %c0_119 = arith.constant 0 : index
    %276 = vector.load %arg17[%c0_118, %c0_119] : memref<1x32xf32, #tpu.memory_space<vmem>>, vector<1x32xf32>
    %277 = vector.broadcast %276 : vector<1x32xf32> to vector<8x32xf32>
    %278 = arith.mulf %275, %277 : vector<8x32xf32>
    %cst_120 = arith.constant dense<0.000000e+00> : vector<8xf32>
    %279 = vector.multi_reduction <add>, %278, %cst_120 [1] : vector<8x32xf32> to vector<8xf32>
    %280 = vector.shape_cast %279 : vector<8xf32> to vector<8x1xf32>
    %c0_121 = arith.constant 0 : index
    %c0_122 = arith.constant 0 : index
    %281 = vector.load %arg18[%c0_121, %c0_122] : memref<1x1xf32, #tpu.memory_space<vmem>>, vector<1x1xf32>
    %282 = vector.broadcast %281 : vector<1x1xf32> to vector<8x1xf32>
    %283 = arith.addf %280, %282 : vector<8x1xf32>
    %c0_123 = arith.constant 0 : index
    %c0_124 = arith.constant 0 : index
    %c0_125 = arith.constant 0 : index
    %284 = vector.load %arg19[%c0_123, %c0_124, %c0_125] : memref<1x8x1xf32, #tpu.memory_space<vmem>>, vector<1x8x1xf32>
    %285 = vector.shape_cast %284 : vector<1x8x1xf32> to vector<8x1xf32>
    %286 = vector.shape_cast %283 : vector<8x1xf32> to vector<1x8x1xf32>
    tpu.vector_store %arg19[%c0_123, %c0_124, %c0_125], %286 {strides = array<i32>} : memref<1x8x1xf32, #tpu.memory_space<vmem>>, vector<1x8x1xf32>,
    return
  }
  func.func @transform_0(%arg0: i32) -> (i32, i32, i32) {
    %c0_i32 = arith.constant 0 : i32
    %c0_i32_0 = arith.constant 0 : i32
    %c0_i32_1 = arith.constant 0 : i32
    return %arg0, %c0_i32, %c0_i32_0 : i32, i32, i32
  }
  func.func @transform_1(%arg0: i32) -> (i32, i32, i32) {
    %c0_i32 = arith.constant 0 : i32
    %c0_i32_0 = arith.constant 0 : i32
    %c0_i32_1 = arith.constant 0 : i32
    return %arg0, %c0_i32, %c0_i32_0 : i32, i32, i32
  }
  func.func @transform_2(%arg0: i32) -> (i32, i32) {
    %c0_i32 = arith.constant 0 : i32
    %c0_i32_0 = arith.constant 0 : i32
    %c0_i32_1 = arith.constant 0 : i32
    return %c0_i32, %c0_i32_0 : i32, i32
  }
  func.func @transform_3(%arg0: i32) -> (i32, i32) {
    %c0_i32 = arith.constant 0 : i32
    %c0_i32_0 = arith.constant 0 : i32
    %c0_i32_1 = arith.constant 0 : i32
    return %c0_i32, %c0_i32_0 : i32, i32
  }
  func.func @transform_4(%arg0: i32) -> (i32, i32, i32) {
    %c0_i32 = arith.constant 0 : i32
    %c0_i32_0 = arith.constant 0 : i32
    %c0_i32_1 = arith.constant 0 : i32
    %c0_i32_2 = arith.constant 0 : i32
    return %c0_i32, %c0_i32_0, %c0_i32_1 : i32, i32, i32
  }
  func.func @transform_5(%arg0: i32) -> (i32, i32, i32) {
    %c0_i32 = arith.constant 0 : i32
    %c0_i32_0 = arith.constant 0 : i32
    %c0_i32_1 = arith.constant 0 : i32
    %c0_i32_2 = arith.constant 0 : i32
    return %c0_i32, %c0_i32_0, %c0_i32_1 : i32, i32, i32
  }
  func.func @transform_6(%arg0: i32) -> (i32, i32, i32) {
    %c0_i32 = arith.constant 0 : i32
    %c0_i32_0 = arith.constant 0 : i32
    %c0_i32_1 = arith.constant 0 : i32
    %c0_i32_2 = arith.constant 0 : i32
    return %c0_i32, %c0_i32_0, %c0_i32_1 : i32, i32, i32
  }
  func.func @transform_7(%arg0: i32) -> (i32, i32, i32) {
    %c0_i32 = arith.constant 0 : i32
    %c0_i32_0 = arith.constant 0 : i32
    %c0_i32_1 = arith.constant 0 : i32
    %c0_i32_2 = arith.constant 0 : i32
    return %c0_i32, %c0_i32_0, %c0_i32_1 : i32, i32, i32
  }
  func.func @transform_8(%arg0: i32) -> (i32, i32, i32) {
    %c0_i32 = arith.constant 0 : i32
    %c0_i32_0 = arith.constant 0 : i32
    %c0_i32_1 = arith.constant 0 : i32
    %c0_i32_2 = arith.constant 0 : i32
    return %c0_i32, %c0_i32_0, %c0_i32_1 : i32, i32, i32
  }
  func.func @transform_9(%arg0: i32) -> (i32, i32, i32) {
    %c0_i32 = arith.constant 0 : i32
    %c0_i32_0 = arith.constant 0 : i32
    %c0_i32_1 = arith.constant 0 : i32
    %c0_i32_2 = arith.constant 0 : i32
    return %c0_i32, %c0_i32_0, %c0_i32_1 : i32, i32, i32
  }
  func.func @transform_10(%arg0: i32) -> (i32, i32, i32) {
    %c0_i32 = arith.constant 0 : i32
    %c0_i32_0 = arith.constant 0 : i32
    %c0_i32_1 = arith.constant 0 : i32
    %c0_i32_2 = arith.constant 0 : i32
    return %c0_i32, %c0_i32_0, %c0_i32_1 : i32, i32, i32
  }
  func.func @transform_11(%arg0: i32) -> (i32, i32, i32) {
    %c0_i32 = arith.constant 0 : i32
    %c0_i32_0 = arith.constant 0 : i32
    %c0_i32_1 = arith.constant 0 : i32
    %c0_i32_2 = arith.constant 0 : i32
    return %c0_i32, %c0_i32_0, %c0_i32_1 : i32, i32, i32
  }
  func.func @transform_12(%arg0: i32) -> (i32, i32, i32) {
    %c0_i32 = arith.constant 0 : i32
    %c0_i32_0 = arith.constant 0 : i32
    %c0_i32_1 = arith.constant 0 : i32
    %c0_i32_2 = arith.constant 0 : i32
    return %c0_i32, %c0_i32_0, %c0_i32_1 : i32, i32, i32
  }
  func.func @transform_13(%arg0: i32) -> (i32, i32, i32) {
    %c0_i32 = arith.constant 0 : i32
    %c0_i32_0 = arith.constant 0 : i32
    %c0_i32_1 = arith.constant 0 : i32
    %c0_i32_2 = arith.constant 0 : i32
    return %c0_i32, %c0_i32_0, %c0_i32_1 : i32, i32, i32
  }
  func.func @transform_14(%arg0: i32) -> (i32, i32, i32) {
    %c0_i32 = arith.constant 0 : i32
    %c0_i32_0 = arith.constant 0 : i32
    %c0_i32_1 = arith.constant 0 : i32
    %c0_i32_2 = arith.constant 0 : i32
    return %c0_i32, %c0_i32_0, %c0_i32_1 : i32, i32, i32
  }
  func.func @transform_15(%arg0: i32) -> (i32, i32, i32) {
    %c0_i32 = arith.constant 0 : i32
    %c0_i32_0 = arith.constant 0 : i32
    %c0_i32_1 = arith.constant 0 : i32
    %c0_i32_2 = arith.constant 0 : i32
    return %c0_i32, %c0_i32_0, %c0_i32_1 : i32, i32, i32
  }
  func.func @transform_16(%arg0: i32) -> (i32, i32) {
    %c0_i32 = arith.constant 0 : i32
    %c0_i32_0 = arith.constant 0 : i32
    %c0_i32_1 = arith.constant 0 : i32
    return %c0_i32, %c0_i32_0 : i32, i32
  }
  func.func @transform_17(%arg0: i32) -> (i32, i32) {
    %c0_i32 = arith.constant 0 : i32
    %c0_i32_0 = arith.constant 0 : i32
    %c0_i32_1 = arith.constant 0 : i32
    return %c0_i32, %c0_i32_0 : i32, i32
  }
  func.func @transform_18(%arg0: i32) -> (i32, i32, i32) {
    %c0_i32 = arith.constant 0 : i32
    %c0_i32_0 = arith.constant 0 : i32
    %c0_i32_1 = arith.constant 0 : i32
    return %arg0, %c0_i32, %c0_i32_0 : i32, i32, i32
  }
}

</mosaic_0001>

<llo_original>
// kernel: transformer_forward.1
$region0: #{transformer_forward.1}
  #allocation0 [shape = 'u32[]', space=smem, size = 0x4, offset = 0x4, fixed_abs, tag = 'smem constant byte address 0x4 - core index']
  #allocation1 [shape = 'u32[144,128]{1,0:T(1,128)}', space=vmem, size = 0x12000, scoped, tag = 'internal scratch']
  #allocation2 [shape = 'f32[1,1]{1,0:T(1,128)S(1)}', space=vmem, size = 0x200, scoped, tag = 'scoped memory for transformer_forward.1']
  %s0 = inlined_call_operand.vmem [shape: f32[2,8,3], index: 0, kind: input, shape index: {}]
  %s1 = inlined_call_operand.vmem [shape: f32[2,8,32], index: 1, kind: input, shape index: {}]
  %s2 = inlined_call_operand.vmem [shape: f32[3,32], index: 2, kind: input, shape index: {}]
  %s3 = inlined_call_operand.vmem [shape: f32[1,32], index: 3, kind: input, shape index: {}]
  %s4 = inlined_call_operand.vmem [shape: bf16[2,32,96], index: 4, kind: input, shape index: {}]
  %s5 = inlined_call_operand.vmem [shape: f32[2,1,96], index: 5, kind: input, shape index: {}]
  %s6 = inlined_call_operand.vmem [shape: f32[2,32,32], index: 6, kind: input, shape index: {}]
  %s7 = inlined_call_operand.vmem [shape: f32[2,1,32], index: 7, kind: input, shape index: {}]
  %s8 = inlined_call_operand.vmem [shape: f32[2,1,32], index: 8, kind: input, shape index: {}]
  %s9 = inlined_call_operand.vmem [shape: f32[2,1,32], index: 9, kind: input, shape index: {}]
  %s10 = inlined_call_operand.vmem [shape: bf16[2,32,2048], index: 10, kind: input, shape index: {}]
  %s11 = inlined_call_operand.vmem [shape: f32[2,1,2048], index: 11, kind: input, shape index: {}]
  %s12 = inlined_call_operand.vmem [shape: bf16[2,2048,32], index: 12, kind: input, shape index: {}]
  %s13 = inlined_call_operand.vmem [shape: f32[2,1,32], index: 13, kind: input, shape index: {}]
  %s14 = inlined_call_operand.vmem [shape: f32[2,1,32], index: 14, kind: input, shape index: {}]
  %s15 = inlined_call_operand.vmem [shape: f32[2,1,32], index: 15, kind: input, shape index: {}]
  %s16 = inlined_call_operand.vmem [shape: f32[1,32], index: 16, kind: input, shape index: {}]
  %s17 = inlined_call_operand.<no memory space> [shape: f32[1,1], index: 17, kind: input, shape index: {}]
  %s18 = inlined_call_operand.vmem [shape: f32[2,8,1], index: 18, kind: output, shape index: {}]
  %s19 = sld [smem:[#allocation0]]
  $region105: #{transformer_forward.1} parent=0
    _
  %s21 = ssub.s32 1, %s19
  %s22 = scalar_select 0, %s21, %s19
  %v23 = vstv %s17
  %24 = vst [vmem:[#allocation2] sm:$0x1] %v23
  loop: start=0, step=1, limit=4
  $region2: #{transformer_forward.1} parent=0 // loop_pre_header
    _
  $region3: #{transformer_forward.1} parent=0 // loop_header
    %s26 = sphi 0, %s30
    %p27 = scmp.ge.s32.totalorder %s26, 4
    %s36 = sphi 0, %s38
    %s39 = sphi 0, %s36
    %s40 = sphi 0, %s39
    %s56 = sphi 0, %s40
    %s62 = sphi 0, %s64
    %s65 = sphi 0, %s62
    %s66 = sphi 0, %s65
    %s82 = sphi 0, %s66
    %s86 = sphi 0, %s86
    %s88 = sphi 0, %s86
    %s89 = sphi 0, %s88
    %s103 = sphi 0, %s89
    %s107 = sphi 0, %s107
    %s109 = sphi 0, %s107
    %s110 = sphi 0, %s109
    %s124 = sphi 0, %s110
    %s128 = sphi 0, %s128
    %s130 = sphi 0, %s128
    %s131 = sphi 0, %s130
    %s145 = sphi 0, %s131
    %s149 = sphi 0, %s149
    %s151 = sphi 0, %s149
    %s152 = sphi 0, %s151
    %s166 = sphi 0, %s152
    %s170 = sphi 0, %s170
    %s172 = sphi 0, %s170
    %s173 = sphi 0, %s172
    %s187 = sphi 0, %s173
    %s191 = sphi 0, %s191
    %s193 = sphi 0, %s191
    %s194 = sphi 0, %s193
    %s208 = sphi 0, %s194
    %s212 = sphi 0, %s212
    %s214 = sphi 0, %s212
    %s215 = sphi 0, %s214
    %s229 = sphi 0, %s215
    %s233 = sphi 0, %s233
    %s235 = sphi 0, %s233
    %s236 = sphi 0, %s235
    %s250 = sphi 0, %s236
    %s254 = sphi 0, %s254
    %s256 = sphi 0, %s254
    %s257 = sphi 0, %s256
    %s271 = sphi 0, %s257
    %s275 = sphi 0, %s275
    %s277 = sphi 0, %s275
    %s278 = sphi 0, %s277
    %s292 = sphi 0, %s278
    %s296 = sphi 0, %s296
    %s298 = sphi 0, %s296
    %s299 = sphi 0, %s298
    %s313 = sphi 0, %s299
    %s317 = sphi 0, %s317
    %s319 = sphi 0, %s317
    %s320 = sphi 0, %s319
    %s334 = sphi 0, %s320
    %s338 = sphi 0, %s338
    %s340 = sphi 0, %s338
    %s341 = sphi 0, %s340
    %s355 = sphi 0, %s341
    %s359 = sphi 0, %s359
    %s361 = sphi 0, %s359
    %s362 = sphi 0, %s361
    %s376 = sphi 0, %s362
    %s380 = sphi 0, %s380
    %s382 = sphi 0, %s380
    %s383 = sphi 0, %s382
    %s397 = sphi 0, %s383
    %s401 = sphi 0, %s401
    %s403 = sphi 0, %s401
    %s404 = sphi 0, %s403
    %s418 = sphi 0, %s404
    %s424 = sphi 0, %s426
    %s427 = sphi 0, %s424
    %s428 = sphi 0, %s427
    %s444 = sphi 0, %s428
  $region4: #{transformer_forward.1} parent=0 // loop_header_branch
    %29 = sbr.rel (%p27) target = $region8
  $region5: #{transformer_forward.1} parent=0 // loop_body
    %s31 = ssub.s32 %s26, 1
    %s32 = ssub.s32 %s26, 2
    %s33 = sadd.s32 %s26, 1
    %s34 = ssub.s32 %s26, %s33
    %p35 = scmp.eq.s32.totalorder %s34, 0
    %s37 = sadd.s32 %s36, 1
    %s38 = scalar_select %p35, %s36, %s37
    %p41 = pneg %p35
    %p42 = scmp.eq.s32.totalorder %s26, 1
    %p43 = por %p41, %p42
    %p44 = scmp.ne.s32.totalorder %s36, %s39
    %p45 = scmp.eq.s32.totalorder %s26, 0
    %p46 = por %p44, %p45
    %p47 = scmp.ne.s32.totalorder %s36, %s39
    %p48 = scmp.eq.s32.totalorder %s31, 1
    %p49 = por %p47, %p48
    %p50 = scmp.ne.s32.totalorder %s39, %s40
    %p51 = scmp.eq.s32.totalorder %s31, 0
    %p52 = por %p50, %p51
    %p53 = scmp.ne.s32.totalorder %s39, %s40
    %p54 = scmp.eq.s32.totalorder %s32, 1
    %p55 = por %p53, %p54
    %p57 = scmp.ne.s32.totalorder %s40, %s56
    %p58 = scmp.eq.s32.totalorder %s32, 0
    %p59 = por %p57, %p58
    %s60 = ssub.s32 %s26, %s33
    %p61 = scmp.eq.s32.totalorder %s60, 0
    %s63 = sadd.s32 %s62, 1
    %s64 = scalar_select %p61, %s62, %s63
    %p67 = pneg %p61
    %p68 = scmp.eq.s32.totalorder %s26, 1
    %p69 = por %p67, %p68
    %p70 = scmp.ne.s32.totalorder %s62, %s65
    %p71 = scmp.eq.s32.totalorder %s26, 0
    %p72 = por %p70, %p71
    %p73 = scmp.ne.s32.totalorder %s62, %s65
    %p74 = scmp.eq.s32.totalorder %s31, 1
    %p75 = por %p73, %p74
    %p76 = scmp.ne.s32.totalorder %s65, %s66
    %p77 = scmp.eq.s32.totalorder %s31, 0
    %p78 = por %p76, %p77
    %p79 = scmp.ne.s32.totalorder %s65, %s66
    %p80 = scmp.eq.s32.totalorder %s32, 1
    %p81 = por %p79, %p80
    %p83 = scmp.ne.s32.totalorder %s66, %s82
    %p84 = scmp.eq.s32.totalorder %s32, 0
    %p85 = por %p83, %p84
    %s87 = sadd.s32 %s86, 1
    %p90 = scmp.eq.s32.totalorder %s26, 1
    %p91 = scmp.ne.s32.totalorder %s86, %s88
    %p92 = scmp.eq.s32.totalorder %s26, 0
    %p93 = por %p91, %p92
    %p94 = scmp.ne.s32.totalorder %s86, %s88
    %p95 = scmp.eq.s32.totalorder %s31, 1
    %p96 = por %p94, %p95
    %p97 = scmp.ne.s32.totalorder %s88, %s89
    %p98 = scmp.eq.s32.totalorder %s31, 0
    %p99 = por %p97, %p98
    %p100 = scmp.ne.s32.totalorder %s88, %s89
    %p101 = scmp.eq.s32.totalorder %s32, 1
    %p102 = por %p100, %p101
    %p104 = scmp.ne.s32.totalorder %s89, %s103
    %p105 = scmp.eq.s32.totalorder %s32, 0
    %p106 = por %p104, %p105
    %s108 = sadd.s32 %s107, 1
    %p111 = scmp.eq.s32.totalorder %s26, 1
    %p112 = scmp.ne.s32.totalorder %s107, %s109
    %p113 = scmp.eq.s32.totalorder %s26, 0
    %p114 = por %p112, %p113
    %p115 = scmp.ne.s32.totalorder %s107, %s109
    %p116 = scmp.eq.s32.totalorder %s31, 1
    %p117 = por %p115, %p116
    %p118 = scmp.ne.s32.totalorder %s109, %s110
    %p119 = scmp.eq.s32.totalorder %s31, 0
    %p120 = por %p118, %p119
    %p121 = scmp.ne.s32.totalorder %s109, %s110
    %p122 = scmp.eq.s32.totalorder %s32, 1
    %p123 = por %p121, %p122
    %p125 = scmp.ne.s32.totalorder %s110, %s124
    %p126 = scmp.eq.s32.totalorder %s32, 0
    %p127 = por %p125, %p126
    %s129 = sadd.s32 %s128, 1
    %p132 = scmp.eq.s32.totalorder %s26, 1
    %p133 = scmp.ne.s32.totalorder %s128, %s130
    %p134 = scmp.eq.s32.totalorder %s26, 0
    %p135 = por %p133, %p134
    %p136 = scmp.ne.s32.totalorder %s128, %s130
    %p137 = scmp.eq.s32.totalorder %s31, 1
    %p138 = por %p136, %p137
    %p139 = scmp.ne.s32.totalorder %s130, %s131
    %p140 = scmp.eq.s32.totalorder %s31, 0
    %p141 = por %p139, %p140
    %p142 = scmp.ne.s32.totalorder %s130, %s131
    %p143 = scmp.eq.s32.totalorder %s32, 1
    %p144 = por %p142, %p143
    %p146 = scmp.ne.s32.totalorder %s131, %s145
    %p147 = scmp.eq.s32.totalorder %s32, 0
    %p148 = por %p146, %p147
    %s150 = sadd.s32 %s149, 1
    %p153 = scmp.eq.s32.totalorder %s26, 1
    %p154 = scmp.ne.s32.totalorder %s149, %s151
    %p155 = scmp.eq.s32.totalorder %s26, 0
    %p156 = por %p154, %p155
    %p157 = scmp.ne.s32.totalorder %s149, %s151
    %p158 = scmp.eq.s32.totalorder %s31, 1
    %p159 = por %p157, %p158
    %p160 = scmp.ne.s32.totalorder %s151, %s152
    %p161 = scmp.eq.s32.totalorder %s31, 0
    %p162 = por %p160, %p161
    %p163 = scmp.ne.s32.totalorder %s151, %s152
    %p164 = scmp.eq.s32.totalorder %s32, 1
    %p165 = por %p163, %p164
    %p167 = scmp.ne.s32.totalorder %s152, %s166
    %p168 = scmp.eq.s32.totalorder %s32, 0
    %p169 = por %p167, %p168
    %s171 = sadd.s32 %s170, 1
    %p174 = scmp.eq.s32.totalorder %s26, 1
    %p175 = scmp.ne.s32.totalorder %s170, %s172
    %p176 = scmp.eq.s32.totalorder %s26, 0
    %p177 = por %p175, %p176
    %p178 = scmp.ne.s32.totalorder %s170, %s172
    %p179 = scmp.eq.s32.totalorder %s31, 1
    %p180 = por %p178, %p179
    %p181 = scmp.ne.s32.totalorder %s172, %s173
    %p182 = scmp.eq.s32.totalorder %s31, 0
    %p183 = por %p181, %p182
    %p184 = scmp.ne.s32.totalorder %s172, %s173
    %p185 = scmp.eq.s32.totalorder %s32, 1
    %p186 = por %p184, %p185
    %p188 = scmp.ne.s32.totalorder %s173, %s187
    %p189 = scmp.eq.s32.totalorder %s32, 0
    %p190 = por %p188, %p189
    %s192 = sadd.s32 %s191, 1
    %p195 = scmp.eq.s32.totalorder %s26, 1
    %p196 = scmp.ne.s32.totalorder %s191, %s193
    %p197 = scmp.eq.s32.totalorder %s26, 0
    %p198 = por %p196, %p197
    %p199 = scmp.ne.s32.totalorder %s191, %s193
    %p200 = scmp.eq.s32.totalorder %s31, 1
    %p201 = por %p199, %p200
    %p202 = scmp.ne.s32.totalorder %s193, %s194
    %p203 = scmp.eq.s32.totalorder %s31, 0
    %p204 = por %p202, %p203
    %p205 = scmp.ne.s32.totalorder %s193, %s194
    %p206 = scmp.eq.s32.totalorder %s32, 1
    %p207 = por %p205, %p206
    %p209 = scmp.ne.s32.totalorder %s194, %s208
    %p210 = scmp.eq.s32.totalorder %s32, 0
    %p211 = por %p209, %p210
    %s213 = sadd.s32 %s212, 1
    %p216 = scmp.eq.s32.totalorder %s26, 1
    %p217 = scmp.ne.s32.totalorder %s212, %s214
    %p218 = scmp.eq.s32.totalorder %s26, 0
    %p219 = por %p217, %p218
    %p220 = scmp.ne.s32.totalorder %s212, %s214
    %p221 = scmp.eq.s32.totalorder %s31, 1
    %p222 = por %p220, %p221
    %p223 = scmp.ne.s32.totalorder %s214, %s215
    %p224 = scmp.eq.s32.totalorder %s31, 0
    %p225 = por %p223, %p224
    %p226 = scmp.ne.s32.totalorder %s214, %s215
    %p227 = scmp.eq.s32.totalorder %s32, 1
    %p228 = por %p226, %p227
    %p230 = scmp.ne.s32.totalorder %s215, %s229
    %p231 = scmp.eq.s32.totalorder %s32, 0
    %p232 = por %p230, %p231
    %s234 = sadd.s32 %s233, 1
    %p237 = scmp.eq.s32.totalorder %s26, 1
    %p238 = scmp.ne.s32.totalorder %s233, %s235
    %p239 = scmp.eq.s32.totalorder %s26, 0
    %p240 = por %p238, %p239
    %p241 = scmp.ne.s32.totalorder %s233, %s235
    %p242 = scmp.eq.s32.totalorder %s31, 1
    %p243 = por %p241, %p242
    %p244 = scmp.ne.s32.totalorder %s235, %s236
    %p245 = scmp.eq.s32.totalorder %s31, 0
    %p246 = por %p244, %p245
    %p247 = scmp.ne.s32.totalorder %s235, %s236
    %p248 = scmp.eq.s32.totalorder %s32, 1
    %p249 = por %p247, %p248
    %p251 = scmp.ne.s32.totalorder %s236, %s250
    %p252 = scmp.eq.s32.totalorder %s32, 0
    %p253 = por %p251, %p252
    %s255 = sadd.s32 %s254, 1
    %p258 = scmp.eq.s32.totalorder %s26, 1
    %p259 = scmp.ne.s32.totalorder %s254, %s256
    %p260 = scmp.eq.s32.totalorder %s26, 0
    %p261 = por %p259, %p260
    %p262 = scmp.ne.s32.totalorder %s254, %s256
    %p263 = scmp.eq.s32.totalorder %s31, 1
    %p264 = por %p262, %p263
    %p265 = scmp.ne.s32.totalorder %s256, %s257
    %p266 = scmp.eq.s32.totalorder %s31, 0
    %p267 = por %p265, %p266
    %p268 = scmp.ne.s32.totalorder %s256, %s257
    %p269 = scmp.eq.s32.totalorder %s32, 1
    %p270 = por %p268, %p269
    %p272 = scmp.ne.s32.totalorder %s257, %s271
    %p273 = scmp.eq.s32.totalorder %s32, 0
    %p274 = por %p272, %p273
    %s276 = sadd.s32 %s275, 1
    %p279 = scmp.eq.s32.totalorder %s26, 1
    %p280 = scmp.ne.s32.totalorder %s275, %s277
    %p281 = scmp.eq.s32.totalorder %s26, 0
    %p282 = por %p280, %p281
    %p283 = scmp.ne.s32.totalorder %s275, %s277
    %p284 = scmp.eq.s32.totalorder %s31, 1
    %p285 = por %p283, %p284
    %p286 = scmp.ne.s32.totalorder %s277, %s278
    %p287 = scmp.eq.s32.totalorder %s31, 0
    %p288 = por %p286, %p287
    %p289 = scmp.ne.s32.totalorder %s277, %s278
    %p290 = scmp.eq.s32.totalorder %s32, 1
    %p291 = por %p289, %p290
    %p293 = scmp.ne.s32.totalorder %s278, %s292
    %p294 = scmp.eq.s32.totalorder %s32, 0
    %p295 = por %p293, %p294
    %s297 = sadd.s32 %s296, 1
    %p300 = scmp.eq.s32.totalorder %s26, 1
    %p301 = scmp.ne.s32.totalorder %s296, %s298
    %p302 = scmp.eq.s32.totalorder %s26, 0
    %p303 = por %p301, %p302
    %p304 = scmp.ne.s32.totalorder %s296, %s298
    %p305 = scmp.eq.s32.totalorder %s31, 1
    %p306 = por %p304, %p305
    %p307 = scmp.ne.s32.totalorder %s298, %s299
    %p308 = scmp.eq.s32.totalorder %s31, 0
    %p309 = por %p307, %p308
    %p310 = scmp.ne.s32.totalorder %s298, %s299
    %p311 = scmp.eq.s32.totalorder %s32, 1
    %p312 = por %p310, %p311
    %p314 = scmp.ne.s32.totalorder %s299, %s313
    %p315 = scmp.eq.s32.totalorder %s32, 0
    %p316 = por %p314, %p315
    %s318 = sadd.s32 %s317, 1
    %p321 = scmp.eq.s32.totalorder %s26, 1
    %p322 = scmp.ne.s32.totalorder %s317, %s319
    %p323 = scmp.eq.s32.totalorder %s26, 0
    %p324 = por %p322, %p323
    %p325 = scmp.ne.s32.totalorder %s317, %s319
    %p326 = scmp.eq.s32.totalorder %s31, 1
    %p327 = por %p325, %p326
    %p328 = scmp.ne.s32.totalorder %s319, %s320
    %p329 = scmp.eq.s32.totalorder %s31, 0
    %p330 = por %p328, %p329
    %p331 = scmp.ne.s32.totalorder %s319, %s320
    %p332 = scmp.eq.s32.totalorder %s32, 1
    %p333 = por %p331, %p332
    %p335 = scmp.ne.s32.totalorder %s320, %s334
    %p336 = scmp.eq.s32.totalorder %s32, 0
    %p337 = por %p335, %p336
    %s339 = sadd.s32 %s338, 1
    %p342 = scmp.eq.s32.totalorder %s26, 1
    %p343 = scmp.ne.s32.totalorder %s338, %s340
    %p344 = scmp.eq.s32.totalorder %s26, 0
    %p345 = por %p343, %p344
    %p346 = scmp.ne.s32.totalorder %s338, %s340
    %p347 = scmp.eq.s32.totalorder %s31, 1
    %p348 = por %p346, %p347
    %p349 = scmp.ne.s32.totalorder %s340, %s341
    %p350 = scmp.eq.s32.totalorder %s31, 0
    %p351 = por %p349, %p350
    %p352 = scmp.ne.s32.totalorder %s340, %s341
    %p353 = scmp.eq.s32.totalorder %s32, 1
    %p354 = por %p352, %p353
    %p356 = scmp.ne.s32.totalorder %s341, %s355
    %p357 = scmp.eq.s32.totalorder %s32, 0
    %p358 = por %p356, %p357
    %s360 = sadd.s32 %s359, 1
    %p363 = scmp.eq.s32.totalorder %s26, 1
    %p364 = scmp.ne.s32.totalorder %s359, %s361
    %p365 = scmp.eq.s32.totalorder %s26, 0
    %p366 = por %p364, %p365
    %p367 = scmp.ne.s32.totalorder %s359, %s361
    %p368 = scmp.eq.s32.totalorder %s31, 1
    %p369 = por %p367, %p368
    %p370 = scmp.ne.s32.totalorder %s361, %s362
    %p371 = scmp.eq.s32.totalorder %s31, 0
    %p372 = por %p370, %p371
    %p373 = scmp.ne.s32.totalorder %s361, %s362
    %p374 = scmp.eq.s32.totalorder %s32, 1
    %p375 = por %p373, %p374
    %p377 = scmp.ne.s32.totalorder %s362, %s376
    %p378 = scmp.eq.s32.totalorder %s32, 0
    %p379 = por %p377, %p378
    %s381 = sadd.s32 %s380, 1
    %p384 = scmp.eq.s32.totalorder %s26, 1
    %p385 = scmp.ne.s32.totalorder %s380, %s382
    %p386 = scmp.eq.s32.totalorder %s26, 0
    %p387 = por %p385, %p386
    %p388 = scmp.ne.s32.totalorder %s380, %s382
    %p389 = scmp.eq.s32.totalorder %s31, 1
    %p390 = por %p388, %p389
    %p391 = scmp.ne.s32.totalorder %s382, %s383
    %p392 = scmp.eq.s32.totalorder %s31, 0
    %p393 = por %p391, %p392
    %p394 = scmp.ne.s32.totalorder %s382, %s383
    %p395 = scmp.eq.s32.totalorder %s32, 1
    %p396 = por %p394, %p395
    %p398 = scmp.ne.s32.totalorder %s383, %s397
    %p399 = scmp.eq.s32.totalorder %s32, 0
    %p400 = por %p398, %p399
    %s402 = sadd.s32 %s401, 1
    %p405 = scmp.eq.s32.totalorder %s26, 1
    %p406 = scmp.ne.s32.totalorder %s401, %s403
    %p407 = scmp.eq.s32.totalorder %s26, 0
    %p408 = por %p406, %p407
    %p409 = scmp.ne.s32.totalorder %s401, %s403
    %p410 = scmp.eq.s32.totalorder %s31, 1
    %p411 = por %p409, %p410
    %p412 = scmp.ne.s32.totalorder %s403, %s404
    %p413 = scmp.eq.s32.totalorder %s31, 0
    %p414 = por %p412, %p413
    %p415 = scmp.ne.s32.totalorder %s403, %s404
    %p416 = scmp.eq.s32.totalorder %s32, 1
    %p417 = por %p415, %p416
    %p419 = scmp.ne.s32.totalorder %s404, %s418
    %p420 = scmp.eq.s32.totalorder %s32, 0
    %p421 = por %p419, %p420
    %s422 = ssub.s32 %s26, %s33
    %p423 = scmp.eq.s32.totalorder %s422, 0
    %s425 = sadd.s32 %s424, 1
    %s426 = scalar_select %p423, %s424, %s425
    %p429 = pneg %p423
    %p430 = scmp.eq.s32.totalorder %s26, 1
    %p431 = por %p429, %p430
    %p432 = scmp.ne.s32.totalorder %s424, %s427
    %p433 = scmp.eq.s32.totalorder %s26, 0
    %p434 = por %p432, %p433
    %p435 = scmp.ne.s32.totalorder %s424, %s427
    %p436 = scmp.eq.s32.totalorder %s31, 1
    %p437 = por %p435, %p436
    %p438 = scmp.ne.s32.totalorder %s427, %s428
    %p439 = scmp.eq.s32.totalorder %s31, 0
    %p440 = por %p438, %p439
    %p441 = scmp.ne.s32.totalorder %s427, %s428
    %p442 = scmp.eq.s32.totalorder %s32, 1
    %p443 = por %p441, %p442
    %p445 = scmp.ne.s32.totalorder %s428, %s444
    %p446 = scmp.eq.s32.totalorder %s32, 0
    %p447 = por %p445, %p446
    %p448 = scmp.le.s32.totalorder 1, %s26
    %p449 = scmp.lt.s32.totalorder %s26, 3
    %p450 = pnand %p448, %p449
    %p451 = pneg %p450
    // Predicated region
    $region9: #{transformer_forward.1} parent=5 // pred_check
      _
    $region10: #{transformer_forward.1} parent=5 // pred_check_branch
      %453 = sbr.rel (%p450) target = $region12
    $region11: #{transformer_forward.1} parent=5 // pred_region
      %s454 = ssub.s32 %s26, 1
      // Predicated region
      $region13: #{transformer_forward.1} parent=11 // pred_check
        %p455 = pneg %p99
      $region14: #{transformer_forward.1} parent=11 // pred_check_branch
        %457 = sbr.rel (%p455) target = $region16
      $region15: #{transformer_forward.1} parent=11 // pred_region
        _
      $region16: #{transformer_forward.1} parent=11 // pred_fallthru
        _
      // Predicated region
      $region17: #{transformer_forward.1} parent=11 // pred_check
        %p458 = pneg %p120
      $region18: #{transformer_forward.1} parent=11 // pred_check_branch
        %460 = sbr.rel (%p458) target = $region20
      $region19: #{transformer_forward.1} parent=11 // pred_region
        _
      $region20: #{transformer_forward.1} parent=11 // pred_fallthru
        _
      // Predicated region
      $region21: #{transformer_forward.1} parent=11 // pred_check
        %p461 = pneg %p141
      $region22: #{transformer_forward.1} parent=11 // pred_check_branch
        %463 = sbr.rel (%p461) target = $region24
      $region23: #{transformer_forward.1} parent=11 // pred_region
        _
      $region24: #{transformer_forward.1} parent=11 // pred_fallthru
        _
      // Predicated region
      $region25: #{transformer_forward.1} parent=11 // pred_check
        %p464 = pneg %p162
      $region26: #{transformer_forward.1} parent=11 // pred_check_branch
        %466 = sbr.rel (%p464) target = $region28
      $region27: #{transformer_forward.1} parent=11 // pred_region
        _
      $region28: #{transformer_forward.1} parent=11 // pred_fallthru
        _
      // Predicated region
      $region29: #{transformer_forward.1} parent=11 // pred_check
        %p467 = pneg %p183
      $region30: #{transformer_forward.1} parent=11 // pred_check_branch
        %469 = sbr.rel (%p467) target = $region32
      $region31: #{transformer_forward.1} parent=11 // pred_region
        _
      $region32: #{transformer_forward.1} parent=11 // pred_fallthru
        _
      // Predicated region
      $region33: #{transformer_forward.1} parent=11 // pred_check
        %p470 = pneg %p204
      $region34: #{transformer_forward.1} parent=11 // pred_check_branch
        %472 = sbr.rel (%p470) target = $region36
      $region35: #{transformer_forward.1} parent=11 // pred_region
        _
      $region36: #{transformer_forward.1} parent=11 // pred_fallthru
        _
      // Predicated region
      $region37: #{transformer_forward.1} parent=11 // pred_check
        %p473 = pneg %p225
      $region38: #{transformer_forward.1} parent=11 // pred_check_branch
        %475 = sbr.rel (%p473) target = $region40
      $region39: #{transformer_forward.1} parent=11 // pred_region
        _
      $region40: #{transformer_forward.1} parent=11 // pred_fallthru
        _
      // Predicated region
      $region41: #{transformer_forward.1} parent=11 // pred_check
        %p476 = pneg %p246
      $region42: #{transformer_forward.1} parent=11 // pred_check_branch
        %478 = sbr.rel (%p476) target = $region44
      $region43: #{transformer_forward.1} parent=11 // pred_region
        _
      $region44: #{transformer_forward.1} parent=11 // pred_fallthru
        _
      // Predicated region
      $region45: #{transformer_forward.1} parent=11 // pred_check
        %p479 = pneg %p267
      $region46: #{transformer_forward.1} parent=11 // pred_check_branch
        %481 = sbr.rel (%p479) target = $region48
      $region47: #{transformer_forward.1} parent=11 // pred_region
        _
      $region48: #{transformer_forward.1} parent=11 // pred_fallthru
        _
      // Predicated region
      $region49: #{transformer_forward.1} parent=11 // pred_check
        %p482 = pneg %p288
      $region50: #{transformer_forward.1} parent=11 // pred_check_branch
        %484 = sbr.rel (%p482) target = $region52
      $region51: #{transformer_forward.1} parent=11 // pred_region
        _
      $region52: #{transformer_forward.1} parent=11 // pred_fallthru
        _
      // Predicated region
      $region53: #{transformer_forward.1} parent=11 // pred_check
        %p485 = pneg %p309
      $region54: #{transformer_forward.1} parent=11 // pred_check_branch
        %487 = sbr.rel (%p485) target = $region56
      $region55: #{transformer_forward.1} parent=11 // pred_region
        _
      $region56: #{transformer_forward.1} parent=11 // pred_fallthru
        _
      // Predicated region
      $region57: #{transformer_forward.1} parent=11 // pred_check
        %p488 = pneg %p330
      $region58: #{transformer_forward.1} parent=11 // pred_check_branch
        %490 = sbr.rel (%p488) target = $region60
      $region59: #{transformer_forward.1} parent=11 // pred_region
        _
      $region60: #{transformer_forward.1} parent=11 // pred_fallthru
        _
      // Predicated region
      $region61: #{transformer_forward.1} parent=11 // pred_check
        %p491 = pneg %p351
      $region62: #{transformer_forward.1} parent=11 // pred_check_branch
        %493 = sbr.rel (%p491) target = $region64
      $region63: #{transformer_forward.1} parent=11 // pred_region
        _
      $region64: #{transformer_forward.1} parent=11 // pred_fallthru
        _
      // Predicated region
      $region65: #{transformer_forward.1} parent=11 // pred_check
        %p494 = pneg %p372
      $region66: #{transformer_forward.1} parent=11 // pred_check_branch
        %496 = sbr.rel (%p494) target = $region68
      $region67: #{transformer_forward.1} parent=11 // pred_region
        _
      $region68: #{transformer_forward.1} parent=11 // pred_fallthru
        _
      // Predicated region
      $region69: #{transformer_forward.1} parent=11 // pred_check
        %p497 = pneg %p393
      $region70: #{transformer_forward.1} parent=11 // pred_check_branch
        %499 = sbr.rel (%p497) target = $region72
      $region71: #{transformer_forward.1} parent=11 // pred_region
        _
      $region72: #{transformer_forward.1} parent=11 // pred_fallthru
        _
      // Predicated region
      $region73: #{transformer_forward.1} parent=11 // pred_check
        %p500 = pneg %p414
      $region74: #{transformer_forward.1} parent=11 // pred_check_branch
        %502 = sbr.rel (%p500) target = $region76
      $region75: #{transformer_forward.1} parent=11 // pred_region
        _
      $region76: #{transformer_forward.1} parent=11 // pred_fallthru
        _
    $region12: #{transformer_forward.1} parent=5 // pred_fallthru
      _
    %p503 = scmp.lt.s32.totalorder %s26, 2
    // Predicated region
    $region77: #{transformer_forward.1} parent=5 // pred_check
      %p504 = pneg %p503
    $region78: #{transformer_forward.1} parent=5 // pred_check_branch
      %506 = sbr.rel (%p504) target = $region80
    $region79: #{transformer_forward.1} parent=5 // pred_region
      // Predicated region
      $region81: #{transformer_forward.1} parent=79 // pred_check
        %p507 = pneg %p46
      $region82: #{transformer_forward.1} parent=79 // pred_check_branch
        %509 = sbr.rel (%p507) target = $region84
      $region83: #{transformer_forward.1} parent=79 // pred_region
        %p510 = scmp.lt.s32.totalorder %s26, 1
        %s511 = scalar_select %p510, %s26, 1
        %s512 = smul.addr %s511, 8
        %s513 = scalar_lea.vmem %s0, %s512
      $region84: #{transformer_forward.1} parent=79 // pred_fallthru
        _
      // Predicated region
      $region85: #{transformer_forward.1} parent=79 // pred_check
        %p514 = pneg %p72
      $region86: #{transformer_forward.1} parent=79 // pred_check_branch
        %516 = sbr.rel (%p514) target = $region88
      $region87: #{transformer_forward.1} parent=79 // pred_region
        %p517 = scmp.lt.s32.totalorder %s26, 1
        %s518 = scalar_select %p517, %s26, 1
        %s519 = smul.addr %s518, 8
        %s520 = scalar_lea.vmem %s1, %s519
      $region88: #{transformer_forward.1} parent=79 // pred_fallthru
        _
    $region80: #{transformer_forward.1} parent=5 // pred_fallthru
      _
    %p521 = scmp.le.s32.totalorder 1, %s26
    %p522 = scmp.lt.s32.totalorder %s26, 3
    %p523 = pnand %p521, %p522
    %p524 = pneg %p523
    // Predicated region
    $region89: #{transformer_forward.1} parent=5 // pred_check
      _
    $region90: #{transformer_forward.1} parent=5 // pred_check_branch
      %526 = sbr.rel (%p523) target = $region92
    $region91: #{transformer_forward.1} parent=5 // pred_region
      %s527 = ssub.s32 %s26, 1
      %p528 = scmp.lt.s32.totalorder %s31, 1
      %s529 = scalar_select %p528, %s31, 1
      %s530 = smul.addr %s529, 8
      %s531 = scalar_lea.vmem %s0, %s530
      %p532 = pneg %p52
      %p533 = pneg %p49
      %p534 = scmp.lt.s32.totalorder %s31, 1
      %s535 = scalar_select %p534, %s31, 1
      %s536 = smul.addr %s535, 8
      %s537 = scalar_lea.vmem %s1, %s536
      %p538 = pneg %p78
      %p539 = pneg %p75
      %p540 = pneg %p99
      %p541 = pneg %p96
      %p542 = pneg %p120
      %p543 = pneg %p117
      %p544 = pneg %p141
      %p545 = pneg %p138
      %p546 = pneg %p162
      %p547 = pneg %p159
      %p548 = pneg %p183
      %p549 = pneg %p180
      %p550 = pneg %p204
      %p551 = pneg %p201
      %p552 = pneg %p225
      %p553 = pneg %p222
      %p554 = pneg %p246
      %p555 = pneg %p243
      %p556 = pneg %p267
      %p557 = pneg %p264
      %p558 = pneg %p288
      %p559 = pneg %p285
      %p560 = pneg %p309
      %p561 = pneg %p306
      %p562 = pneg %p330
      %p563 = pneg %p327
      %p564 = pneg %p351
      %p565 = pneg %p348
      %p566 = pneg %p372
      %p567 = pneg %p369
      %p568 = pneg %p393
      %p569 = pneg %p390
      %p570 = pneg %p414
      %p571 = pneg %p411
      %p572 = pneg %p440
      %p573 = pneg %p437
      %p574 = scmp.lt.s32.totalorder %s31, 1
      %s575 = scalar_select %p574, %s31, 1
      %s576 = smul.addr %s575, 8
      %s577 = scalar_lea.vmem %s18, %s576
      %p578 = scmp.lt.s32.totalorder %s31, 1
      %s579 = scalar_select %p578, %s31, 1
      %s580 = smul.addr %s579, 8
      %s581 = scalar_lea.vmem %s0, %s580
      %p582 = scmp.lt.s32.totalorder %s31, 1
      %s583 = scalar_select %p582, %s31, 1
      %s584 = smul.addr %s583, 8
      %s585 = scalar_lea.vmem %s1, %s584
      %p586 = scmp.lt.s32.totalorder %s31, 1
      %s587 = scalar_select %p586, %s31, 1
      %s588 = smul.addr %s587, 8
      %s589 = scalar_lea.vmem %s18, %s588
      %v591 = vld [vmem:[%s581] sm:$0xff]
      %v592 = vld [vmem:[%s2] sm:$0x7]
      %v593 = vld [vmem:[%s3] sm:$0x1]
      %v595 = vlaneseq
      %v596 = vshrl.u32 %v595, 7
      %v597 = vsub.s32 0, %v596
      %v598 = vrot.slane %v593, %v597
      %vm600 = vcmask 23552
      %v602 = vsel %vm600, %v591, 0
      %vm604 = vcmask 1042432
      %v606 = vsel %vm604, %v592, 0
      %608 = vmatprep.subr.mxu0 0.0
      %609 = vmatpush1.msra.mxu0 %v606
      %610 = vmatprep.subr.mxu0 0.0
      %611 = vmatpush1.msra.mxu0 0.0
      %612 = vmatprep.subr.mxu0 0.0
      %613 = vmatpush1.msra.mxu0 0.0
      %614 = vmatprep.subr.mxu0 0.0
      %615 = vmatpush1.msra.mxu0 0.0
      %616 = vmatprep.subr.mxu0 0.0
      %617 = vmatpush1.msra.mxu0 0.0
      %618 = vmatprep.subr.mxu0 0.0
      %619 = vmatpush1.msra.mxu0 0.0
      %620 = vmatprep.subr.mxu0 0.0
      %621 = vmatpush1.msra.mxu0 0.0
      %622 = vmatprep.subr.mxu0 0.0
      %623 = vmatpush1.msra.mxu0 0.0
      %624 = vmatprep.subr.mxu0 0.0
      %625 = vmatpush1.msra.mxu0 0.0
      %626 = vmatprep.subr.mxu0 0.0
      %627 = vmatpush1.msra.mxu0 0.0
      %628 = vmatprep.subr.mxu0 0.0
      %629 = vmatpush1.msra.mxu0 0.0
      %630 = vmatprep.subr.mxu0 0.0
      %631 = vmatpush1.msra.mxu0 0.0
      %632 = vmatprep.subr.mxu0 0.0
      %633 = vmatpush1.msra.mxu0 0.0
      %634 = vmatprep.subr.mxu0 0.0
      %635 = vmatpush1.msra.mxu0 0.0
      %636 = vmatprep.subr.mxu0 0.0
      %637 = vmatpush1.msra.mxu0 0.0
      %638 = vmatprep.subr.mxu0 0.0
      %639 = vmatpush1.msra.mxu0 0.0
      %640 = vmatprep.subr.mxu0 0.0
      %641 = vmatpush1.msra.mxu0 0.0
      %642 = vmatprep.subr.mxu0 0.0
      %643 = vmatpush1.msra.mxu0 0.0
      %644 = vmatprep.subr.mxu0 0.0
      %645 = vmatpush1.msra.mxu0 0.0
      %646 = vmatprep.subr.mxu0 0.0
      %647 = vmatpush1.msra.mxu0 0.0
      %648 = vmatprep.subr.mxu0 0.0
      %649 = vmatpush1.msra.mxu0 0.0
      %650 = vmatprep.subr.mxu0 0.0
      %651 = vmatpush1.msra.mxu0 0.0
      %652 = vmatprep.subr.mxu0 0.0
      %653 = vmatpush1.msra.mxu0 0.0
      %654 = vmatprep.subr.mxu0 0.0
      %655 = vmatpush1.msra.mxu0 0.0
      %656 = vmatprep.subr.mxu0 0.0
      %657 = vmatpush1.msra.mxu0 0.0
      %658 = vmatprep.subr.mxu0 0.0
      %659 = vmatpush1.msra.mxu0 0.0
      %660 = vmatprep.subr.mxu0 0.0
      %661 = vmatpush1.msra.mxu0 0.0
      %662 = vmatprep.subr.mxu0 0.0
      %663 = vmatpush1.msra.mxu0 0.0
      %664 = vmatprep.subr.mxu0 0.0
      %665 = vmatpush1.msra.mxu0 0.0
      %666 = vmatprep.subr.mxu0 0.0
      %667 = vmatpush1.msra.mxu0 0.0
      %668 = vmatprep.subr.mxu0 0.0
      %669 = vmatpush1.msra.mxu0 0.0
      %670 = vmatprep.subr.mxu0 0.0
      %671 = vmatpush1.msra.mxu0 0.0
      %672 = vmatprep.mubr.f32.mxu0 0.0
      %673 = vmatmul.mubr.f32.gmra.mrb[0].mxu0 %v602
      %v674 = vpop.f32.mrb[0].mxu0
      %v675 = vadd.f32 %v598, %v674
      %v676 = vpop.f32.mrb[0].mxu0
      %677 = vdwg.mxu0
      %v678 = vld [vmem:[%s585] sm:$0xff]
      %v679 = vadd.f32 %v675, %v678
      %v680 = vld [vmem:[%s4] sm:$0xf]
      %v681 = vld [vmem:[%s4 + $0x4] sm:$0xf]
      %v682 = vld [vmem:[%s4 + $0x8] sm:$0xf]
      %v683 = vld [vmem:[%s4 + $0xc] sm:$0xf]
      %v684 = vld [vmem:[%s5] sm:$0x1]
      %v685 = vld [vmem:[%s6] sm:$0xff]
      %v686 = vld [vmem:[%s6 + $0x8] sm:$0xff]
      %v687 = vld [vmem:[%s6 + $0x10] sm:$0xff]
      %v688 = vld [vmem:[%s6 + $0x18] sm:$0xff]
      %v689 = vld [vmem:[%s7] sm:$0x1]
      %v690 = vld [vmem:[%s8] sm:$0x1]
      %v691 = vld [vmem:[%s9] sm:$0x1]
      %v692 = vld [vmem:[%s10] sm:$0xff]
      %v693 = vld [vmem:[%s10 + $0x8] sm:$0xff]
      %v694 = vld [vmem:[%s10 + $0x10] sm:$0xff]
      %v695 = vld [vmem:[%s10 + $0x18] sm:$0xff]
      %v696 = vld [vmem:[%s10 + $0x20] sm:$0xff]
      %v697 = vld [vmem:[%s10 + $0x28] sm:$0xff]
      %v698 = vld [vmem:[%s10 + $0x30] sm:$0xff]
      %v699 = vld [vmem:[%s10 + $0x38] sm:$0xff]
      %v700 = vld [vmem:[%s10 + $0x40] sm:$0xff]
      %v701 = vld [vmem:[%s10 + $0x48] sm:$0xff]
      %v702 = vld [vmem:[%s10 + $0x50] sm:$0xff]
      %v703 = vld [vmem:[%s10 + $0x58] sm:$0xff]
      %v704 = vld [vmem:[%s10 + $0x60] sm:$0xff]
      %v705 = vld [vmem:[%s10 + $0x68] sm:$0xff]
      %v706 = vld [vmem:[%s10 + $0x70] sm:$0xff]
      %v707 = vld [vmem:[%s10 + $0x78] sm:$0xff]
      %v708 = vld [vmem:[%s10 + $0x80] sm:$0xff]
      %v709 = vld [vmem:[%s10 + $0x88] sm:$0xff]
      %v710 = vld [vmem:[%s10 + $0x90] sm:$0xff]
      %v711 = vld [vmem:[%s10 + $0x98] sm:$0xff]
      %v712 = vld [vmem:[%s10 + $0xa0] sm:$0xff]
      %v713 = vld [vmem:[%s10 + $0xa8] sm:$0xff]
      %v714 = vld [vmem:[%s10 + $0xb0] sm:$0xff]
      %v715 = vld [vmem:[%s10 + $0xb8] sm:$0xff]
      %v716 = vld [vmem:[%s10 + $0xc0] sm:$0xff]
      %v717 = vld [vmem:[%s10 + $0xc8] sm:$0xff]
      %v718 = vld [vmem:[%s10 + $0xd0] sm:$0xff]
      %v719 = vld [vmem:[%s10 + $0xd8] sm:$0xff]
      %v720 = vld [vmem:[%s10 + $0xe0] sm:$0xff]
      %v721 = vld [vmem:[%s10 + $0xe8] sm:$0xff]
      %v722 = vld [vmem:[%s10 + $0xf0] sm:$0xff]
      %v723 = vld [vmem:[%s10 + $0xf8] sm:$0xff]
      %v724 = vld [vmem:[%s11] sm:$0xff]
      %v725 = vld [vmem:[%s11 + $0x8] sm:$0xff]
      %v726 = vld [vmem:[%s12] sm:$0xf]
      %v727 = vld [vmem:[%s12 + $0x4] sm:$0xf]
      %v728 = vld [vmem:[%s12 + $0x8] sm:$0xf]
      %v729 = vld [vmem:[%s12 + $0xc] sm:$0xf]
      %v730 = vld [vmem:[%s12 + $0x10] sm:$0xf]
      %v731 = vld [vmem:[%s12 + $0x14] sm:$0xf]
      %v732 = vld [vmem:[%s12 + $0x18] sm:$0xf]
      %v733 = vld [vmem:[%s12 + $0x1c] sm:$0xf]
      %v734 = vld [vmem:[%s12 + $0x20] sm:$0xf]
      %v735 = vld [vmem:[%s12 + $0x24] sm:$0xf]
      %v736 = vld [vmem:[%s12 + $0x28] sm:$0xf]
      %v737 = vld [vmem:[%s12 + $0x2c] sm:$0xf]
      %v738 = vld [vmem:[%s12 + $0x30] sm:$0xf]
      %v739 = vld [vmem:[%s12 + $0x34] sm:$0xf]
      %v740 = vld [vmem:[%s12 + $0x38] sm:$0xf]
      %v741 = vld [vmem:[%s12 + $0x3c] sm:$0xf]
      %v742 = vld [vmem:[%s12 + $0x40] sm:$0xf]
      %v743 = vld [vmem:[%s12 + $0x44] sm:$0xf]
      %v744 = vld [vmem:[%s12 + $0x48] sm:$0xf]
      %v745 = vld [vmem:[%s12 + $0x4c] sm:$0xf]
      %v746 = vld [vmem:[%s12 + $0x50] sm:$0xf]
      %v747 = vld [vmem:[%s12 + $0x54] sm:$0xf]
      %v748 = vld [vmem:[%s12 + $0x58] sm:$0xf]
      %v749 = vld [vmem:[%s12 + $0x5c] sm:$0xf]
      %v750 = vld [vmem:[%s12 + $0x60] sm:$0xf]
      %v751 = vld [vmem:[%s12 + $0x64] sm:$0xf]
      %v752 = vld [vmem:[%s12 + $0x68] sm:$0xf]
      %v753 = vld [vmem:[%s12 + $0x6c] sm:$0xf]
      %v754 = vld [vmem:[%s12 + $0x70] sm:$0xf]
      %v755 = vld [vmem:[%s12 + $0x74] sm:$0xf]
      %v756 = vld [vmem:[%s12 + $0x78] sm:$0xf]
      %v757 = vld [vmem:[%s12 + $0x7c] sm:$0xf]
      %v758 = vld [vmem:[%s12 + $0x80] sm:$0xf]
      %v759 = vld [vmem:[%s12 + $0x84] sm:$0xf]
      %v760 = vld [vmem:[%s12 + $0x88] sm:$0xf]
      %v761 = vld [vmem:[%s12 + $0x8c] sm:$0xf]
      %v762 = vld [vmem:[%s12 + $0x90] sm:$0xf]
      %v763 = vld [vmem:[%s12 + $0x94] sm:$0xf]
      %v764 = vld [vmem:[%s12 + $0x98] sm:$0xf]
      %v765 = vld [vmem:[%s12 + $0x9c] sm:$0xf]
      %v766 = vld [vmem:[%s12 + $0xa0] sm:$0xf]
      %v767 = vld [vmem:[%s12 + $0xa4] sm:$0xf]
      %v768 = vld [vmem:[%s12 + $0xa8] sm:$0xf]
      %v769 = vld [vmem:[%s12 + $0xac] sm:$0xf]
      %v770 = vld [vmem:[%s12 + $0xb0] sm:$0xf]
      %v771 = vld [vmem:[%s12 + $0xb4] sm:$0xf]
      %v772 = vld [vmem:[%s12 + $0xb8] sm:$0xf]
      %v773 = vld [vmem:[%s12 + $0xbc] sm:$0xf]
      %v774 = vld [vmem:[%s12 + $0xc0] sm:$0xf]
      %v775 = vld [vmem:[%s12 + $0xc4] sm:$0xf]
      %v776 = vld [vmem:[%s12 + $0xc8] sm:$0xf]
      %v777 = vld [vmem:[%s12 + $0xcc] sm:$0xf]
      %v778 = vld [vmem:[%s12 + $0xd0] sm:$0xf]
      %v779 = vld [vmem:[%s12 + $0xd4] sm:$0xf]
      %v780 = vld [vmem:[%s12 + $0xd8] sm:$0xf]
      %v781 = vld [vmem:[%s12 + $0xdc] sm:$0xf]
      %v782 = vld [vmem:[%s12 + $0xe0] sm:$0xf]
      %v783 = vld [vmem:[%s12 + $0xe4] sm:$0xf]
      %v784 = vld [vmem:[%s12 + $0xe8] sm:$0xf]
      %v785 = vld [vmem:[%s12 + $0xec] sm:$0xf]
      %v786 = vld [vmem:[%s12 + $0xf0] sm:$0xf]
      %v787 = vld [vmem:[%s12 + $0xf4] sm:$0xf]
      %v788 = vld [vmem:[%s12 + $0xf8] sm:$0xf]
      %v789 = vld [vmem:[%s12 + $0xfc] sm:$0xf]
      %v790 = vld [vmem:[%s12 + $0x100] sm:$0xf]
      %v791 = vld [vmem:[%s12 + $0x104] sm:$0xf]
      %v792 = vld [vmem:[%s12 + $0x108] sm:$0xf]
      %v793 = vld [vmem:[%s12 + $0x10c] sm:$0xf]
      %v794 = vld [vmem:[%s12 + $0x110] sm:$0xf]
      %v795 = vld [vmem:[%s12 + $0x114] sm:$0xf]
      %v796 = vld [vmem:[%s12 + $0x118] sm:$0xf]
      %v797 = vld [vmem:[%s12 + $0x11c] sm:$0xf]
      %v798 = vld [vmem:[%s12 + $0x120] sm:$0xf]
      %v799 = vld [vmem:[%s12 + $0x124] sm:$0xf]
      %v800 = vld [vmem:[%s12 + $0x128] sm:$0xf]
      %v801 = vld [vmem:[%s12 + $0x12c] sm:$0xf]
      %v802 = vld [vmem:[%s12 + $0x130] sm:$0xf]
      %v803 = vld [vmem:[%s12 + $0x134] sm:$0xf]
      %v804 = vld [vmem:[%s12 + $0x138] sm:$0xf]
      %v805 = vld [vmem:[%s12 + $0x13c] sm:$0xf]
      %v806 = vld [vmem:[%s12 + $0x140] sm:$0xf]
      %v807 = vld [vmem:[%s12 + $0x144] sm:$0xf]
      %v808 = vld [vmem:[%s12 + $0x148] sm:$0xf]
      %v809 = vld [vmem:[%s12 + $0x14c] sm:$0xf]
      %v810 = vld [vmem:[%s12 + $0x150] sm:$0xf]
      %v811 = vld [vmem:[%s12 + $0x154] sm:$0xf]
      %v812 = vld [vmem:[%s12 + $0x158] sm:$0xf]
      %v813 = vld [vmem:[%s12 + $0x15c] sm:$0xf]
      %v814 = vld [vmem:[%s12 + $0x160] sm:$0xf]
      %v815 = vld [vmem:[%s12 + $0x164] sm:$0xf]
      %v816 = vld [vmem:[%s12 + $0x168] sm:$0xf]
      %v817 = vld [vmem:[%s12 + $0x16c] sm:$0xf]
      %v818 = vld [vmem:[%s12 + $0x170] sm:$0xf]
      %v819 = vld [vmem:[%s12 + $0x174] sm:$0xf]
      %v820 = vld [vmem:[%s12 + $0x178] sm:$0xf]
      %v821 = vld [vmem:[%s12 + $0x17c] sm:$0xf]
      %v822 = vld [vmem:[%s12 + $0x180] sm:$0xf]
      %v823 = vld [vmem:[%s12 + $0x184] sm:$0xf]
      %v824 = vld [vmem:[%s12 + $0x188] sm:$0xf]
      %v825 = vld [vmem:[%s12 + $0x18c] sm:$0xf]
      %v826 = vld [vmem:[%s12 + $0x190] sm:$0xf]
      %v827 = vld [vmem:[%s12 + $0x194] sm:$0xf]
      %v828 = vld [vmem:[%s12 + $0x198] sm:$0xf]
      %v829 = vld [vmem:[%s12 + $0x19c] sm:$0xf]
      %v830 = vld [vmem:[%s12 + $0x1a0] sm:$0xf]
      %v831 = vld [vmem:[%s12 + $0x1a4] sm:$0xf]
      %v832 = vld [vmem:[%s12 + $0x1a8] sm:$0xf]
      %v833 = vld [vmem:[%s12 + $0x1ac] sm:$0xf]
      %v834 = vld [vmem:[%s12 + $0x1b0] sm:$0xf]
      %v835 = vld [vmem:[%s12 + $0x1b4] sm:$0xf]
      %v836 = vld [vmem:[%s12 + $0x1b8] sm:$0xf]
      %v837 = vld [vmem:[%s12 + $0x1bc] sm:$0xf]
      %v838 = vld [vmem:[%s12 + $0x1c0] sm:$0xf]
      %v839 = vld [vmem:[%s12 + $0x1c4] sm:$0xf]
      %v840 = vld [vmem:[%s12 + $0x1c8] sm:$0xf]
      %v841 = vld [vmem:[%s12 + $0x1cc] sm:$0xf]
      %v842 = vld [vmem:[%s12 + $0x1d0] sm:$0xf]
      %v843 = vld [vmem:[%s12 + $0x1d4] sm:$0xf]
      %v844 = vld [vmem:[%s12 + $0x1d8] sm:$0xf]
      %v845 = vld [vmem:[%s12 + $0x1dc] sm:$0xf]
      %v846 = vld [vmem:[%s12 + $0x1e0] sm:$0xf]
      %v847 = vld [vmem:[%s12 + $0x1e4] sm:$0xf]
      %v848 = vld [vmem:[%s12 + $0x1e8] sm:$0xf]
      %v849 = vld [vmem:[%s12 + $0x1ec] sm:$0xf]
      %v850 = vld [vmem:[%s12 + $0x1f0] sm:$0xf]
      %v851 = vld [vmem:[%s12 + $0x1f4] sm:$0xf]
      %v852 = vld [vmem:[%s12 + $0x1f8] sm:$0xf]
      %v853 = vld [vmem:[%s12 + $0x1fc] sm:$0xf]
      %v854 = vld [vmem:[%s12 + $0x200] sm:$0xf]
      %v855 = vld [vmem:[%s12 + $0x204] sm:$0xf]
      %v856 = vld [vmem:[%s12 + $0x208] sm:$0xf]
      %v857 = vld [vmem:[%s12 + $0x20c] sm:$0xf]
      %v858 = vld [vmem:[%s12 + $0x210] sm:$0xf]
      %v859 = vld [vmem:[%s12 + $0x214] sm:$0xf]
      %v860 = vld [vmem:[%s12 + $0x218] sm:$0xf]
      %v861 = vld [vmem:[%s12 + $0x21c] sm:$0xf]
      %v862 = vld [vmem:[%s12 + $0x220] sm:$0xf]
      %v863 = vld [vmem:[%s12 + $0x224] sm:$0xf]
      %v864 = vld [vmem:[%s12 + $0x228] sm:$0xf]
      %v865 = vld [vmem:[%s12 + $0x22c] sm:$0xf]
      %v866 = vld [vmem:[%s12 + $0x230] sm:$0xf]
      %v867 = vld [vmem:[%s12 + $0x234] sm:$0xf]
      %v868 = vld [vmem:[%s12 + $0x238] sm:$0xf]
      %v869 = vld [vmem:[%s12 + $0x23c] sm:$0xf]
      %v870 = vld [vmem:[%s12 + $0x240] sm:$0xf]
      %v871 = vld [vmem:[%s12 + $0x244] sm:$0xf]
      %v872 = vld [vmem:[%s12 + $0x248] sm:$0xf]
      %v873 = vld [vmem:[%s12 + $0x24c] sm:$0xf]
      %v874 = vld [vmem:[%s12 + $0x250] sm:$0xf]
      %v875 = vld [vmem:[%s12 + $0x254] sm:$0xf]
      %v876 = vld [vmem:[%s12 + $0x258] sm:$0xf]
      %v877 = vld [vmem:[%s12 + $0x25c] sm:$0xf]
      %v878 = vld [vmem:[%s12 + $0x260] sm:$0xf]
      %v879 = vld [vmem:[%s12 + $0x264] sm:$0xf]
      %v880 = vld [vmem:[%s12 + $0x268] sm:$0xf]
      %v881 = vld [vmem:[%s12 + $0x26c] sm:$0xf]
      %v882 = vld [vmem:[%s12 + $0x270] sm:$0xf]
      %v883 = vld [vmem:[%s12 + $0x274] sm:$0xf]
      %v884 = vld [vmem:[%s12 + $0x278] sm:$0xf]
      %v885 = vld [vmem:[%s12 + $0x27c] sm:$0xf]
      %v886 = vld [vmem:[%s12 + $0x280] sm:$0xf]
      %v887 = vld [vmem:[%s12 + $0x284] sm:$0xf]
      %v888 = vld [vmem:[%s12 + $0x288] sm:$0xf]
      %v889 = vld [vmem:[%s12 + $0x28c] sm:$0xf]
      %v890 = vld [vmem:[%s12 + $0x290] sm:$0xf]
      %v891 = vld [vmem:[%s12 + $0x294] sm:$0xf]
      %v892 = vld [vmem:[%s12 + $0x298] sm:$0xf]
      %v893 = vld [vmem:[%s12 + $0x29c] sm:$0xf]
      %v894 = vld [vmem:[%s12 + $0x2a0] sm:$0xf]
      %v895 = vld [vmem:[%s12 + $0x2a4] sm:$0xf]
      %v896 = vld [vmem:[%s12 + $0x2a8] sm:$0xf]
      %v897 = vld [vmem:[%s12 + $0x2ac] sm:$0xf]
      %v898 = vld [vmem:[%s12 + $0x2b0] sm:$0xf]
      %v899 = vld [vmem:[%s12 + $0x2b4] sm:$0xf]
      %v900 = vld [vmem:[%s12 + $0x2b8] sm:$0xf]
      %v901 = vld [vmem:[%s12 + $0x2bc] sm:$0xf]
      %v902 = vld [vmem:[%s12 + $0x2c0] sm:$0xf]
      %v903 = vld [vmem:[%s12 + $0x2c4] sm:$0xf]
      %v904 = vld [vmem:[%s12 + $0x2c8] sm:$0xf]
      %v905 = vld [vmem:[%s12 + $0x2cc] sm:$0xf]
      %v906 = vld [vmem:[%s12 + $0x2d0] sm:$0xf]
      %v907 = vld [vmem:[%s12 + $0x2d4] sm:$0xf]
      %v908 = vld [vmem:[%s12 + $0x2d8] sm:$0xf]
      %v909 = vld [vmem:[%s12 + $0x2dc] sm:$0xf]
      %v910 = vld [vmem:[%s12 + $0x2e0] sm:$0xf]
      %v911 = vld [vmem:[%s12 + $0x2e4] sm:$0xf]
      %v912 = vld [vmem:[%s12 + $0x2e8] sm:$0xf]
      %v913 = vld [vmem:[%s12 + $0x2ec] sm:$0xf]
      %v914 = vld [vmem:[%s12 + $0x2f0] sm:$0xf]
      %v915 = vld [vmem:[%s12 + $0x2f4] sm:$0xf]
      %v916 = vld [vmem:[%s12 + $0x2f8] sm:$0xf]
      %v917 = vld [vmem:[%s12 + $0x2fc] sm:$0xf]
      %v918 = vld [vmem:[%s12 + $0x300] sm:$0xf]
      %v919 = vld [vmem:[%s12 + $0x304] sm:$0xf]
      %v920 = vld [vmem:[%s12 + $0x308] sm:$0xf]
      %v921 = vld [vmem:[%s12 + $0x30c] sm:$0xf]
      %v922 = vld [vmem:[%s12 + $0x310] sm:$0xf]
      %v923 = vld [vmem:[%s12 + $0x314] sm:$0xf]
      %v924 = vld [vmem:[%s12 + $0x318] sm:$0xf]
      %v925 = vld [vmem:[%s12 + $0x31c] sm:$0xf]
      %v926 = vld [vmem:[%s12 + $0x320] sm:$0xf]
      %v927 = vld [vmem:[%s12 + $0x324] sm:$0xf]
      %v928 = vld [vmem:[%s12 + $0x328] sm:$0xf]
      %v929 = vld [vmem:[%s12 + $0x32c] sm:$0xf]
      %v930 = vld [vmem:[%s12 + $0x330] sm:$0xf]
      %v931 = vld [vmem:[%s12 + $0x334] sm:$0xf]
      %v932 = vld [vmem:[%s12 + $0x338] sm:$0xf]
      %v933 = vld [vmem:[%s12 + $0x33c] sm:$0xf]
      %v934 = vld [vmem:[%s12 + $0x340] sm:$0xf]
      %v935 = vld [vmem:[%s12 + $0x344] sm:$0xf]
      %v936 = vld [vmem:[%s12 + $0x348] sm:$0xf]
      %v937 = vld [vmem:[%s12 + $0x34c] sm:$0xf]
      %v938 = vld [vmem:[%s12 + $0x350] sm:$0xf]
      %v939 = vld [vmem:[%s12 + $0x354] sm:$0xf]
      %v940 = vld [vmem:[%s12 + $0x358] sm:$0xf]
      %v941 = vld [vmem:[%s12 + $0x35c] sm:$0xf]
      %v942 = vld [vmem:[%s12 + $0x360] sm:$0xf]
      %v943 = vld [vmem:[%s12 + $0x364] sm:$0xf]
      %v944 = vld [vmem:[%s12 + $0x368] sm:$0xf]
      %v945 = vld [vmem:[%s12 + $0x36c] sm:$0xf]
      %v946 = vld [vmem:[%s12 + $0x370] sm:$0xf]
      %v947 = vld [vmem:[%s12 + $0x374] sm:$0xf]
      %v948 = vld [vmem:[%s12 + $0x378] sm:$0xf]
      %v949 = vld [vmem:[%s12 + $0x37c] sm:$0xf]
      %v950 = vld [vmem:[%s12 + $0x380] sm:$0xf]
      %v951 = vld [vmem:[%s12 + $0x384] sm:$0xf]
      %v952 = vld [vmem:[%s12 + $0x388] sm:$0xf]
      %v953 = vld [vmem:[%s12 + $0x38c] sm:$0xf]
      %v954 = vld [vmem:[%s12 + $0x390] sm:$0xf]
      %v955 = vld [vmem:[%s12 + $0x394] sm:$0xf]
      %v956 = vld [vmem:[%s12 + $0x398] sm:$0xf]
      %v957 = vld [vmem:[%s12 + $0x39c] sm:$0xf]
      %v958 = vld [vmem:[%s12 + $0x3a0] sm:$0xf]
      %v959 = vld [vmem:[%s12 + $0x3a4] sm:$0xf]
      %v960 = vld [vmem:[%s12 + $0x3a8] sm:$0xf]
      %v961 = vld [vmem:[%s12 + $0x3ac] sm:$0xf]
      %v962 = vld [vmem:[%s12 + $0x3b0] sm:$0xf]
      %v963 = vld [vmem:[%s12 + $0x3b4] sm:$0xf]
      %v964 = vld [vmem:[%s12 + $0x3b8] sm:$0xf]
      %v965 = vld [vmem:[%s12 + $0x3bc] sm:$0xf]
      %v966 = vld [vmem:[%s12 + $0x3c0] sm:$0xf]
      %v967 = vld [vmem:[%s12 + $0x3c4] sm:$0xf]
      %v968 = vld [vmem:[%s12 + $0x3c8] sm:$0xf]
      %v969 = vld [vmem:[%s12 + $0x3cc] sm:$0xf]
      %v970 = vld [vmem:[%s12 + $0x3d0] sm:$0xf]
      %v971 = vld [vmem:[%s12 + $0x3d4] sm:$0xf]
      %v972 = vld [vmem:[%s12 + $0x3d8] sm:$0xf]
      %v973 = vld [vmem:[%s12 + $0x3dc] sm:$0xf]
      %v974 = vld [vmem:[%s12 + $0x3e0] sm:$0xf]
      %v975 = vld [vmem:[%s12 + $0x3e4] sm:$0xf]
      %v976 = vld [vmem:[%s12 + $0x3e8] sm:$0xf]
      %v977 = vld [vmem:[%s12 + $0x3ec] sm:$0xf]
      %v978 = vld [vmem:[%s12 + $0x3f0] sm:$0xf]
      %v979 = vld [vmem:[%s12 + $0x3f4] sm:$0xf]
      %v980 = vld [vmem:[%s12 + $0x3f8] sm:$0xf]
      %v981 = vld [vmem:[%s12 + $0x3fc] sm:$0xf]
      %v982 = vld [vmem:[%s13] sm:$0x1]
      %v983 = vld [vmem:[%s14] sm:$0x1]
      %v984 = vld [vmem:[%s15] sm:$0x1]
      %v985 = vpack.c.bf16 %v679, %v679
      %v987 = vlaneseq
      %v988 = vshrl.u32 %v987, 7
      %v989 = vsub.s32 0, %v988
      %v990 = vrot.slane %v684, %v989
      %v996 = vunpack.c.l.b16 %v680
      %v997 = vunpack.c.l.b16 %v681
      %v998 = vunpack.c.l.b16 %v682
      %v999 = vunpack.c.l.b16 %v683
      %v1000 = vpack.c.b16 %v997, %v996
      %v1001 = vpack.c.b16 %v999, %v998
      %vm1004 = vcmask 261120
      %v1006 = vsel %vm1004, %v985, 0
      %1008 = vmatprep.subr.bf16.mxu0 0
      %1009 = vmatpush1.bf16.msra.mxu0 %v1000
      %1010 = vmatprep.subr.bf16.mxu0 0
      %1011 = vmatpush1.bf16.msra.mxu0 %v1001
      %1012 = vmatprep.subr.bf16.mxu0 0
      %1013 = vmatpush1.bf16.msra.mxu0 0
      %1014 = vmatprep.subr.bf16.mxu0 0
      %1015 = vmatpush1.bf16.msra.mxu0 0
      %1016 = vmatprep.subr.bf16.mxu0 0
      %1017 = vmatpush1.bf16.msra.mxu0 0
      %1018 = vmatprep.subr.bf16.mxu0 0
      %1019 = vmatpush1.bf16.msra.mxu0 0
      %1020 = vmatprep.subr.bf16.mxu0 0
      %1021 = vmatpush1.bf16.msra.mxu0 0
      %1022 = vmatprep.subr.bf16.mxu0 0
      %1023 = vmatpush1.bf16.msra.mxu0 0
      %1024 = vmatprep.subr.bf16.mxu0 0
      %1025 = vmatpush1.bf16.msra.mxu0 0
      %1026 = vmatprep.subr.bf16.mxu0 0
      %1027 = vmatpush1.bf16.msra.mxu0 0
      %1028 = vmatprep.subr.bf16.mxu0 0
      %1029 = vmatpush1.bf16.msra.mxu0 0
      %1030 = vmatprep.subr.bf16.mxu0 0
      %1031 = vmatpush1.bf16.msra.mxu0 0
      %1032 = vmatprep.subr.bf16.mxu0 0
      %1033 = vmatpush1.bf16.msra.mxu0 0
      %1034 = vmatprep.subr.bf16.mxu0 0
      %1035 = vmatpush1.bf16.msra.mxu0 0
      %1036 = vmatprep.subr.bf16.mxu0 0
      %1037 = vmatpush1.bf16.msra.mxu0 0
      %1038 = vmatprep.subr.bf16.mxu0 0
      %1039 = vmatpush1.bf16.msra.mxu0 0
      %1040 = vmatprep.mubr.bf16.mxu0 0
      %1041 = vmatmul.mubr.bf16.gmra.mrb[0].mxu0 %v1006
      %v1042 = vpop.f32.mrb[0].mxu0
      %v1043 = vadd.f32 %v990, %v1042
      %v1044 = vpop.f32.mrb[0].mxu0
      %v1045 = vpop.f32.mrb[0].mxu0
      %v1046 = vpop.f32.mrb[0].mxu0
      %1047 = vdwg.mxu0
      %1049 = vrot.lane.b32.xlu0 %v1043, 120
      %v1050 = vpop.permute.xlu0 %1049
      %1051 = vrot.lane.b32.xlu0 %v1043, 112
      %v1052 = vpop.permute.xlu0 %1051
      %1053 = vrot.lane.b32.xlu0 %v1043, 104
      %v1054 = vpop.permute.xlu0 %1053
      %1055 = vrot.lane.b32.xlu0 %v1043, 96
      %v1056 = vpop.permute.xlu0 %1055
      %vm1057 = vcmask 64512
      %v1058 = vsel %vm1057, %v1043, 0
      %v1060 = vsel %vm1057, %v1056, 0
      %1062 = vmatprep.subr.mxu0 0.0
      %1063 = vmatpush1.xpose.msra.mxu0 %v1060
      %1064 = vmatprep.subr.mxu0 0.0
      %1065 = vmatpush1.xpose.msra.mxu0 0.0
      %1066 = vmatprep.subr.mxu0 0.0
      %1067 = vmatpush1.xpose.msra.mxu0 0.0
      %1068 = vmatprep.subr.mxu0 0.0
      %1069 = vmatpush1.xpose.msra.mxu0 0.0
      %1070 = vmatprep.subr.mxu0 0.0
      %1071 = vmatpush1.xpose.msra.mxu0 0.0
      %1072 = vmatprep.subr.mxu0 0.0
      %1073 = vmatpush1.xpose.msra.mxu0 0.0
      %1074 = vmatprep.subr.mxu0 0.0
      %1075 = vmatpush1.xpose.msra.mxu0 0.0
      %1076 = vmatprep.subr.mxu0 0.0
      %1077 = vmatpush1.xpose.msra.mxu0 0.0
      %1078 = vmatprep.subr.mxu0 0.0
      %1079 = vmatpush1.xpose.msra.mxu0 0.0
      %1080 = vmatprep.subr.mxu0 0.0
      %1081 = vmatpush1.xpose.msra.mxu0 0.0
      %1082 = vmatprep.subr.mxu0 0.0
      %1083 = vmatpush1.xpose.msra.mxu0 0.0
      %1084 = vmatprep.subr.mxu0 0.0
      %1085 = vmatpush1.xpose.msra.mxu0 0.0
      %1086 = vmatprep.subr.mxu0 0.0
      %1087 = vmatpush1.xpose.msra.mxu0 0.0
      %1088 = vmatprep.subr.mxu0 0.0
      %1089 = vmatpush1.xpose.msra.mxu0 0.0
      %1090 = vmatprep.subr.mxu0 0.0
      %1091 = vmatpush1.xpose.msra.mxu0 0.0
      %1092 = vmatprep.subr.mxu0 0.0
      %1093 = vmatpush1.xpose.msra.mxu0 0.0
      %1094 = vmatprep.subr.mxu0 0.0
      %1095 = vmatpush1.xpose.msra.mxu0 0.0
      %1096 = vmatprep.subr.mxu0 0.0
      %1097 = vmatpush1.xpose.msra.mxu0 0.0
      %1098 = vmatprep.subr.mxu0 0.0
      %1099 = vmatpush1.xpose.msra.mxu0 0.0
      %1100 = vmatprep.subr.mxu0 0.0
      %1101 = vmatpush1.xpose.msra.mxu0 0.0
      %1102 = vmatprep.subr.mxu0 0.0
      %1103 = vmatpush1.xpose.msra.mxu0 0.0
      %1104 = vmatprep.subr.mxu0 0.0
      %1105 = vmatpush1.xpose.msra.mxu0 0.0
      %1106 = vmatprep.subr.mxu0 0.0
      %1107 = vmatpush1.xpose.msra.mxu0 0.0
      %1108 = vmatprep.subr.mxu0 0.0
      %1109 = vmatpush1.xpose.msra.mxu0 0.0
      %1110 = vmatprep.subr.mxu0 0.0
      %1111 = vmatpush1.xpose.msra.mxu0 0.0
      %1112 = vmatprep.subr.mxu0 0.0
      %1113 = vmatpush1.xpose.msra.mxu0 0.0
      %1114 = vmatprep.subr.mxu0 0.0
      %1115 = vmatpush1.xpose.msra.mxu0 0.0
      %1116 = vmatprep.subr.mxu0 0.0
      %1117 = vmatpush1.xpose.msra.mxu0 0.0
      %1118 = vmatprep.subr.mxu0 0.0
      %1119 = vmatpush1.xpose.msra.mxu0 0.0
      %1120 = vmatprep.subr.mxu0 0.0
      %1121 = vmatpush1.xpose.msra.mxu0 0.0
      %1122 = vmatprep.subr.mxu0 0.0
      %1123 = vmatpush1.xpose.msra.mxu0 0.0
      %1124 = vmatprep.subr.mxu0 0.0
      %1125 = vmatpush1.xpose.msra.mxu0 0.0
      %1126 = vmatprep.mubr.f32.mxu0 0.0
      %1127 = vmatmul.mubr.f32.gmra.mrb[0].mxu0 %v1058
      %v1128 = vpop.f32.mrb[0].mxu0
      %v1129 = vadd.f32 0.0, %v1128
      %v1130 = vpop.f32.mrb[0].mxu0
      %1131 = vdwg.mxu0
      %1132 = vrot.lane.b32.xlu0 %v1050, 96
      %v1133 = vpop.permute.xlu0 %1132
      %v1134 = vsel %vm1057, %v1050, 0
      %v1136 = vsel %vm1057, %v1133, 0
      %1138 = vmatprep.subr.mxu0 0.0
      %1139 = vmatpush1.xpose.msra.mxu0 %v1136
      %1140 = vmatprep.subr.mxu0 0.0
      %1141 = vmatpush1.xpose.msra.mxu0 0.0
      %1142 = vmatprep.subr.mxu0 0.0
      %1143 = vmatpush1.xpose.msra.mxu0 0.0
      %1144 = vmatprep.subr.mxu0 0.0
      %1145 = vmatpush1.xpose.msra.mxu0 0.0
      %1146 = vmatprep.subr.mxu0 0.0
      %1147 = vmatpush1.xpose.msra.mxu0 0.0
      %1148 = vmatprep.subr.mxu0 0.0
      %1149 = vmatpush1.xpose.msra.mxu0 0.0
      %1150 = vmatprep.subr.mxu0 0.0
      %1151 = vmatpush1.xpose.msra.mxu0 0.0
      %1152 = vmatprep.subr.mxu0 0.0
      %1153 = vmatpush1.xpose.msra.mxu0 0.0
      %1154 = vmatprep.subr.mxu0 0.0
      %1155 = vmatpush1.xpose.msra.mxu0 0.0
      %1156 = vmatprep.subr.mxu0 0.0
      %1157 = vmatpush1.xpose.msra.mxu0 0.0
      %1158 = vmatprep.subr.mxu0 0.0
      %1159 = vmatpush1.xpose.msra.mxu0 0.0
      %1160 = vmatprep.subr.mxu0 0.0
      %1161 = vmatpush1.xpose.msra.mxu0 0.0
      %1162 = vmatprep.subr.mxu0 0.0
      %1163 = vmatpush1.xpose.msra.mxu0 0.0
      %1164 = vmatprep.subr.mxu0 0.0
      %1165 = vmatpush1.xpose.msra.mxu0 0.0
      %1166 = vmatprep.subr.mxu0 0.0
      %1167 = vmatpush1.xpose.msra.mxu0 0.0
      %1168 = vmatprep.subr.mxu0 0.0
      %1169 = vmatpush1.xpose.msra.mxu0 0.0
      %1170 = vmatprep.subr.mxu0 0.0
      %1171 = vmatpush1.xpose.msra.mxu0 0.0
      %1172 = vmatprep.subr.mxu0 0.0
      %1173 = vmatpush1.xpose.msra.mxu0 0.0
      %1174 = vmatprep.subr.mxu0 0.0
      %1175 = vmatpush1.xpose.msra.mxu0 0.0
      %1176 = vmatprep.subr.mxu0 0.0
      %1177 = vmatpush1.xpose.msra.mxu0 0.0
      %1178 = vmatprep.subr.mxu0 0.0
      %1179 = vmatpush1.xpose.msra.mxu0 0.0
      %1180 = vmatprep.subr.mxu0 0.0
      %1181 = vmatpush1.xpose.msra.mxu0 0.0
      %1182 = vmatprep.subr.mxu0 0.0
      %1183 = vmatpush1.xpose.msra.mxu0 0.0
      %1184 = vmatprep.subr.mxu0 0.0
      %1185 = vmatpush1.xpose.msra.mxu0 0.0
      %1186 = vmatprep.subr.mxu0 0.0
      %1187 = vmatpush1.xpose.msra.mxu0 0.0
      %1188 = vmatprep.subr.mxu0 0.0
      %1189 = vmatpush1.xpose.msra.mxu0 0.0
      %1190 = vmatprep.subr.mxu0 0.0
      %1191 = vmatpush1.xpose.msra.mxu0 0.0
      %1192 = vmatprep.subr.mxu0 0.0
      %1193 = vmatpush1.xpose.msra.mxu0 0.0
      %1194 = vmatprep.subr.mxu0 0.0
      %1195 = vmatpush1.xpose.msra.mxu0 0.0
      %1196 = vmatprep.subr.mxu0 0.0
      %1197 = vmatpush1.xpose.msra.mxu0 0.0
      %1198 = vmatprep.subr.mxu0 0.0
      %1199 = vmatpush1.xpose.msra.mxu0 0.0
      %1200 = vmatprep.subr.mxu0 0.0
      %1201 = vmatpush1.xpose.msra.mxu0 0.0
      %1202 = vmatprep.mubr.f32.mxu0 0.0
      %1203 = vmatmul.mubr.f32.gmra.mrb[0].mxu0 %v1134
      %v1204 = vpop.f32.mrb[0].mxu0
      %v1205 = vadd.f32 0.0, %v1204
      %v1206 = vpop.f32.mrb[0].mxu0
      %1207 = vdwg.mxu0
      %1208 = vrot.lane.b32.xlu0 %v1052, 96
      %v1209 = vpop.permute.xlu0 %1208
      %v1210 = vsel %vm1057, %v1052, 0
      %v1212 = vsel %vm1057, %v1209, 0
      %1214 = vmatprep.subr.mxu0 0.0
      %1215 = vmatpush1.xpose.msra.mxu0 %v1212
      %1216 = vmatprep.subr.mxu0 0.0
      %1217 = vmatpush1.xpose.msra.mxu0 0.0
      %1218 = vmatprep.subr.mxu0 0.0
      %1219 = vmatpush1.xpose.msra.mxu0 0.0
      %1220 = vmatprep.subr.mxu0 0.0
      %1221 = vmatpush1.xpose.msra.mxu0 0.0
      %1222 = vmatprep.subr.mxu0 0.0
      %1223 = vmatpush1.xpose.msra.mxu0 0.0
      %1224 = vmatprep.subr.mxu0 0.0
      %1225 = vmatpush1.xpose.msra.mxu0 0.0
      %1226 = vmatprep.subr.mxu0 0.0
      %1227 = vmatpush1.xpose.msra.mxu0 0.0
      %1228 = vmatprep.subr.mxu0 0.0
      %1229 = vmatpush1.xpose.msra.mxu0 0.0
      %1230 = vmatprep.subr.mxu0 0.0
      %1231 = vmatpush1.xpose.msra.mxu0 0.0
      %1232 = vmatprep.subr.mxu0 0.0
      %1233 = vmatpush1.xpose.msra.mxu0 0.0
      %1234 = vmatprep.subr.mxu0 0.0
      %1235 = vmatpush1.xpose.msra.mxu0 0.0
      %1236 = vmatprep.subr.mxu0 0.0
      %1237 = vmatpush1.xpose.msra.mxu0 0.0
      %1238 = vmatprep.subr.mxu0 0.0
      %1239 = vmatpush1.xpose.msra.mxu0 0.0
      %1240 = vmatprep.subr.mxu0 0.0
      %1241 = vmatpush1.xpose.msra.mxu0 0.0
      %1242 = vmatprep.subr.mxu0 0.0
      %1243 = vmatpush1.xpose.msra.mxu0 0.0
      %1244 = vmatprep.subr.mxu0 0.0
      %1245 = vmatpush1.xpose.msra.mxu0 0.0
      %1246 = vmatprep.subr.mxu0 0.0
      %1247 = vmatpush1.xpose.msra.mxu0 0.0
      %1248 = vmatprep.subr.mxu0 0.0
      %1249 = vmatpush1.xpose.msra.mxu0 0.0
      %1250 = vmatprep.subr.mxu0 0.0
      %1251 = vmatpush1.xpose.msra.mxu0 0.0
      %1252 = vmatprep.subr.mxu0 0.0
      %1253 = vmatpush1.xpose.msra.mxu0 0.0
      %1254 = vmatprep.subr.mxu0 0.0
      %1255 = vmatpush1.xpose.msra.mxu0 0.0
      %1256 = vmatprep.subr.mxu0 0.0
      %1257 = vmatpush1.xpose.msra.mxu0 0.0
      %1258 = vmatprep.subr.mxu0 0.0
      %1259 = vmatpush1.xpose.msra.mxu0 0.0
      %1260 = vmatprep.subr.mxu0 0.0
      %1261 = vmatpush1.xpose.msra.mxu0 0.0
      %1262 = vmatprep.subr.mxu0 0.0
      %1263 = vmatpush1.xpose.msra.mxu0 0.0
      %1264 = vmatprep.subr.mxu0 0.0
      %1265 = vmatpush1.xpose.msra.mxu0 0.0
      %1266 = vmatprep.subr.mxu0 0.0
      %1267 = vmatpush1.xpose.msra.mxu0 0.0
      %1268 = vmatprep.subr.mxu0 0.0
      %1269 = vmatpush1.xpose.msra.mxu0 0.0
      %1270 = vmatprep.subr.mxu0 0.0
      %1271 = vmatpush1.xpose.msra.mxu0 0.0
      %1272 = vmatprep.subr.mxu0 0.0
      %1273 = vmatpush1.xpose.msra.mxu0 0.0
      %1274 = vmatprep.subr.mxu0 0.0
      %1275 = vmatpush1.xpose.msra.mxu0 0.0
      %1276 = vmatprep.subr.mxu0 0.0
      %1277 = vmatpush1.xpose.msra.mxu0 0.0
      %1278 = vmatprep.mubr.f32.mxu0 0.0
      %1279 = vmatmul.mubr.f32.gmra.mrb[0].mxu0 %v1210
      %v1280 = vpop.f32.mrb[0].mxu0
      %v1281 = vadd.f32 0.0, %v1280
      %v1282 = vpop.f32.mrb[0].mxu0
      %1283 = vdwg.mxu0
      %1284 = vrot.lane.b32.xlu0 %v1054, 96
      %v1285 = vpop.permute.xlu0 %1284
      %v1286 = vsel %vm1057, %v1054, 0
      %v1288 = vsel %vm1057, %v1285, 0
      %1290 = vmatprep.subr.mxu0 0.0
      %1291 = vmatpush1.xpose.msra.mxu0 %v1288
      %1292 = vmatprep.subr.mxu0 0.0
      %1293 = vmatpush1.xpose.msra.mxu0 0.0
      %1294 = vmatprep.subr.mxu0 0.0
      %1295 = vmatpush1.xpose.msra.mxu0 0.0
      %1296 = vmatprep.subr.mxu0 0.0
      %1297 = vmatpush1.xpose.msra.mxu0 0.0
      %1298 = vmatprep.subr.mxu0 0.0
      %1299 = vmatpush1.xpose.msra.mxu0 0.0
      %1300 = vmatprep.subr.mxu0 0.0
      %1301 = vmatpush1.xpose.msra.mxu0 0.0
      %1302 = vmatprep.subr.mxu0 0.0
      %1303 = vmatpush1.xpose.msra.mxu0 0.0
      %1304 = vmatprep.subr.mxu0 0.0
      %1305 = vmatpush1.xpose.msra.mxu0 0.0
      %1306 = vmatprep.subr.mxu0 0.0
      %1307 = vmatpush1.xpose.msra.mxu0 0.0
      %1308 = vmatprep.subr.mxu0 0.0
      %1309 = vmatpush1.xpose.msra.mxu0 0.0
      %1310 = vmatprep.subr.mxu0 0.0
      %1311 = vmatpush1.xpose.msra.mxu0 0.0
      %1312 = vmatprep.subr.mxu0 0.0
      %1313 = vmatpush1.xpose.msra.mxu0 0.0
      %1314 = vmatprep.subr.mxu0 0.0
      %1315 = vmatpush1.xpose.msra.mxu0 0.0
      %1316 = vmatprep.subr.mxu0 0.0
      %1317 = vmatpush1.xpose.msra.mxu0 0.0
      %1318 = vmatprep.subr.mxu0 0.0
      %1319 = vmatpush1.xpose.msra.mxu0 0.0
      %1320 = vmatprep.subr.mxu0 0.0
      %1321 = vmatpush1.xpose.msra.mxu0 0.0
      %1322 = vmatprep.subr.mxu0 0.0
      %1323 = vmatpush1.xpose.msra.mxu0 0.0
      %1324 = vmatprep.subr.mxu0 0.0
      %1325 = vmatpush1.xpose.msra.mxu0 0.0
      %1326 = vmatprep.subr.mxu0 0.0
      %1327 = vmatpush1.xpose.msra.mxu0 0.0
      %1328 = vmatprep.subr.mxu0 0.0
      %1329 = vmatpush1.xpose.msra.mxu0 0.0
      %1330 = vmatprep.subr.mxu0 0.0
      %1331 = vmatpush1.xpose.msra.mxu0 0.0
      %1332 = vmatprep.subr.mxu0 0.0
      %1333 = vmatpush1.xpose.msra.mxu0 0.0
      %1334 = vmatprep.subr.mxu0 0.0
      %1335 = vmatpush1.xpose.msra.mxu0 0.0
      %1336 = vmatprep.subr.mxu0 0.0
      %1337 = vmatpush1.xpose.msra.mxu0 0.0
      %1338 = vmatprep.subr.mxu0 0.0
      %1339 = vmatpush1.xpose.msra.mxu0 0.0
      %1340 = vmatprep.subr.mxu0 0.0
      %1341 = vmatpush1.xpose.msra.mxu0 0.0
      %1342 = vmatprep.subr.mxu0 0.0
      %1343 = vmatpush1.xpose.msra.mxu0 0.0
      %1344 = vmatprep.subr.mxu0 0.0
      %1345 = vmatpush1.xpose.msra.mxu0 0.0
      %1346 = vmatprep.subr.mxu0 0.0
      %1347 = vmatpush1.xpose.msra.mxu0 0.0
      %1348 = vmatprep.subr.mxu0 0.0
      %1349 = vmatpush1.xpose.msra.mxu0 0.0
      %1350 = vmatprep.subr.mxu0 0.0
      %1351 = vmatpush1.xpose.msra.mxu0 0.0
      %1352 = vmatprep.subr.mxu0 0.0
      %1353 = vmatpush1.xpose.msra.mxu0 0.0
      %1354 = vmatprep.mubr.f32.mxu0 0.0
      %1355 = vmatmul.mubr.f32.gmra.mrb[0].mxu0 %v1286
      %v1356 = vpop.f32.mrb[0].mxu0
      %v1357 = vadd.f32 0.0, %v1356
      %v1358 = vpop.f32.mrb[0].mxu0
      %1359 = vdwg.mxu0
      %v1360 = vsel %vm1057, %v1129, -inf
      %1361 = vmax.xlane.f32.xlu0 %v1360
      %v1362 = vpop.xlane.xlu0 %1361
      %v1363 = vsel %vm1057, %v1205, -inf
      %1364 = vmax.xlane.f32.xlu0 %v1363
      %v1365 = vpop.xlane.xlu0 %1364
      %v1366 = vsel %vm1057, %v1281, -inf
      %1367 = vmax.xlane.f32.xlu0 %v1366
      %v1368 = vpop.xlane.xlu0 %1367
      %v1369 = vsel %vm1057, %v1357, -inf
      %1370 = vmax.xlane.f32.xlu0 %v1369
      %v1371 = vpop.xlane.xlu0 %1370
      %v1372 = vsub.f32 %v1129, %v1362
      %v1373 = vsub.f32 %v1205, %v1365
      %v1374 = vsub.f32 %v1281, %v1368
      %v1375 = vsub.f32 %v1357, %v1371
      %v1376 = vmul.f32 %v1372, 1.442695
      %v1377 = vpow.pop %v1376
      %v1378 = vmul.f32 %v1373, 1.442695
      %v1379 = vpow.pop %v1378
      %v1380 = vmul.f32 %v1374, 1.442695
      %v1381 = vpow.pop %v1380
      %v1382 = vmul.f32 %v1375, 1.442695
      %v1383 = vpow.pop %v1382
      %v1384 = vsel %vm1057, %v1377, 0.0
      %1385 = vadd.xlane.f32.xlu0 %v1384
      %v1386 = vpop.xlane.xlu0 %1385
      %v1387 = vsel %vm1057, %v1379, 0.0
      %1388 = vadd.xlane.f32.xlu0 %v1387
      %v1389 = vpop.xlane.xlu0 %1388
      %v1390 = vsel %vm1057, %v1381, 0.0
      %1391 = vadd.xlane.f32.xlu0 %v1390
      %v1392 = vpop.xlane.xlu0 %1391
      %v1393 = vsel %vm1057, %v1383, 0.0
      %1394 = vadd.xlane.f32.xlu0 %v1393
      %v1395 = vpop.xlane.xlu0 %1394
      %v1396 = vrcp.pop %v1386
      %v1397 = vmul.f32 %v1377, %v1396
      %v1398 = vrcp.pop %v1389
      %v1399 = vmul.f32 %v1379, %v1398
      %v1400 = vrcp.pop %v1392
      %v1401 = vmul.f32 %v1381, %v1400
      %v1402 = vrcp.pop %v1395
      %v1403 = vmul.f32 %v1383, %v1402
      %1404 = vrot.lane.b32.xlu0 %v1043, 64
      %v1405 = vpop.permute.xlu0 %1404
      %v1408 = vsel %vm1057, %v1397, 0
      %1410 = vmatprep.subr.mxu0 0.0
      %1411 = vmatpush1.msra.mxu0 %v1405
      %1412 = vmatprep.subr.mxu0 0.0
      %1413 = vmatpush1.msra.mxu0 0.0
      %1414 = vmatprep.subr.mxu0 0.0
      %1415 = vmatpush1.msra.mxu0 0.0
      %1416 = vmatprep.subr.mxu0 0.0
      %1417 = vmatpush1.msra.mxu0 0.0
      %1418 = vmatprep.subr.mxu0 0.0
      %1419 = vmatpush1.msra.mxu0 0.0
      %1420 = vmatprep.subr.mxu0 0.0
      %1421 = vmatpush1.msra.mxu0 0.0
      %1422 = vmatprep.subr.mxu0 0.0
      %1423 = vmatpush1.msra.mxu0 0.0
      %1424 = vmatprep.subr.mxu0 0.0
      %1425 = vmatpush1.msra.mxu0 0.0
      %1426 = vmatprep.subr.mxu0 0.0
      %1427 = vmatpush1.msra.mxu0 0.0
      %1428 = vmatprep.subr.mxu0 0.0
      %1429 = vmatpush1.msra.mxu0 0.0
      %1430 = vmatprep.subr.mxu0 0.0
      %1431 = vmatpush1.msra.mxu0 0.0
      %1432 = vmatprep.subr.mxu0 0.0
      %1433 = vmatpush1.msra.mxu0 0.0
      %1434 = vmatprep.subr.mxu0 0.0
      %1435 = vmatpush1.msra.mxu0 0.0
      %1436 = vmatprep.subr.mxu0 0.0
      %1437 = vmatpush1.msra.mxu0 0.0
      %1438 = vmatprep.subr.mxu0 0.0
      %1439 = vmatpush1.msra.mxu0 0.0
      %1440 = vmatprep.subr.mxu0 0.0
      %1441 = vmatpush1.msra.mxu0 0.0
      %1442 = vmatprep.subr.mxu0 0.0
      %1443 = vmatpush1.msra.mxu0 0.0
      %1444 = vmatprep.subr.mxu0 0.0
      %1445 = vmatpush1.msra.mxu0 0.0
      %1446 = vmatprep.subr.mxu0 0.0
      %1447 = vmatpush1.msra.mxu0 0.0
      %1448 = vmatprep.subr.mxu0 0.0
      %1449 = vmatpush1.msra.mxu0 0.0
      %1450 = vmatprep.subr.mxu0 0.0
      %1451 = vmatpush1.msra.mxu0 0.0
      %1452 = vmatprep.subr.mxu0 0.0
      %1453 = vmatpush1.msra.mxu0 0.0
      %1454 = vmatprep.subr.mxu0 0.0
      %1455 = vmatpush1.msra.mxu0 0.0
      %1456 = vmatprep.subr.mxu0 0.0
      %1457 = vmatpush1.msra.mxu0 0.0
      %1458 = vmatprep.subr.mxu0 0.0
      %1459 = vmatpush1.msra.mxu0 0.0
      %1460 = vmatprep.subr.mxu0 0.0
      %1461 = vmatpush1.msra.mxu0 0.0
      %1462 = vmatprep.subr.mxu0 0.0
      %1463 = vmatpush1.msra.mxu0 0.0
      %1464 = vmatprep.subr.mxu0 0.0
      %1465 = vmatpush1.msra.mxu0 0.0
      %1466 = vmatprep.subr.mxu0 0.0
      %1467 = vmatpush1.msra.mxu0 0.0
      %1468 = vmatprep.subr.mxu0 0.0
      %1469 = vmatpush1.msra.mxu0 0.0
      %1470 = vmatprep.subr.mxu0 0.0
      %1471 = vmatpush1.msra.mxu0 0.0
      %1472 = vmatprep.subr.mxu0 0.0
      %1473 = vmatpush1.msra.mxu0 0.0
      %1474 = vmatprep.mubr.f32.mxu0 0.0
      %1475 = vmatmul.mubr.f32.gmra.mrb[0].mxu0 %v1408
      %v1476 = vpop.f32.mrb[0].mxu0
      %v1477 = vadd.f32 0.0, %v1476
      %v1478 = vpop.f32.mrb[0].mxu0
      %1479 = vdwg.mxu0
      %1480 = vrot.lane.b32.xlu0 %v1050, 64
      %v1481 = vpop.permute.xlu0 %1480
      %v1484 = vsel %vm1057, %v1399, 0
      %1486 = vmatprep.subr.mxu0 0.0
      %1487 = vmatpush1.msra.mxu0 %v1481
      %1488 = vmatprep.subr.mxu0 0.0
      %1489 = vmatpush1.msra.mxu0 0.0
      %1490 = vmatprep.subr.mxu0 0.0
      %1491 = vmatpush1.msra.mxu0 0.0
      %1492 = vmatprep.subr.mxu0 0.0
      %1493 = vmatpush1.msra.mxu0 0.0
      %1494 = vmatprep.subr.mxu0 0.0
      %1495 = vmatpush1.msra.mxu0 0.0
      %1496 = vmatprep.subr.mxu0 0.0
      %1497 = vmatpush1.msra.mxu0 0.0
      %1498 = vmatprep.subr.mxu0 0.0
      %1499 = vmatpush1.msra.mxu0 0.0
      %1500 = vmatprep.subr.mxu0 0.0
      %1501 = vmatpush1.msra.mxu0 0.0
      %1502 = vmatprep.subr.mxu0 0.0
      %1503 = vmatpush1.msra.mxu0 0.0
      %1504 = vmatprep.subr.mxu0 0.0
      %1505 = vmatpush1.msra.mxu0 0.0
      %1506 = vmatprep.subr.mxu0 0.0
      %1507 = vmatpush1.msra.mxu0 0.0
      %1508 = vmatprep.subr.mxu0 0.0
      %1509 = vmatpush1.msra.mxu0 0.0
      %1510 = vmatprep.subr.mxu0 0.0
      %1511 = vmatpush1.msra.mxu0 0.0
      %1512 = vmatprep.subr.mxu0 0.0
      %1513 = vmatpush1.msra.mxu0 0.0
      %1514 = vmatprep.subr.mxu0 0.0
      %1515 = vmatpush1.msra.mxu0 0.0
      %1516 = vmatprep.subr.mxu0 0.0
      %1517 = vmatpush1.msra.mxu0 0.0
      %1518 = vmatprep.subr.mxu0 0.0
      %1519 = vmatpush1.msra.mxu0 0.0
      %1520 = vmatprep.subr.mxu0 0.0
      %1521 = vmatpush1.msra.mxu0 0.0
      %1522 = vmatprep.subr.mxu0 0.0
      %1523 = vmatpush1.msra.mxu0 0.0
      %1524 = vmatprep.subr.mxu0 0.0
      %1525 = vmatpush1.msra.mxu0 0.0
      %1526 = vmatprep.subr.mxu0 0.0
      %1527 = vmatpush1.msra.mxu0 0.0
      %1528 = vmatprep.subr.mxu0 0.0
      %1529 = vmatpush1.msra.mxu0 0.0
      %1530 = vmatprep.subr.mxu0 0.0
      %1531 = vmatpush1.msra.mxu0 0.0
      %1532 = vmatprep.subr.mxu0 0.0
      %1533 = vmatpush1.msra.mxu0 0.0
      %1534 = vmatprep.subr.mxu0 0.0
      %1535 = vmatpush1.msra.mxu0 0.0
      %1536 = vmatprep.subr.mxu0 0.0
      %1537 = vmatpush1.msra.mxu0 0.0
      %1538 = vmatprep.subr.mxu0 0.0
      %1539 = vmatpush1.msra.mxu0 0.0
      %1540 = vmatprep.subr.mxu0 0.0
      %1541 = vmatpush1.msra.mxu0 0.0
      %1542 = vmatprep.subr.mxu0 0.0
      %1543 = vmatpush1.msra.mxu0 0.0
      %1544 = vmatprep.subr.mxu0 0.0
      %1545 = vmatpush1.msra.mxu0 0.0
      %1546 = vmatprep.subr.mxu0 0.0
      %1547 = vmatpush1.msra.mxu0 0.0
      %1548 = vmatprep.subr.mxu0 0.0
      %1549 = vmatpush1.msra.mxu0 0.0
      %1550 = vmatprep.mubr.f32.mxu0 0.0
      %1551 = vmatmul.mubr.f32.gmra.mrb[0].mxu0 %v1484
      %v1552 = vpop.f32.mrb[0].mxu0
      %v1553 = vadd.f32 0.0, %v1552
      %v1554 = vpop.f32.mrb[0].mxu0
      %1555 = vdwg.mxu0
      %1556 = vrot.lane.b32.xlu0 %v1052, 64
      %v1557 = vpop.permute.xlu0 %1556
      %v1560 = vsel %vm1057, %v1401, 0
      %1562 = vmatprep.subr.mxu0 0.0
      %1563 = vmatpush1.msra.mxu0 %v1557
      %1564 = vmatprep.subr.mxu0 0.0
      %1565 = vmatpush1.msra.mxu0 0.0
      %1566 = vmatprep.subr.mxu0 0.0
      %1567 = vmatpush1.msra.mxu0 0.0
      %1568 = vmatprep.subr.mxu0 0.0
      %1569 = vmatpush1.msra.mxu0 0.0
      %1570 = vmatprep.subr.mxu0 0.0
      %1571 = vmatpush1.msra.mxu0 0.0
      %1572 = vmatprep.subr.mxu0 0.0
      %1573 = vmatpush1.msra.mxu0 0.0
      %1574 = vmatprep.subr.mxu0 0.0
      %1575 = vmatpush1.msra.mxu0 0.0
      %1576 = vmatprep.subr.mxu0 0.0
      %1577 = vmatpush1.msra.mxu0 0.0
      %1578 = vmatprep.subr.mxu0 0.0
      %1579 = vmatpush1.msra.mxu0 0.0
      %1580 = vmatprep.subr.mxu0 0.0
      %1581 = vmatpush1.msra.mxu0 0.0
      %1582 = vmatprep.subr.mxu0 0.0
      %1583 = vmatpush1.msra.mxu0 0.0
      %1584 = vmatprep.subr.mxu0 0.0
      %1585 = vmatpush1.msra.mxu0 0.0
      %1586 = vmatprep.subr.mxu0 0.0
      %1587 = vmatpush1.msra.mxu0 0.0
      %1588 = vmatprep.subr.mxu0 0.0
      %1589 = vmatpush1.msra.mxu0 0.0
      %1590 = vmatprep.subr.mxu0 0.0
      %1591 = vmatpush1.msra.mxu0 0.0
      %1592 = vmatprep.subr.mxu0 0.0
      %1593 = vmatpush1.msra.mxu0 0.0
      %1594 = vmatprep.subr.mxu0 0.0
      %1595 = vmatpush1.msra.mxu0 0.0
      %1596 = vmatprep.subr.mxu0 0.0
      %1597 = vmatpush1.msra.mxu0 0.0
      %1598 = vmatprep.subr.mxu0 0.0
      %1599 = vmatpush1.msra.mxu0 0.0
      %1600 = vmatprep.subr.mxu0 0.0
      %1601 = vmatpush1.msra.mxu0 0.0
      %1602 = vmatprep.subr.mxu0 0.0
      %1603 = vmatpush1.msra.mxu0 0.0
      %1604 = vmatprep.subr.mxu0 0.0
      %1605 = vmatpush1.msra.mxu0 0.0
      %1606 = vmatprep.subr.mxu0 0.0
      %1607 = vmatpush1.msra.mxu0 0.0
      %1608 = vmatprep.subr.mxu0 0.0
      %1609 = vmatpush1.msra.mxu0 0.0
      %1610 = vmatprep.subr.mxu0 0.0
      %1611 = vmatpush1.msra.mxu0 0.0
      %1612 = vmatprep.subr.mxu0 0.0
      %1613 = vmatpush1.msra.mxu0 0.0
      %1614 = vmatprep.subr.mxu0 0.0
      %1615 = vmatpush1.msra.mxu0 0.0
      %1616 = vmatprep.subr.mxu0 0.0
      %1617 = vmatpush1.msra.mxu0 0.0
      %1618 = vmatprep.subr.mxu0 0.0
      %1619 = vmatpush1.msra.mxu0 0.0
      %1620 = vmatprep.subr.mxu0 0.0
      %1621 = vmatpush1.msra.mxu0 0.0
      %1622 = vmatprep.subr.mxu0 0.0
      %1623 = vmatpush1.msra.mxu0 0.0
      %1624 = vmatprep.subr.mxu0 0.0
      %1625 = vmatpush1.msra.mxu0 0.0
      %1626 = vmatprep.mubr.f32.mxu0 0.0
      %1627 = vmatmul.mubr.f32.gmra.mrb[0].mxu0 %v1560
      %v1628 = vpop.f32.mrb[0].mxu0
      %v1629 = vadd.f32 0.0, %v1628
      %v1630 = vpop.f32.mrb[0].mxu0
      %1631 = vdwg.mxu0
      %1632 = vrot.lane.b32.xlu0 %v1054, 64
      %v1633 = vpop.permute.xlu0 %1632
      %v1636 = vsel %vm1057, %v1403, 0
      %1638 = vmatprep.subr.mxu0 0.0
      %1639 = vmatpush1.msra.mxu0 %v1633
      %1640 = vmatprep.subr.mxu0 0.0
      %1641 = vmatpush1.msra.mxu0 0.0
      %1642 = vmatprep.subr.mxu0 0.0
      %1643 = vmatpush1.msra.mxu0 0.0
      %1644 = vmatprep.subr.mxu0 0.0
      %1645 = vmatpush1.msra.mxu0 0.0
      %1646 = vmatprep.subr.mxu0 0.0
      %1647 = vmatpush1.msra.mxu0 0.0
      %1648 = vmatprep.subr.mxu0 0.0
      %1649 = vmatpush1.msra.mxu0 0.0
      %1650 = vmatprep.subr.mxu0 0.0
      %1651 = vmatpush1.msra.mxu0 0.0
      %1652 = vmatprep.subr.mxu0 0.0
      %1653 = vmatpush1.msra.mxu0 0.0
      %1654 = vmatprep.subr.mxu0 0.0
      %1655 = vmatpush1.msra.mxu0 0.0
      %1656 = vmatprep.subr.mxu0 0.0
      %1657 = vmatpush1.msra.mxu0 0.0
      %1658 = vmatprep.subr.mxu0 0.0
      %1659 = vmatpush1.msra.mxu0 0.0
      %1660 = vmatprep.subr.mxu0 0.0
      %1661 = vmatpush1.msra.mxu0 0.0
      %1662 = vmatprep.subr.mxu0 0.0
      %1663 = vmatpush1.msra.mxu0 0.0
      %1664 = vmatprep.subr.mxu0 0.0
      %1665 = vmatpush1.msra.mxu0 0.0
      %1666 = vmatprep.subr.mxu0 0.0
      %1667 = vmatpush1.msra.mxu0 0.0
      %1668 = vmatprep.subr.mxu0 0.0
      %1669 = vmatpush1.msra.mxu0 0.0
      %1670 = vmatprep.subr.mxu0 0.0
      %1671 = vmatpush1.msra.mxu0 0.0
      %1672 = vmatprep.subr.mxu0 0.0
      %1673 = vmatpush1.msra.mxu0 0.0
      %1674 = vmatprep.subr.mxu0 0.0
      %1675 = vmatpush1.msra.mxu0 0.0
      %1676 = vmatprep.subr.mxu0 0.0
      %1677 = vmatpush1.msra.mxu0 0.0
      %1678 = vmatprep.subr.mxu0 0.0
      %1679 = vmatpush1.msra.mxu0 0.0
      %1680 = vmatprep.subr.mxu0 0.0
      %1681 = vmatpush1.msra.mxu0 0.0
      %1682 = vmatprep.subr.mxu0 0.0
      %1683 = vmatpush1.msra.mxu0 0.0
      %1684 = vmatprep.subr.mxu0 0.0
      %1685 = vmatpush1.msra.mxu0 0.0
      %1686 = vmatprep.subr.mxu0 0.0
      %1687 = vmatpush1.msra.mxu0 0.0
      %1688 = vmatprep.subr.mxu0 0.0
      %1689 = vmatpush1.msra.mxu0 0.0
      %1690 = vmatprep.subr.mxu0 0.0
      %1691 = vmatpush1.msra.mxu0 0.0
      %1692 = vmatprep.subr.mxu0 0.0
      %1693 = vmatpush1.msra.mxu0 0.0
      %1694 = vmatprep.subr.mxu0 0.0
      %1695 = vmatpush1.msra.mxu0 0.0
      %1696 = vmatprep.subr.mxu0 0.0
      %1697 = vmatpush1.msra.mxu0 0.0
      %1698 = vmatprep.subr.mxu0 0.0
      %1699 = vmatpush1.msra.mxu0 0.0
      %1700 = vmatprep.subr.mxu0 0.0
      %1701 = vmatpush1.msra.mxu0 0.0
      %1702 = vmatprep.mubr.f32.mxu0 0.0
      %1703 = vmatmul.mubr.f32.gmra.mrb[0].mxu0 %v1636
      %v1704 = vpop.f32.mrb[0].mxu0
      %v1705 = vadd.f32 0.0, %v1704
      %v1706 = vpop.f32.mrb[0].mxu0
      %1707 = vdwg.mxu0
      %1709 = vrot.lane.b32.xlu0 %v1553, 8
      %v1710 = vpop.permute.xlu0 %1709
      %1713 = vrot.lane.b32.xlu0 %v1629, 16
      %v1714 = vpop.permute.xlu0 %1713
      %1717 = vrot.lane.b32.xlu0 %v1705, 24
      %v1718 = vpop.permute.xlu0 %1717
      %v1720 = vsel %vm1057, %v1477, %v1710
      %vm1721 = vcmask 130048
      %v1722 = vsel %vm1721, %v1720, %v1714
      %vm1723 = vcmask 195584
      %v1724 = vsel %vm1723, %v1722, %v1718
      %v1726 = vlaneseq
      %v1727 = vshrl.u32 %v1726, 7
      %v1728 = vsub.s32 0, %v1727
      %v1729 = vrot.slane %v689, %v1728
      %v1732 = vsel %vm1004, %v1724, 0
      %1734 = vmatprep.subr.mxu0 0.0
      %1735 = vmatpush1.msra.mxu0 %v685
      %1736 = vmatprep.subr.mxu0 0.0
      %1737 = vmatpush1.msra.mxu0 %v686
      %1738 = vmatprep.subr.mxu0 0.0
      %1739 = vmatpush1.msra.mxu0 %v687
      %1740 = vmatprep.subr.mxu0 0.0
      %1741 = vmatpush1.msra.mxu0 %v688
      %1742 = vmatprep.subr.mxu0 0.0
      %1743 = vmatpush1.msra.mxu0 0.0
      %1744 = vmatprep.subr.mxu0 0.0
      %1745 = vmatpush1.msra.mxu0 0.0
      %1746 = vmatprep.subr.mxu0 0.0
      %1747 = vmatpush1.msra.mxu0 0.0
      %1748 = vmatprep.subr.mxu0 0.0
      %1749 = vmatpush1.msra.mxu0 0.0
      %1750 = vmatprep.subr.mxu0 0.0
      %1751 = vmatpush1.msra.mxu0 0.0
      %1752 = vmatprep.subr.mxu0 0.0
      %1753 = vmatpush1.msra.mxu0 0.0
      %1754 = vmatprep.subr.mxu0 0.0
      %1755 = vmatpush1.msra.mxu0 0.0
      %1756 = vmatprep.subr.mxu0 0.0
      %1757 = vmatpush1.msra.mxu0 0.0
      %1758 = vmatprep.subr.mxu0 0.0
      %1759 = vmatpush1.msra.mxu0 0.0
      %1760 = vmatprep.subr.mxu0 0.0
      %1761 = vmatpush1.msra.mxu0 0.0
      %1762 = vmatprep.subr.mxu0 0.0
      %1763 = vmatpush1.msra.mxu0 0.0
      %1764 = vmatprep.subr.mxu0 0.0
      %1765 = vmatpush1.msra.mxu0 0.0
      %1766 = vmatprep.subr.mxu0 0.0
      %1767 = vmatpush1.msra.mxu0 0.0
      %1768 = vmatprep.subr.mxu0 0.0
      %1769 = vmatpush1.msra.mxu0 0.0
      %1770 = vmatprep.subr.mxu0 0.0
      %1771 = vmatpush1.msra.mxu0 0.0
      %1772 = vmatprep.subr.mxu0 0.0
      %1773 = vmatpush1.msra.mxu0 0.0
      %1774 = vmatprep.subr.mxu0 0.0
      %1775 = vmatpush1.msra.mxu0 0.0
      %1776 = vmatprep.subr.mxu0 0.0
      %1777 = vmatpush1.msra.mxu0 0.0
      %1778 = vmatprep.subr.mxu0 0.0
      %1779 = vmatpush1.msra.mxu0 0.0
      %1780 = vmatprep.subr.mxu0 0.0
      %1781 = vmatpush1.msra.mxu0 0.0
      %1782 = vmatprep.subr.mxu0 0.0
      %1783 = vmatpush1.msra.mxu0 0.0
      %1784 = vmatprep.subr.mxu0 0.0
      %1785 = vmatpush1.msra.mxu0 0.0
      %1786 = vmatprep.subr.mxu0 0.0
      %1787 = vmatpush1.msra.mxu0 0.0
      %1788 = vmatprep.subr.mxu0 0.0
      %1789 = vmatpush1.msra.mxu0 0.0
      %1790 = vmatprep.subr.mxu0 0.0
      %1791 = vmatpush1.msra.mxu0 0.0
      %1792 = vmatprep.subr.mxu0 0.0
      %1793 = vmatpush1.msra.mxu0 0.0
      %1794 = vmatprep.subr.mxu0 0.0
      %1795 = vmatpush1.msra.mxu0 0.0
      %1796 = vmatprep.subr.mxu0 0.0
      %1797 = vmatpush1.msra.mxu0 0.0
      %1798 = vmatprep.mubr.f32.mxu0 0.0
      %1799 = vmatmul.mubr.f32.gmra.mrb[0].mxu0 %v1732
      %v1800 = vpop.f32.mrb[0].mxu0
      %v1801 = vadd.f32 %v1729, %v1800
      %v1802 = vpop.f32.mrb[0].mxu0
      %1803 = vdwg.mxu0
      %v1804 = vadd.f32 %v679, %v1801
      %v1805 = vsel %vm1004, %v1804, 0.0
      %1806 = vadd.xlane.f32.xlu0 %v1805
      %v1807 = vpop.xlane.xlu0 %1806
      %v1808 = vrcp.pop 32.0
      %v1809 = vmul.f32 %v1807, %v1808
      %v1810 = vsub.f32 %v1804, %v1809
      %v1811 = vmul.f32 %v1810, %v1810
      %v1812 = vsel %vm1004, %v1811, 0.0
      %1813 = vadd.xlane.f32.xlu0 %v1812
      %v1814 = vpop.xlane.xlu0 %1813
      %v1815 = vmul.f32 %v1814, %v1808
      %v1816 = vadd.f32 %v1815, 1e-05
      %v1817 = vrsqrt.pop %v1816
      %v1818 = vmul.f32 %v1810, %v1817
      %v1820 = vlaneseq
      %v1821 = vshrl.u32 %v1820, 7
      %v1822 = vsub.s32 0, %v1821
      %v1823 = vrot.slane %v690, %v1822
      %v1825 = vmul.f32 %v1818, %v1823
      %v1827 = vlaneseq
      %v1828 = vshrl.u32 %v1827, 7
      %v1829 = vsub.s32 0, %v1828
      %v1830 = vrot.slane %v691, %v1829
      %v1832 = vadd.f32 %v1825, %v1830
      %v1833 = vpack.c.bf16 %v1832, %v1832
      %v1836 = vlaneseq
      %v1837 = vshrl.u32 %v1836, 7
      %v1838 = vsub.s32 0, %v1837
      %v1839 = vrot.slane %v724, %v1838
      %v1840 = vlaneseq
      %v1841 = vshrl.u32 %v1840, 7
      %v1842 = vsub.s32 1, %v1841
      %v1843 = vrot.slane %v724, %v1842
      %v1844 = vlaneseq
      %v1845 = vshrl.u32 %v1844, 7
      %v1846 = vsub.s32 2, %v1845
      %v1847 = vrot.slane %v724, %v1846
      %v1848 = vlaneseq
      %v1849 = vshrl.u32 %v1848, 7
      %v1850 = vsub.s32 3, %v1849
      %v1851 = vrot.slane %v724, %v1850
      %v1852 = vlaneseq
      %v1853 = vshrl.u32 %v1852, 7
      %v1854 = vsub.s32 4, %v1853
      %v1855 = vrot.slane %v724, %v1854
      %v1856 = vlaneseq
      %v1857 = vshrl.u32 %v1856, 7
      %v1858 = vsub.s32 5, %v1857
      %v1859 = vrot.slane %v724, %v1858
      %v1860 = vlaneseq
      %v1861 = vshrl.u32 %v1860, 7
      %v1862 = vsub.s32 6, %v1861
      %v1863 = vrot.slane %v724, %v1862
      %v1864 = vlaneseq
      %v1865 = vshrl.u32 %v1864, 7
      %v1866 = vsub.s32 7, %v1865
      %v1867 = vrot.slane %v724, %v1866
      %v1868 = vlaneseq
      %v1869 = vshrl.u32 %v1868, 7
      %v1870 = vsub.s32 0, %v1869
      %v1871 = vrot.slane %v725, %v1870
      %v1872 = vlaneseq
      %v1873 = vshrl.u32 %v1872, 7
      %v1874 = vsub.s32 1, %v1873
      %v1875 = vrot.slane %v725, %v1874
      %v1876 = vlaneseq
      %v1877 = vshrl.u32 %v1876, 7
      %v1878 = vsub.s32 2, %v1877
      %v1879 = vrot.slane %v725, %v1878
      %v1880 = vlaneseq
      %v1881 = vshrl.u32 %v1880, 7
      %v1882 = vsub.s32 3, %v1881
      %v1883 = vrot.slane %v725, %v1882
      %v1884 = vlaneseq
      %v1885 = vshrl.u32 %v1884, 7
      %v1886 = vsub.s32 4, %v1885
      %v1887 = vrot.slane %v725, %v1886
      %v1888 = vlaneseq
      %v1889 = vshrl.u32 %v1888, 7
      %v1890 = vsub.s32 5, %v1889
      %v1891 = vrot.slane %v725, %v1890
      %v1892 = vlaneseq
      %v1893 = vshrl.u32 %v1892, 7
      %v1894 = vsub.s32 6, %v1893
      %v1895 = vrot.slane %v725, %v1894
      %v1896 = vlaneseq
      %v1897 = vshrl.u32 %v1896, 7
      %v1898 = vsub.s32 7, %v1897
      %v1899 = vrot.slane %v725, %v1898
      %v1948 = vunpack.c.l.b16 %v692
      %v1949 = vunpack.c.h.b16 %v692
      %v1950 = vunpack.c.l.b16 %v693
      %v1951 = vunpack.c.h.b16 %v693
      %v1952 = vunpack.c.l.b16 %v694
      %v1953 = vunpack.c.h.b16 %v694
      %v1954 = vunpack.c.l.b16 %v695
      %v1955 = vunpack.c.h.b16 %v695
      %v1956 = vunpack.c.l.b16 %v696
      %v1957 = vunpack.c.h.b16 %v696
      %v1958 = vunpack.c.l.b16 %v697
      %v1959 = vunpack.c.h.b16 %v697
      %v1960 = vunpack.c.l.b16 %v698
      %v1961 = vunpack.c.h.b16 %v698
      %v1962 = vunpack.c.l.b16 %v699
      %v1963 = vunpack.c.h.b16 %v699
      %v1964 = vunpack.c.l.b16 %v700
      %v1965 = vunpack.c.h.b16 %v700
      %v1966 = vunpack.c.l.b16 %v701
      %v1967 = vunpack.c.h.b16 %v701
      %v1968 = vunpack.c.l.b16 %v702
      %v1969 = vunpack.c.h.b16 %v702
      %v1970 = vunpack.c.l.b16 %v703
      %v1971 = vunpack.c.h.b16 %v703
      %v1972 = vunpack.c.l.b16 %v704
      %v1973 = vunpack.c.h.b16 %v704
      %v1974 = vunpack.c.l.b16 %v705
      %v1975 = vunpack.c.h.b16 %v705
      %v1976 = vunpack.c.l.b16 %v706
      %v1977 = vunpack.c.h.b16 %v706
      %v1978 = vunpack.c.l.b16 %v707
      %v1979 = vunpack.c.h.b16 %v707
      %v1980 = vunpack.c.l.b16 %v708
      %v1981 = vunpack.c.h.b16 %v708
      %v1982 = vunpack.c.l.b16 %v709
      %v1983 = vunpack.c.h.b16 %v709
      %v1984 = vunpack.c.l.b16 %v710
      %v1985 = vunpack.c.h.b16 %v710
      %v1986 = vunpack.c.l.b16 %v711
      %v1987 = vunpack.c.h.b16 %v711
      %v1988 = vunpack.c.l.b16 %v712
      %v1989 = vunpack.c.h.b16 %v712
      %v1990 = vunpack.c.l.b16 %v713
      %v1991 = vunpack.c.h.b16 %v713
      %v1992 = vunpack.c.l.b16 %v714
      %v1993 = vunpack.c.h.b16 %v714
      %v1994 = vunpack.c.l.b16 %v715
      %v1995 = vunpack.c.h.b16 %v715
      %v1996 = vunpack.c.l.b16 %v716
      %v1997 = vunpack.c.h.b16 %v716
      %v1998 = vunpack.c.l.b16 %v717
      %v1999 = vunpack.c.h.b16 %v717
      %v2000 = vunpack.c.l.b16 %v718
      %v2001 = vunpack.c.h.b16 %v718
      %v2002 = vunpack.c.l.b16 %v719
      %v2003 = vunpack.c.h.b16 %v719
      %v2004 = vunpack.c.l.b16 %v720
      %v2005 = vunpack.c.h.b16 %v720
      %v2006 = vunpack.c.l.b16 %v721
      %v2007 = vunpack.c.h.b16 %v721
      %v2008 = vunpack.c.l.b16 %v722
      %v2009 = vunpack.c.h.b16 %v722
      %v2010 = vunpack.c.l.b16 %v723
      %v2011 = vunpack.c.h.b16 %v723
      %v2012 = vpack.c.b16 %v1964, %v1948
      %v2013 = vpack.c.b16 %v1965, %v1949
      %v2014 = vpack.c.b16 %v1966, %v1950
      %v2015 = vpack.c.b16 %v1967, %v1951
      %v2016 = vpack.c.b16 %v1968, %v1952
      %v2017 = vpack.c.b16 %v1969, %v1953
      %v2018 = vpack.c.b16 %v1970, %v1954
      %v2019 = vpack.c.b16 %v1971, %v1955
      %v2020 = vpack.c.b16 %v1972, %v1956
      %v2021 = vpack.c.b16 %v1973, %v1957
      %v2022 = vpack.c.b16 %v1974, %v1958
      %v2023 = vpack.c.b16 %v1975, %v1959
      %v2024 = vpack.c.b16 %v1976, %v1960
      %v2025 = vpack.c.b16 %v1977, %v1961
      %v2026 = vpack.c.b16 %v1978, %v1962
      %v2027 = vpack.c.b16 %v1979, %v1963
      %v2028 = vpack.c.b16 %v1996, %v1980
      %v2029 = vpack.c.b16 %v1997, %v1981
      %v2030 = vpack.c.b16 %v1998, %v1982
      %v2031 = vpack.c.b16 %v1999, %v1983
      %v2032 = vpack.c.b16 %v2000, %v1984
      %v2033 = vpack.c.b16 %v2001, %v1985
      %v2034 = vpack.c.b16 %v2002, %v1986
      %v2035 = vpack.c.b16 %v2003, %v1987
      %v2036 = vpack.c.b16 %v2004, %v1988
      %v2037 = vpack.c.b16 %v2005, %v1989
      %v2038 = vpack.c.b16 %v2006, %v1990
      %v2039 = vpack.c.b16 %v2007, %v1991
      %v2040 = vpack.c.b16 %v2008, %v1992
      %v2041 = vpack.c.b16 %v2009, %v1993
      %v2042 = vpack.c.b16 %v2010, %v1994
      %v2043 = vpack.c.b16 %v2011, %v1995
      %v2077 = vsel %vm1004, %v1833, 0
      %2079 = vmatprep.subr.bf16.mxu0 %v2013
      %2080 = vmatpush1.bf16.msra.mxu0 %v2012
      %2081 = vmatprep.subr.bf16.mxu0 %v2029
      %2082 = vmatpush1.bf16.msra.mxu0 %v2028
      %2083 = vmatprep.subr.bf16.mxu0 0
      %2084 = vmatpush1.bf16.msra.mxu0 0
      %2085 = vmatprep.subr.bf16.mxu0 0
      %2086 = vmatpush1.bf16.msra.mxu0 0
      %2087 = vmatprep.subr.bf16.mxu0 0
      %2088 = vmatpush1.bf16.msra.mxu0 0
      %2089 = vmatprep.subr.bf16.mxu0 0
      %2090 = vmatpush1.bf16.msra.mxu0 0
      %2091 = vmatprep.subr.bf16.mxu0 0
      %2092 = vmatpush1.bf16.msra.mxu0 0
      %2093 = vmatprep.subr.bf16.mxu0 0
      %2094 = vmatpush1.bf16.msra.mxu0 0
      %2095 = vmatprep.subr.bf16.mxu0 0
      %2096 = vmatpush1.bf16.msra.mxu0 0
      %2097 = vmatprep.subr.bf16.mxu0 0
      %2098 = vmatpush1.bf16.msra.mxu0 0
      %2099 = vmatprep.subr.bf16.mxu0 0
      %2100 = vmatpush1.bf16.msra.mxu0 0
      %2101 = vmatprep.subr.bf16.mxu0 0
      %2102 = vmatpush1.bf16.msra.mxu0 0
      %2103 = vmatprep.subr.bf16.mxu0 0
      %2104 = vmatpush1.bf16.msra.mxu0 0
      %2105 = vmatprep.subr.bf16.mxu0 0
      %2106 = vmatpush1.bf16.msra.mxu0 0
      %2107 = vmatprep.subr.bf16.mxu0 0
      %2108 = vmatpush1.bf16.msra.mxu0 0
      %2109 = vmatprep.subr.bf16.mxu0 0
      %2110 = vmatpush1.bf16.msra.mxu0 0
      %2111 = vmatprep.mubr.bf16.mxu0 0
      %2112 = vmatmul.mubr.bf16.gmra.mrb[0].mxu0 %v2077
      %v2113 = vpop.f32.mrb[0].mxu0
      %v2114 = vadd.f32 %v1839, %v2113
      %v2115 = vpop.f32.mrb[0].mxu0
      %v2116 = vadd.f32 %v1843, %v2115
      %v2117 = vpop.f32.mrb[0].mxu0
      %v2118 = vpop.f32.mrb[0].mxu0
      %2119 = vdwg.mxu0
      %2120 = vmatprep.subr.bf16.mxu0 %v2015
      %2121 = vmatpush1.bf16.msra.mxu0 %v2014
      %2122 = vmatprep.subr.bf16.mxu0 %v2031
      %2123 = vmatpush1.bf16.msra.mxu0 %v2030
      %2124 = vmatprep.subr.bf16.mxu0 0
      %2125 = vmatpush1.bf16.msra.mxu0 0
      %2126 = vmatprep.subr.bf16.mxu0 0
      %2127 = vmatpush1.bf16.msra.mxu0 0
      %2128 = vmatprep.subr.bf16.mxu0 0
      %2129 = vmatpush1.bf16.msra.mxu0 0
      %2130 = vmatprep.subr.bf16.mxu0 0
      %2131 = vmatpush1.bf16.msra.mxu0 0
      %2132 = vmatprep.subr.bf16.mxu0 0
      %2133 = vmatpush1.bf16.msra.mxu0 0
      %2134 = vmatprep.subr.bf16.mxu0 0
      %2135 = vmatpush1.bf16.msra.mxu0 0
      %2136 = vmatprep.subr.bf16.mxu0 0
      %2137 = vmatpush1.bf16.msra.mxu0 0
      %2138 = vmatprep.subr.bf16.mxu0 0
      %2139 = vmatpush1.bf16.msra.mxu0 0
      %2140 = vmatprep.subr.bf16.mxu0 0
      %2141 = vmatpush1.bf16.msra.mxu0 0
      %2142 = vmatprep.subr.bf16.mxu0 0
      %2143 = vmatpush1.bf16.msra.mxu0 0
      %2144 = vmatprep.subr.bf16.mxu0 0
      %2145 = vmatpush1.bf16.msra.mxu0 0
      %2146 = vmatprep.subr.bf16.mxu0 0
      %2147 = vmatpush1.bf16.msra.mxu0 0
      %2148 = vmatprep.subr.bf16.mxu0 0
      %2149 = vmatpush1.bf16.msra.mxu0 0
      %2150 = vmatprep.subr.bf16.mxu0 0
      %2151 = vmatpush1.bf16.msra.mxu0 0
      %2152 = vmatprep.mubr.bf16.mxu0 0
      %2153 = vmatmul.mubr.bf16.gmra.mrb[0].mxu0 %v2077
      %v2154 = vpop.f32.mrb[0].mxu0
      %v2155 = vadd.f32 %v1847, %v2154
      %v2156 = vpop.f32.mrb[0].mxu0
      %v2157 = vadd.f32 %v1851, %v2156
      %v2158 = vpop.f32.mrb[0].mxu0
      %v2159 = vpop.f32.mrb[0].mxu0
      %2160 = vdwg.mxu0
      %2161 = vmatprep.subr.bf16.mxu0 %v2017
      %2162 = vmatpush1.bf16.msra.mxu0 %v2016
      %2163 = vmatprep.subr.bf16.mxu0 %v2033
      %2164 = vmatpush1.bf16.msra.mxu0 %v2032
      %2165 = vmatprep.subr.bf16.mxu0 0
      %2166 = vmatpush1.bf16.msra.mxu0 0
      %2167 = vmatprep.subr.bf16.mxu0 0
      %2168 = vmatpush1.bf16.msra.mxu0 0
      %2169 = vmatprep.subr.bf16.mxu0 0
      %2170 = vmatpush1.bf16.msra.mxu0 0
      %2171 = vmatprep.subr.bf16.mxu0 0
      %2172 = vmatpush1.bf16.msra.mxu0 0
      %2173 = vmatprep.subr.bf16.mxu0 0
      %2174 = vmatpush1.bf16.msra.mxu0 0
      %2175 = vmatprep.subr.bf16.mxu0 0
      %2176 = vmatpush1.bf16.msra.mxu0 0
      %2177 = vmatprep.subr.bf16.mxu0 0
      %2178 = vmatpush1.bf16.msra.mxu0 0
      %2179 = vmatprep.subr.bf16.mxu0 0
      %2180 = vmatpush1.bf16.msra.mxu0 0
      %2181 = vmatprep.subr.bf16.mxu0 0
      %2182 = vmatpush1.bf16.msra.mxu0 0
      %2183 = vmatprep.subr.bf16.mxu0 0
      %2184 = vmatpush1.bf16.msra.mxu0 0
      %2185 = vmatprep.subr.bf16.mxu0 0
      %2186 = vmatpush1.bf16.msra.mxu0 0
      %2187 = vmatprep.subr.bf16.mxu0 0
      %2188 = vmatpush1.bf16.msra.mxu0 0
      %2189 = vmatprep.subr.bf16.mxu0 0
      %2190 = vmatpush1.bf16.msra.mxu0 0
      %2191 = vmatprep.subr.bf16.mxu0 0
      %2192 = vmatpush1.bf16.msra.mxu0 0
      %2193 = vmatprep.mubr.bf16.mxu0 0
      %2194 = vmatmul.mubr.bf16.gmra.mrb[0].mxu0 %v2077
      %v2195 = vpop.f32.mrb[0].mxu0
      %v2196 = vadd.f32 %v1855, %v2195
      %v2197 = vpop.f32.mrb[0].mxu0
      %v2198 = vadd.f32 %v1859, %v2197
      %v2199 = vpop.f32.mrb[0].mxu0
      %v2200 = vpop.f32.mrb[0].mxu0
      %2201 = vdwg.mxu0
      %2202 = vmatprep.subr.bf16.mxu0 %v2019
      %2203 = vmatpush1.bf16.msra.mxu0 %v2018
      %2204 = vmatprep.subr.bf16.mxu0 %v2035
      %2205 = vmatpush1.bf16.msra.mxu0 %v2034
      %2206 = vmatprep.subr.bf16.mxu0 0
      %2207 = vmatpush1.bf16.msra.mxu0 0
      %2208 = vmatprep.subr.bf16.mxu0 0
      %2209 = vmatpush1.bf16.msra.mxu0 0
      %2210 = vmatprep.subr.bf16.mxu0 0
      %2211 = vmatpush1.bf16.msra.mxu0 0
      %2212 = vmatprep.subr.bf16.mxu0 0
      %2213 = vmatpush1.bf16.msra.mxu0 0
      %2214 = vmatprep.subr.bf16.mxu0 0
      %2215 = vmatpush1.bf16.msra.mxu0 0
      %2216 = vmatprep.subr.bf16.mxu0 0
      %2217 = vmatpush1.bf16.msra.mxu0 0
      %2218 = vmatprep.subr.bf16.mxu0 0
      %2219 = vmatpush1.bf16.msra.mxu0 0
      %2220 = vmatprep.subr.bf16.mxu0 0
      %2221 = vmatpush1.bf16.msra.mxu0 0
      %2222 = vmatprep.subr.bf16.mxu0 0
      %2223 = vmatpush1.bf16.msra.mxu0 0
      %2224 = vmatprep.subr.bf16.mxu0 0
      %2225 = vmatpush1.bf16.msra.mxu0 0
      %2226 = vmatprep.subr.bf16.mxu0 0
      %2227 = vmatpush1.bf16.msra.mxu0 0
      %2228 = vmatprep.subr.bf16.mxu0 0
      %2229 = vmatpush1.bf16.msra.mxu0 0
      %2230 = vmatprep.subr.bf16.mxu0 0
      %2231 = vmatpush1.bf16.msra.mxu0 0
      %2232 = vmatprep.subr.bf16.mxu0 0
      %2233 = vmatpush1.bf16.msra.mxu0 0
      %2234 = vmatprep.mubr.bf16.mxu0 0
      %2235 = vmatmul.mubr.bf16.gmra.mrb[0].mxu0 %v2077
      %v2236 = vpop.f32.mrb[0].mxu0
      %v2237 = vadd.f32 %v1863, %v2236
      %v2238 = vpop.f32.mrb[0].mxu0
      %v2239 = vadd.f32 %v1867, %v2238
      %v2240 = vpop.f32.mrb[0].mxu0
      %v2241 = vpop.f32.mrb[0].mxu0
      %2242 = vdwg.mxu0
      %2243 = vmatprep.subr.bf16.mxu0 %v2021
      %2244 = vmatpush1.bf16.msra.mxu0 %v2020
      %2245 = vmatprep.subr.bf16.mxu0 %v2037
      %2246 = vmatpush1.bf16.msra.mxu0 %v2036
      %2247 = vmatprep.subr.bf16.mxu0 0
      %2248 = vmatpush1.bf16.msra.mxu0 0
      %2249 = vmatprep.subr.bf16.mxu0 0
      %2250 = vmatpush1.bf16.msra.mxu0 0
      %2251 = vmatprep.subr.bf16.mxu0 0
      %2252 = vmatpush1.bf16.msra.mxu0 0
      %2253 = vmatprep.subr.bf16.mxu0 0
      %2254 = vmatpush1.bf16.msra.mxu0 0
      %2255 = vmatprep.subr.bf16.mxu0 0
      %2256 = vmatpush1.bf16.msra.mxu0 0
      %2257 = vmatprep.subr.bf16.mxu0 0
      %2258 = vmatpush1.bf16.msra.mxu0 0
      %2259 = vmatprep.subr.bf16.mxu0 0
      %2260 = vmatpush1.bf16.msra.mxu0 0
      %2261 = vmatprep.subr.bf16.mxu0 0
      %2262 = vmatpush1.bf16.msra.mxu0 0
      %2263 = vmatprep.subr.bf16.mxu0 0
      %2264 = vmatpush1.bf16.msra.mxu0 0
      %2265 = vmatprep.subr.bf16.mxu0 0
      %2266 = vmatpush1.bf16.msra.mxu0 0
      %2267 = vmatprep.subr.bf16.mxu0 0
      %2268 = vmatpush1.bf16.msra.mxu0 0
      %2269 = vmatprep.subr.bf16.mxu0 0
      %2270 = vmatpush1.bf16.msra.mxu0 0
      %2271 = vmatprep.subr.bf16.mxu0 0
      %2272 = vmatpush1.bf16.msra.mxu0 0
      %2273 = vmatprep.subr.bf16.mxu0 0
      %2274 = vmatpush1.bf16.msra.mxu0 0
      %2275 = vmatprep.mubr.bf16.mxu0 0
      %2276 = vmatmul.mubr.bf16.gmra.mrb[0].mxu0 %v2077
      %v2277 = vpop.f32.mrb[0].mxu0
      %v2278 = vadd.f32 %v1871, %v2277
      %v2279 = vpop.f32.mrb[0].mxu0
      %v2280 = vadd.f32 %v1875, %v2279
      %v2281 = vpop.f32.mrb[0].mxu0
      %v2282 = vpop.f32.mrb[0].mxu0
      %2283 = vdwg.mxu0
      %2284 = vmatprep.subr.bf16.mxu0 %v2023
      %2285 = vmatpush1.bf16.msra.mxu0 %v2022
      %2286 = vmatprep.subr.bf16.mxu0 %v2039
      %2287 = vmatpush1.bf16.msra.mxu0 %v2038
      %2288 = vmatprep.subr.bf16.mxu0 0
      %2289 = vmatpush1.bf16.msra.mxu0 0
      %2290 = vmatprep.subr.bf16.mxu0 0
      %2291 = vmatpush1.bf16.msra.mxu0 0
      %2292 = vmatprep.subr.bf16.mxu0 0
      %2293 = vmatpush1.bf16.msra.mxu0 0
      %2294 = vmatprep.subr.bf16.mxu0 0
      %2295 = vmatpush1.bf16.msra.mxu0 0
      %2296 = vmatprep.subr.bf16.mxu0 0
      %2297 = vmatpush1.bf16.msra.mxu0 0
      %2298 = vmatprep.subr.bf16.mxu0 0
      %2299 = vmatpush1.bf16.msra.mxu0 0
      %2300 = vmatprep.subr.bf16.mxu0 0
      %2301 = vmatpush1.bf16.msra.mxu0 0
      %2302 = vmatprep.subr.bf16.mxu0 0
      %2303 = vmatpush1.bf16.msra.mxu0 0
      %2304 = vmatprep.subr.bf16.mxu0 0
      %2305 = vmatpush1.bf16.msra.mxu0 0
      %2306 = vmatprep.subr.bf16.mxu0 0
      %2307 = vmatpush1.bf16.msra.mxu0 0
      %2308 = vmatprep.subr.bf16.mxu0 0
      %2309 = vmatpush1.bf16.msra.mxu0 0
      %2310 = vmatprep.subr.bf16.mxu0 0
      %2311 = vmatpush1.bf16.msra.mxu0 0
      %2312 = vmatprep.subr.bf16.mxu0 0
      %2313 = vmatpush1.bf16.msra.mxu0 0
      %2314 = vmatprep.subr.bf16.mxu0 0
      %2315 = vmatpush1.bf16.msra.mxu0 0
      %2316 = vmatprep.mubr.bf16.mxu0 0
      %2317 = vmatmul.mubr.bf16.gmra.mrb[0].mxu0 %v2077
      %v2318 = vpop.f32.mrb[0].mxu0
      %v2319 = vadd.f32 %v1879, %v2318
      %v2320 = vpop.f32.mrb[0].mxu0
      %v2321 = vadd.f32 %v1883, %v2320
      %v2322 = vpop.f32.mrb[0].mxu0
      %v2323 = vpop.f32.mrb[0].mxu0
      %2324 = vdwg.mxu0
      %2325 = vmatprep.subr.bf16.mxu0 %v2025
      %2326 = vmatpush1.bf16.msra.mxu0 %v2024
      %2327 = vmatprep.subr.bf16.mxu0 %v2041
      %2328 = vmatpush1.bf16.msra.mxu0 %v2040
      %2329 = vmatprep.subr.bf16.mxu0 0
      %2330 = vmatpush1.bf16.msra.mxu0 0
      %2331 = vmatprep.subr.bf16.mxu0 0
      %2332 = vmatpush1.bf16.msra.mxu0 0
      %2333 = vmatprep.subr.bf16.mxu0 0
      %2334 = vmatpush1.bf16.msra.mxu0 0
      %2335 = vmatprep.subr.bf16.mxu0 0
      %2336 = vmatpush1.bf16.msra.mxu0 0
      %2337 = vmatprep.subr.bf16.mxu0 0
      %2338 = vmatpush1.bf16.msra.mxu0 0
      %2339 = vmatprep.subr.bf16.mxu0 0
      %2340 = vmatpush1.bf16.msra.mxu0 0
      %2341 = vmatprep.subr.bf16.mxu0 0
      %2342 = vmatpush1.bf16.msra.mxu0 0
      %2343 = vmatprep.subr.bf16.mxu0 0
      %2344 = vmatpush1.bf16.msra.mxu0 0
      %2345 = vmatprep.subr.bf16.mxu0 0
      %2346 = vmatpush1.bf16.msra.mxu0 0
      %2347 = vmatprep.subr.bf16.mxu0 0
      %2348 = vmatpush1.bf16.msra.mxu0 0
      %2349 = vmatprep.subr.bf16.mxu0 0
      %2350 = vmatpush1.bf16.msra.mxu0 0
      %2351 = vmatprep.subr.bf16.mxu0 0
      %2352 = vmatpush1.bf16.msra.mxu0 0
      %2353 = vmatprep.subr.bf16.mxu0 0
      %2354 = vmatpush1.bf16.msra.mxu0 0
      %2355 = vmatprep.subr.bf16.mxu0 0
      %2356 = vmatpush1.bf16.msra.mxu0 0
      %2357 = vmatprep.mubr.bf16.mxu0 0
      %2358 = vmatmul.mubr.bf16.gmra.mrb[0].mxu0 %v2077
      %v2359 = vpop.f32.mrb[0].mxu0
      %v2360 = vadd.f32 %v1887, %v2359
      %v2361 = vpop.f32.mrb[0].mxu0
      %v2362 = vadd.f32 %v1891, %v2361
      %v2363 = vpop.f32.mrb[0].mxu0
      %v2364 = vpop.f32.mrb[0].mxu0
      %2365 = vdwg.mxu0
      %2366 = vmatprep.subr.bf16.mxu0 %v2027
      %2367 = vmatpush1.bf16.msra.mxu0 %v2026
      %2368 = vmatprep.subr.bf16.mxu0 %v2043
      %2369 = vmatpush1.bf16.msra.mxu0 %v2042
      %2370 = vmatprep.subr.bf16.mxu0 0
      %2371 = vmatpush1.bf16.msra.mxu0 0
      %2372 = vmatprep.subr.bf16.mxu0 0
      %2373 = vmatpush1.bf16.msra.mxu0 0
      %2374 = vmatprep.subr.bf16.mxu0 0
      %2375 = vmatpush1.bf16.msra.mxu0 0
      %2376 = vmatprep.subr.bf16.mxu0 0
      %2377 = vmatpush1.bf16.msra.mxu0 0
      %2378 = vmatprep.subr.bf16.mxu0 0
      %2379 = vmatpush1.bf16.msra.mxu0 0
      %2380 = vmatprep.subr.bf16.mxu0 0
      %2381 = vmatpush1.bf16.msra.mxu0 0
      %2382 = vmatprep.subr.bf16.mxu0 0
      %2383 = vmatpush1.bf16.msra.mxu0 0
      %2384 = vmatprep.subr.bf16.mxu0 0
      %2385 = vmatpush1.bf16.msra.mxu0 0
      %2386 = vmatprep.subr.bf16.mxu0 0
      %2387 = vmatpush1.bf16.msra.mxu0 0
      %2388 = vmatprep.subr.bf16.mxu0 0
      %2389 = vmatpush1.bf16.msra.mxu0 0
      %2390 = vmatprep.subr.bf16.mxu0 0
      %2391 = vmatpush1.bf16.msra.mxu0 0
      %2392 = vmatprep.subr.bf16.mxu0 0
      %2393 = vmatpush1.bf16.msra.mxu0 0
      %2394 = vmatprep.subr.bf16.mxu0 0
      %2395 = vmatpush1.bf16.msra.mxu0 0
      %2396 = vmatprep.subr.bf16.mxu0 0
      %2397 = vmatpush1.bf16.msra.mxu0 0
      %2398 = vmatprep.mubr.bf16.mxu0 0
      %2399 = vmatmul.mubr.bf16.gmra.mrb[0].mxu0 %v2077
      %v2400 = vpop.f32.mrb[0].mxu0
      %v2401 = vadd.f32 %v1895, %v2400
      %v2402 = vpop.f32.mrb[0].mxu0
      %v2403 = vadd.f32 %v1899, %v2402
      %v2404 = vpop.f32.mrb[0].mxu0
      %v2405 = vpop.f32.mrb[0].mxu0
      %2406 = vdwg.mxu0
      %v2407 = vmax.f32 %v2114, 0.0
      %v2408 = vmax.f32 %v2116, 0.0
      %v2409 = vmax.f32 %v2155, 0.0
      %v2410 = vmax.f32 %v2157, 0.0
      %v2411 = vmax.f32 %v2196, 0.0
      %v2412 = vmax.f32 %v2198, 0.0
      %v2413 = vmax.f32 %v2237, 0.0
      %v2414 = vmax.f32 %v2239, 0.0
      %v2415 = vmax.f32 %v2278, 0.0
      %v2416 = vmax.f32 %v2280, 0.0
      %v2417 = vmax.f32 %v2319, 0.0
      %v2418 = vmax.f32 %v2321, 0.0
      %v2419 = vmax.f32 %v2360, 0.0
      %v2420 = vmax.f32 %v2362, 0.0
      %v2421 = vmax.f32 %v2401, 0.0
      %v2422 = vmax.f32 %v2403, 0.0
      %v2423 = vpack.c.bf16 %v2407, %v2407
      %v2424 = vpack.c.bf16 %v2408, %v2408
      %v2425 = vpack.c.bf16 %v2409, %v2409
      %v2426 = vpack.c.bf16 %v2410, %v2410
      %v2427 = vpack.c.bf16 %v2411, %v2411
      %v2428 = vpack.c.bf16 %v2412, %v2412
      %v2429 = vpack.c.bf16 %v2413, %v2413
      %v2430 = vpack.c.bf16 %v2414, %v2414
      %v2431 = vpack.c.bf16 %v2415, %v2415
      %v2432 = vpack.c.bf16 %v2416, %v2416
      %v2433 = vpack.c.bf16 %v2417, %v2417
      %v2434 = vpack.c.bf16 %v2418, %v2418
      %v2435 = vpack.c.bf16 %v2419, %v2419
      %v2436 = vpack.c.bf16 %v2420, %v2420
      %v2437 = vpack.c.bf16 %v2421, %v2421
      %v2438 = vpack.c.bf16 %v2422, %v2422
      %v2440 = vlaneseq
      %v2441 = vshrl.u32 %v2440, 7
      %v2442 = vsub.s32 0, %v2441
      %v2443 = vrot.slane %v982, %v2442
      %v2701 = vunpack.c.l.b16 %v726
      %v2702 = vunpack.c.l.b16 %v727
      %v2703 = vunpack.c.l.b16 %v728
      %v2704 = vunpack.c.l.b16 %v729
      %v2705 = vunpack.c.l.b16 %v730
      %v2706 = vunpack.c.l.b16 %v731
      %v2707 = vunpack.c.l.b16 %v732
      %v2708 = vunpack.c.l.b16 %v733
      %v2709 = vunpack.c.l.b16 %v734
      %v2710 = vunpack.c.l.b16 %v735
      %v2711 = vunpack.c.l.b16 %v736
      %v2712 = vunpack.c.l.b16 %v737
      %v2713 = vunpack.c.l.b16 %v738
      %v2714 = vunpack.c.l.b16 %v739
      %v2715 = vunpack.c.l.b16 %v740
      %v2716 = vunpack.c.l.b16 %v741
      %v2717 = vunpack.c.l.b16 %v742
      %v2718 = vunpack.c.l.b16 %v743
      %v2719 = vunpack.c.l.b16 %v744
      %v2720 = vunpack.c.l.b16 %v745
      %v2721 = vunpack.c.l.b16 %v746
      %v2722 = vunpack.c.l.b16 %v747
      %v2723 = vunpack.c.l.b16 %v748
      %v2724 = vunpack.c.l.b16 %v749
      %v2725 = vunpack.c.l.b16 %v750
      %v2726 = vunpack.c.l.b16 %v751
      %v2727 = vunpack.c.l.b16 %v752
      %v2728 = vunpack.c.l.b16 %v753
      %v2729 = vunpack.c.l.b16 %v754
      %v2730 = vunpack.c.l.b16 %v755
      %v2731 = vunpack.c.l.b16 %v756
      %v2732 = vunpack.c.l.b16 %v757
      %v2733 = vunpack.c.l.b16 %v758
      %v2734 = vunpack.c.l.b16 %v759
      %v2735 = vunpack.c.l.b16 %v760
      %v2736 = vunpack.c.l.b16 %v761
      %v2737 = vunpack.c.l.b16 %v762
      %v2738 = vunpack.c.l.b16 %v763
      %v2739 = vunpack.c.l.b16 %v764
      %v2740 = vunpack.c.l.b16 %v765
      %v2741 = vunpack.c.l.b16 %v766
      %v2742 = vunpack.c.l.b16 %v767
      %v2743 = vunpack.c.l.b16 %v768
      %v2744 = vunpack.c.l.b16 %v769
      %v2745 = vunpack.c.l.b16 %v770
      %v2746 = vunpack.c.l.b16 %v771
      %v2747 = vunpack.c.l.b16 %v772
      %v2748 = vunpack.c.l.b16 %v773
      %v2749 = vunpack.c.l.b16 %v774
      %v2750 = vunpack.c.l.b16 %v775
      %v2751 = vunpack.c.l.b16 %v776
      %v2752 = vunpack.c.l.b16 %v777
      %v2753 = vunpack.c.l.b16 %v778
      %v2754 = vunpack.c.l.b16 %v779
      %v2755 = vunpack.c.l.b16 %v780
      %v2756 = vunpack.c.l.b16 %v781
      %v2757 = vunpack.c.l.b16 %v782
      %v2758 = vunpack.c.l.b16 %v783
      %v2759 = vunpack.c.l.b16 %v784
      %v2760 = vunpack.c.l.b16 %v785
      %v2761 = vunpack.c.l.b16 %v786
      %v2762 = vunpack.c.l.b16 %v787
      %v2763 = vunpack.c.l.b16 %v788
      %v2764 = vunpack.c.l.b16 %v789
      %v2765 = vunpack.c.l.b16 %v790
      %v2766 = vunpack.c.l.b16 %v791
      %v2767 = vunpack.c.l.b16 %v792
      %v2768 = vunpack.c.l.b16 %v793
      %v2769 = vunpack.c.l.b16 %v794
      %v2770 = vunpack.c.l.b16 %v795
      %v2771 = vunpack.c.l.b16 %v796
      %v2772 = vunpack.c.l.b16 %v797
      %v2773 = vunpack.c.l.b16 %v798
      %v2774 = vunpack.c.l.b16 %v799
      %v2775 = vunpack.c.l.b16 %v800
      %v2776 = vunpack.c.l.b16 %v801
      %v2777 = vunpack.c.l.b16 %v802
      %v2778 = vunpack.c.l.b16 %v803
      %v2779 = vunpack.c.l.b16 %v804
      %v2780 = vunpack.c.l.b16 %v805
      %v2781 = vunpack.c.l.b16 %v806
      %v2782 = vunpack.c.l.b16 %v807
      %v2783 = vunpack.c.l.b16 %v808
      %v2784 = vunpack.c.l.b16 %v809
      %v2785 = vunpack.c.l.b16 %v810
      %v2786 = vunpack.c.l.b16 %v811
      %v2787 = vunpack.c.l.b16 %v812
      %v2788 = vunpack.c.l.b16 %v813
      %v2789 = vunpack.c.l.b16 %v814
      %v2790 = vunpack.c.l.b16 %v815
      %v2791 = vunpack.c.l.b16 %v816
      %v2792 = vunpack.c.l.b16 %v817
      %v2793 = vunpack.c.l.b16 %v818
      %v2794 = vunpack.c.l.b16 %v819
      %v2795 = vunpack.c.l.b16 %v820
      %v2796 = vunpack.c.l.b16 %v821
      %v2797 = vunpack.c.l.b16 %v822
      %v2798 = vunpack.c.l.b16 %v823
      %v2799 = vunpack.c.l.b16 %v824
      %v2800 = vunpack.c.l.b16 %v825
      %v2801 = vunpack.c.l.b16 %v826
      %v2802 = vunpack.c.l.b16 %v827
      %v2803 = vunpack.c.l.b16 %v828
      %v2804 = vunpack.c.l.b16 %v829
      %v2805 = vunpack.c.l.b16 %v830
      %v2806 = vunpack.c.l.b16 %v831
      %v2807 = vunpack.c.l.b16 %v832
      %v2808 = vunpack.c.l.b16 %v833
      %v2809 = vunpack.c.l.b16 %v834
      %v2810 = vunpack.c.l.b16 %v835
      %v2811 = vunpack.c.l.b16 %v836
      %v2812 = vunpack.c.l.b16 %v837
      %v2813 = vunpack.c.l.b16 %v838
      %v2814 = vunpack.c.l.b16 %v839
      %v2815 = vunpack.c.l.b16 %v840
      %v2816 = vunpack.c.l.b16 %v841
      %v2817 = vunpack.c.l.b16 %v842
      %v2818 = vunpack.c.l.b16 %v843
      %v2819 = vunpack.c.l.b16 %v844
      %v2820 = vunpack.c.l.b16 %v845
      %v2821 = vunpack.c.l.b16 %v846
      %v2822 = vunpack.c.l.b16 %v847
      %v2823 = vunpack.c.l.b16 %v848
      %v2824 = vunpack.c.l.b16 %v849
      %v2825 = vunpack.c.l.b16 %v850
      %v2826 = vunpack.c.l.b16 %v851
      %v2827 = vunpack.c.l.b16 %v852
      %v2828 = vunpack.c.l.b16 %v853
      %v2829 = vunpack.c.l.b16 %v854
      %v2830 = vunpack.c.l.b16 %v855
      %v2831 = vunpack.c.l.b16 %v856
      %v2832 = vunpack.c.l.b16 %v857
      %v2833 = vunpack.c.l.b16 %v858
      %v2834 = vunpack.c.l.b16 %v859
      %v2835 = vunpack.c.l.b16 %v860
      %v2836 = vunpack.c.l.b16 %v861
      %v2837 = vunpack.c.l.b16 %v862
      %v2838 = vunpack.c.l.b16 %v863
      %v2839 = vunpack.c.l.b16 %v864
      %v2840 = vunpack.c.l.b16 %v865
      %v2841 = vunpack.c.l.b16 %v866
      %v2842 = vunpack.c.l.b16 %v867
      %v2843 = vunpack.c.l.b16 %v868
      %v2844 = vunpack.c.l.b16 %v869
      %v2845 = vunpack.c.l.b16 %v870
      %v2846 = vunpack.c.l.b16 %v871
      %v2847 = vunpack.c.l.b16 %v872
      %v2848 = vunpack.c.l.b16 %v873
      %v2849 = vunpack.c.l.b16 %v874
      %v2850 = vunpack.c.l.b16 %v875
      %v2851 = vunpack.c.l.b16 %v876
      %v2852 = vunpack.c.l.b16 %v877
      %v2853 = vunpack.c.l.b16 %v878
      %v2854 = vunpack.c.l.b16 %v879
      %v2855 = vunpack.c.l.b16 %v880
      %v2856 = vunpack.c.l.b16 %v881
      %v2857 = vunpack.c.l.b16 %v882
      %v2858 = vunpack.c.l.b16 %v883
      %v2859 = vunpack.c.l.b16 %v884
      %v2860 = vunpack.c.l.b16 %v885
      %v2861 = vunpack.c.l.b16 %v886
      %v2862 = vunpack.c.l.b16 %v887
      %v2863 = vunpack.c.l.b16 %v888
      %v2864 = vunpack.c.l.b16 %v889
      %v2865 = vunpack.c.l.b16 %v890
      %v2866 = vunpack.c.l.b16 %v891
      %v2867 = vunpack.c.l.b16 %v892
      %v2868 = vunpack.c.l.b16 %v893
      %v2869 = vunpack.c.l.b16 %v894
      %v2870 = vunpack.c.l.b16 %v895
      %v2871 = vunpack.c.l.b16 %v896
      %v2872 = vunpack.c.l.b16 %v897
      %v2873 = vunpack.c.l.b16 %v898
      %v2874 = vunpack.c.l.b16 %v899
      %v2875 = vunpack.c.l.b16 %v900
      %v2876 = vunpack.c.l.b16 %v901
      %v2877 = vunpack.c.l.b16 %v902
      %v2878 = vunpack.c.l.b16 %v903
      %v2879 = vunpack.c.l.b16 %v904
      %v2880 = vunpack.c.l.b16 %v905
      %v2881 = vunpack.c.l.b16 %v906
      %v2882 = vunpack.c.l.b16 %v907
      %v2883 = vunpack.c.l.b16 %v908
      %v2884 = vunpack.c.l.b16 %v909
      %v2885 = vunpack.c.l.b16 %v910
      %v2886 = vunpack.c.l.b16 %v911
      %v2887 = vunpack.c.l.b16 %v912
      %v2888 = vunpack.c.l.b16 %v913
      %v2889 = vunpack.c.l.b16 %v914
      %v2890 = vunpack.c.l.b16 %v915
      %v2891 = vunpack.c.l.b16 %v916
      %v2892 = vunpack.c.l.b16 %v917
      %v2893 = vunpack.c.l.b16 %v918
      %v2894 = vunpack.c.l.b16 %v919
      %v2895 = vunpack.c.l.b16 %v920
      %v2896 = vunpack.c.l.b16 %v921
      %v2897 = vunpack.c.l.b16 %v922
      %v2898 = vunpack.c.l.b16 %v923
      %v2899 = vunpack.c.l.b16 %v924
      %v2900 = vunpack.c.l.b16 %v925
      %v2901 = vunpack.c.l.b16 %v926
      %v2902 = vunpack.c.l.b16 %v927
      %v2903 = vunpack.c.l.b16 %v928
      %v2904 = vunpack.c.l.b16 %v929
      %v2905 = vunpack.c.l.b16 %v930
      %v2906 = vunpack.c.l.b16 %v931
      %v2907 = vunpack.c.l.b16 %v932
      %v2908 = vunpack.c.l.b16 %v933
      %v2909 = vunpack.c.l.b16 %v934
      %v2910 = vunpack.c.l.b16 %v935
      %v2911 = vunpack.c.l.b16 %v936
      %v2912 = vunpack.c.l.b16 %v937
      %v2913 = vunpack.c.l.b16 %v938
      %v2914 = vunpack.c.l.b16 %v939
      %v2915 = vunpack.c.l.b16 %v940
      %v2916 = vunpack.c.l.b16 %v941
      %v2917 = vunpack.c.l.b16 %v942
      %v2918 = vunpack.c.l.b16 %v943
      %v2919 = vunpack.c.l.b16 %v944
      %v2920 = vunpack.c.l.b16 %v945
      %v2921 = vunpack.c.l.b16 %v946
      %v2922 = vunpack.c.l.b16 %v947
      %v2923 = vunpack.c.l.b16 %v948
      %v2924 = vunpack.c.l.b16 %v949
      %v2925 = vunpack.c.l.b16 %v950
      %v2926 = vunpack.c.l.b16 %v951
      %v2927 = vunpack.c.l.b16 %v952
      %v2928 = vunpack.c.l.b16 %v953
      %v2929 = vunpack.c.l.b16 %v954
      %v2930 = vunpack.c.l.b16 %v955
      %v2931 = vunpack.c.l.b16 %v956
      %v2932 = vunpack.c.l.b16 %v957
      %v2933 = vunpack.c.l.b16 %v958
      %v2934 = vunpack.c.l.b16 %v959
      %v2935 = vunpack.c.l.b16 %v960
      %v2936 = vunpack.c.l.b16 %v961
      %v2937 = vunpack.c.l.b16 %v962
      %v2938 = vunpack.c.l.b16 %v963
      %v2939 = vunpack.c.l.b16 %v964
      %v2940 = vunpack.c.l.b16 %v965
      %v2941 = vunpack.c.l.b16 %v966
      %v2942 = vunpack.c.l.b16 %v967
      %v2943 = vunpack.c.l.b16 %v968
      %v2944 = vunpack.c.l.b16 %v969
      %v2945 = vunpack.c.l.b16 %v970
      %v2946 = vunpack.c.l.b16 %v971
      %v2947 = vunpack.c.l.b16 %v972
      %v2948 = vunpack.c.l.b16 %v973
      %v2949 = vunpack.c.l.b16 %v974
      %v2950 = vunpack.c.l.b16 %v975
      %v2951 = vunpack.c.l.b16 %v976
      %v2952 = vunpack.c.l.b16 %v977
      %v2953 = vunpack.c.l.b16 %v978
      %v2954 = vunpack.c.l.b16 %v979
      %v2955 = vunpack.c.l.b16 %v980
      %v2956 = vunpack.c.l.b16 %v981
      %v2957 = vpack.c.b16 %v2702, %v2701
      %v2958 = vpack.c.b16 %v2704, %v2703
      %v2959 = vpack.c.b16 %v2706, %v2705
      %v2960 = vpack.c.b16 %v2708, %v2707
      %v2961 = vpack.c.b16 %v2710, %v2709
      %v2962 = vpack.c.b16 %v2712, %v2711
      %v2963 = vpack.c.b16 %v2714, %v2713
      %v2964 = vpack.c.b16 %v2716, %v2715
      %v2965 = vpack.c.b16 %v2718, %v2717
      %v2966 = vpack.c.b16 %v2720, %v2719
      %v2967 = vpack.c.b16 %v2722, %v2721
      %v2968 = vpack.c.b16 %v2724, %v2723
      %v2969 = vpack.c.b16 %v2726, %v2725
      %v2970 = vpack.c.b16 %v2728, %v2727
      %v2971 = vpack.c.b16 %v2730, %v2729
      %v2972 = vpack.c.b16 %v2732, %v2731
      %v2973 = vpack.c.b16 %v2734, %v2733
      %v2974 = vpack.c.b16 %v2736, %v2735
      %v2975 = vpack.c.b16 %v2738, %v2737
      %v2976 = vpack.c.b16 %v2740, %v2739
      %v2977 = vpack.c.b16 %v2742, %v2741
      %v2978 = vpack.c.b16 %v2744, %v2743
      %v2979 = vpack.c.b16 %v2746, %v2745
      %v2980 = vpack.c.b16 %v2748, %v2747
      %v2981 = vpack.c.b16 %v2750, %v2749
      %v2982 = vpack.c.b16 %v2752, %v2751
      %v2983 = vpack.c.b16 %v2754, %v2753
      %v2984 = vpack.c.b16 %v2756, %v2755
      %v2985 = vpack.c.b16 %v2758, %v2757
      %v2986 = vpack.c.b16 %v2760, %v2759
      %v2987 = vpack.c.b16 %v2762, %v2761
      %v2988 = vpack.c.b16 %v2764, %v2763
      %v2989 = vpack.c.b16 %v2766, %v2765
      %v2990 = vpack.c.b16 %v2768, %v2767
      %v2991 = vpack.c.b16 %v2770, %v2769
      %v2992 = vpack.c.b16 %v2772, %v2771
      %v2993 = vpack.c.b16 %v2774, %v2773
      %v2994 = vpack.c.b16 %v2776, %v2775
      %v2995 = vpack.c.b16 %v2778, %v2777
      %v2996 = vpack.c.b16 %v2780, %v2779
      %v2997 = vpack.c.b16 %v2782, %v2781
      %v2998 = vpack.c.b16 %v2784, %v2783
      %v2999 = vpack.c.b16 %v2786, %v2785
      %v3000 = vpack.c.b16 %v2788, %v2787
      %v3001 = vpack.c.b16 %v2790, %v2789
      %v3002 = vpack.c.b16 %v2792, %v2791
      %v3003 = vpack.c.b16 %v2794, %v2793
      %v3004 = vpack.c.b16 %v2796, %v2795
      %v3005 = vpack.c.b16 %v2798, %v2797
      %v3006 = vpack.c.b16 %v2800, %v2799
      %v3007 = vpack.c.b16 %v2802, %v2801
      %v3008 = vpack.c.b16 %v2804, %v2803
      %v3009 = vpack.c.b16 %v2806, %v2805
      %v3010 = vpack.c.b16 %v2808, %v2807
      %v3011 = vpack.c.b16 %v2810, %v2809
      %v3012 = vpack.c.b16 %v2812, %v2811
      %v3013 = vpack.c.b16 %v2814, %v2813
      %v3014 = vpack.c.b16 %v2816, %v2815
      %v3015 = vpack.c.b16 %v2818, %v2817
      %v3016 = vpack.c.b16 %v2820, %v2819
      %v3017 = vpack.c.b16 %v2822, %v2821
      %v3018 = vpack.c.b16 %v2824, %v2823
      %v3019 = vpack.c.b16 %v2826, %v2825
      %v3020 = vpack.c.b16 %v2828, %v2827
      %v3021 = vpack.c.b16 %v2830, %v2829
      %v3022 = vpack.c.b16 %v2832, %v2831
      %v3023 = vpack.c.b16 %v2834, %v2833
      %v3024 = vpack.c.b16 %v2836, %v2835
      %v3025 = vpack.c.b16 %v2838, %v2837
      %v3026 = vpack.c.b16 %v2840, %v2839
      %v3027 = vpack.c.b16 %v2842, %v2841
      %v3028 = vpack.c.b16 %v2844, %v2843
      %v3029 = vpack.c.b16 %v2846, %v2845
      %v3030 = vpack.c.b16 %v2848, %v2847
      %v3031 = vpack.c.b16 %v2850, %v2849
      %v3032 = vpack.c.b16 %v2852, %v2851
      %v3033 = vpack.c.b16 %v2854, %v2853
      %v3034 = vpack.c.b16 %v2856, %v2855
      %v3035 = vpack.c.b16 %v2858, %v2857
      %v3036 = vpack.c.b16 %v2860, %v2859
      %v3037 = vpack.c.b16 %v2862, %v2861
      %v3038 = vpack.c.b16 %v2864, %v2863
      %v3039 = vpack.c.b16 %v2866, %v2865
      %v3040 = vpack.c.b16 %v2868, %v2867
      %v3041 = vpack.c.b16 %v2870, %v2869
      %v3042 = vpack.c.b16 %v2872, %v2871
      %v3043 = vpack.c.b16 %v2874, %v2873
      %v3044 = vpack.c.b16 %v2876, %v2875
      %v3045 = vpack.c.b16 %v2878, %v2877
      %v3046 = vpack.c.b16 %v2880, %v2879
      %v3047 = vpack.c.b16 %v2882, %v2881
      %v3048 = vpack.c.b16 %v2884, %v2883
      %v3049 = vpack.c.b16 %v2886, %v2885
      %v3050 = vpack.c.b16 %v2888, %v2887
      %v3051 = vpack.c.b16 %v2890, %v2889
      %v3052 = vpack.c.b16 %v2892, %v2891
      %v3053 = vpack.c.b16 %v2894, %v2893
      %v3054 = vpack.c.b16 %v2896, %v2895
      %v3055 = vpack.c.b16 %v2898, %v2897
      %v3056 = vpack.c.b16 %v2900, %v2899
      %v3057 = vpack.c.b16 %v2902, %v2901
      %v3058 = vpack.c.b16 %v2904, %v2903
      %v3059 = vpack.c.b16 %v2906, %v2905
      %v3060 = vpack.c.b16 %v2908, %v2907
      %v3061 = vpack.c.b16 %v2910, %v2909
      %v3062 = vpack.c.b16 %v2912, %v2911
      %v3063 = vpack.c.b16 %v2914, %v2913
      %v3064 = vpack.c.b16 %v2916, %v2915
      %v3065 = vpack.c.b16 %v2918, %v2917
      %v3066 = vpack.c.b16 %v2920, %v2919
      %v3067 = vpack.c.b16 %v2922, %v2921
      %v3068 = vpack.c.b16 %v2924, %v2923
      %v3069 = vpack.c.b16 %v2926, %v2925
      %v3070 = vpack.c.b16 %v2928, %v2927
      %v3071 = vpack.c.b16 %v2930, %v2929
      %v3072 = vpack.c.b16 %v2932, %v2931
      %v3073 = vpack.c.b16 %v2934, %v2933
      %v3074 = vpack.c.b16 %v2936, %v2935
      %v3075 = vpack.c.b16 %v2938, %v2937
      %v3076 = vpack.c.b16 %v2940, %v2939
      %v3077 = vpack.c.b16 %v2942, %v2941
      %v3078 = vpack.c.b16 %v2944, %v2943
      %v3079 = vpack.c.b16 %v2946, %v2945
      %v3080 = vpack.c.b16 %v2948, %v2947
      %v3081 = vpack.c.b16 %v2950, %v2949
      %v3082 = vpack.c.b16 %v2952, %v2951
      %v3083 = vpack.c.b16 %v2954, %v2953
      %v3084 = vpack.c.b16 %v2956, %v2955
      %3213 = vmatprep.subr.bf16.mxu0 0
      %3214 = vmatpush1.bf16.msra.mxu0 %v2957
      %3215 = vmatprep.subr.bf16.mxu0 0
      %3216 = vmatpush1.bf16.msra.mxu0 %v2958
      %3217 = vmatprep.subr.bf16.mxu0 0
      %3218 = vmatpush1.bf16.msra.mxu0 %v2959
      %3219 = vmatprep.subr.bf16.mxu0 0
      %3220 = vmatpush1.bf16.msra.mxu0 %v2960
      %3221 = vmatprep.subr.bf16.mxu0 0
      %3222 = vmatpush1.bf16.msra.mxu0 %v2961
      %3223 = vmatprep.subr.bf16.mxu0 0
      %3224 = vmatpush1.bf16.msra.mxu0 %v2962
      %3225 = vmatprep.subr.bf16.mxu0 0
      %3226 = vmatpush1.bf16.msra.mxu0 %v2963
      %3227 = vmatprep.subr.bf16.mxu0 0
      %3228 = vmatpush1.bf16.msra.mxu0 %v2964
      %3229 = vmatprep.subr.bf16.mxu0 0
      %3230 = vmatpush1.bf16.msra.mxu0 %v2965
      %3231 = vmatprep.subr.bf16.mxu0 0
      %3232 = vmatpush1.bf16.msra.mxu0 %v2966
      %3233 = vmatprep.subr.bf16.mxu0 0
      %3234 = vmatpush1.bf16.msra.mxu0 %v2967
      %3235 = vmatprep.subr.bf16.mxu0 0
      %3236 = vmatpush1.bf16.msra.mxu0 %v2968
      %3237 = vmatprep.subr.bf16.mxu0 0
      %3238 = vmatpush1.bf16.msra.mxu0 %v2969
      %3239 = vmatprep.subr.bf16.mxu0 0
      %3240 = vmatpush1.bf16.msra.mxu0 %v2970
      %3241 = vmatprep.subr.bf16.mxu0 0
      %3242 = vmatpush1.bf16.msra.mxu0 %v2971
      %3243 = vmatprep.subr.bf16.mxu0 0
      %3244 = vmatpush1.bf16.msra.mxu0 %v2972
      %3245 = vmatprep.mubr.bf16.mxu0 %v2424
      %3246 = vmatmul.mubr.bf16.gmra.mrb[0].mxu0 %v2423
      %v3247 = vpop.f32.mrb[0].mxu0
      %v3248 = vadd.f32 %v2443, %v3247
      %v3249 = vpop.f32.mrb[0].mxu0
      %v3250 = vpop.f32.mrb[0].mxu0
      %v3251 = vpop.f32.mrb[0].mxu0
      %3252 = vdwg.mxu0
      %3253 = vmatprep.subr.bf16.mxu0 0
      %3254 = vmatpush1.bf16.msra.mxu0 %v2973
      %3255 = vmatprep.subr.bf16.mxu0 0
      %3256 = vmatpush1.bf16.msra.mxu0 %v2974
      %3257 = vmatprep.subr.bf16.mxu0 0
      %3258 = vmatpush1.bf16.msra.mxu0 %v2975
      %3259 = vmatprep.subr.bf16.mxu0 0
      %3260 = vmatpush1.bf16.msra.mxu0 %v2976
      %3261 = vmatprep.subr.bf16.mxu0 0
      %3262 = vmatpush1.bf16.msra.mxu0 %v2977
      %3263 = vmatprep.subr.bf16.mxu0 0
      %3264 = vmatpush1.bf16.msra.mxu0 %v2978
      %3265 = vmatprep.subr.bf16.mxu0 0
      %3266 = vmatpush1.bf16.msra.mxu0 %v2979
      %3267 = vmatprep.subr.bf16.mxu0 0
      %3268 = vmatpush1.bf16.msra.mxu0 %v2980
      %3269 = vmatprep.subr.bf16.mxu0 0
      %3270 = vmatpush1.bf16.msra.mxu0 %v2981
      %3271 = vmatprep.subr.bf16.mxu0 0
      %3272 = vmatpush1.bf16.msra.mxu0 %v2982
      %3273 = vmatprep.subr.bf16.mxu0 0
      %3274 = vmatpush1.bf16.msra.mxu0 %v2983
      %3275 = vmatprep.subr.bf16.mxu0 0
      %3276 = vmatpush1.bf16.msra.mxu0 %v2984
      %3277 = vmatprep.subr.bf16.mxu0 0
      %3278 = vmatpush1.bf16.msra.mxu0 %v2985
      %3279 = vmatprep.subr.bf16.mxu0 0
      %3280 = vmatpush1.bf16.msra.mxu0 %v2986
      %3281 = vmatprep.subr.bf16.mxu0 0
      %3282 = vmatpush1.bf16.msra.mxu0 %v2987
      %3283 = vmatprep.subr.bf16.mxu0 0
      %3284 = vmatpush1.bf16.msra.mxu0 %v2988
      %3285 = vmatprep.mubr.bf16.mxu0 %v2426
      %3286 = vmatmul.mubr.bf16.gmra.mrb[0].mxu0 %v2425
      %v3287 = vpop.f32.mrb[0].mxu0
      %v3288 = vadd.f32 %v3248, %v3287
      %v3289 = vpop.f32.mrb[0].mxu0
      %v3290 = vpop.f32.mrb[0].mxu0
      %v3291 = vpop.f32.mrb[0].mxu0
      %3292 = vdwg.mxu0
      %3293 = vmatprep.subr.bf16.mxu0 0
      %3294 = vmatpush1.bf16.msra.mxu0 %v2989
      %3295 = vmatprep.subr.bf16.mxu0 0
      %3296 = vmatpush1.bf16.msra.mxu0 %v2990
      %3297 = vmatprep.subr.bf16.mxu0 0
      %3298 = vmatpush1.bf16.msra.mxu0 %v2991
      %3299 = vmatprep.subr.bf16.mxu0 0
      %3300 = vmatpush1.bf16.msra.mxu0 %v2992
      %3301 = vmatprep.subr.bf16.mxu0 0
      %3302 = vmatpush1.bf16.msra.mxu0 %v2993
      %3303 = vmatprep.subr.bf16.mxu0 0
      %3304 = vmatpush1.bf16.msra.mxu0 %v2994
      %3305 = vmatprep.subr.bf16.mxu0 0
      %3306 = vmatpush1.bf16.msra.mxu0 %v2995
      %3307 = vmatprep.subr.bf16.mxu0 0
      %3308 = vmatpush1.bf16.msra.mxu0 %v2996
      %3309 = vmatprep.subr.bf16.mxu0 0
      %3310 = vmatpush1.bf16.msra.mxu0 %v2997
      %3311 = vmatprep.subr.bf16.mxu0 0
      %3312 = vmatpush1.bf16.msra.mxu0 %v2998
      %3313 = vmatprep.subr.bf16.mxu0 0
      %3314 = vmatpush1.bf16.msra.mxu0 %v2999
      %3315 = vmatprep.subr.bf16.mxu0 0
      %3316 = vmatpush1.bf16.msra.mxu0 %v3000
      %3317 = vmatprep.subr.bf16.mxu0 0
      %3318 = vmatpush1.bf16.msra.mxu0 %v3001
      %3319 = vmatprep.subr.bf16.mxu0 0
      %3320 = vmatpush1.bf16.msra.mxu0 %v3002
      %3321 = vmatprep.subr.bf16.mxu0 0
      %3322 = vmatpush1.bf16.msra.mxu0 %v3003
      %3323 = vmatprep.subr.bf16.mxu0 0
      %3324 = vmatpush1.bf16.msra.mxu0 %v3004
      %3325 = vmatprep.mubr.bf16.mxu0 %v2428
      %3326 = vmatmul.mubr.bf16.gmra.mrb[0].mxu0 %v2427
      %v3327 = vpop.f32.mrb[0].mxu0
      %v3328 = vadd.f32 %v3288, %v3327
      %v3329 = vpop.f32.mrb[0].mxu0
      %v3330 = vpop.f32.mrb[0].mxu0
      %v3331 = vpop.f32.mrb[0].mxu0
      %3332 = vdwg.mxu0
      %3333 = vmatprep.subr.bf16.mxu0 0
      %3334 = vmatpush1.bf16.msra.mxu0 %v3005
      %3335 = vmatprep.subr.bf16.mxu0 0
      %3336 = vmatpush1.bf16.msra.mxu0 %v3006
      %3337 = vmatprep.subr.bf16.mxu0 0
      %3338 = vmatpush1.bf16.msra.mxu0 %v3007
      %3339 = vmatprep.subr.bf16.mxu0 0
      %3340 = vmatpush1.bf16.msra.mxu0 %v3008
      %3341 = vmatprep.subr.bf16.mxu0 0
      %3342 = vmatpush1.bf16.msra.mxu0 %v3009
      %3343 = vmatprep.subr.bf16.mxu0 0
      %3344 = vmatpush1.bf16.msra.mxu0 %v3010
      %3345 = vmatprep.subr.bf16.mxu0 0
      %3346 = vmatpush1.bf16.msra.mxu0 %v3011
      %3347 = vmatprep.subr.bf16.mxu0 0
      %3348 = vmatpush1.bf16.msra.mxu0 %v3012
      %3349 = vmatprep.subr.bf16.mxu0 0
      %3350 = vmatpush1.bf16.msra.mxu0 %v3013
      %3351 = vmatprep.subr.bf16.mxu0 0
      %3352 = vmatpush1.bf16.msra.mxu0 %v3014
      %3353 = vmatprep.subr.bf16.mxu0 0
      %3354 = vmatpush1.bf16.msra.mxu0 %v3015
      %3355 = vmatprep.subr.bf16.mxu0 0
      %3356 = vmatpush1.bf16.msra.mxu0 %v3016
      %3357 = vmatprep.subr.bf16.mxu0 0
      %3358 = vmatpush1.bf16.msra.mxu0 %v3017
      %3359 = vmatprep.subr.bf16.mxu0 0
      %3360 = vmatpush1.bf16.msra.mxu0 %v3018
      %3361 = vmatprep.subr.bf16.mxu0 0
      %3362 = vmatpush1.bf16.msra.mxu0 %v3019
      %3363 = vmatprep.subr.bf16.mxu0 0
      %3364 = vmatpush1.bf16.msra.mxu0 %v3020
      %3365 = vmatprep.mubr.bf16.mxu0 %v2430
      %3366 = vmatmul.mubr.bf16.gmra.mrb[0].mxu0 %v2429
      %v3367 = vpop.f32.mrb[0].mxu0
      %v3368 = vadd.f32 %v3328, %v3367
      %v3369 = vpop.f32.mrb[0].mxu0
      %v3370 = vpop.f32.mrb[0].mxu0
      %v3371 = vpop.f32.mrb[0].mxu0
      %3372 = vdwg.mxu0
      %3373 = vmatprep.subr.bf16.mxu0 0
      %3374 = vmatpush1.bf16.msra.mxu0 %v3021
      %3375 = vmatprep.subr.bf16.mxu0 0
      %3376 = vmatpush1.bf16.msra.mxu0 %v3022
      %3377 = vmatprep.subr.bf16.mxu0 0
      %3378 = vmatpush1.bf16.msra.mxu0 %v3023
      %3379 = vmatprep.subr.bf16.mxu0 0
      %3380 = vmatpush1.bf16.msra.mxu0 %v3024
      %3381 = vmatprep.subr.bf16.mxu0 0
      %3382 = vmatpush1.bf16.msra.mxu0 %v3025
      %3383 = vmatprep.subr.bf16.mxu0 0
      %3384 = vmatpush1.bf16.msra.mxu0 %v3026
      %3385 = vmatprep.subr.bf16.mxu0 0
      %3386 = vmatpush1.bf16.msra.mxu0 %v3027
      %3387 = vmatprep.subr.bf16.mxu0 0
      %3388 = vmatpush1.bf16.msra.mxu0 %v3028
      %3389 = vmatprep.subr.bf16.mxu0 0
      %3390 = vmatpush1.bf16.msra.mxu0 %v3029
      %3391 = vmatprep.subr.bf16.mxu0 0
      %3392 = vmatpush1.bf16.msra.mxu0 %v3030
      %3393 = vmatprep.subr.bf16.mxu0 0
      %3394 = vmatpush1.bf16.msra.mxu0 %v3031
      %3395 = vmatprep.subr.bf16.mxu0 0
      %3396 = vmatpush1.bf16.msra.mxu0 %v3032
      %3397 = vmatprep.subr.bf16.mxu0 0
      %3398 = vmatpush1.bf16.msra.mxu0 %v3033
      %3399 = vmatprep.subr.bf16.mxu0 0
      %3400 = vmatpush1.bf16.msra.mxu0 %v3034
      %3401 = vmatprep.subr.bf16.mxu0 0
      %3402 = vmatpush1.bf16.msra.mxu0 %v3035
      %3403 = vmatprep.subr.bf16.mxu0 0
      %3404 = vmatpush1.bf16.msra.mxu0 %v3036
      %3405 = vmatprep.mubr.bf16.mxu0 %v2432
      %3406 = vmatmul.mubr.bf16.gmra.mrb[0].mxu0 %v2431
      %v3407 = vpop.f32.mrb[0].mxu0
      %v3408 = vadd.f32 %v3368, %v3407
      %v3409 = vpop.f32.mrb[0].mxu0
      %v3410 = vpop.f32.mrb[0].mxu0
      %v3411 = vpop.f32.mrb[0].mxu0
      %3412 = vdwg.mxu0
      %3413 = vmatprep.subr.bf16.mxu0 0
      %3414 = vmatpush1.bf16.msra.mxu0 %v3037
      %3415 = vmatprep.subr.bf16.mxu0 0
      %3416 = vmatpush1.bf16.msra.mxu0 %v3038
      %3417 = vmatprep.subr.bf16.mxu0 0
      %3418 = vmatpush1.bf16.msra.mxu0 %v3039
      %3419 = vmatprep.subr.bf16.mxu0 0
      %3420 = vmatpush1.bf16.msra.mxu0 %v3040
      %3421 = vmatprep.subr.bf16.mxu0 0
      %3422 = vmatpush1.bf16.msra.mxu0 %v3041
      %3423 = vmatprep.subr.bf16.mxu0 0
      %3424 = vmatpush1.bf16.msra.mxu0 %v3042
      %3425 = vmatprep.subr.bf16.mxu0 0
      %3426 = vmatpush1.bf16.msra.mxu0 %v3043
      %3427 = vmatprep.subr.bf16.mxu0 0
      %3428 = vmatpush1.bf16.msra.mxu0 %v3044
      %3429 = vmatprep.subr.bf16.mxu0 0
      %3430 = vmatpush1.bf16.msra.mxu0 %v3045
      %3431 = vmatprep.subr.bf16.mxu0 0
      %3432 = vmatpush1.bf16.msra.mxu0 %v3046
      %3433 = vmatprep.subr.bf16.mxu0 0
      %3434 = vmatpush1.bf16.msra.mxu0 %v3047
      %3435 = vmatprep.subr.bf16.mxu0 0
      %3436 = vmatpush1.bf16.msra.mxu0 %v3048
      %3437 = vmatprep.subr.bf16.mxu0 0
      %3438 = vmatpush1.bf16.msra.mxu0 %v3049
      %3439 = vmatprep.subr.bf16.mxu0 0
      %3440 = vmatpush1.bf16.msra.mxu0 %v3050
      %3441 = vmatprep.subr.bf16.mxu0 0
      %3442 = vmatpush1.bf16.msra.mxu0 %v3051
      %3443 = vmatprep.subr.bf16.mxu0 0
      %3444 = vmatpush1.bf16.msra.mxu0 %v3052
      %3445 = vmatprep.mubr.bf16.mxu0 %v2434
      %3446 = vmatmul.mubr.bf16.gmra.mrb[0].mxu0 %v2433
      %v3447 = vpop.f32.mrb[0].mxu0
      %v3448 = vadd.f32 %v3408, %v3447
      %v3449 = vpop.f32.mrb[0].mxu0
      %v3450 = vpop.f32.mrb[0].mxu0
      %v3451 = vpop.f32.mrb[0].mxu0
      %3452 = vdwg.mxu0
      %3453 = vmatprep.subr.bf16.mxu0 0
      %3454 = vmatpush1.bf16.msra.mxu0 %v3053
      %3455 = vmatprep.subr.bf16.mxu0 0
      %3456 = vmatpush1.bf16.msra.mxu0 %v3054
      %3457 = vmatprep.subr.bf16.mxu0 0
      %3458 = vmatpush1.bf16.msra.mxu0 %v3055
      %3459 = vmatprep.subr.bf16.mxu0 0
      %3460 = vmatpush1.bf16.msra.mxu0 %v3056
      %3461 = vmatprep.subr.bf16.mxu0 0
      %3462 = vmatpush1.bf16.msra.mxu0 %v3057
      %3463 = vmatprep.subr.bf16.mxu0 0
      %3464 = vmatpush1.bf16.msra.mxu0 %v3058
      %3465 = vmatprep.subr.bf16.mxu0 0
      %3466 = vmatpush1.bf16.msra.mxu0 %v3059
      %3467 = vmatprep.subr.bf16.mxu0 0
      %3468 = vmatpush1.bf16.msra.mxu0 %v3060
      %3469 = vmatprep.subr.bf16.mxu0 0
      %3470 = vmatpush1.bf16.msra.mxu0 %v3061
      %3471 = vmatprep.subr.bf16.mxu0 0
      %3472 = vmatpush1.bf16.msra.mxu0 %v3062
      %3473 = vmatprep.subr.bf16.mxu0 0
      %3474 = vmatpush1.bf16.msra.mxu0 %v3063
      %3475 = vmatprep.subr.bf16.mxu0 0
      %3476 = vmatpush1.bf16.msra.mxu0 %v3064
      %3477 = vmatprep.subr.bf16.mxu0 0
      %3478 = vmatpush1.bf16.msra.mxu0 %v3065
      %3479 = vmatprep.subr.bf16.mxu0 0
      %3480 = vmatpush1.bf16.msra.mxu0 %v3066
      %3481 = vmatprep.subr.bf16.mxu0 0
      %3482 = vmatpush1.bf16.msra.mxu0 %v3067
      %3483 = vmatprep.subr.bf16.mxu0 0
      %3484 = vmatpush1.bf16.msra.mxu0 %v3068
      %3485 = vmatprep.mubr.bf16.mxu0 %v2436
      %3486 = vmatmul.mubr.bf16.gmra.mrb[0].mxu0 %v2435
      %v3487 = vpop.f32.mrb[0].mxu0
      %v3488 = vadd.f32 %v3448, %v3487
      %v3489 = vpop.f32.mrb[0].mxu0
      %v3490 = vpop.f32.mrb[0].mxu0
      %v3491 = vpop.f32.mrb[0].mxu0
      %3492 = vdwg.mxu0
      %3493 = vmatprep.subr.bf16.mxu0 0
      %3494 = vmatpush1.bf16.msra.mxu0 %v3069
      %3495 = vmatprep.subr.bf16.mxu0 0
      %3496 = vmatpush1.bf16.msra.mxu0 %v3070
      %3497 = vmatprep.subr.bf16.mxu0 0
      %3498 = vmatpush1.bf16.msra.mxu0 %v3071
      %3499 = vmatprep.subr.bf16.mxu0 0
      %3500 = vmatpush1.bf16.msra.mxu0 %v3072
      %3501 = vmatprep.subr.bf16.mxu0 0
      %3502 = vmatpush1.bf16.msra.mxu0 %v3073
      %3503 = vmatprep.subr.bf16.mxu0 0
      %3504 = vmatpush1.bf16.msra.mxu0 %v3074
      %3505 = vmatprep.subr.bf16.mxu0 0
      %3506 = vmatpush1.bf16.msra.mxu0 %v3075
      %3507 = vmatprep.subr.bf16.mxu0 0
      %3508 = vmatpush1.bf16.msra.mxu0 %v3076
      %3509 = vmatprep.subr.bf16.mxu0 0
      %3510 = vmatpush1.bf16.msra.mxu0 %v3077
      %3511 = vmatprep.subr.bf16.mxu0 0
      %3512 = vmatpush1.bf16.msra.mxu0 %v3078
      %3513 = vmatprep.subr.bf16.mxu0 0
      %3514 = vmatpush1.bf16.msra.mxu0 %v3079
      %3515 = vmatprep.subr.bf16.mxu0 0
      %3516 = vmatpush1.bf16.msra.mxu0 %v3080
      %3517 = vmatprep.subr.bf16.mxu0 0
      %3518 = vmatpush1.bf16.msra.mxu0 %v3081
      %3519 = vmatprep.subr.bf16.mxu0 0
      %3520 = vmatpush1.bf16.msra.mxu0 %v3082
      %3521 = vmatprep.subr.bf16.mxu0 0
      %3522 = vmatpush1.bf16.msra.mxu0 %v3083
      %3523 = vmatprep.subr.bf16.mxu0 0
      %3524 = vmatpush1.bf16.msra.mxu0 %v3084
      %3525 = vmatprep.mubr.bf16.mxu0 %v2438
      %3526 = vmatmul.mubr.bf16.gmra.mrb[0].mxu0 %v2437
      %v3527 = vpop.f32.mrb[0].mxu0
      %v3528 = vadd.f32 %v3488, %v3527
      %v3529 = vpop.f32.mrb[0].mxu0
      %v3530 = vpop.f32.mrb[0].mxu0
      %v3531 = vpop.f32.mrb[0].mxu0
      %3532 = vdwg.mxu0
      %v3533 = vadd.f32 %v1832, %v3528
      %v3534 = vsel %vm1004, %v3533, 0.0
      %3535 = vadd.xlane.f32.xlu0 %v3534
      %v3536 = vpop.xlane.xlu0 %3535
      %v3537 = vmul.f32 %v3536, %v1808
      %v3538 = vsub.f32 %v3533, %v3537
      %v3539 = vmul.f32 %v3538, %v3538
      %v3540 = vsel %vm1004, %v3539, 0.0
      %3541 = vadd.xlane.f32.xlu0 %v3540
      %v3542 = vpop.xlane.xlu0 %3541
      %v3543 = vmul.f32 %v3542, %v1808
      %v3544 = vadd.f32 %v3543, 1e-05
      %v3545 = vrsqrt.pop %v3544
      %v3546 = vmul.f32 %v3538, %v3545
      %v3548 = vlaneseq
      %v3549 = vshrl.u32 %v3548, 7
      %v3550 = vsub.s32 0, %v3549
      %v3551 = vrot.slane %v983, %v3550
      %v3553 = vmul.f32 %v3546, %v3551
      %v3555 = vlaneseq
      %v3556 = vshrl.u32 %v3555, 7
      %v3557 = vsub.s32 0, %v3556
      %v3558 = vrot.slane %v984, %v3557
      %v3560 = vadd.f32 %v3553, %v3558
      %s3561 = scalar_lea.vmem %s4, 16
      %v3562 = vld [vmem:[%s3561] sm:$0xf]
      %v3563 = vld [vmem:[%s3561 + $0x4] sm:$0xf]
      %v3564 = vld [vmem:[%s3561 + $0x8] sm:$0xf]
      %v3565 = vld [vmem:[%s3561 + $0xc] sm:$0xf]
      %s3566 = scalar_lea.vmem %s5, 1
      %v3567 = vld [vmem:[%s3566] sm:$0x1]
      %s3568 = scalar_lea.vmem %s6, 32
      %v3569 = vld [vmem:[%s3568] sm:$0xff]
      %v3570 = vld [vmem:[%s3568 + $0x8] sm:$0xff]
      %v3571 = vld [vmem:[%s3568 + $0x10] sm:$0xff]
      %v3572 = vld [vmem:[%s3568 + $0x18] sm:$0xff]
      %s3573 = scalar_lea.vmem %s7, 1
      %v3574 = vld [vmem:[%s3573] sm:$0x1]
      %s3575 = scalar_lea.vmem %s8, 1
      %v3576 = vld [vmem:[%s3575] sm:$0x1]
      %s3577 = scalar_lea.vmem %s9, 1
      %v3578 = vld [vmem:[%s3577] sm:$0x1]
      %s3579 = scalar_lea.vmem %s10, 256
      %v3580 = vld [vmem:[%s3579] sm:$0xff]
      %v3581 = vld [vmem:[%s3579 + $0x8] sm:$0xff]
      %v3582 = vld [vmem:[%s3579 + $0x10] sm:$0xff]
      %v3583 = vld [vmem:[%s3579 + $0x18] sm:$0xff]
      %v3584 = vld [vmem:[%s3579 + $0x20] sm:$0xff]
      %v3585 = vld [vmem:[%s3579 + $0x28] sm:$0xff]
      %v3586 = vld [vmem:[%s3579 + $0x30] sm:$0xff]
      %v3587 = vld [vmem:[%s3579 + $0x38] sm:$0xff]
      %v3588 = vld [vmem:[%s3579 + $0x40] sm:$0xff]
      %v3589 = vld [vmem:[%s3579 + $0x48] sm:$0xff]
      %v3590 = vld [vmem:[%s3579 + $0x50] sm:$0xff]
      %v3591 = vld [vmem:[%s3579 + $0x58] sm:$0xff]
      %v3592 = vld [vmem:[%s3579 + $0x60] sm:$0xff]
      %v3593 = vld [vmem:[%s3579 + $0x68] sm:$0xff]
      %v3594 = vld [vmem:[%s3579 + $0x70] sm:$0xff]
      %v3595 = vld [vmem:[%s3579 + $0x78] sm:$0xff]
      %v3596 = vld [vmem:[%s3579 + $0x80] sm:$0xff]
      %v3597 = vld [vmem:[%s3579 + $0x88] sm:$0xff]
      %v3598 = vld [vmem:[%s3579 + $0x90] sm:$0xff]
      %v3599 = vld [vmem:[%s3579 + $0x98] sm:$0xff]
      %v3600 = vld [vmem:[%s3579 + $0xa0] sm:$0xff]
      %v3601 = vld [vmem:[%s3579 + $0xa8] sm:$0xff]
      %v3602 = vld [vmem:[%s3579 + $0xb0] sm:$0xff]
      %v3603 = vld [vmem:[%s3579 + $0xb8] sm:$0xff]
      %v3604 = vld [vmem:[%s3579 + $0xc0] sm:$0xff]
      %v3605 = vld [vmem:[%s3579 + $0xc8] sm:$0xff]
      %v3606 = vld [vmem:[%s3579 + $0xd0] sm:$0xff]
      %v3607 = vld [vmem:[%s3579 + $0xd8] sm:$0xff]
      %v3608 = vld [vmem:[%s3579 + $0xe0] sm:$0xff]
      %v3609 = vld [vmem:[%s3579 + $0xe8] sm:$0xff]
      %v3610 = vld [vmem:[%s3579 + $0xf0] sm:$0xff]
      %v3611 = vld [vmem:[%s3579 + $0xf8] sm:$0xff]
      %s3612 = scalar_lea.vmem %s11, 16
      %v3613 = vld [vmem:[%s3612] sm:$0xff]
      %v3614 = vld [vmem:[%s3612 + $0x8] sm:$0xff]
      %s3615 = scalar_lea.vmem %s12, 1024
      %v3616 = vld [vmem:[%s3615] sm:$0xf]
      %v3617 = vld [vmem:[%s3615 + $0x4] sm:$0xf]
      %v3618 = vld [vmem:[%s3615 + $0x8] sm:$0xf]
      %v3619 = vld [vmem:[%s3615 + $0xc] sm:$0xf]
      %v3620 = vld [vmem:[%s3615 + $0x10] sm:$0xf]
      %v3621 = vld [vmem:[%s3615 + $0x14] sm:$0xf]
      %v3622 = vld [vmem:[%s3615 + $0x18] sm:$0xf]
      %v3623 = vld [vmem:[%s3615 + $0x1c] sm:$0xf]
      %v3624 = vld [vmem:[%s3615 + $0x20] sm:$0xf]
      %v3625 = vld [vmem:[%s3615 + $0x24] sm:$0xf]
      %v3626 = vld [vmem:[%s3615 + $0x28] sm:$0xf]
      %v3627 = vld [vmem:[%s3615 + $0x2c] sm:$0xf]
      %v3628 = vld [vmem:[%s3615 + $0x30] sm:$0xf]
      %v3629 = vld [vmem:[%s3615 + $0x34] sm:$0xf]
      %v3630 = vld [vmem:[%s3615 + $0x38] sm:$0xf]
      %v3631 = vld [vmem:[%s3615 + $0x3c] sm:$0xf]
      %v3632 = vld [vmem:[%s3615 + $0x40] sm:$0xf]
      %v3633 = vld [vmem:[%s3615 + $0x44] sm:$0xf]
      %v3634 = vld [vmem:[%s3615 + $0x48] sm:$0xf]
      %v3635 = vld [vmem:[%s3615 + $0x4c] sm:$0xf]
      %v3636 = vld [vmem:[%s3615 + $0x50] sm:$0xf]
      %v3637 = vld [vmem:[%s3615 + $0x54] sm:$0xf]
      %v3638 = vld [vmem:[%s3615 + $0x58] sm:$0xf]
      %v3639 = vld [vmem:[%s3615 + $0x5c] sm:$0xf]
      %v3640 = vld [vmem:[%s3615 + $0x60] sm:$0xf]
      %v3641 = vld [vmem:[%s3615 + $0x64] sm:$0xf]
      %v3642 = vld [vmem:[%s3615 + $0x68] sm:$0xf]
      %v3643 = vld [vmem:[%s3615 + $0x6c] sm:$0xf]
      %v3644 = vld [vmem:[%s3615 + $0x70] sm:$0xf]
      %v3645 = vld [vmem:[%s3615 + $0x74] sm:$0xf]
      %v3646 = vld [vmem:[%s3615 + $0x78] sm:$0xf]
      %v3647 = vld [vmem:[%s3615 + $0x7c] sm:$0xf]
      %v3648 = vld [vmem:[%s3615 + $0x80] sm:$0xf]
      %v3649 = vld [vmem:[%s3615 + $0x84] sm:$0xf]
      %v3650 = vld [vmem:[%s3615 + $0x88] sm:$0xf]
      %v3651 = vld [vmem:[%s3615 + $0x8c] sm:$0xf]
      %v3652 = vld [vmem:[%s3615 + $0x90] sm:$0xf]
      %v3653 = vld [vmem:[%s3615 + $0x94] sm:$0xf]
      %v3654 = vld [vmem:[%s3615 + $0x98] sm:$0xf]
      %v3655 = vld [vmem:[%s3615 + $0x9c] sm:$0xf]
      %v3656 = vld [vmem:[%s3615 + $0xa0] sm:$0xf]
      %v3657 = vld [vmem:[%s3615 + $0xa4] sm:$0xf]
      %v3658 = vld [vmem:[%s3615 + $0xa8] sm:$0xf]
      %v3659 = vld [vmem:[%s3615 + $0xac] sm:$0xf]
      %v3660 = vld [vmem:[%s3615 + $0xb0] sm:$0xf]
      %v3661 = vld [vmem:[%s3615 + $0xb4] sm:$0xf]
      %v3662 = vld [vmem:[%s3615 + $0xb8] sm:$0xf]
      %v3663 = vld [vmem:[%s3615 + $0xbc] sm:$0xf]
      %v3664 = vld [vmem:[%s3615 + $0xc0] sm:$0xf]
      %v3665 = vld [vmem:[%s3615 + $0xc4] sm:$0xf]
      %v3666 = vld [vmem:[%s3615 + $0xc8] sm:$0xf]
      %v3667 = vld [vmem:[%s3615 + $0xcc] sm:$0xf]
      %v3668 = vld [vmem:[%s3615 + $0xd0] sm:$0xf]
      %v3669 = vld [vmem:[%s3615 + $0xd4] sm:$0xf]
      %v3670 = vld [vmem:[%s3615 + $0xd8] sm:$0xf]
      %v3671 = vld [vmem:[%s3615 + $0xdc] sm:$0xf]
      %v3672 = vld [vmem:[%s3615 + $0xe0] sm:$0xf]
      %v3673 = vld [vmem:[%s3615 + $0xe4] sm:$0xf]
      %v3674 = vld [vmem:[%s3615 + $0xe8] sm:$0xf]
      %v3675 = vld [vmem:[%s3615 + $0xec] sm:$0xf]
      %v3676 = vld [vmem:[%s3615 + $0xf0] sm:$0xf]
      %v3677 = vld [vmem:[%s3615 + $0xf4] sm:$0xf]
      %v3678 = vld [vmem:[%s3615 + $0xf8] sm:$0xf]
      %v3679 = vld [vmem:[%s3615 + $0xfc] sm:$0xf]
      %v3680 = vld [vmem:[%s3615 + $0x100] sm:$0xf]
      %v3681 = vld [vmem:[%s3615 + $0x104] sm:$0xf]
      %v3682 = vld [vmem:[%s3615 + $0x108] sm:$0xf]
      %v3683 = vld [vmem:[%s3615 + $0x10c] sm:$0xf]
      %v3684 = vld [vmem:[%s3615 + $0x110] sm:$0xf]
      %v3685 = vld [vmem:[%s3615 + $0x114] sm:$0xf]
      %v3686 = vld [vmem:[%s3615 + $0x118] sm:$0xf]
      %v3687 = vld [vmem:[%s3615 + $0x11c] sm:$0xf]
      %v3688 = vld [vmem:[%s3615 + $0x120] sm:$0xf]
      %v3689 = vld [vmem:[%s3615 + $0x124] sm:$0xf]
      %v3690 = vld [vmem:[%s3615 + $0x128] sm:$0xf]
      %v3691 = vld [vmem:[%s3615 + $0x12c] sm:$0xf]
      %v3692 = vld [vmem:[%s3615 + $0x130] sm:$0xf]
      %v3693 = vld [vmem:[%s3615 + $0x134] sm:$0xf]
      %v3694 = vld [vmem:[%s3615 + $0x138] sm:$0xf]
      %v3695 = vld [vmem:[%s3615 + $0x13c] sm:$0xf]
      %v3696 = vld [vmem:[%s3615 + $0x140] sm:$0xf]
      %v3697 = vld [vmem:[%s3615 + $0x144] sm:$0xf]
      %v3698 = vld [vmem:[%s3615 + $0x148] sm:$0xf]
      %v3699 = vld [vmem:[%s3615 + $0x14c] sm:$0xf]
      %v3700 = vld [vmem:[%s3615 + $0x150] sm:$0xf]
      %v3701 = vld [vmem:[%s3615 + $0x154] sm:$0xf]
      %v3702 = vld [vmem:[%s3615 + $0x158] sm:$0xf]
      %v3703 = vld [vmem:[%s3615 + $0x15c] sm:$0xf]
      %v3704 = vld [vmem:[%s3615 + $0x160] sm:$0xf]
      %v3705 = vld [vmem:[%s3615 + $0x164] sm:$0xf]
      %v3706 = vld [vmem:[%s3615 + $0x168] sm:$0xf]
      %v3707 = vld [vmem:[%s3615 + $0x16c] sm:$0xf]
      %v3708 = vld [vmem:[%s3615 + $0x170] sm:$0xf]
      %v3709 = vld [vmem:[%s3615 + $0x174] sm:$0xf]
      %v3710 = vld [vmem:[%s3615 + $0x178] sm:$0xf]
      %v3711 = vld [vmem:[%s3615 + $0x17c] sm:$0xf]
      %v3712 = vld [vmem:[%s3615 + $0x180] sm:$0xf]
      %v3713 = vld [vmem:[%s3615 + $0x184] sm:$0xf]
      %v3714 = vld [vmem:[%s3615 + $0x188] sm:$0xf]
      %v3715 = vld [vmem:[%s3615 + $0x18c] sm:$0xf]
      %v3716 = vld [vmem:[%s3615 + $0x190] sm:$0xf]
      %v3717 = vld [vmem:[%s3615 + $0x194] sm:$0xf]
      %v3718 = vld [vmem:[%s3615 + $0x198] sm:$0xf]
      %v3719 = vld [vmem:[%s3615 + $0x19c] sm:$0xf]
      %v3720 = vld [vmem:[%s3615 + $0x1a0] sm:$0xf]
      %v3721 = vld [vmem:[%s3615 + $0x1a4] sm:$0xf]
      %v3722 = vld [vmem:[%s3615 + $0x1a8] sm:$0xf]
      %v3723 = vld [vmem:[%s3615 + $0x1ac] sm:$0xf]
      %v3724 = vld [vmem:[%s3615 + $0x1b0] sm:$0xf]
      %v3725 = vld [vmem:[%s3615 + $0x1b4] sm:$0xf]
      %v3726 = vld [vmem:[%s3615 + $0x1b8] sm:$0xf]
      %v3727 = vld [vmem:[%s3615 + $0x1bc] sm:$0xf]
      %v3728 = vld [vmem:[%s3615 + $0x1c0] sm:$0xf]
      %v3729 = vld [vmem:[%s3615 + $0x1c4] sm:$0xf]
      %v3730 = vld [vmem:[%s3615 + $0x1c8] sm:$0xf]
      %v3731 = vld [vmem:[%s3615 + $0x1cc] sm:$0xf]
      %v3732 = vld [vmem:[%s3615 + $0x1d0] sm:$0xf]
      %v3733 = vld [vmem:[%s3615 + $0x1d4] sm:$0xf]
      %v3734 = vld [vmem:[%s3615 + $0x1d8] sm:$0xf]
      %v3735 = vld [vmem:[%s3615 + $0x1dc] sm:$0xf]
      %v3736 = vld [vmem:[%s3615 + $0x1e0] sm:$0xf]
      %v3737 = vld [vmem:[%s3615 + $0x1e4] sm:$0xf]
      %v3738 = vld [vmem:[%s3615 + $0x1e8] sm:$0xf]
      %v3739 = vld [vmem:[%s3615 + $0x1ec] sm:$0xf]
      %v3740 = vld [vmem:[%s3615 + $0x1f0] sm:$0xf]
      %v3741 = vld [vmem:[%s3615 + $0x1f4] sm:$0xf]
      %v3742 = vld [vmem:[%s3615 + $0x1f8] sm:$0xf]
      %v3743 = vld [vmem:[%s3615 + $0x1fc] sm:$0xf]
      %v3744 = vld [vmem:[%s3615 + $0x200] sm:$0xf]
      %v3745 = vld [vmem:[%s3615 + $0x204] sm:$0xf]
      %v3746 = vld [vmem:[%s3615 + $0x208] sm:$0xf]
      %v3747 = vld [vmem:[%s3615 + $0x20c] sm:$0xf]
      %v3748 = vld [vmem:[%s3615 + $0x210] sm:$0xf]
      %v3749 = vld [vmem:[%s3615 + $0x214] sm:$0xf]
      %v3750 = vld [vmem:[%s3615 + $0x218] sm:$0xf]
      %v3751 = vld [vmem:[%s3615 + $0x21c] sm:$0xf]
      %v3752 = vld [vmem:[%s3615 + $0x220] sm:$0xf]
      %v3753 = vld [vmem:[%s3615 + $0x224] sm:$0xf]
      %v3754 = vld [vmem:[%s3615 + $0x228] sm:$0xf]
      %v3755 = vld [vmem:[%s3615 + $0x22c] sm:$0xf]
      %v3756 = vld [vmem:[%s3615 + $0x230] sm:$0xf]
      %v3757 = vld [vmem:[%s3615 + $0x234] sm:$0xf]
      %v3758 = vld [vmem:[%s3615 + $0x238] sm:$0xf]
      %v3759 = vld [vmem:[%s3615 + $0x23c] sm:$0xf]
      %v3760 = vld [vmem:[%s3615 + $0x240] sm:$0xf]
      %v3761 = vld [vmem:[%s3615 + $0x244] sm:$0xf]
      %v3762 = vld [vmem:[%s3615 + $0x248] sm:$0xf]
      %v3763 = vld [vmem:[%s3615 + $0x24c] sm:$0xf]
      %v3764 = vld [vmem:[%s3615 + $0x250] sm:$0xf]
      %v3765 = vld [vmem:[%s3615 + $0x254] sm:$0xf]
      %v3766 = vld [vmem:[%s3615 + $0x258] sm:$0xf]
      %v3767 = vld [vmem:[%s3615 + $0x25c] sm:$0xf]
      %v3768 = vld [vmem:[%s3615 + $0x260] sm:$0xf]
      %v3769 = vld [vmem:[%s3615 + $0x264] sm:$0xf]
      %v3770 = vld [vmem:[%s3615 + $0x268] sm:$0xf]
      %v3771 = vld [vmem:[%s3615 + $0x26c] sm:$0xf]
      %v3772 = vld [vmem:[%s3615 + $0x270] sm:$0xf]
      %v3773 = vld [vmem:[%s3615 + $0x274] sm:$0xf]
      %v3774 = vld [vmem:[%s3615 + $0x278] sm:$0xf]
      %v3775 = vld [vmem:[%s3615 + $0x27c] sm:$0xf]
      %v3776 = vld [vmem:[%s3615 + $0x280] sm:$0xf]
      %v3777 = vld [vmem:[%s3615 + $0x284] sm:$0xf]
      %v3778 = vld [vmem:[%s3615 + $0x288] sm:$0xf]
      %v3779 = vld [vmem:[%s3615 + $0x28c] sm:$0xf]
      %v3780 = vld [vmem:[%s3615 + $0x290] sm:$0xf]
      %v3781 = vld [vmem:[%s3615 + $0x294] sm:$0xf]
      %v3782 = vld [vmem:[%s3615 + $0x298] sm:$0xf]
      %v3783 = vld [vmem:[%s3615 + $0x29c] sm:$0xf]
      %v3784 = vld [vmem:[%s3615 + $0x2a0] sm:$0xf]
      %v3785 = vld [vmem:[%s3615 + $0x2a4] sm:$0xf]
      %v3786 = vld [vmem:[%s3615 + $0x2a8] sm:$0xf]
      %v3787 = vld [vmem:[%s3615 + $0x2ac] sm:$0xf]
      %v3788 = vld [vmem:[%s3615 + $0x2b0] sm:$0xf]
      %v3789 = vld [vmem:[%s3615 + $0x2b4] sm:$0xf]
      %v3790 = vld [vmem:[%s3615 + $0x2b8] sm:$0xf]
      %v3791 = vld [vmem:[%s3615 + $0x2bc] sm:$0xf]
      %v3792 = vld [vmem:[%s3615 + $0x2c0] sm:$0xf]
      %v3793 = vld [vmem:[%s3615 + $0x2c4] sm:$0xf]
      %v3794 = vld [vmem:[%s3615 + $0x2c8] sm:$0xf]
      %v3795 = vld [vmem:[%s3615 + $0x2cc] sm:$0xf]
      %v3796 = vld [vmem:[%s3615 + $0x2d0] sm:$0xf]
      %v3797 = vld [vmem:[%s3615 + $0x2d4] sm:$0xf]
      %v3798 = vld [vmem:[%s3615 + $0x2d8] sm:$0xf]
      %v3799 = vld [vmem:[%s3615 + $0x2dc] sm:$0xf]
      %v3800 = vld [vmem:[%s3615 + $0x2e0] sm:$0xf]
      %v3801 = vld [vmem:[%s3615 + $0x2e4] sm:$0xf]
      %v3802 = vld [vmem:[%s3615 + $0x2e8] sm:$0xf]
      %v3803 = vld [vmem:[%s3615 + $0x2ec] sm:$0xf]
      %v3804 = vld [vmem:[%s3615 + $0x2f0] sm:$0xf]
      %v3805 = vld [vmem:[%s3615 + $0x2f4] sm:$0xf]
      %v3806 = vld [vmem:[%s3615 + $0x2f8] sm:$0xf]
      %v3807 = vld [vmem:[%s3615 + $0x2fc] sm:$0xf]
      %v3808 = vld [vmem:[%s3615 + $0x300] sm:$0xf]
      %v3809 = vld [vmem:[%s3615 + $0x304] sm:$0xf]
      %v3810 = vld [vmem:[%s3615 + $0x308] sm:$0xf]
      %v3811 = vld [vmem:[%s3615 + $0x30c] sm:$0xf]
      %v3812 = vld [vmem:[%s3615 + $0x310] sm:$0xf]
      %v3813 = vld [vmem:[%s3615 + $0x314] sm:$0xf]
      %v3814 = vld [vmem:[%s3615 + $0x318] sm:$0xf]
      %v3815 = vld [vmem:[%s3615 + $0x31c] sm:$0xf]
      %v3816 = vld [vmem:[%s3615 + $0x320] sm:$0xf]
      %v3817 = vld [vmem:[%s3615 + $0x324] sm:$0xf]
      %v3818 = vld [vmem:[%s3615 + $0x328] sm:$0xf]
      %v3819 = vld [vmem:[%s3615 + $0x32c] sm:$0xf]
      %v3820 = vld [vmem:[%s3615 + $0x330] sm:$0xf]
      %v3821 = vld [vmem:[%s3615 + $0x334] sm:$0xf]
      %v3822 = vld [vmem:[%s3615 + $0x338] sm:$0xf]
      %v3823 = vld [vmem:[%s3615 + $0x33c] sm:$0xf]
      %v3824 = vld [vmem:[%s3615 + $0x340] sm:$0xf]
      %v3825 = vld [vmem:[%s3615 + $0x344] sm:$0xf]
      %v3826 = vld [vmem:[%s3615 + $0x348] sm:$0xf]
      %v3827 = vld [vmem:[%s3615 + $0x34c] sm:$0xf]
      %v3828 = vld [vmem:[%s3615 + $0x350] sm:$0xf]
      %v3829 = vld [vmem:[%s3615 + $0x354] sm:$0xf]
      %v3830 = vld [vmem:[%s3615 + $0x358] sm:$0xf]
      %v3831 = vld [vmem:[%s3615 + $0x35c] sm:$0xf]
      %v3832 = vld [vmem:[%s3615 + $0x360] sm:$0xf]
      %v3833 = vld [vmem:[%s3615 + $0x364] sm:$0xf]
      %v3834 = vld [vmem:[%s3615 + $0x368] sm:$0xf]
      %v3835 = vld [vmem:[%s3615 + $0x36c] sm:$0xf]
      %v3836 = vld [vmem:[%s3615 + $0x370] sm:$0xf]
      %v3837 = vld [vmem:[%s3615 + $0x374] sm:$0xf]
      %v3838 = vld [vmem:[%s3615 + $0x378] sm:$0xf]
      %v3839 = vld [vmem:[%s3615 + $0x37c] sm:$0xf]
      %v3840 = vld [vmem:[%s3615 + $0x380] sm:$0xf]
      %v3841 = vld [vmem:[%s3615 + $0x384] sm:$0xf]
      %v3842 = vld [vmem:[%s3615 + $0x388] sm:$0xf]
      %v3843 = vld [vmem:[%s3615 + $0x38c] sm:$0xf]
      %v3844 = vld [vmem:[%s3615 + $0x390] sm:$0xf]
      %v3845 = vld [vmem:[%s3615 + $0x394] sm:$0xf]
      %v3846 = vld [vmem:[%s3615 + $0x398] sm:$0xf]
      %v3847 = vld [vmem:[%s3615 + $0x39c] sm:$0xf]
      %v3848 = vld [vmem:[%s3615 + $0x3a0] sm:$0xf]
      %v3849 = vld [vmem:[%s3615 + $0x3a4] sm:$0xf]
      %v3850 = vld [vmem:[%s3615 + $0x3a8] sm:$0xf]
      %v3851 = vld [vmem:[%s3615 + $0x3ac] sm:$0xf]
      %v3852 = vld [vmem:[%s3615 + $0x3b0] sm:$0xf]
      %v3853 = vld [vmem:[%s3615 + $0x3b4] sm:$0xf]
      %v3854 = vld [vmem:[%s3615 + $0x3b8] sm:$0xf]
      %v3855 = vld [vmem:[%s3615 + $0x3bc] sm:$0xf]
      %v3856 = vld [vmem:[%s3615 + $0x3c0] sm:$0xf]
      %v3857 = vld [vmem:[%s3615 + $0x3c4] sm:$0xf]
      %v3858 = vld [vmem:[%s3615 + $0x3c8] sm:$0xf]
      %v3859 = vld [vmem:[%s3615 + $0x3cc] sm:$0xf]
      %v3860 = vld [vmem:[%s3615 + $0x3d0] sm:$0xf]
      %v3861 = vld [vmem:[%s3615 + $0x3d4] sm:$0xf]
      %v3862 = vld [vmem:[%s3615 + $0x3d8] sm:$0xf]
      %v3863 = vld [vmem:[%s3615 + $0x3dc] sm:$0xf]
      %v3864 = vld [vmem:[%s3615 + $0x3e0] sm:$0xf]
      %v3865 = vld [vmem:[%s3615 + $0x3e4] sm:$0xf]
      %v3866 = vld [vmem:[%s3615 + $0x3e8] sm:$0xf]
      %v3867 = vld [vmem:[%s3615 + $0x3ec] sm:$0xf]
      %v3868 = vld [vmem:[%s3615 + $0x3f0] sm:$0xf]
      %v3869 = vld [vmem:[%s3615 + $0x3f4] sm:$0xf]
      %v3870 = vld [vmem:[%s3615 + $0x3f8] sm:$0xf]
      %v3871 = vld [vmem:[%s3615 + $0x3fc] sm:$0xf]
      %s3872 = scalar_lea.vmem %s13, 1
      %v3873 = vld [vmem:[%s3872] sm:$0x1]
      %s3874 = scalar_lea.vmem %s14, 1
      %v3875 = vld [vmem:[%s3874] sm:$0x1]
      %s3876 = scalar_lea.vmem %s15, 1
      %v3877 = vld [vmem:[%s3876] sm:$0x1]
      %v3878 = vpack.c.bf16 %v3560, %v3560
      %v3880 = vlaneseq
      %v3881 = vshrl.u32 %v3880, 7
      %v3882 = vsub.s32 0, %v3881
      %v3883 = vrot.slane %v3567, %v3882
      %v3889 = vunpack.c.l.b16 %v3562
      %v3890 = vunpack.c.l.b16 %v3563
      %v3891 = vunpack.c.l.b16 %v3564
      %v3892 = vunpack.c.l.b16 %v3565
      %v3893 = vpack.c.b16 %v3890, %v3889
      %v3894 = vpack.c.b16 %v3892, %v3891
      %v3898 = vsel %vm1004, %v3878, 0
      %3900 = vmatprep.subr.bf16.mxu0 0
      %3901 = vmatpush1.bf16.msra.mxu0 %v3893
      %3902 = vmatprep.subr.bf16.mxu0 0
      %3903 = vmatpush1.bf16.msra.mxu0 %v3894
      %3904 = vmatprep.subr.bf16.mxu0 0
      %3905 = vmatpush1.bf16.msra.mxu0 0
      %3906 = vmatprep.subr.bf16.mxu0 0
      %3907 = vmatpush1.bf16.msra.mxu0 0
      %3908 = vmatprep.subr.bf16.mxu0 0
      %3909 = vmatpush1.bf16.msra.mxu0 0
      %3910 = vmatprep.subr.bf16.mxu0 0
      %3911 = vmatpush1.bf16.msra.mxu0 0
      %3912 = vmatprep.subr.bf16.mxu0 0
      %3913 = vmatpush1.bf16.msra.mxu0 0
      %3914 = vmatprep.subr.bf16.mxu0 0
      %3915 = vmatpush1.bf16.msra.mxu0 0
      %3916 = vmatprep.subr.bf16.mxu0 0
      %3917 = vmatpush1.bf16.msra.mxu0 0
      %3918 = vmatprep.subr.bf16.mxu0 0
      %3919 = vmatpush1.bf16.msra.mxu0 0
      %3920 = vmatprep.subr.bf16.mxu0 0
      %3921 = vmatpush1.bf16.msra.mxu0 0
      %3922 = vmatprep.subr.bf16.mxu0 0
      %3923 = vmatpush1.bf16.msra.mxu0 0
      %3924 = vmatprep.subr.bf16.mxu0 0
      %3925 = vmatpush1.bf16.msra.mxu0 0
      %3926 = vmatprep.subr.bf16.mxu0 0
      %3927 = vmatpush1.bf16.msra.mxu0 0
      %3928 = vmatprep.subr.bf16.mxu0 0
      %3929 = vmatpush1.bf16.msra.mxu0 0
      %3930 = vmatprep.subr.bf16.mxu0 0
      %3931 = vmatpush1.bf16.msra.mxu0 0
      %3932 = vmatprep.mubr.bf16.mxu0 0
      %3933 = vmatmul.mubr.bf16.gmra.mrb[0].mxu0 %v3898
      %v3934 = vpop.f32.mrb[0].mxu0
      %v3935 = vadd.f32 %v3883, %v3934
      %v3936 = vpop.f32.mrb[0].mxu0
      %v3937 = vpop.f32.mrb[0].mxu0
      %v3938 = vpop.f32.mrb[0].mxu0
      %3939 = vdwg.mxu0
      %3941 = vrot.lane.b32.xlu0 %v3935, 120
      %v3942 = vpop.permute.xlu0 %3941
      %3943 = vrot.lane.b32.xlu0 %v3935, 112
      %v3944 = vpop.permute.xlu0 %3943
      %3945 = vrot.lane.b32.xlu0 %v3935, 104
      %v3946 = vpop.permute.xlu0 %3945
      %3947 = vrot.lane.b32.xlu0 %v3935, 96
      %v3948 = vpop.permute.xlu0 %3947
      %v3949 = vsel %vm1057, %v3935, 0
      %v3951 = vsel %vm1057, %v3948, 0
      %3953 = vmatprep.subr.mxu0 0.0
      %3954 = vmatpush1.xpose.msra.mxu0 %v3951
      %3955 = vmatprep.subr.mxu0 0.0
      %3956 = vmatpush1.xpose.msra.mxu0 0.0
      %3957 = vmatprep.subr.mxu0 0.0
      %3958 = vmatpush1.xpose.msra.mxu0 0.0
      %3959 = vmatprep.subr.mxu0 0.0
      %3960 = vmatpush1.xpose.msra.mxu0 0.0
      %3961 = vmatprep.subr.mxu0 0.0
      %3962 = vmatpush1.xpose.msra.mxu0 0.0
      %3963 = vmatprep.subr.mxu0 0.0
      %3964 = vmatpush1.xpose.msra.mxu0 0.0
      %3965 = vmatprep.subr.mxu0 0.0
      %3966 = vmatpush1.xpose.msra.mxu0 0.0
      %3967 = vmatprep.subr.mxu0 0.0
      %3968 = vmatpush1.xpose.msra.mxu0 0.0
      %3969 = vmatprep.subr.mxu0 0.0
      %3970 = vmatpush1.xpose.msra.mxu0 0.0
      %3971 = vmatprep.subr.mxu0 0.0
      %3972 = vmatpush1.xpose.msra.mxu0 0.0
      %3973 = vmatprep.subr.mxu0 0.0
      %3974 = vmatpush1.xpose.msra.mxu0 0.0
      %3975 = vmatprep.subr.mxu0 0.0
      %3976 = vmatpush1.xpose.msra.mxu0 0.0
      %3977 = vmatprep.subr.mxu0 0.0
      %3978 = vmatpush1.xpose.msra.mxu0 0.0
      %3979 = vmatprep.subr.mxu0 0.0
      %3980 = vmatpush1.xpose.msra.mxu0 0.0
      %3981 = vmatprep.subr.mxu0 0.0
      %3982 = vmatpush1.xpose.msra.mxu0 0.0
      %3983 = vmatprep.subr.mxu0 0.0
      %3984 = vmatpush1.xpose.msra.mxu0 0.0
      %3985 = vmatprep.subr.mxu0 0.0
      %3986 = vmatpush1.xpose.msra.mxu0 0.0
      %3987 = vmatprep.subr.mxu0 0.0
      %3988 = vmatpush1.xpose.msra.mxu0 0.0
      %3989 = vmatprep.subr.mxu0 0.0
      %3990 = vmatpush1.xpose.msra.mxu0 0.0
      %3991 = vmatprep.subr.mxu0 0.0
      %3992 = vmatpush1.xpose.msra.mxu0 0.0
      %3993 = vmatprep.subr.mxu0 0.0
      %3994 = vmatpush1.xpose.msra.mxu0 0.0
      %3995 = vmatprep.subr.mxu0 0.0
      %3996 = vmatpush1.xpose.msra.mxu0 0.0
      %3997 = vmatprep.subr.mxu0 0.0
      %3998 = vmatpush1.xpose.msra.mxu0 0.0
      %3999 = vmatprep.subr.mxu0 0.0
      %4000 = vmatpush1.xpose.msra.mxu0 0.0
      %4001 = vmatprep.subr.mxu0 0.0
      %4002 = vmatpush1.xpose.msra.mxu0 0.0
      %4003 = vmatprep.subr.mxu0 0.0
      %4004 = vmatpush1.xpose.msra.mxu0 0.0
      %4005 = vmatprep.subr.mxu0 0.0
      %4006 = vmatpush1.xpose.msra.mxu0 0.0
      %4007 = vmatprep.subr.mxu0 0.0
      %4008 = vmatpush1.xpose.msra.mxu0 0.0
      %4009 = vmatprep.subr.mxu0 0.0
      %4010 = vmatpush1.xpose.msra.mxu0 0.0
      %4011 = vmatprep.subr.mxu0 0.0
      %4012 = vmatpush1.xpose.msra.mxu0 0.0
      %4013 = vmatprep.subr.mxu0 0.0
      %4014 = vmatpush1.xpose.msra.mxu0 0.0
      %4015 = vmatprep.subr.mxu0 0.0
      %4016 = vmatpush1.xpose.msra.mxu0 0.0
      %4017 = vmatprep.mubr.f32.mxu0 0.0
      %4018 = vmatmul.mubr.f32.gmra.mrb[0].mxu0 %v3949
      %v4019 = vpop.f32.mrb[0].mxu0
      %v4020 = vadd.f32 0.0, %v4019
      %v4021 = vpop.f32.mrb[0].mxu0
      %4022 = vdwg.mxu0
      %4023 = vrot.lane.b32.xlu0 %v3942, 96
      %v4024 = vpop.permute.xlu0 %4023
      %v4025 = vsel %vm1057, %v3942, 0
      %v4027 = vsel %vm1057, %v4024, 0
      %4029 = vmatprep.subr.mxu0 0.0
      %4030 = vmatpush1.xpose.msra.mxu0 %v4027
      %4031 = vmatprep.subr.mxu0 0.0
      %4032 = vmatpush1.xpose.msra.mxu0 0.0
      %4033 = vmatprep.subr.mxu0 0.0
      %4034 = vmatpush1.xpose.msra.mxu0 0.0
      %4035 = vmatprep.subr.mxu0 0.0
      %4036 = vmatpush1.xpose.msra.mxu0 0.0
      %4037 = vmatprep.subr.mxu0 0.0
      %4038 = vmatpush1.xpose.msra.mxu0 0.0
      %4039 = vmatprep.subr.mxu0 0.0
      %4040 = vmatpush1.xpose.msra.mxu0 0.0
      %4041 = vmatprep.subr.mxu0 0.0
      %4042 = vmatpush1.xpose.msra.mxu0 0.0
      %4043 = vmatprep.subr.mxu0 0.0
      %4044 = vmatpush1.xpose.msra.mxu0 0.0
      %4045 = vmatprep.subr.mxu0 0.0
      %4046 = vmatpush1.xpose.msra.mxu0 0.0
      %4047 = vmatprep.subr.mxu0 0.0
      %4048 = vmatpush1.xpose.msra.mxu0 0.0
      %4049 = vmatprep.subr.mxu0 0.0
      %4050 = vmatpush1.xpose.msra.mxu0 0.0
      %4051 = vmatprep.subr.mxu0 0.0
      %4052 = vmatpush1.xpose.msra.mxu0 0.0
      %4053 = vmatprep.subr.mxu0 0.0
      %4054 = vmatpush1.xpose.msra.mxu0 0.0
      %4055 = vmatprep.subr.mxu0 0.0
      %4056 = vmatpush1.xpose.msra.mxu0 0.0
      %4057 = vmatprep.subr.mxu0 0.0
      %4058 = vmatpush1.xpose.msra.mxu0 0.0
      %4059 = vmatprep.subr.mxu0 0.0
      %4060 = vmatpush1.xpose.msra.mxu0 0.0
      %4061 = vmatprep.subr.mxu0 0.0
      %4062 = vmatpush1.xpose.msra.mxu0 0.0
      %4063 = vmatprep.subr.mxu0 0.0
      %4064 = vmatpush1.xpose.msra.mxu0 0.0
      %4065 = vmatprep.subr.mxu0 0.0
      %4066 = vmatpush1.xpose.msra.mxu0 0.0
      %4067 = vmatprep.subr.mxu0 0.0
      %4068 = vmatpush1.xpose.msra.mxu0 0.0
      %4069 = vmatprep.subr.mxu0 0.0
      %4070 = vmatpush1.xpose.msra.mxu0 0.0
      %4071 = vmatprep.subr.mxu0 0.0
      %4072 = vmatpush1.xpose.msra.mxu0 0.0
      %4073 = vmatprep.subr.mxu0 0.0
      %4074 = vmatpush1.xpose.msra.mxu0 0.0
      %4075 = vmatprep.subr.mxu0 0.0
      %4076 = vmatpush1.xpose.msra.mxu0 0.0
      %4077 = vmatprep.subr.mxu0 0.0
      %4078 = vmatpush1.xpose.msra.mxu0 0.0
      %4079 = vmatprep.subr.mxu0 0.0
      %4080 = vmatpush1.xpose.msra.mxu0 0.0
      %4081 = vmatprep.subr.mxu0 0.0
      %4082 = vmatpush1.xpose.msra.mxu0 0.0
      %4083 = vmatprep.subr.mxu0 0.0
      %4084 = vmatpush1.xpose.msra.mxu0 0.0
      %4085 = vmatprep.subr.mxu0 0.0
      %4086 = vmatpush1.xpose.msra.mxu0 0.0
      %4087 = vmatprep.subr.mxu0 0.0
      %4088 = vmatpush1.xpose.msra.mxu0 0.0
      %4089 = vmatprep.subr.mxu0 0.0
      %4090 = vmatpush1.xpose.msra.mxu0 0.0
      %4091 = vmatprep.subr.mxu0 0.0
      %4092 = vmatpush1.xpose.msra.mxu0 0.0
      %4093 = vmatprep.mubr.f32.mxu0 0.0
      %4094 = vmatmul.mubr.f32.gmra.mrb[0].mxu0 %v4025
      %v4095 = vpop.f32.mrb[0].mxu0
      %v4096 = vadd.f32 0.0, %v4095
      %v4097 = vpop.f32.mrb[0].mxu0
      %4098 = vdwg.mxu0
      %4099 = vrot.lane.b32.xlu0 %v3944, 96
      %v4100 = vpop.permute.xlu0 %4099
      %v4101 = vsel %vm1057, %v3944, 0
      %v4103 = vsel %vm1057, %v4100, 0
      %4105 = vmatprep.subr.mxu0 0.0
      %4106 = vmatpush1.xpose.msra.mxu0 %v4103
      %4107 = vmatprep.subr.mxu0 0.0
      %4108 = vmatpush1.xpose.msra.mxu0 0.0
      %4109 = vmatprep.subr.mxu0 0.0
      %4110 = vmatpush1.xpose.msra.mxu0 0.0
      %4111 = vmatprep.subr.mxu0 0.0
      %4112 = vmatpush1.xpose.msra.mxu0 0.0
      %4113 = vmatprep.subr.mxu0 0.0
      %4114 = vmatpush1.xpose.msra.mxu0 0.0
      %4115 = vmatprep.subr.mxu0 0.0
      %4116 = vmatpush1.xpose.msra.mxu0 0.0
      %4117 = vmatprep.subr.mxu0 0.0
      %4118 = vmatpush1.xpose.msra.mxu0 0.0
      %4119 = vmatprep.subr.mxu0 0.0
      %4120 = vmatpush1.xpose.msra.mxu0 0.0
      %4121 = vmatprep.subr.mxu0 0.0
      %4122 = vmatpush1.xpose.msra.mxu0 0.0
      %4123 = vmatprep.subr.mxu0 0.0
      %4124 = vmatpush1.xpose.msra.mxu0 0.0
      %4125 = vmatprep.subr.mxu0 0.0
      %4126 = vmatpush1.xpose.msra.mxu0 0.0
      %4127 = vmatprep.subr.mxu0 0.0
      %4128 = vmatpush1.xpose.msra.mxu0 0.0
      %4129 = vmatprep.subr.mxu0 0.0
      %4130 = vmatpush1.xpose.msra.mxu0 0.0
      %4131 = vmatprep.subr.mxu0 0.0
      %4132 = vmatpush1.xpose.msra.mxu0 0.0
      %4133 = vmatprep.subr.mxu0 0.0
      %4134 = vmatpush1.xpose.msra.mxu0 0.0
      %4135 = vmatprep.subr.mxu0 0.0
      %4136 = vmatpush1.xpose.msra.mxu0 0.0
      %4137 = vmatprep.subr.mxu0 0.0
      %4138 = vmatpush1.xpose.msra.mxu0 0.0
      %4139 = vmatprep.subr.mxu0 0.0
      %4140 = vmatpush1.xpose.msra.mxu0 0.0
      %4141 = vmatprep.subr.mxu0 0.0
      %4142 = vmatpush1.xpose.msra.mxu0 0.0
      %4143 = vmatprep.subr.mxu0 0.0
      %4144 = vmatpush1.xpose.msra.mxu0 0.0
      %4145 = vmatprep.subr.mxu0 0.0
      %4146 = vmatpush1.xpose.msra.mxu0 0.0
      %4147 = vmatprep.subr.mxu0 0.0
      %4148 = vmatpush1.xpose.msra.mxu0 0.0
      %4149 = vmatprep.subr.mxu0 0.0
      %4150 = vmatpush1.xpose.msra.mxu0 0.0
      %4151 = vmatprep.subr.mxu0 0.0
      %4152 = vmatpush1.xpose.msra.mxu0 0.0
      %4153 = vmatprep.subr.mxu0 0.0
      %4154 = vmatpush1.xpose.msra.mxu0 0.0
      %4155 = vmatprep.subr.mxu0 0.0
      %4156 = vmatpush1.xpose.msra.mxu0 0.0
      %4157 = vmatprep.subr.mxu0 0.0
      %4158 = vmatpush1.xpose.msra.mxu0 0.0
      %4159 = vmatprep.subr.mxu0 0.0
      %4160 = vmatpush1.xpose.msra.mxu0 0.0
      %4161 = vmatprep.subr.mxu0 0.0
      %4162 = vmatpush1.xpose.msra.mxu0 0.0
      %4163 = vmatprep.subr.mxu0 0.0
      %4164 = vmatpush1.xpose.msra.mxu0 0.0
      %4165 = vmatprep.subr.mxu0 0.0
      %4166 = vmatpush1.xpose.msra.mxu0 0.0
      %4167 = vmatprep.subr.mxu0 0.0
      %4168 = vmatpush1.xpose.msra.mxu0 0.0
      %4169 = vmatprep.mubr.f32.mxu0 0.0
      %4170 = vmatmul.mubr.f32.gmra.mrb[0].mxu0 %v4101
      %v4171 = vpop.f32.mrb[0].mxu0
      %v4172 = vadd.f32 0.0, %v4171
      %v4173 = vpop.f32.mrb[0].mxu0
      %4174 = vdwg.mxu0
      %4175 = vrot.lane.b32.xlu0 %v3946, 96
      %v4176 = vpop.permute.xlu0 %4175
      %v4177 = vsel %vm1057, %v3946, 0
      %v4179 = vsel %vm1057, %v4176, 0
      %4181 = vmatprep.subr.mxu0 0.0
      %4182 = vmatpush1.xpose.msra.mxu0 %v4179
      %4183 = vmatprep.subr.mxu0 0.0
      %4184 = vmatpush1.xpose.msra.mxu0 0.0
      %4185 = vmatprep.subr.mxu0 0.0
      %4186 = vmatpush1.xpose.msra.mxu0 0.0
      %4187 = vmatprep.subr.mxu0 0.0
      %4188 = vmatpush1.xpose.msra.mxu0 0.0
      %4189 = vmatprep.subr.mxu0 0.0
      %4190 = vmatpush1.xpose.msra.mxu0 0.0
      %4191 = vmatprep.subr.mxu0 0.0
      %4192 = vmatpush1.xpose.msra.mxu0 0.0
      %4193 = vmatprep.subr.mxu0 0.0
      %4194 = vmatpush1.xpose.msra.mxu0 0.0
      %4195 = vmatprep.subr.mxu0 0.0
      %4196 = vmatpush1.xpose.msra.mxu0 0.0
      %4197 = vmatprep.subr.mxu0 0.0
      %4198 = vmatpush1.xpose.msra.mxu0 0.0
      %4199 = vmatprep.subr.mxu0 0.0
      %4200 = vmatpush1.xpose.msra.mxu0 0.0
      %4201 = vmatprep.subr.mxu0 0.0
      %4202 = vmatpush1.xpose.msra.mxu0 0.0
      %4203 = vmatprep.subr.mxu0 0.0
      %4204 = vmatpush1.xpose.msra.mxu0 0.0
      %4205 = vmatprep.subr.mxu0 0.0
      %4206 = vmatpush1.xpose.msra.mxu0 0.0
      %4207 = vmatprep.subr.mxu0 0.0
      %4208 = vmatpush1.xpose.msra.mxu0 0.0
      %4209 = vmatprep.subr.mxu0 0.0
      %4210 = vmatpush1.xpose.msra.mxu0 0.0
      %4211 = vmatprep.subr.mxu0 0.0
      %4212 = vmatpush1.xpose.msra.mxu0 0.0
      %4213 = vmatprep.subr.mxu0 0.0
      %4214 = vmatpush1.xpose.msra.mxu0 0.0
      %4215 = vmatprep.subr.mxu0 0.0
      %4216 = vmatpush1.xpose.msra.mxu0 0.0
      %4217 = vmatprep.subr.mxu0 0.0
      %4218 = vmatpush1.xpose.msra.mxu0 0.0
      %4219 = vmatprep.subr.mxu0 0.0
      %4220 = vmatpush1.xpose.msra.mxu0 0.0
      %4221 = vmatprep.subr.mxu0 0.0
      %4222 = vmatpush1.xpose.msra.mxu0 0.0
      %4223 = vmatprep.subr.mxu0 0.0
      %4224 = vmatpush1.xpose.msra.mxu0 0.0
      %4225 = vmatprep.subr.mxu0 0.0
      %4226 = vmatpush1.xpose.msra.mxu0 0.0
      %4227 = vmatprep.subr.mxu0 0.0
      %4228 = vmatpush1.xpose.msra.mxu0 0.0
      %4229 = vmatprep.subr.mxu0 0.0
      %4230 = vmatpush1.xpose.msra.mxu0 0.0
      %4231 = vmatprep.subr.mxu0 0.0
      %4232 = vmatpush1.xpose.msra.mxu0 0.0
      %4233 = vmatprep.subr.mxu0 0.0
      %4234 = vmatpush1.xpose.msra.mxu0 0.0
      %4235 = vmatprep.subr.mxu0 0.0
      %4236 = vmatpush1.xpose.msra.mxu0 0.0
      %4237 = vmatprep.subr.mxu0 0.0
      %4238 = vmatpush1.xpose.msra.mxu0 0.0
      %4239 = vmatprep.subr.mxu0 0.0
      %4240 = vmatpush1.xpose.msra.mxu0 0.0
      %4241 = vmatprep.subr.mxu0 0.0
      %4242 = vmatpush1.xpose.msra.mxu0 0.0
      %4243 = vmatprep.subr.mxu0 0.0
      %4244 = vmatpush1.xpose.msra.mxu0 0.0
      %4245 = vmatprep.mubr.f32.mxu0 0.0
      %4246 = vmatmul.mubr.f32.gmra.mrb[0].mxu0 %v4177
      %v4247 = vpop.f32.mrb[0].mxu0
      %v4248 = vadd.f32 0.0, %v4247
      %v4249 = vpop.f32.mrb[0].mxu0
      %4250 = vdwg.mxu0
      %v4251 = vsel %vm1057, %v4020, -inf
      %4252 = vmax.xlane.f32.xlu0 %v4251
      %v4253 = vpop.xlane.xlu0 %4252
      %v4254 = vsel %vm1057, %v4096, -inf
      %4255 = vmax.xlane.f32.xlu0 %v4254
      %v4256 = vpop.xlane.xlu0 %4255
      %v4257 = vsel %vm1057, %v4172, -inf
      %4258 = vmax.xlane.f32.xlu0 %v4257
      %v4259 = vpop.xlane.xlu0 %4258
      %v4260 = vsel %vm1057, %v4248, -inf
      %4261 = vmax.xlane.f32.xlu0 %v4260
      %v4262 = vpop.xlane.xlu0 %4261
      %v4263 = vsub.f32 %v4020, %v4253
      %v4264 = vsub.f32 %v4096, %v4256
      %v4265 = vsub.f32 %v4172, %v4259
      %v4266 = vsub.f32 %v4248, %v4262
      %v4267 = vmul.f32 %v4263, 1.442695
      %v4268 = vpow.pop %v4267
      %v4269 = vmul.f32 %v4264, 1.442695
      %v4270 = vpow.pop %v4269
      %v4271 = vmul.f32 %v4265, 1.442695
      %v4272 = vpow.pop %v4271
      %v4273 = vmul.f32 %v4266, 1.442695
      %v4274 = vpow.pop %v4273
      %v4275 = vsel %vm1057, %v4268, 0.0
      %4276 = vadd.xlane.f32.xlu0 %v4275
      %v4277 = vpop.xlane.xlu0 %4276
      %v4278 = vsel %vm1057, %v4270, 0.0
      %4279 = vadd.xlane.f32.xlu0 %v4278
      %v4280 = vpop.xlane.xlu0 %4279
      %v4281 = vsel %vm1057, %v4272, 0.0
      %4282 = vadd.xlane.f32.xlu0 %v4281
      %v4283 = vpop.xlane.xlu0 %4282
      %v4284 = vsel %vm1057, %v4274, 0.0
      %4285 = vadd.xlane.f32.xlu0 %v4284
      %v4286 = vpop.xlane.xlu0 %4285
      %v4287 = vrcp.pop %v4277
      %v4288 = vmul.f32 %v4268, %v4287
      %v4289 = vrcp.pop %v4280
      %v4290 = vmul.f32 %v4270, %v4289
      %v4291 = vrcp.pop %v4283
      %v4292 = vmul.f32 %v4272, %v4291
      %v4293 = vrcp.pop %v4286
      %v4294 = vmul.f32 %v4274, %v4293
      %4295 = vrot.lane.b32.xlu0 %v3935, 64
      %v4296 = vpop.permute.xlu0 %4295
      %v4299 = vsel %vm1057, %v4288, 0
      %4301 = vmatprep.subr.mxu0 0.0
      %4302 = vmatpush1.msra.mxu0 %v4296
      %4303 = vmatprep.subr.mxu0 0.0
      %4304 = vmatpush1.msra.mxu0 0.0
      %4305 = vmatprep.subr.mxu0 0.0
      %4306 = vmatpush1.msra.mxu0 0.0
      %4307 = vmatprep.subr.mxu0 0.0
      %4308 = vmatpush1.msra.mxu0 0.0
      %4309 = vmatprep.subr.mxu0 0.0
      %4310 = vmatpush1.msra.mxu0 0.0
      %4311 = vmatprep.subr.mxu0 0.0
      %4312 = vmatpush1.msra.mxu0 0.0
      %4313 = vmatprep.subr.mxu0 0.0
      %4314 = vmatpush1.msra.mxu0 0.0
      %4315 = vmatprep.subr.mxu0 0.0
      %4316 = vmatpush1.msra.mxu0 0.0
      %4317 = vmatprep.subr.mxu0 0.0
      %4318 = vmatpush1.msra.mxu0 0.0
      %4319 = vmatprep.subr.mxu0 0.0
      %4320 = vmatpush1.msra.mxu0 0.0
      %4321 = vmatprep.subr.mxu0 0.0
      %4322 = vmatpush1.msra.mxu0 0.0
      %4323 = vmatprep.subr.mxu0 0.0
      %4324 = vmatpush1.msra.mxu0 0.0
      %4325 = vmatprep.subr.mxu0 0.0
      %4326 = vmatpush1.msra.mxu0 0.0
      %4327 = vmatprep.subr.mxu0 0.0
      %4328 = vmatpush1.msra.mxu0 0.0
      %4329 = vmatprep.subr.mxu0 0.0
      %4330 = vmatpush1.msra.mxu0 0.0
      %4331 = vmatprep.subr.mxu0 0.0
      %4332 = vmatpush1.msra.mxu0 0.0
      %4333 = vmatprep.subr.mxu0 0.0
      %4334 = vmatpush1.msra.mxu0 0.0
      %4335 = vmatprep.subr.mxu0 0.0
      %4336 = vmatpush1.msra.mxu0 0.0
      %4337 = vmatprep.subr.mxu0 0.0
      %4338 = vmatpush1.msra.mxu0 0.0
      %4339 = vmatprep.subr.mxu0 0.0
      %4340 = vmatpush1.msra.mxu0 0.0
      %4341 = vmatprep.subr.mxu0 0.0
      %4342 = vmatpush1.msra.mxu0 0.0
      %4343 = vmatprep.subr.mxu0 0.0
      %4344 = vmatpush1.msra.mxu0 0.0
      %4345 = vmatprep.subr.mxu0 0.0
      %4346 = vmatpush1.msra.mxu0 0.0
      %4347 = vmatprep.subr.mxu0 0.0
      %4348 = vmatpush1.msra.mxu0 0.0
      %4349 = vmatprep.subr.mxu0 0.0
      %4350 = vmatpush1.msra.mxu0 0.0
      %4351 = vmatprep.subr.mxu0 0.0
      %4352 = vmatpush1.msra.mxu0 0.0
      %4353 = vmatprep.subr.mxu0 0.0
      %4354 = vmatpush1.msra.mxu0 0.0
      %4355 = vmatprep.subr.mxu0 0.0
      %4356 = vmatpush1.msra.mxu0 0.0
      %4357 = vmatprep.subr.mxu0 0.0
      %4358 = vmatpush1.msra.mxu0 0.0
      %4359 = vmatprep.subr.mxu0 0.0
      %4360 = vmatpush1.msra.mxu0 0.0
      %4361 = vmatprep.subr.mxu0 0.0
      %4362 = vmatpush1.msra.mxu0 0.0
      %4363 = vmatprep.subr.mxu0 0.0
      %4364 = vmatpush1.msra.mxu0 0.0
      %4365 = vmatprep.mubr.f32.mxu0 0.0
      %4366 = vmatmul.mubr.f32.gmra.mrb[0].mxu0 %v4299
      %v4367 = vpop.f32.mrb[0].mxu0
      %v4368 = vadd.f32 0.0, %v4367
      %v4369 = vpop.f32.mrb[0].mxu0
      %4370 = vdwg.mxu0
      %4371 = vrot.lane.b32.xlu0 %v3942, 64
      %v4372 = vpop.permute.xlu0 %4371
      %v4375 = vsel %vm1057, %v4290, 0
      %4377 = vmatprep.subr.mxu0 0.0
      %4378 = vmatpush1.msra.mxu0 %v4372
      %4379 = vmatprep.subr.mxu0 0.0
      %4380 = vmatpush1.msra.mxu0 0.0
      %4381 = vmatprep.subr.mxu0 0.0
      %4382 = vmatpush1.msra.mxu0 0.0
      %4383 = vmatprep.subr.mxu0 0.0
      %4384 = vmatpush1.msra.mxu0 0.0
      %4385 = vmatprep.subr.mxu0 0.0
      %4386 = vmatpush1.msra.mxu0 0.0
      %4387 = vmatprep.subr.mxu0 0.0
      %4388 = vmatpush1.msra.mxu0 0.0
      %4389 = vmatprep.subr.mxu0 0.0
      %4390 = vmatpush1.msra.mxu0 0.0
      %4391 = vmatprep.subr.mxu0 0.0
      %4392 = vmatpush1.msra.mxu0 0.0
      %4393 = vmatprep.subr.mxu0 0.0
      %4394 = vmatpush1.msra.mxu0 0.0
      %4395 = vmatprep.subr.mxu0 0.0
      %4396 = vmatpush1.msra.mxu0 0.0
      %4397 = vmatprep.subr.mxu0 0.0
      %4398 = vmatpush1.msra.mxu0 0.0
      %4399 = vmatprep.subr.mxu0 0.0
      %4400 = vmatpush1.msra.mxu0 0.0
      %4401 = vmatprep.subr.mxu0 0.0
      %4402 = vmatpush1.msra.mxu0 0.0
      %4403 = vmatprep.subr.mxu0 0.0
      %4404 = vmatpush1.msra.mxu0 0.0
      %4405 = vmatprep.subr.mxu0 0.0
      %4406 = vmatpush1.msra.mxu0 0.0
      %4407 = vmatprep.subr.mxu0 0.0
      %4408 = vmatpush1.msra.mxu0 0.0
      %4409 = vmatprep.subr.mxu0 0.0
      %4410 = vmatpush1.msra.mxu0 0.0
      %4411 = vmatprep.subr.mxu0 0.0
      %4412 = vmatpush1.msra.mxu0 0.0
      %4413 = vmatprep.subr.mxu0 0.0
      %4414 = vmatpush1.msra.mxu0 0.0
      %4415 = vmatprep.subr.mxu0 0.0
      %4416 = vmatpush1.msra.mxu0 0.0
      %4417 = vmatprep.subr.mxu0 0.0
      %4418 = vmatpush1.msra.mxu0 0.0
      %4419 = vmatprep.subr.mxu0 0.0
      %4420 = vmatpush1.msra.mxu0 0.0
      %4421 = vmatprep.subr.mxu0 0.0
      %4422 = vmatpush1.msra.mxu0 0.0
      %4423 = vmatprep.subr.mxu0 0.0
      %4424 = vmatpush1.msra.mxu0 0.0
      %4425 = vmatprep.subr.mxu0 0.0
      %4426 = vmatpush1.msra.mxu0 0.0
      %4427 = vmatprep.subr.mxu0 0.0
      %4428 = vmatpush1.msra.mxu0 0.0
      %4429 = vmatprep.subr.mxu0 0.0
      %4430 = vmatpush1.msra.mxu0 0.0
      %4431 = vmatprep.subr.mxu0 0.0
      %4432 = vmatpush1.msra.mxu0 0.0
      %4433 = vmatprep.subr.mxu0 0.0
      %4434 = vmatpush1.msra.mxu0 0.0
      %4435 = vmatprep.subr.mxu0 0.0
      %4436 = vmatpush1.msra.mxu0 0.0
      %4437 = vmatprep.subr.mxu0 0.0
      %4438 = vmatpush1.msra.mxu0 0.0
      %4439 = vmatprep.subr.mxu0 0.0
      %4440 = vmatpush1.msra.mxu0 0.0
      %4441 = vmatprep.mubr.f32.mxu0 0.0
      %4442 = vmatmul.mubr.f32.gmra.mrb[0].mxu0 %v4375
      %v4443 = vpop.f32.mrb[0].mxu0
      %v4444 = vadd.f32 0.0, %v4443
      %v4445 = vpop.f32.mrb[0].mxu0
      %4446 = vdwg.mxu0
      %4447 = vrot.lane.b32.xlu0 %v3944, 64
      %v4448 = vpop.permute.xlu0 %4447
      %v4451 = vsel %vm1057, %v4292, 0
      %4453 = vmatprep.subr.mxu0 0.0
      %4454 = vmatpush1.msra.mxu0 %v4448
      %4455 = vmatprep.subr.mxu0 0.0
      %4456 = vmatpush1.msra.mxu0 0.0
      %4457 = vmatprep.subr.mxu0 0.0
      %4458 = vmatpush1.msra.mxu0 0.0
      %4459 = vmatprep.subr.mxu0 0.0
      %4460 = vmatpush1.msra.mxu0 0.0
      %4461 = vmatprep.subr.mxu0 0.0
      %4462 = vmatpush1.msra.mxu0 0.0
      %4463 = vmatprep.subr.mxu0 0.0
      %4464 = vmatpush1.msra.mxu0 0.0
      %4465 = vmatprep.subr.mxu0 0.0
      %4466 = vmatpush1.msra.mxu0 0.0
      %4467 = vmatprep.subr.mxu0 0.0
      %4468 = vmatpush1.msra.mxu0 0.0
      %4469 = vmatprep.subr.mxu0 0.0
      %4470 = vmatpush1.msra.mxu0 0.0
      %4471 = vmatprep.subr.mxu0 0.0
      %4472 = vmatpush1.msra.mxu0 0.0
      %4473 = vmatprep.subr.mxu0 0.0
      %4474 = vmatpush1.msra.mxu0 0.0
      %4475 = vmatprep.subr.mxu0 0.0
      %4476 = vmatpush1.msra.mxu0 0.0
      %4477 = vmatprep.subr.mxu0 0.0
      %4478 = vmatpush1.msra.mxu0 0.0
      %4479 = vmatprep.subr.mxu0 0.0
      %4480 = vmatpush1.msra.mxu0 0.0
      %4481 = vmatprep.subr.mxu0 0.0
      %4482 = vmatpush1.msra.mxu0 0.0
      %4483 = vmatprep.subr.mxu0 0.0
      %4484 = vmatpush1.msra.mxu0 0.0
      %4485 = vmatprep.subr.mxu0 0.0
      %4486 = vmatpush1.msra.mxu0 0.0
      %4487 = vmatprep.subr.mxu0 0.0
      %4488 = vmatpush1.msra.mxu0 0.0
      %4489 = vmatprep.subr.mxu0 0.0
      %4490 = vmatpush1.msra.mxu0 0.0
      %4491 = vmatprep.subr.mxu0 0.0
      %4492 = vmatpush1.msra.mxu0 0.0
      %4493 = vmatprep.subr.mxu0 0.0
      %4494 = vmatpush1.msra.mxu0 0.0
      %4495 = vmatprep.subr.mxu0 0.0
      %4496 = vmatpush1.msra.mxu0 0.0
      %4497 = vmatprep.subr.mxu0 0.0
      %4498 = vmatpush1.msra.mxu0 0.0
      %4499 = vmatprep.subr.mxu0 0.0
      %4500 = vmatpush1.msra.mxu0 0.0
      %4501 = vmatprep.subr.mxu0 0.0
      %4502 = vmatpush1.msra.mxu0 0.0
      %4503 = vmatprep.subr.mxu0 0.0
      %4504 = vmatpush1.msra.mxu0 0.0
      %4505 = vmatprep.subr.mxu0 0.0
      %4506 = vmatpush1.msra.mxu0 0.0
      %4507 = vmatprep.subr.mxu0 0.0
      %4508 = vmatpush1.msra.mxu0 0.0
      %4509 = vmatprep.subr.mxu0 0.0
      %4510 = vmatpush1.msra.mxu0 0.0
      %4511 = vmatprep.subr.mxu0 0.0
      %4512 = vmatpush1.msra.mxu0 0.0
      %4513 = vmatprep.subr.mxu0 0.0
      %4514 = vmatpush1.msra.mxu0 0.0
      %4515 = vmatprep.subr.mxu0 0.0
      %4516 = vmatpush1.msra.mxu0 0.0
      %4517 = vmatprep.mubr.f32.mxu0 0.0
      %4518 = vmatmul.mubr.f32.gmra.mrb[0].mxu0 %v4451
      %v4519 = vpop.f32.mrb[0].mxu0
      %v4520 = vadd.f32 0.0, %v4519
      %v4521 = vpop.f32.mrb[0].mxu0
      %4522 = vdwg.mxu0
      %4523 = vrot.lane.b32.xlu0 %v3946, 64
      %v4524 = vpop.permute.xlu0 %4523
      %v4527 = vsel %vm1057, %v4294, 0
      %4529 = vmatprep.subr.mxu0 0.0
      %4530 = vmatpush1.msra.mxu0 %v4524
      %4531 = vmatprep.subr.mxu0 0.0
      %4532 = vmatpush1.msra.mxu0 0.0
      %4533 = vmatprep.subr.mxu0 0.0
      %4534 = vmatpush1.msra.mxu0 0.0
      %4535 = vmatprep.subr.mxu0 0.0
      %4536 = vmatpush1.msra.mxu0 0.0
      %4537 = vmatprep.subr.mxu0 0.0
      %4538 = vmatpush1.msra.mxu0 0.0
      %4539 = vmatprep.subr.mxu0 0.0
      %4540 = vmatpush1.msra.mxu0 0.0
      %4541 = vmatprep.subr.mxu0 0.0
      %4542 = vmatpush1.msra.mxu0 0.0
      %4543 = vmatprep.subr.mxu0 0.0
      %4544 = vmatpush1.msra.mxu0 0.0
      %4545 = vmatprep.subr.mxu0 0.0
      %4546 = vmatpush1.msra.mxu0 0.0
      %4547 = vmatprep.subr.mxu0 0.0
      %4548 = vmatpush1.msra.mxu0 0.0
      %4549 = vmatprep.subr.mxu0 0.0
      %4550 = vmatpush1.msra.mxu0 0.0
      %4551 = vmatprep.subr.mxu0 0.0
      %4552 = vmatpush1.msra.mxu0 0.0
      %4553 = vmatprep.subr.mxu0 0.0
      %4554 = vmatpush1.msra.mxu0 0.0
      %4555 = vmatprep.subr.mxu0 0.0
      %4556 = vmatpush1.msra.mxu0 0.0
      %4557 = vmatprep.subr.mxu0 0.0
      %4558 = vmatpush1.msra.mxu0 0.0
      %4559 = vmatprep.subr.mxu0 0.0
      %4560 = vmatpush1.msra.mxu0 0.0
      %4561 = vmatprep.subr.mxu0 0.0
      %4562 = vmatpush1.msra.mxu0 0.0
      %4563 = vmatprep.subr.mxu0 0.0
      %4564 = vmatpush1.msra.mxu0 0.0
      %4565 = vmatprep.subr.mxu0 0.0
      %4566 = vmatpush1.msra.mxu0 0.0
      %4567 = vmatprep.subr.mxu0 0.0
      %4568 = vmatpush1.msra.mxu0 0.0
      %4569 = vmatprep.subr.mxu0 0.0
      %4570 = vmatpush1.msra.mxu0 0.0
      %4571 = vmatprep.subr.mxu0 0.0
      %4572 = vmatpush1.msra.mxu0 0.0
      %4573 = vmatprep.subr.mxu0 0.0
      %4574 = vmatpush1.msra.mxu0 0.0
      %4575 = vmatprep.subr.mxu0 0.0
      %4576 = vmatpush1.msra.mxu0 0.0
      %4577 = vmatprep.subr.mxu0 0.0
      %4578 = vmatpush1.msra.mxu0 0.0
      %4579 = vmatprep.subr.mxu0 0.0
      %4580 = vmatpush1.msra.mxu0 0.0
      %4581 = vmatprep.subr.mxu0 0.0
      %4582 = vmatpush1.msra.mxu0 0.0
      %4583 = vmatprep.subr.mxu0 0.0
      %4584 = vmatpush1.msra.mxu0 0.0
      %4585 = vmatprep.subr.mxu0 0.0
      %4586 = vmatpush1.msra.mxu0 0.0
      %4587 = vmatprep.subr.mxu0 0.0
      %4588 = vmatpush1.msra.mxu0 0.0
      %4589 = vmatprep.subr.mxu0 0.0
      %4590 = vmatpush1.msra.mxu0 0.0
      %4591 = vmatprep.subr.mxu0 0.0
      %4592 = vmatpush1.msra.mxu0 0.0
      %4593 = vmatprep.mubr.f32.mxu0 0.0
      %4594 = vmatmul.mubr.f32.gmra.mrb[0].mxu0 %v4527
      %v4595 = vpop.f32.mrb[0].mxu0
      %v4596 = vadd.f32 0.0, %v4595
      %v4597 = vpop.f32.mrb[0].mxu0
      %4598 = vdwg.mxu0
      %4600 = vrot.lane.b32.xlu0 %v4444, 8
      %v4601 = vpop.permute.xlu0 %4600
      %4604 = vrot.lane.b32.xlu0 %v4520, 16
      %v4605 = vpop.permute.xlu0 %4604
      %4608 = vrot.lane.b32.xlu0 %v4596, 24
      %v4609 = vpop.permute.xlu0 %4608
      %v4611 = vsel %vm1057, %v4368, %v4601
      %v4612 = vsel %vm1721, %v4611, %v4605
      %v4613 = vsel %vm1723, %v4612, %v4609
      %v4615 = vlaneseq
      %v4616 = vshrl.u32 %v4615, 7
      %v4617 = vsub.s32 0, %v4616
      %v4618 = vrot.slane %v3574, %v4617
      %v4621 = vsel %vm1004, %v4613, 0
      %4623 = vmatprep.subr.mxu0 0.0
      %4624 = vmatpush1.msra.mxu0 %v3569
      %4625 = vmatprep.subr.mxu0 0.0
      %4626 = vmatpush1.msra.mxu0 %v3570
      %4627 = vmatprep.subr.mxu0 0.0
      %4628 = vmatpush1.msra.mxu0 %v3571
      %4629 = vmatprep.subr.mxu0 0.0
      %4630 = vmatpush1.msra.mxu0 %v3572
      %4631 = vmatprep.subr.mxu0 0.0
      %4632 = vmatpush1.msra.mxu0 0.0
      %4633 = vmatprep.subr.mxu0 0.0
      %4634 = vmatpush1.msra.mxu0 0.0
      %4635 = vmatprep.subr.mxu0 0.0
      %4636 = vmatpush1.msra.mxu0 0.0
      %4637 = vmatprep.subr.mxu0 0.0
      %4638 = vmatpush1.msra.mxu0 0.0
      %4639 = vmatprep.subr.mxu0 0.0
      %4640 = vmatpush1.msra.mxu0 0.0
      %4641 = vmatprep.subr.mxu0 0.0
      %4642 = vmatpush1.msra.mxu0 0.0
      %4643 = vmatprep.subr.mxu0 0.0
      %4644 = vmatpush1.msra.mxu0 0.0
      %4645 = vmatprep.subr.mxu0 0.0
      %4646 = vmatpush1.msra.mxu0 0.0
      %4647 = vmatprep.subr.mxu0 0.0
      %4648 = vmatpush1.msra.mxu0 0.0
      %4649 = vmatprep.subr.mxu0 0.0
      %4650 = vmatpush1.msra.mxu0 0.0
      %4651 = vmatprep.subr.mxu0 0.0
      %4652 = vmatpush1.msra.mxu0 0.0
      %4653 = vmatprep.subr.mxu0 0.0
      %4654 = vmatpush1.msra.mxu0 0.0
      %4655 = vmatprep.subr.mxu0 0.0
      %4656 = vmatpush1.msra.mxu0 0.0
      %4657 = vmatprep.subr.mxu0 0.0
      %4658 = vmatpush1.msra.mxu0 0.0
      %4659 = vmatprep.subr.mxu0 0.0
      %4660 = vmatpush1.msra.mxu0 0.0
      %4661 = vmatprep.subr.mxu0 0.0
      %4662 = vmatpush1.msra.mxu0 0.0
      %4663 = vmatprep.subr.mxu0 0.0
      %4664 = vmatpush1.msra.mxu0 0.0
      %4665 = vmatprep.subr.mxu0 0.0
      %4666 = vmatpush1.msra.mxu0 0.0
      %4667 = vmatprep.subr.mxu0 0.0
      %4668 = vmatpush1.msra.mxu0 0.0
      %4669 = vmatprep.subr.mxu0 0.0
      %4670 = vmatpush1.msra.mxu0 0.0
      %4671 = vmatprep.subr.mxu0 0.0
      %4672 = vmatpush1.msra.mxu0 0.0
      %4673 = vmatprep.subr.mxu0 0.0
      %4674 = vmatpush1.msra.mxu0 0.0
      %4675 = vmatprep.subr.mxu0 0.0
      %4676 = vmatpush1.msra.mxu0 0.0
      %4677 = vmatprep.subr.mxu0 0.0
      %4678 = vmatpush1.msra.mxu0 0.0
      %4679 = vmatprep.subr.mxu0 0.0
      %4680 = vmatpush1.msra.mxu0 0.0
      %4681 = vmatprep.subr.mxu0 0.0
      %4682 = vmatpush1.msra.mxu0 0.0
      %4683 = vmatprep.subr.mxu0 0.0
      %4684 = vmatpush1.msra.mxu0 0.0
      %4685 = vmatprep.subr.mxu0 0.0
      %4686 = vmatpush1.msra.mxu0 0.0
      %4687 = vmatprep.mubr.f32.mxu0 0.0
      %4688 = vmatmul.mubr.f32.gmra.mrb[0].mxu0 %v4621
      %v4689 = vpop.f32.mrb[0].mxu0
      %v4690 = vadd.f32 %v4618, %v4689
      %v4691 = vpop.f32.mrb[0].mxu0
      %4692 = vdwg.mxu0
      %v4693 = vadd.f32 %v3560, %v4690
      %v4694 = vsel %vm1004, %v4693, 0.0
      %4695 = vadd.xlane.f32.xlu0 %v4694
      %v4696 = vpop.xlane.xlu0 %4695
      %v4697 = vmul.f32 %v4696, %v1808
      %v4698 = vsub.f32 %v4693, %v4697
      %v4699 = vmul.f32 %v4698, %v4698
      %v4700 = vsel %vm1004, %v4699, 0.0
      %4701 = vadd.xlane.f32.xlu0 %v4700
      %v4702 = vpop.xlane.xlu0 %4701
      %v4703 = vmul.f32 %v4702, %v1808
      %v4704 = vadd.f32 %v4703, 1e-05
      %v4705 = vrsqrt.pop %v4704
      %v4706 = vmul.f32 %v4698, %v4705
      %v4708 = vlaneseq
      %v4709 = vshrl.u32 %v4708, 7
      %v4710 = vsub.s32 0, %v4709
      %v4711 = vrot.slane %v3576, %v4710
      %v4713 = vmul.f32 %v4706, %v4711
      %v4715 = vlaneseq
      %v4716 = vshrl.u32 %v4715, 7
      %v4717 = vsub.s32 0, %v4716
      %v4718 = vrot.slane %v3578, %v4717
      %v4720 = vadd.f32 %v4713, %v4718
      %v4721 = vpack.c.bf16 %v4720, %v4720
      %v4724 = vlaneseq
      %v4725 = vshrl.u32 %v4724, 7
      %v4726 = vsub.s32 0, %v4725
      %v4727 = vrot.slane %v3613, %v4726
      %v4728 = vlaneseq
      %v4729 = vshrl.u32 %v4728, 7
      %v4730 = vsub.s32 1, %v4729
      %v4731 = vrot.slane %v3613, %v4730
      %v4732 = vlaneseq
      %v4733 = vshrl.u32 %v4732, 7
      %v4734 = vsub.s32 2, %v4733
      %v4735 = vrot.slane %v3613, %v4734
      %v4736 = vlaneseq
      %v4737 = vshrl.u32 %v4736, 7
      %v4738 = vsub.s32 3, %v4737
      %v4739 = vrot.slane %v3613, %v4738
      %v4740 = vlaneseq
      %v4741 = vshrl.u32 %v4740, 7
      %v4742 = vsub.s32 4, %v4741
      %v4743 = vrot.slane %v3613, %v4742
      %v4744 = vlaneseq
      %v4745 = vshrl.u32 %v4744, 7
      %v4746 = vsub.s32 5, %v4745
      %v4747 = vrot.slane %v3613, %v4746
      %v4748 = vlaneseq
      %v4749 = vshrl.u32 %v4748, 7
      %v4750 = vsub.s32 6, %v4749
      %v4751 = vrot.slane %v3613, %v4750
      %v4752 = vlaneseq
      %v4753 = vshrl.u32 %v4752, 7
      %v4754 = vsub.s32 7, %v4753
      %v4755 = vrot.slane %v3613, %v4754
      %v4756 = vlaneseq
      %v4757 = vshrl.u32 %v4756, 7
      %v4758 = vsub.s32 0, %v4757
      %v4759 = vrot.slane %v3614, %v4758
      %v4760 = vlaneseq
      %v4761 = vshrl.u32 %v4760, 7
      %v4762 = vsub.s32 1, %v4761
      %v4763 = vrot.slane %v3614, %v4762
      %v4764 = vlaneseq
      %v4765 = vshrl.u32 %v4764, 7
      %v4766 = vsub.s32 2, %v4765
      %v4767 = vrot.slane %v3614, %v4766
      %v4768 = vlaneseq
      %v4769 = vshrl.u32 %v4768, 7
      %v4770 = vsub.s32 3, %v4769
      %v4771 = vrot.slane %v3614, %v4770
      %v4772 = vlaneseq
      %v4773 = vshrl.u32 %v4772, 7
      %v4774 = vsub.s32 4, %v4773
      %v4775 = vrot.slane %v3614, %v4774
      %v4776 = vlaneseq
      %v4777 = vshrl.u32 %v4776, 7
      %v4778 = vsub.s32 5, %v4777
      %v4779 = vrot.slane %v3614, %v4778
      %v4780 = vlaneseq
      %v4781 = vshrl.u32 %v4780, 7
      %v4782 = vsub.s32 6, %v4781
      %v4783 = vrot.slane %v3614, %v4782
      %v4784 = vlaneseq
      %v4785 = vshrl.u32 %v4784, 7
      %v4786 = vsub.s32 7, %v4785
      %v4787 = vrot.slane %v3614, %v4786
      %v4836 = vunpack.c.l.b16 %v3580
      %v4837 = vunpack.c.h.b16 %v3580
      %v4838 = vunpack.c.l.b16 %v3581
      %v4839 = vunpack.c.h.b16 %v3581
      %v4840 = vunpack.c.l.b16 %v3582
      %v4841 = vunpack.c.h.b16 %v3582
      %v4842 = vunpack.c.l.b16 %v3583
      %v4843 = vunpack.c.h.b16 %v3583
      %v4844 = vunpack.c.l.b16 %v3584
      %v4845 = vunpack.c.h.b16 %v3584
      %v4846 = vunpack.c.l.b16 %v3585
      %v4847 = vunpack.c.h.b16 %v3585
      %v4848 = vunpack.c.l.b16 %v3586
      %v4849 = vunpack.c.h.b16 %v3586
      %v4850 = vunpack.c.l.b16 %v3587
      %v4851 = vunpack.c.h.b16 %v3587
      %v4852 = vunpack.c.l.b16 %v3588
      %v4853 = vunpack.c.h.b16 %v3588
      %v4854 = vunpack.c.l.b16 %v3589
      %v4855 = vunpack.c.h.b16 %v3589
      %v4856 = vunpack.c.l.b16 %v3590
      %v4857 = vunpack.c.h.b16 %v3590
      %v4858 = vunpack.c.l.b16 %v3591
      %v4859 = vunpack.c.h.b16 %v3591
      %v4860 = vunpack.c.l.b16 %v3592
      %v4861 = vunpack.c.h.b16 %v3592
      %v4862 = vunpack.c.l.b16 %v3593
      %v4863 = vunpack.c.h.b16 %v3593
      %v4864 = vunpack.c.l.b16 %v3594
      %v4865 = vunpack.c.h.b16 %v3594
      %v4866 = vunpack.c.l.b16 %v3595
      %v4867 = vunpack.c.h.b16 %v3595
      %v4868 = vunpack.c.l.b16 %v3596
      %v4869 = vunpack.c.h.b16 %v3596
      %v4870 = vunpack.c.l.b16 %v3597
      %v4871 = vunpack.c.h.b16 %v3597
      %v4872 = vunpack.c.l.b16 %v3598
      %v4873 = vunpack.c.h.b16 %v3598
      %v4874 = vunpack.c.l.b16 %v3599
      %v4875 = vunpack.c.h.b16 %v3599
      %v4876 = vunpack.c.l.b16 %v3600
      %v4877 = vunpack.c.h.b16 %v3600
      %v4878 = vunpack.c.l.b16 %v3601
      %v4879 = vunpack.c.h.b16 %v3601
      %v4880 = vunpack.c.l.b16 %v3602
      %v4881 = vunpack.c.h.b16 %v3602
      %v4882 = vunpack.c.l.b16 %v3603
      %v4883 = vunpack.c.h.b16 %v3603
      %v4884 = vunpack.c.l.b16 %v3604
      %v4885 = vunpack.c.h.b16 %v3604
      %v4886 = vunpack.c.l.b16 %v3605
      %v4887 = vunpack.c.h.b16 %v3605
      %v4888 = vunpack.c.l.b16 %v3606
      %v4889 = vunpack.c.h.b16 %v3606
      %v4890 = vunpack.c.l.b16 %v3607
      %v4891 = vunpack.c.h.b16 %v3607
      %v4892 = vunpack.c.l.b16 %v3608
      %v4893 = vunpack.c.h.b16 %v3608
      %v4894 = vunpack.c.l.b16 %v3609
      %v4895 = vunpack.c.h.b16 %v3609
      %v4896 = vunpack.c.l.b16 %v3610
      %v4897 = vunpack.c.h.b16 %v3610
      %v4898 = vunpack.c.l.b16 %v3611
      %v4899 = vunpack.c.h.b16 %v3611
      %v4900 = vpack.c.b16 %v4852, %v4836
      %v4901 = vpack.c.b16 %v4853, %v4837
      %v4902 = vpack.c.b16 %v4854, %v4838
      %v4903 = vpack.c.b16 %v4855, %v4839
      %v4904 = vpack.c.b16 %v4856, %v4840
      %v4905 = vpack.c.b16 %v4857, %v4841
      %v4906 = vpack.c.b16 %v4858, %v4842
      %v4907 = vpack.c.b16 %v4859, %v4843
      %v4908 = vpack.c.b16 %v4860, %v4844
      %v4909 = vpack.c.b16 %v4861, %v4845
      %v4910 = vpack.c.b16 %v4862, %v4846
      %v4911 = vpack.c.b16 %v4863, %v4847
      %v4912 = vpack.c.b16 %v4864, %v4848
      %v4913 = vpack.c.b16 %v4865, %v4849
      %v4914 = vpack.c.b16 %v4866, %v4850
      %v4915 = vpack.c.b16 %v4867, %v4851
      %v4916 = vpack.c.b16 %v4884, %v4868
      %v4917 = vpack.c.b16 %v4885, %v4869
      %v4918 = vpack.c.b16 %v4886, %v4870
      %v4919 = vpack.c.b16 %v4887, %v4871
      %v4920 = vpack.c.b16 %v4888, %v4872
      %v4921 = vpack.c.b16 %v4889, %v4873
      %v4922 = vpack.c.b16 %v4890, %v4874
      %v4923 = vpack.c.b16 %v4891, %v4875
      %v4924 = vpack.c.b16 %v4892, %v4876
      %v4925 = vpack.c.b16 %v4893, %v4877
      %v4926 = vpack.c.b16 %v4894, %v4878
      %v4927 = vpack.c.b16 %v4895, %v4879
      %v4928 = vpack.c.b16 %v4896, %v4880
      %v4929 = vpack.c.b16 %v4897, %v4881
      %v4930 = vpack.c.b16 %v4898, %v4882
      %v4931 = vpack.c.b16 %v4899, %v4883
      %v4965 = vsel %vm1004, %v4721, 0
      %4967 = vmatprep.subr.bf16.mxu0 %v4901
      %4968 = vmatpush1.bf16.msra.mxu0 %v4900
      %4969 = vmatprep.subr.bf16.mxu0 %v4917
      %4970 = vmatpush1.bf16.msra.mxu0 %v4916
      %4971 = vmatprep.subr.bf16.mxu0 0
      %4972 = vmatpush1.bf16.msra.mxu0 0
      %4973 = vmatprep.subr.bf16.mxu0 0
      %4974 = vmatpush1.bf16.msra.mxu0 0
      %4975 = vmatprep.subr.bf16.mxu0 0
      %4976 = vmatpush1.bf16.msra.mxu0 0
      %4977 = vmatprep.subr.bf16.mxu0 0
      %4978 = vmatpush1.bf16.msra.mxu0 0
      %4979 = vmatprep.subr.bf16.mxu0 0
      %4980 = vmatpush1.bf16.msra.mxu0 0
      %4981 = vmatprep.subr.bf16.mxu0 0
      %4982 = vmatpush1.bf16.msra.mxu0 0
      %4983 = vmatprep.subr.bf16.mxu0 0
      %4984 = vmatpush1.bf16.msra.mxu0 0
      %4985 = vmatprep.subr.bf16.mxu0 0
      %4986 = vmatpush1.bf16.msra.mxu0 0
      %4987 = vmatprep.subr.bf16.mxu0 0
      %4988 = vmatpush1.bf16.msra.mxu0 0
      %4989 = vmatprep.subr.bf16.mxu0 0
      %4990 = vmatpush1.bf16.msra.mxu0 0
      %4991 = vmatprep.subr.bf16.mxu0 0
      %4992 = vmatpush1.bf16.msra.mxu0 0
      %4993 = vmatprep.subr.bf16.mxu0 0
      %4994 = vmatpush1.bf16.msra.mxu0 0
      %4995 = vmatprep.subr.bf16.mxu0 0
      %4996 = vmatpush1.bf16.msra.mxu0 0
      %4997 = vmatprep.subr.bf16.mxu0 0
      %4998 = vmatpush1.bf16.msra.mxu0 0
      %4999 = vmatprep.mubr.bf16.mxu0 0
      %5000 = vmatmul.mubr.bf16.gmra.mrb[0].mxu0 %v4965
      %v5001 = vpop.f32.mrb[0].mxu0
      %v5002 = vadd.f32 %v4727, %v5001
      %v5003 = vpop.f32.mrb[0].mxu0
      %v5004 = vadd.f32 %v4731, %v5003
      %v5005 = vpop.f32.mrb[0].mxu0
      %v5006 = vpop.f32.mrb[0].mxu0
      %5007 = vdwg.mxu0
      %5008 = vmatprep.subr.bf16.mxu0 %v4903
      %5009 = vmatpush1.bf16.msra.mxu0 %v4902
      %5010 = vmatprep.subr.bf16.mxu0 %v4919
      %5011 = vmatpush1.bf16.msra.mxu0 %v4918
      %5012 = vmatprep.subr.bf16.mxu0 0
      %5013 = vmatpush1.bf16.msra.mxu0 0
      %5014 = vmatprep.subr.bf16.mxu0 0
      %5015 = vmatpush1.bf16.msra.mxu0 0
      %5016 = vmatprep.subr.bf16.mxu0 0
      %5017 = vmatpush1.bf16.msra.mxu0 0
      %5018 = vmatprep.subr.bf16.mxu0 0
      %5019 = vmatpush1.bf16.msra.mxu0 0
      %5020 = vmatprep.subr.bf16.mxu0 0
      %5021 = vmatpush1.bf16.msra.mxu0 0
      %5022 = vmatprep.subr.bf16.mxu0 0
      %5023 = vmatpush1.bf16.msra.mxu0 0
      %5024 = vmatprep.subr.bf16.mxu0 0
      %5025 = vmatpush1.bf16.msra.mxu0 0
      %5026 = vmatprep.subr.bf16.mxu0 0
      %5027 = vmatpush1.bf16.msra.mxu0 0
      %5028 = vmatprep.subr.bf16.mxu0 0
      %5029 = vmatpush1.bf16.msra.mxu0 0
      %5030 = vmatprep.subr.bf16.mxu0 0
      %5031 = vmatpush1.bf16.msra.mxu0 0
      %5032 = vmatprep.subr.bf16.mxu0 0
      %5033 = vmatpush1.bf16.msra.mxu0 0
      %5034 = vmatprep.subr.bf16.mxu0 0
      %5035 = vmatpush1.bf16.msra.mxu0 0
      %5036 = vmatprep.subr.bf16.mxu0 0
      %5037 = vmatpush1.bf16.msra.mxu0 0
      %5038 = vmatprep.subr.bf16.mxu0 0
      %5039 = vmatpush1.bf16.msra.mxu0 0
      %5040 = vmatprep.mubr.bf16.mxu0 0
      %5041 = vmatmul.mubr.bf16.gmra.mrb[0].mxu0 %v4965
      %v5042 = vpop.f32.mrb[0].mxu0
      %v5043 = vadd.f32 %v4735, %v5042
      %v5044 = vpop.f32.mrb[0].mxu0
      %v5045 = vadd.f32 %v4739, %v5044
      %v5046 = vpop.f32.mrb[0].mxu0
      %v5047 = vpop.f32.mrb[0].mxu0
      %5048 = vdwg.mxu0
      %5049 = vmatprep.subr.bf16.mxu0 %v4905
      %5050 = vmatpush1.bf16.msra.mxu0 %v4904
      %5051 = vmatprep.subr.bf16.mxu0 %v4921
      %5052 = vmatpush1.bf16.msra.mxu0 %v4920
      %5053 = vmatprep.subr.bf16.mxu0 0
      %5054 = vmatpush1.bf16.msra.mxu0 0
      %5055 = vmatprep.subr.bf16.mxu0 0
      %5056 = vmatpush1.bf16.msra.mxu0 0
      %5057 = vmatprep.subr.bf16.mxu0 0
      %5058 = vmatpush1.bf16.msra.mxu0 0
      %5059 = vmatprep.subr.bf16.mxu0 0
      %5060 = vmatpush1.bf16.msra.mxu0 0
      %5061 = vmatprep.subr.bf16.mxu0 0
      %5062 = vmatpush1.bf16.msra.mxu0 0
      %5063 = vmatprep.subr.bf16.mxu0 0
      %5064 = vmatpush1.bf16.msra.mxu0 0
      %5065 = vmatprep.subr.bf16.mxu0 0
      %5066 = vmatpush1.bf16.msra.mxu0 0
      %5067 = vmatprep.subr.bf16.mxu0 0
      %5068 = vmatpush1.bf16.msra.mxu0 0
      %5069 = vmatprep.subr.bf16.mxu0 0
      %5070 = vmatpush1.bf16.msra.mxu0 0
      %5071 = vmatprep.subr.bf16.mxu0 0
      %5072 = vmatpush1.bf16.msra.mxu0 0
      %5073 = vmatprep.subr.bf16.mxu0 0
      %5074 = vmatpush1.bf16.msra.mxu0 0
      %5075 = vmatprep.subr.bf16.mxu0 0
      %5076 = vmatpush1.bf16.msra.mxu0 0
      %5077 = vmatprep.subr.bf16.mxu0 0
      %5078 = vmatpush1.bf16.msra.mxu0 0
      %5079 = vmatprep.subr.bf16.mxu0 0
      %5080 = vmatpush1.bf16.msra.mxu0 0
      %5081 = vmatprep.mubr.bf16.mxu0 0
      %5082 = vmatmul.mubr.bf16.gmra.mrb[0].mxu0 %v4965
      %v5083 = vpop.f32.mrb[0].mxu0
      %v5084 = vadd.f32 %v4743, %v5083
      %v5085 = vpop.f32.mrb[0].mxu0
      %v5086 = vadd.f32 %v4747, %v5085
      %v5087 = vpop.f32.mrb[0].mxu0
      %v5088 = vpop.f32.mrb[0].mxu0
      %5089 = vdwg.mxu0
      %5090 = vmatprep.subr.bf16.mxu0 %v4907
      %5091 = vmatpush1.bf16.msra.mxu0 %v4906
      %5092 = vmatprep.subr.bf16.mxu0 %v4923
      %5093 = vmatpush1.bf16.msra.mxu0 %v4922
      %5094 = vmatprep.subr.bf16.mxu0 0
      %5095 = vmatpush1.bf16.msra.mxu0 0
      %5096 = vmatprep.subr.bf16.mxu0 0
      %5097 = vmatpush1.bf16.msra.mxu0 0
      %5098 = vmatprep.subr.bf16.mxu0 0
      %5099 = vmatpush1.bf16.msra.mxu0 0
      %5100 = vmatprep.subr.bf16.mxu0 0
      %5101 = vmatpush1.bf16.msra.mxu0 0
      %5102 = vmatprep.subr.bf16.mxu0 0
      %5103 = vmatpush1.bf16.msra.mxu0 0
      %5104 = vmatprep.subr.bf16.mxu0 0
      %5105 = vmatpush1.bf16.msra.mxu0 0
      %5106 = vmatprep.subr.bf16.mxu0 0
      %5107 = vmatpush1.bf16.msra.mxu0 0
      %5108 = vmatprep.subr.bf16.mxu0 0
      %5109 = vmatpush1.bf16.msra.mxu0 0
      %5110 = vmatprep.subr.bf16.mxu0 0
      %5111 = vmatpush1.bf16.msra.mxu0 0
      %5112 = vmatprep.subr.bf16.mxu0 0
      %5113 = vmatpush1.bf16.msra.mxu0 0
      %5114 = vmatprep.subr.bf16.mxu0 0
      %5115 = vmatpush1.bf16.msra.mxu0 0
      %5116 = vmatprep.subr.bf16.mxu0 0
      %5117 = vmatpush1.bf16.msra.mxu0 0
      %5118 = vmatprep.subr.bf16.mxu0 0
      %5119 = vmatpush1.bf16.msra.mxu0 0
      %5120 = vmatprep.subr.bf16.mxu0 0
      %5121 = vmatpush1.bf16.msra.mxu0 0
      %5122 = vmatprep.mubr.bf16.mxu0 0
      %5123 = vmatmul.mubr.bf16.gmra.mrb[0].mxu0 %v4965
      %v5124 = vpop.f32.mrb[0].mxu0
      %v5125 = vadd.f32 %v4751, %v5124
      %v5126 = vpop.f32.mrb[0].mxu0
      %v5127 = vadd.f32 %v4755, %v5126
      %v5128 = vpop.f32.mrb[0].mxu0
      %v5129 = vpop.f32.mrb[0].mxu0
      %5130 = vdwg.mxu0
      %5131 = vmatprep.subr.bf16.mxu0 %v4909
      %5132 = vmatpush1.bf16.msra.mxu0 %v4908
      %5133 = vmatprep.subr.bf16.mxu0 %v4925
      %5134 = vmatpush1.bf16.msra.mxu0 %v4924
      %5135 = vmatprep.subr.bf16.mxu0 0
      %5136 = vmatpush1.bf16.msra.mxu0 0
      %5137 = vmatprep.subr.bf16.mxu0 0
      %5138 = vmatpush1.bf16.msra.mxu0 0
      %5139 = vmatprep.subr.bf16.mxu0 0
      %5140 = vmatpush1.bf16.msra.mxu0 0
      %5141 = vmatprep.subr.bf16.mxu0 0
      %5142 = vmatpush1.bf16.msra.mxu0 0
      %5143 = vmatprep.subr.bf16.mxu0 0
      %5144 = vmatpush1.bf16.msra.mxu0 0
      %5145 = vmatprep.subr.bf16.mxu0 0
      %5146 = vmatpush1.bf16.msra.mxu0 0
      %5147 = vmatprep.subr.bf16.mxu0 0
      %5148 = vmatpush1.bf16.msra.mxu0 0
      %5149 = vmatprep.subr.bf16.mxu0 0
      %5150 = vmatpush1.bf16.msra.mxu0 0
      %5151 = vmatprep.subr.bf16.mxu0 0
      %5152 = vmatpush1.bf16.msra.mxu0 0
      %5153 = vmatprep.subr.bf16.mxu0 0
      %5154 = vmatpush1.bf16.msra.mxu0 0
      %5155 = vmatprep.subr.bf16.mxu0 0
      %5156 = vmatpush1.bf16.msra.mxu0 0
      %5157 = vmatprep.subr.bf16.mxu0 0
      %5158 = vmatpush1.bf16.msra.mxu0 0
      %5159 = vmatprep.subr.bf16.mxu0 0
      %5160 = vmatpush1.bf16.msra.mxu0 0
      %5161 = vmatprep.subr.bf16.mxu0 0
      %5162 = vmatpush1.bf16.msra.mxu0 0
      %5163 = vmatprep.mubr.bf16.mxu0 0
      %5164 = vmatmul.mubr.bf16.gmra.mrb[0].mxu0 %v4965
      %v5165 = vpop.f32.mrb[0].mxu0
      %v5166 = vadd.f32 %v4759, %v5165
      %v5167 = vpop.f32.mrb[0].mxu0
      %v5168 = vadd.f32 %v4763, %v5167
      %v5169 = vpop.f32.mrb[0].mxu0
      %v5170 = vpop.f32.mrb[0].mxu0
      %5171 = vdwg.mxu0
      %5172 = vmatprep.subr.bf16.mxu0 %v4911
      %5173 = vmatpush1.bf16.msra.mxu0 %v4910
      %5174 = vmatprep.subr.bf16.mxu0 %v4927
      %5175 = vmatpush1.bf16.msra.mxu0 %v4926
      %5176 = vmatprep.subr.bf16.mxu0 0
      %5177 = vmatpush1.bf16.msra.mxu0 0
      %5178 = vmatprep.subr.bf16.mxu0 0
      %5179 = vmatpush1.bf16.msra.mxu0 0
      %5180 = vmatprep.subr.bf16.mxu0 0
      %5181 = vmatpush1.bf16.msra.mxu0 0
      %5182 = vmatprep.subr.bf16.mxu0 0
      %5183 = vmatpush1.bf16.msra.mxu0 0
      %5184 = vmatprep.subr.bf16.mxu0 0
      %5185 = vmatpush1.bf16.msra.mxu0 0
      %5186 = vmatprep.subr.bf16.mxu0 0
      %5187 = vmatpush1.bf16.msra.mxu0 0
      %5188 = vmatprep.subr.bf16.mxu0 0
      %5189 = vmatpush1.bf16.msra.mxu0 0
      %5190 = vmatprep.subr.bf16.mxu0 0
      %5191 = vmatpush1.bf16.msra.mxu0 0
      %5192 = vmatprep.subr.bf16.mxu0 0
      %5193 = vmatpush1.bf16.msra.mxu0 0
      %5194 = vmatprep.subr.bf16.mxu0 0
      %5195 = vmatpush1.bf16.msra.mxu0 0
      %5196 = vmatprep.subr.bf16.mxu0 0
      %5197 = vmatpush1.bf16.msra.mxu0 0
      %5198 = vmatprep.subr.bf16.mxu0 0
      %5199 = vmatpush1.bf16.msra.mxu0 0
      %5200 = vmatprep.subr.bf16.mxu0 0
      %5201 = vmatpush1.bf16.msra.mxu0 0
      %5202 = vmatprep.subr.bf16.mxu0 0
      %5203 = vmatpush1.bf16.msra.mxu0 0
      %5204 = vmatprep.mubr.bf16.mxu0 0
      %5205 = vmatmul.mubr.bf16.gmra.mrb[0].mxu0 %v4965
      %v5206 = vpop.f32.mrb[0].mxu0
      %v5207 = vadd.f32 %v4767, %v5206
      %v5208 = vpop.f32.mrb[0].mxu0
      %v5209 = vadd.f32 %v4771, %v5208
      %v5210 = vpop.f32.mrb[0].mxu0
      %v5211 = vpop.f32.mrb[0].mxu0
      %5212 = vdwg.mxu0
      %5213 = vmatprep.subr.bf16.mxu0 %v4913
      %5214 = vmatpush1.bf16.msra.mxu0 %v4912
      %5215 = vmatprep.subr.bf16.mxu0 %v4929
      %5216 = vmatpush1.bf16.msra.mxu0 %v4928
      %5217 = vmatprep.subr.bf16.mxu0 0
      %5218 = vmatpush1.bf16.msra.mxu0 0
      %5219 = vmatprep.subr.bf16.mxu0 0
      %5220 = vmatpush1.bf16.msra.mxu0 0
      %5221 = vmatprep.subr.bf16.mxu0 0
      %5222 = vmatpush1.bf16.msra.mxu0 0
      %5223 = vmatprep.subr.bf16.mxu0 0
      %5224 = vmatpush1.bf16.msra.mxu0 0
      %5225 = vmatprep.subr.bf16.mxu0 0
      %5226 = vmatpush1.bf16.msra.mxu0 0
      %5227 = vmatprep.subr.bf16.mxu0 0
      %5228 = vmatpush1.bf16.msra.mxu0 0
      %5229 = vmatprep.subr.bf16.mxu0 0
      %5230 = vmatpush1.bf16.msra.mxu0 0
      %5231 = vmatprep.subr.bf16.mxu0 0
      %5232 = vmatpush1.bf16.msra.mxu0 0
      %5233 = vmatprep.subr.bf16.mxu0 0
      %5234 = vmatpush1.bf16.msra.mxu0 0
      %5235 = vmatprep.subr.bf16.mxu0 0
      %5236 = vmatpush1.bf16.msra.mxu0 0
      %5237 = vmatprep.subr.bf16.mxu0 0
      %5238 = vmatpush1.bf16.msra.mxu0 0
      %5239 = vmatprep.subr.bf16.mxu0 0
      %5240 = vmatpush1.bf16.msra.mxu0 0
      %5241 = vmatprep.subr.bf16.mxu0 0
      %5242 = vmatpush1.bf16.msra.mxu0 0
      %5243 = vmatprep.subr.bf16.mxu0 0
      %5244 = vmatpush1.bf16.msra.mxu0 0
      %5245 = vmatprep.mubr.bf16.mxu0 0
      %5246 = vmatmul.mubr.bf16.gmra.mrb[0].mxu0 %v4965
      %v5247 = vpop.f32.mrb[0].mxu0
      %v5248 = vadd.f32 %v4775, %v5247
      %v5249 = vpop.f32.mrb[0].mxu0
      %v5250 = vadd.f32 %v4779, %v5249
      %v5251 = vpop.f32.mrb[0].mxu0
      %v5252 = vpop.f32.mrb[0].mxu0
      %5253 = vdwg.mxu0
      %5254 = vmatprep.subr.bf16.mxu0 %v4915
      %5255 = vmatpush1.bf16.msra.mxu0 %v4914
      %5256 = vmatprep.subr.bf16.mxu0 %v4931
      %5257 = vmatpush1.bf16.msra.mxu0 %v4930
      %5258 = vmatprep.subr.bf16.mxu0 0
      %5259 = vmatpush1.bf16.msra.mxu0 0
      %5260 = vmatprep.subr.bf16.mxu0 0
      %5261 = vmatpush1.bf16.msra.mxu0 0
      %5262 = vmatprep.subr.bf16.mxu0 0
      %5263 = vmatpush1.bf16.msra.mxu0 0
      %5264 = vmatprep.subr.bf16.mxu0 0
      %5265 = vmatpush1.bf16.msra.mxu0 0
      %5266 = vmatprep.subr.bf16.mxu0 0
      %5267 = vmatpush1.bf16.msra.mxu0 0
      %5268 = vmatprep.subr.bf16.mxu0 0
      %5269 = vmatpush1.bf16.msra.mxu0 0
      %5270 = vmatprep.subr.bf16.mxu0 0
      %5271 = vmatpush1.bf16.msra.mxu0 0
      %5272 = vmatprep.subr.bf16.mxu0 0
      %5273 = vmatpush1.bf16.msra.mxu0 0
      %5274 = vmatprep.subr.bf16.mxu0 0
      %5275 = vmatpush1.bf16.msra.mxu0 0
      %5276 = vmatprep.subr.bf16.mxu0 0
      %5277 = vmatpush1.bf16.msra.mxu0 0
      %5278 = vmatprep.subr.bf16.mxu0 0
      %5279 = vmatpush1.bf16.msra.mxu0 0
      %5280 = vmatprep.subr.bf16.mxu0 0
      %5281 = vmatpush1.bf16.msra.mxu0 0
      %5282 = vmatprep.subr.bf16.mxu0 0
      %5283 = vmatpush1.bf16.msra.mxu0 0
      %5284 = vmatprep.subr.bf16.mxu0 0
      %5285 = vmatpush1.bf16.msra.mxu0 0
      %5286 = vmatprep.mubr.bf16.mxu0 0
      %5287 = vmatmul.mubr.bf16.gmra.mrb[0].mxu0 %v4965
      %v5288 = vpop.f32.mrb[0].mxu0
      %v5289 = vadd.f32 %v4783, %v5288
      %v5290 = vpop.f32.mrb[0].mxu0
      %v5291 = vadd.f32 %v4787, %v5290
      %v5292 = vpop.f32.mrb[0].mxu0
      %v5293 = vpop.f32.mrb[0].mxu0
      %5294 = vdwg.mxu0
      %v5295 = vmax.f32 %v5002, 0.0
      %v5296 = vmax.f32 %v5004, 0.0
      %v5297 = vmax.f32 %v5043, 0.0
      %v5298 = vmax.f32 %v5045, 0.0
      %v5299 = vmax.f32 %v5084, 0.0
      %v5300 = vmax.f32 %v5086, 0.0
      %v5301 = vmax.f32 %v5125, 0.0
      %v5302 = vmax.f32 %v5127, 0.0
      %v5303 = vmax.f32 %v5166, 0.0
      %v5304 = vmax.f32 %v5168, 0.0
      %v5305 = vmax.f32 %v5207, 0.0
      %v5306 = vmax.f32 %v5209, 0.0
      %v5307 = vmax.f32 %v5248, 0.0
      %v5308 = vmax.f32 %v5250, 0.0
      %v5309 = vmax.f32 %v5289, 0.0
      %v5310 = vmax.f32 %v5291, 0.0
      %v5311 = vpack.c.bf16 %v5295, %v5295
      %v5312 = vpack.c.bf16 %v5296, %v5296
      %v5313 = vpack.c.bf16 %v5297, %v5297
      %v5314 = vpack.c.bf16 %v5298, %v5298
      %v5315 = vpack.c.bf16 %v5299, %v5299
      %v5316 = vpack.c.bf16 %v5300, %v5300
      %v5317 = vpack.c.bf16 %v5301, %v5301
      %v5318 = vpack.c.bf16 %v5302, %v5302
      %v5319 = vpack.c.bf16 %v5303, %v5303
      %v5320 = vpack.c.bf16 %v5304, %v5304
      %v5321 = vpack.c.bf16 %v5305, %v5305
      %v5322 = vpack.c.bf16 %v5306, %v5306
      %v5323 = vpack.c.bf16 %v5307, %v5307
      %v5324 = vpack.c.bf16 %v5308, %v5308
      %v5325 = vpack.c.bf16 %v5309, %v5309
      %v5326 = vpack.c.bf16 %v5310, %v5310
      %v5328 = vlaneseq
      %v5329 = vshrl.u32 %v5328, 7
      %v5330 = vsub.s32 0, %v5329
      %v5331 = vrot.slane %v3873, %v5330
      %v5589 = vunpack.c.l.b16 %v3616
      %v5590 = vunpack.c.l.b16 %v3617
      %v5591 = vunpack.c.l.b16 %v3618
      %v5592 = vunpack.c.l.b16 %v3619
      %v5593 = vunpack.c.l.b16 %v3620
      %v5594 = vunpack.c.l.b16 %v3621
      %v5595 = vunpack.c.l.b16 %v3622
      %v5596 = vunpack.c.l.b16 %v3623
      %v5597 = vunpack.c.l.b16 %v3624
      %v5598 = vunpack.c.l.b16 %v3625
      %v5599 = vunpack.c.l.b16 %v3626
      %v5600 = vunpack.c.l.b16 %v3627
      %v5601 = vunpack.c.l.b16 %v3628
      %v5602 = vunpack.c.l.b16 %v3629
      %v5603 = vunpack.c.l.b16 %v3630
      %v5604 = vunpack.c.l.b16 %v3631
      %v5605 = vunpack.c.l.b16 %v3632
      %v5606 = vunpack.c.l.b16 %v3633
      %v5607 = vunpack.c.l.b16 %v3634
      %v5608 = vunpack.c.l.b16 %v3635
      %v5609 = vunpack.c.l.b16 %v3636
      %v5610 = vunpack.c.l.b16 %v3637
      %v5611 = vunpack.c.l.b16 %v3638
      %v5612 = vunpack.c.l.b16 %v3639
      %v5613 = vunpack.c.l.b16 %v3640
      %v5614 = vunpack.c.l.b16 %v3641
      %v5615 = vunpack.c.l.b16 %v3642
      %v5616 = vunpack.c.l.b16 %v3643
      %v5617 = vunpack.c.l.b16 %v3644
      %v5618 = vunpack.c.l.b16 %v3645
      %v5619 = vunpack.c.l.b16 %v3646
      %v5620 = vunpack.c.l.b16 %v3647
      %v5621 = vunpack.c.l.b16 %v3648
      %v5622 = vunpack.c.l.b16 %v3649
      %v5623 = vunpack.c.l.b16 %v3650
      %v5624 = vunpack.c.l.b16 %v3651
      %v5625 = vunpack.c.l.b16 %v3652
      %v5626 = vunpack.c.l.b16 %v3653
      %v5627 = vunpack.c.l.b16 %v3654
      %v5628 = vunpack.c.l.b16 %v3655
      %v5629 = vunpack.c.l.b16 %v3656
      %v5630 = vunpack.c.l.b16 %v3657
      %v5631 = vunpack.c.l.b16 %v3658
      %v5632 = vunpack.c.l.b16 %v3659
      %v5633 = vunpack.c.l.b16 %v3660
      %v5634 = vunpack.c.l.b16 %v3661
      %v5635 = vunpack.c.l.b16 %v3662
      %v5636 = vunpack.c.l.b16 %v3663
      %v5637 = vunpack.c.l.b16 %v3664
      %v5638 = vunpack.c.l.b16 %v3665
      %v5639 = vunpack.c.l.b16 %v3666
      %v5640 = vunpack.c.l.b16 %v3667
      %v5641 = vunpack.c.l.b16 %v3668
      %v5642 = vunpack.c.l.b16 %v3669
      %v5643 = vunpack.c.l.b16 %v3670
      %v5644 = vunpack.c.l.b16 %v3671
      %v5645 = vunpack.c.l.b16 %v3672
      %v5646 = vunpack.c.l.b16 %v3673
      %v5647 = vunpack.c.l.b16 %v3674
      %v5648 = vunpack.c.l.b16 %v3675
      %v5649 = vunpack.c.l.b16 %v3676
      %v5650 = vunpack.c.l.b16 %v3677
      %v5651 = vunpack.c.l.b16 %v3678
      %v5652 = vunpack.c.l.b16 %v3679
      %v5653 = vunpack.c.l.b16 %v3680
      %v5654 = vunpack.c.l.b16 %v3681
      %v5655 = vunpack.c.l.b16 %v3682
      %v5656 = vunpack.c.l.b16 %v3683
      %v5657 = vunpack.c.l.b16 %v3684
      %v5658 = vunpack.c.l.b16 %v3685
      %v5659 = vunpack.c.l.b16 %v3686
      %v5660 = vunpack.c.l.b16 %v3687
      %v5661 = vunpack.c.l.b16 %v3688
      %v5662 = vunpack.c.l.b16 %v3689
      %v5663 = vunpack.c.l.b16 %v3690
      %v5664 = vunpack.c.l.b16 %v3691
      %v5665 = vunpack.c.l.b16 %v3692
      %v5666 = vunpack.c.l.b16 %v3693
      %v5667 = vunpack.c.l.b16 %v3694
      %v5668 = vunpack.c.l.b16 %v3695
      %v5669 = vunpack.c.l.b16 %v3696
      %v5670 = vunpack.c.l.b16 %v3697
      %v5671 = vunpack.c.l.b16 %v3698
      %v5672 = vunpack.c.l.b16 %v3699
      %v5673 = vunpack.c.l.b16 %v3700
      %v5674 = vunpack.c.l.b16 %v3701
      %v5675 = vunpack.c.l.b16 %v3702
      %v5676 = vunpack.c.l.b16 %v3703
      %v5677 = vunpack.c.l.b16 %v3704
      %v5678 = vunpack.c.l.b16 %v3705
      %v5679 = vunpack.c.l.b16 %v3706
      %v5680 = vunpack.c.l.b16 %v3707
      %v5681 = vunpack.c.l.b16 %v3708
      %v5682 = vunpack.c.l.b16 %v3709
      %v5683 = vunpack.c.l.b16 %v3710
      %v5684 = vunpack.c.l.b16 %v3711
      %v5685 = vunpack.c.l.b16 %v3712
      %v5686 = vunpack.c.l.b16 %v3713
      %v5687 = vunpack.c.l.b16 %v3714
      %v5688 = vunpack.c.l.b16 %v3715
      %v5689 = vunpack.c.l.b16 %v3716
      %v5690 = vunpack.c.l.b16 %v3717
      %v5691 = vunpack.c.l.b16 %v3718
      %v5692 = vunpack.c.l.b16 %v3719
      %v5693 = vunpack.c.l.b16 %v3720
      %v5694 = vunpack.c.l.b16 %v3721
      %v5695 = vunpack.c.l.b16 %v3722
      %v5696 = vunpack.c.l.b16 %v3723
      %v5697 = vunpack.c.l.b16 %v3724
      %v5698 = vunpack.c.l.b16 %v3725
      %v5699 = vunpack.c.l.b16 %v3726
      %v5700 = vunpack.c.l.b16 %v3727
      %v5701 = vunpack.c.l.b16 %v3728
      %v5702 = vunpack.c.l.b16 %v3729
      %v5703 = vunpack.c.l.b16 %v3730
      %v5704 = vunpack.c.l.b16 %v3731
      %v5705 = vunpack.c.l.b16 %v3732
      %v5706 = vunpack.c.l.b16 %v3733
      %v5707 = vunpack.c.l.b16 %v3734
      %v5708 = vunpack.c.l.b16 %v3735
      %v5709 = vunpack.c.l.b16 %v3736
      %v5710 = vunpack.c.l.b16 %v3737
      %v5711 = vunpack.c.l.b16 %v3738
      %v5712 = vunpack.c.l.b16 %v3739
      %v5713 = vunpack.c.l.b16 %v3740
      %v5714 = vunpack.c.l.b16 %v3741
      %v5715 = vunpack.c.l.b16 %v3742
      %v5716 = vunpack.c.l.b16 %v3743
      %v5717 = vunpack.c.l.b16 %v3744
      %v5718 = vunpack.c.l.b16 %v3745
      %v5719 = vunpack.c.l.b16 %v3746
      %v5720 = vunpack.c.l.b16 %v3747
      %v5721 = vunpack.c.l.b16 %v3748
      %v5722 = vunpack.c.l.b16 %v3749
      %v5723 = vunpack.c.l.b16 %v3750
      %v5724 = vunpack.c.l.b16 %v3751
      %v5725 = vunpack.c.l.b16 %v3752
      %v5726 = vunpack.c.l.b16 %v3753
      %v5727 = vunpack.c.l.b16 %v3754
      %v5728 = vunpack.c.l.b16 %v3755
      %v5729 = vunpack.c.l.b16 %v3756
      %v5730 = vunpack.c.l.b16 %v3757
      %v5731 = vunpack.c.l.b16 %v3758
      %v5732 = vunpack.c.l.b16 %v3759
      %v5733 = vunpack.c.l.b16 %v3760
      %v5734 = vunpack.c.l.b16 %v3761
      %v5735 = vunpack.c.l.b16 %v3762
      %v5736 = vunpack.c.l.b16 %v3763
      %v5737 = vunpack.c.l.b16 %v3764
      %v5738 = vunpack.c.l.b16 %v3765
      %v5739 = vunpack.c.l.b16 %v3766
      %v5740 = vunpack.c.l.b16 %v3767
      %v5741 = vunpack.c.l.b16 %v3768
      %v5742 = vunpack.c.l.b16 %v3769
      %v5743 = vunpack.c.l.b16 %v3770
      %v5744 = vunpack.c.l.b16 %v3771
      %v5745 = vunpack.c.l.b16 %v3772
      %v5746 = vunpack.c.l.b16 %v3773
      %v5747 = vunpack.c.l.b16 %v3774
      %v5748 = vunpack.c.l.b16 %v3775
      %v5749 = vunpack.c.l.b16 %v3776
      %v5750 = vunpack.c.l.b16 %v3777
      %v5751 = vunpack.c.l.b16 %v3778
      %v5752 = vunpack.c.l.b16 %v3779
      %v5753 = vunpack.c.l.b16 %v3780
      %v5754 = vunpack.c.l.b16 %v3781
      %v5755 = vunpack.c.l.b16 %v3782
      %v5756 = vunpack.c.l.b16 %v3783
      %v5757 = vunpack.c.l.b16 %v3784
      %v5758 = vunpack.c.l.b16 %v3785
      %v5759 = vunpack.c.l.b16 %v3786
      %v5760 = vunpack.c.l.b16 %v3787
      %v5761 = vunpack.c.l.b16 %v3788
      %v5762 = vunpack.c.l.b16 %v3789
      %v5763 = vunpack.c.l.b16 %v3790
      %v5764 = vunpack.c.l.b16 %v3791
      %v5765 = vunpack.c.l.b16 %v3792
      %v5766 = vunpack.c.l.b16 %v3793
      %v5767 = vunpack.c.l.b16 %v3794
      %v5768 = vunpack.c.l.b16 %v3795
      %v5769 = vunpack.c.l.b16 %v3796
      %v5770 = vunpack.c.l.b16 %v3797
      %v5771 = vunpack.c.l.b16 %v3798
      %v5772 = vunpack.c.l.b16 %v3799
      %v5773 = vunpack.c.l.b16 %v3800
      %v5774 = vunpack.c.l.b16 %v3801
      %v5775 = vunpack.c.l.b16 %v3802
      %v5776 = vunpack.c.l.b16 %v3803
      %v5777 = vunpack.c.l.b16 %v3804
      %v5778 = vunpack.c.l.b16 %v3805
      %v5779 = vunpack.c.l.b16 %v3806
      %v5780 = vunpack.c.l.b16 %v3807
      %v5781 = vunpack.c.l.b16 %v3808
      %v5782 = vunpack.c.l.b16 %v3809
      %v5783 = vunpack.c.l.b16 %v3810
      %v5784 = vunpack.c.l.b16 %v3811
      %v5785 = vunpack.c.l.b16 %v3812
      %v5786 = vunpack.c.l.b16 %v3813
      %v5787 = vunpack.c.l.b16 %v3814
      %v5788 = vunpack.c.l.b16 %v3815
      %v5789 = vunpack.c.l.b16 %v3816
      %v5790 = vunpack.c.l.b16 %v3817
      %v5791 = vunpack.c.l.b16 %v3818
      %v5792 = vunpack.c.l.b16 %v3819
      %v5793 = vunpack.c.l.b16 %v3820
      %v5794 = vunpack.c.l.b16 %v3821
      %v5795 = vunpack.c.l.b16 %v3822
      %v5796 = vunpack.c.l.b16 %v3823
      %v5797 = vunpack.c.l.b16 %v3824
      %v5798 = vunpack.c.l.b16 %v3825
      %v5799 = vunpack.c.l.b16 %v3826
      %v5800 = vunpack.c.l.b16 %v3827
      %v5801 = vunpack.c.l.b16 %v3828
      %v5802 = vunpack.c.l.b16 %v3829
      %v5803 = vunpack.c.l.b16 %v3830
      %v5804 = vunpack.c.l.b16 %v3831
      %v5805 = vunpack.c.l.b16 %v3832
      %v5806 = vunpack.c.l.b16 %v3833
      %v5807 = vunpack.c.l.b16 %v3834
      %v5808 = vunpack.c.l.b16 %v3835
      %v5809 = vunpack.c.l.b16 %v3836
      %v5810 = vunpack.c.l.b16 %v3837
      %v5811 = vunpack.c.l.b16 %v3838
      %v5812 = vunpack.c.l.b16 %v3839
      %v5813 = vunpack.c.l.b16 %v3840
      %v5814 = vunpack.c.l.b16 %v3841
      %v5815 = vunpack.c.l.b16 %v3842
      %v5816 = vunpack.c.l.b16 %v3843
      %v5817 = vunpack.c.l.b16 %v3844
      %v5818 = vunpack.c.l.b16 %v3845
      %v5819 = vunpack.c.l.b16 %v3846
      %v5820 = vunpack.c.l.b16 %v3847
      %v5821 = vunpack.c.l.b16 %v3848
      %v5822 = vunpack.c.l.b16 %v3849
      %v5823 = vunpack.c.l.b16 %v3850
      %v5824 = vunpack.c.l.b16 %v3851
      %v5825 = vunpack.c.l.b16 %v3852
      %v5826 = vunpack.c.l.b16 %v3853
      %v5827 = vunpack.c.l.b16 %v3854
      %v5828 = vunpack.c.l.b16 %v3855
      %v5829 = vunpack.c.l.b16 %v3856
      %v5830 = vunpack.c.l.b16 %v3857
      %v5831 = vunpack.c.l.b16 %v3858
      %v5832 = vunpack.c.l.b16 %v3859
      %v5833 = vunpack.c.l.b16 %v3860
      %v5834 = vunpack.c.l.b16 %v3861
      %v5835 = vunpack.c.l.b16 %v3862
      %v5836 = vunpack.c.l.b16 %v3863
      %v5837 = vunpack.c.l.b16 %v3864
      %v5838 = vunpack.c.l.b16 %v3865
      %v5839 = vunpack.c.l.b16 %v3866
      %v5840 = vunpack.c.l.b16 %v3867
      %v5841 = vunpack.c.l.b16 %v3868
      %v5842 = vunpack.c.l.b16 %v3869
      %v5843 = vunpack.c.l.b16 %v3870
      %v5844 = vunpack.c.l.b16 %v3871
      %v5845 = vpack.c.b16 %v5590, %v5589
      %v5846 = vpack.c.b16 %v5592, %v5591
      %v5847 = vpack.c.b16 %v5594, %v5593
      %v5848 = vpack.c.b16 %v5596, %v5595
      %v5849 = vpack.c.b16 %v5598, %v5597
      %v5850 = vpack.c.b16 %v5600, %v5599
      %v5851 = vpack.c.b16 %v5602, %v5601
      %v5852 = vpack.c.b16 %v5604, %v5603
      %v5853 = vpack.c.b16 %v5606, %v5605
      %v5854 = vpack.c.b16 %v5608, %v5607
      %v5855 = vpack.c.b16 %v5610, %v5609
      %v5856 = vpack.c.b16 %v5612, %v5611
      %v5857 = vpack.c.b16 %v5614, %v5613
      %v5858 = vpack.c.b16 %v5616, %v5615
      %v5859 = vpack.c.b16 %v5618, %v5617
      %v5860 = vpack.c.b16 %v5620, %v5619
      %v5861 = vpack.c.b16 %v5622, %v5621
      %v5862 = vpack.c.b16 %v5624, %v5623
      %v5863 = vpack.c.b16 %v5626, %v5625
      %v5864 = vpack.c.b16 %v5628, %v5627
      %v5865 = vpack.c.b16 %v5630, %v5629
      %v5866 = vpack.c.b16 %v5632, %v5631
      %v5867 = vpack.c.b16 %v5634, %v5633
      %v5868 = vpack.c.b16 %v5636, %v5635
      %v5869 = vpack.c.b16 %v5638, %v5637
      %v5870 = vpack.c.b16 %v5640, %v5639
      %v5871 = vpack.c.b16 %v5642, %v5641
      %v5872 = vpack.c.b16 %v5644, %v5643
      %v5873 = vpack.c.b16 %v5646, %v5645
      %v5874 = vpack.c.b16 %v5648, %v5647
      %v5875 = vpack.c.b16 %v5650, %v5649
      %v5876 = vpack.c.b16 %v5652, %v5651
      %v5877 = vpack.c.b16 %v5654, %v5653
      %v5878 = vpack.c.b16 %v5656, %v5655
      %v5879 = vpack.c.b16 %v5658, %v5657
      %v5880 = vpack.c.b16 %v5660, %v5659
      %v5881 = vpack.c.b16 %v5662, %v5661
      %v5882 = vpack.c.b16 %v5664, %v5663
      %v5883 = vpack.c.b16 %v5666, %v5665
      %v5884 = vpack.c.b16 %v5668, %v5667
      %v5885 = vpack.c.b16 %v5670, %v5669
      %v5886 = vpack.c.b16 %v5672, %v5671
      %v5887 = vpack.c.b16 %v5674, %v5673
      %v5888 = vpack.c.b16 %v5676, %v5675
      %v5889 = vpack.c.b16 %v5678, %v5677
      %v5890 = vpack.c.b16 %v5680, %v5679
      %v5891 = vpack.c.b16 %v5682, %v5681
      %v5892 = vpack.c.b16 %v5684, %v5683
      %v5893 = vpack.c.b16 %v5686, %v5685
      %v5894 = vpack.c.b16 %v5688, %v5687
      %v5895 = vpack.c.b16 %v5690, %v5689
      %v5896 = vpack.c.b16 %v5692, %v5691
      %v5897 = vpack.c.b16 %v5694, %v5693
      %v5898 = vpack.c.b16 %v5696, %v5695
      %v5899 = vpack.c.b16 %v5698, %v5697
      %v5900 = vpack.c.b16 %v5700, %v5699
      %v5901 = vpack.c.b16 %v5702, %v5701
      %v5902 = vpack.c.b16 %v5704, %v5703
      %v5903 = vpack.c.b16 %v5706, %v5705
      %v5904 = vpack.c.b16 %v5708, %v5707
      %v5905 = vpack.c.b16 %v5710, %v5709
      %v5906 = vpack.c.b16 %v5712, %v5711
      %v5907 = vpack.c.b16 %v5714, %v5713
      %v5908 = vpack.c.b16 %v5716, %v5715
      %v5909 = vpack.c.b16 %v5718, %v5717
      %v5910 = vpack.c.b16 %v5720, %v5719
      %v5911 = vpack.c.b16 %v5722, %v5721
      %v5912 = vpack.c.b16 %v5724, %v5723
      %v5913 = vpack.c.b16 %v5726, %v5725
      %v5914 = vpack.c.b16 %v5728, %v5727
      %v5915 = vpack.c.b16 %v5730, %v5729
      %v5916 = vpack.c.b16 %v5732, %v5731
      %v5917 = vpack.c.b16 %v5734, %v5733
      %v5918 = vpack.c.b16 %v5736, %v5735
      %v5919 = vpack.c.b16 %v5738, %v5737
      %v5920 = vpack.c.b16 %v5740, %v5739
      %v5921 = vpack.c.b16 %v5742, %v5741
      %v5922 = vpack.c.b16 %v5744, %v5743
      %v5923 = vpack.c.b16 %v5746, %v5745
      %v5924 = vpack.c.b16 %v5748, %v5747
      %v5925 = vpack.c.b16 %v5750, %v5749
      %v5926 = vpack.c.b16 %v5752, %v5751
      %v5927 = vpack.c.b16 %v5754, %v5753
      %v5928 = vpack.c.b16 %v5756, %v5755
      %v5929 = vpack.c.b16 %v5758, %v5757
      %v5930 = vpack.c.b16 %v5760, %v5759
      %v5931 = vpack.c.b16 %v5762, %v5761
      %v5932 = vpack.c.b16 %v5764, %v5763
      %v5933 = vpack.c.b16 %v5766, %v5765
      %v5934 = vpack.c.b16 %v5768, %v5767
      %v5935 = vpack.c.b16 %v5770, %v5769
      %v5936 = vpack.c.b16 %v5772, %v5771
      %v5937 = vpack.c.b16 %v5774, %v5773
      %v5938 = vpack.c.b16 %v5776, %v5775
      %v5939 = vpack.c.b16 %v5778, %v5777
      %v5940 = vpack.c.b16 %v5780, %v5779
      %v5941 = vpack.c.b16 %v5782, %v5781
      %v5942 = vpack.c.b16 %v5784, %v5783
      %v5943 = vpack.c.b16 %v5786, %v5785
      %v5944 = vpack.c.b16 %v5788, %v5787
      %v5945 = vpack.c.b16 %v5790, %v5789
      %v5946 = vpack.c.b16 %v5792, %v5791
      %v5947 = vpack.c.b16 %v5794, %v5793
      %v5948 = vpack.c.b16 %v5796, %v5795
      %v5949 = vpack.c.b16 %v5798, %v5797
      %v5950 = vpack.c.b16 %v5800, %v5799
      %v5951 = vpack.c.b16 %v5802, %v5801
      %v5952 = vpack.c.b16 %v5804, %v5803
      %v5953 = vpack.c.b16 %v5806, %v5805
      %v5954 = vpack.c.b16 %v5808, %v5807
      %v5955 = vpack.c.b16 %v5810, %v5809
      %v5956 = vpack.c.b16 %v5812, %v5811
      %v5957 = vpack.c.b16 %v5814, %v5813
      %v5958 = vpack.c.b16 %v5816, %v5815
      %v5959 = vpack.c.b16 %v5818, %v5817
      %v5960 = vpack.c.b16 %v5820, %v5819
      %v5961 = vpack.c.b16 %v5822, %v5821
      %v5962 = vpack.c.b16 %v5824, %v5823
      %v5963 = vpack.c.b16 %v5826, %v5825
      %v5964 = vpack.c.b16 %v5828, %v5827
      %v5965 = vpack.c.b16 %v5830, %v5829
      %v5966 = vpack.c.b16 %v5832, %v5831
      %v5967 = vpack.c.b16 %v5834, %v5833
      %v5968 = vpack.c.b16 %v5836, %v5835
      %v5969 = vpack.c.b16 %v5838, %v5837
      %v5970 = vpack.c.b16 %v5840, %v5839
      %v5971 = vpack.c.b16 %v5842, %v5841
      %v5972 = vpack.c.b16 %v5844, %v5843
      %6101 = vmatprep.subr.bf16.mxu0 0
      %6102 = vmatpush1.bf16.msra.mxu0 %v5845
      %6103 = vmatprep.subr.bf16.mxu0 0
      %6104 = vmatpush1.bf16.msra.mxu0 %v5846
      %6105 = vmatprep.subr.bf16.mxu0 0
      %6106 = vmatpush1.bf16.msra.mxu0 %v5847
      %6107 = vmatprep.subr.bf16.mxu0 0
      %6108 = vmatpush1.bf16.msra.mxu0 %v5848
      %6109 = vmatprep.subr.bf16.mxu0 0
      %6110 = vmatpush1.bf16.msra.mxu0 %v5849
      %6111 = vmatprep.subr.bf16.mxu0 0
      %6112 = vmatpush1.bf16.msra.mxu0 %v5850
      %6113 = vmatprep.subr.bf16.mxu0 0
      %6114 = vmatpush1.bf16.msra.mxu0 %v5851
      %6115 = vmatprep.subr.bf16.mxu0 0
      %6116 = vmatpush1.bf16.msra.mxu0 %v5852
      %6117 = vmatprep.subr.bf16.mxu0 0
      %6118 = vmatpush1.bf16.msra.mxu0 %v5853
      %6119 = vmatprep.subr.bf16.mxu0 0
      %6120 = vmatpush1.bf16.msra.mxu0 %v5854
      %6121 = vmatprep.subr.bf16.mxu0 0
      %6122 = vmatpush1.bf16.msra.mxu0 %v5855
      %6123 = vmatprep.subr.bf16.mxu0 0
      %6124 = vmatpush1.bf16.msra.mxu0 %v5856
      %6125 = vmatprep.subr.bf16.mxu0 0
      %6126 = vmatpush1.bf16.msra.mxu0 %v5857
      %6127 = vmatprep.subr.bf16.mxu0 0
      %6128 = vmatpush1.bf16.msra.mxu0 %v5858
      %6129 = vmatprep.subr.bf16.mxu0 0
      %6130 = vmatpush1.bf16.msra.mxu0 %v5859
      %6131 = vmatprep.subr.bf16.mxu0 0
      %6132 = vmatpush1.bf16.msra.mxu0 %v5860
      %6133 = vmatprep.mubr.bf16.mxu0 %v5312
      %6134 = vmatmul.mubr.bf16.gmra.mrb[0].mxu0 %v5311
      %v6135 = vpop.f32.mrb[0].mxu0
      %v6136 = vadd.f32 %v5331, %v6135
      %v6137 = vpop.f32.mrb[0].mxu0
      %v6138 = vpop.f32.mrb[0].mxu0
      %v6139 = vpop.f32.mrb[0].mxu0
      %6140 = vdwg.mxu0
      %6141 = vmatprep.subr.bf16.mxu0 0
      %6142 = vmatpush1.bf16.msra.mxu0 %v5861
      %6143 = vmatprep.subr.bf16.mxu0 0
      %6144 = vmatpush1.bf16.msra.mxu0 %v5862
      %6145 = vmatprep.subr.bf16.mxu0 0
      %6146 = vmatpush1.bf16.msra.mxu0 %v5863
      %6147 = vmatprep.subr.bf16.mxu0 0
      %6148 = vmatpush1.bf16.msra.mxu0 %v5864
      %6149 = vmatprep.subr.bf16.mxu0 0
      %6150 = vmatpush1.bf16.msra.mxu0 %v5865
      %6151 = vmatprep.subr.bf16.mxu0 0
      %6152 = vmatpush1.bf16.msra.mxu0 %v5866
      %6153 = vmatprep.subr.bf16.mxu0 0
      %6154 = vmatpush1.bf16.msra.mxu0 %v5867
      %6155 = vmatprep.subr.bf16.mxu0 0
      %6156 = vmatpush1.bf16.msra.mxu0 %v5868
      %6157 = vmatprep.subr.bf16.mxu0 0
      %6158 = vmatpush1.bf16.msra.mxu0 %v5869
      %6159 = vmatprep.subr.bf16.mxu0 0
      %6160 = vmatpush1.bf16.msra.mxu0 %v5870
      %6161 = vmatprep.subr.bf16.mxu0 0
      %6162 = vmatpush1.bf16.msra.mxu0 %v5871
      %6163 = vmatprep.subr.bf16.mxu0 0
      %6164 = vmatpush1.bf16.msra.mxu0 %v5872
      %6165 = vmatprep.subr.bf16.mxu0 0
      %6166 = vmatpush1.bf16.msra.mxu0 %v5873
      %6167 = vmatprep.subr.bf16.mxu0 0
      %6168 = vmatpush1.bf16.msra.mxu0 %v5874
      %6169 = vmatprep.subr.bf16.mxu0 0
      %6170 = vmatpush1.bf16.msra.mxu0 %v5875
      %6171 = vmatprep.subr.bf16.mxu0 0
      %6172 = vmatpush1.bf16.msra.mxu0 %v5876
      %6173 = vmatprep.mubr.bf16.mxu0 %v5314
      %6174 = vmatmul.mubr.bf16.gmra.mrb[0].mxu0 %v5313
      %v6175 = vpop.f32.mrb[0].mxu0
      %v6176 = vadd.f32 %v6136, %v6175
      %v6177 = vpop.f32.mrb[0].mxu0
      %v6178 = vpop.f32.mrb[0].mxu0
      %v6179 = vpop.f32.mrb[0].mxu0
      %6180 = vdwg.mxu0
      %6181 = vmatprep.subr.bf16.mxu0 0
      %6182 = vmatpush1.bf16.msra.mxu0 %v5877
      %6183 = vmatprep.subr.bf16.mxu0 0
      %6184 = vmatpush1.bf16.msra.mxu0 %v5878
      %6185 = vmatprep.subr.bf16.mxu0 0
      %6186 = vmatpush1.bf16.msra.mxu0 %v5879
      %6187 = vmatprep.subr.bf16.mxu0 0
      %6188 = vmatpush1.bf16.msra.mxu0 %v5880
      %6189 = vmatprep.subr.bf16.mxu0 0
      %6190 = vmatpush1.bf16.msra.mxu0 %v5881
      %6191 = vmatprep.subr.bf16.mxu0 0
      %6192 = vmatpush1.bf16.msra.mxu0 %v5882
      %6193 = vmatprep.subr.bf16.mxu0 0
      %6194 = vmatpush1.bf16.msra.mxu0 %v5883
      %6195 = vmatprep.subr.bf16.mxu0 0
      %6196 = vmatpush1.bf16.msra.mxu0 %v5884
      %6197 = vmatprep.subr.bf16.mxu0 0
      %6198 = vmatpush1.bf16.msra.mxu0 %v5885
      %6199 = vmatprep.subr.bf16.mxu0 0
      %6200 = vmatpush1.bf16.msra.mxu0 %v5886
      %6201 = vmatprep.subr.bf16.mxu0 0
      %6202 = vmatpush1.bf16.msra.mxu0 %v5887
      %6203 = vmatprep.subr.bf16.mxu0 0
      %6204 = vmatpush1.bf16.msra.mxu0 %v5888
      %6205 = vmatprep.subr.bf16.mxu0 0
      %6206 = vmatpush1.bf16.msra.mxu0 %v5889
      %6207 = vmatprep.subr.bf16.mxu0 0
      %6208 = vmatpush1.bf16.msra.mxu0 %v5890
      %6209 = vmatprep.subr.bf16.mxu0 0
      %6210 = vmatpush1.bf16.msra.mxu0 %v5891
      %6211 = vmatprep.subr.bf16.mxu0 0
      %6212 = vmatpush1.bf16.msra.mxu0 %v5892
      %6213 = vmatprep.mubr.bf16.mxu0 %v5316
      %6214 = vmatmul.mubr.bf16.gmra.mrb[0].mxu0 %v5315
      %v6215 = vpop.f32.mrb[0].mxu0
      %v6216 = vadd.f32 %v6176, %v6215
      %v6217 = vpop.f32.mrb[0].mxu0
      %v6218 = vpop.f32.mrb[0].mxu0
      %v6219 = vpop.f32.mrb[0].mxu0
      %6220 = vdwg.mxu0
      %6221 = vmatprep.subr.bf16.mxu0 0
      %6222 = vmatpush1.bf16.msra.mxu0 %v5893
      %6223 = vmatprep.subr.bf16.mxu0 0
      %6224 = vmatpush1.bf16.msra.mxu0 %v5894
      %6225 = vmatprep.subr.bf16.mxu0 0
      %6226 = vmatpush1.bf16.msra.mxu0 %v5895
      %6227 = vmatprep.subr.bf16.mxu0 0
      %6228 = vmatpush1.bf16.msra.mxu0 %v5896
      %6229 = vmatprep.subr.bf16.mxu0 0
      %6230 = vmatpush1.bf16.msra.mxu0 %v5897
      %6231 = vmatprep.subr.bf16.mxu0 0
      %6232 = vmatpush1.bf16.msra.mxu0 %v5898
      %6233 = vmatprep.subr.bf16.mxu0 0
      %6234 = vmatpush1.bf16.msra.mxu0 %v5899
      %6235 = vmatprep.subr.bf16.mxu0 0
      %6236 = vmatpush1.bf16.msra.mxu0 %v5900
      %6237 = vmatprep.subr.bf16.mxu0 0
      %6238 = vmatpush1.bf16.msra.mxu0 %v5901
      %6239 = vmatprep.subr.bf16.mxu0 0
      %6240 = vmatpush1.bf16.msra.mxu0 %v5902
      %6241 = vmatprep.subr.bf16.mxu0 0
      %6242 = vmatpush1.bf16.msra.mxu0 %v5903
      %6243 = vmatprep.subr.bf16.mxu0 0
      %6244 = vmatpush1.bf16.msra.mxu0 %v5904
      %6245 = vmatprep.subr.bf16.mxu0 0
      %6246 = vmatpush1.bf16.msra.mxu0 %v5905
      %6247 = vmatprep.subr.bf16.mxu0 0
      %6248 = vmatpush1.bf16.msra.mxu0 %v5906
      %6249 = vmatprep.subr.bf16.mxu0 0
      %6250 = vmatpush1.bf16.msra.mxu0 %v5907
      %6251 = vmatprep.subr.bf16.mxu0 0
      %6252 = vmatpush1.bf16.msra.mxu0 %v5908
      %6253 = vmatprep.mubr.bf16.mxu0 %v5318
      %6254 = vmatmul.mubr.bf16.gmra.mrb[0].mxu0 %v5317
      %v6255 = vpop.f32.mrb[0].mxu0
      %v6256 = vadd.f32 %v6216, %v6255
      %v6257 = vpop.f32.mrb[0].mxu0
      %v6258 = vpop.f32.mrb[0].mxu0
      %v6259 = vpop.f32.mrb[0].mxu0
      %6260 = vdwg.mxu0
      %6261 = vmatprep.subr.bf16.mxu0 0
      %6262 = vmatpush1.bf16.msra.mxu0 %v5909
      %6263 = vmatprep.subr.bf16.mxu0 0
      %6264 = vmatpush1.bf16.msra.mxu0 %v5910
      %6265 = vmatprep.subr.bf16.mxu0 0
      %6266 = vmatpush1.bf16.msra.mxu0 %v5911
      %6267 = vmatprep.subr.bf16.mxu0 0
      %6268 = vmatpush1.bf16.msra.mxu0 %v5912
      %6269 = vmatprep.subr.bf16.mxu0 0
      %6270 = vmatpush1.bf16.msra.mxu0 %v5913
      %6271 = vmatprep.subr.bf16.mxu0 0
      %6272 = vmatpush1.bf16.msra.mxu0 %v5914
      %6273 = vmatprep.subr.bf16.mxu0 0
      %6274 = vmatpush1.bf16.msra.mxu0 %v5915
      %6275 = vmatprep.subr.bf16.mxu0 0
      %6276 = vmatpush1.bf16.msra.mxu0 %v5916
      %6277 = vmatprep.subr.bf16.mxu0 0
      %6278 = vmatpush1.bf16.msra.mxu0 %v5917
      %6279 = vmatprep.subr.bf16.mxu0 0
      %6280 = vmatpush1.bf16.msra.mxu0 %v5918
      %6281 = vmatprep.subr.bf16.mxu0 0
      %6282 = vmatpush1.bf16.msra.mxu0 %v5919
      %6283 = vmatprep.subr.bf16.mxu0 0
      %6284 = vmatpush1.bf16.msra.mxu0 %v5920
      %6285 = vmatprep.subr.bf16.mxu0 0
      %6286 = vmatpush1.bf16.msra.mxu0 %v5921
      %6287 = vmatprep.subr.bf16.mxu0 0
      %6288 = vmatpush1.bf16.msra.mxu0 %v5922
      %6289 = vmatprep.subr.bf16.mxu0 0
      %6290 = vmatpush1.bf16.msra.mxu0 %v5923
      %6291 = vmatprep.subr.bf16.mxu0 0
      %6292 = vmatpush1.bf16.msra.mxu0 %v5924
      %6293 = vmatprep.mubr.bf16.mxu0 %v5320
      %6294 = vmatmul.mubr.bf16.gmra.mrb[0].mxu0 %v5319
      %v6295 = vpop.f32.mrb[0].mxu0
      %v6296 = vadd.f32 %v6256, %v6295
      %v6297 = vpop.f32.mrb[0].mxu0
      %v6298 = vpop.f32.mrb[0].mxu0
      %v6299 = vpop.f32.mrb[0].mxu0
      %6300 = vdwg.mxu0
      %6301 = vmatprep.subr.bf16.mxu0 0
      %6302 = vmatpush1.bf16.msra.mxu0 %v5925
      %6303 = vmatprep.subr.bf16.mxu0 0
      %6304 = vmatpush1.bf16.msra.mxu0 %v5926
      %6305 = vmatprep.subr.bf16.mxu0 0
      %6306 = vmatpush1.bf16.msra.mxu0 %v5927
      %6307 = vmatprep.subr.bf16.mxu0 0
      %6308 = vmatpush1.bf16.msra.mxu0 %v5928
      %6309 = vmatprep.subr.bf16.mxu0 0
      %6310 = vmatpush1.bf16.msra.mxu0 %v5929
      %6311 = vmatprep.subr.bf16.mxu0 0
      %6312 = vmatpush1.bf16.msra.mxu0 %v5930
      %6313 = vmatprep.subr.bf16.mxu0 0
      %6314 = vmatpush1.bf16.msra.mxu0 %v5931
      %6315 = vmatprep.subr.bf16.mxu0 0
      %6316 = vmatpush1.bf16.msra.mxu0 %v5932
      %6317 = vmatprep.subr.bf16.mxu0 0
      %6318 = vmatpush1.bf16.msra.mxu0 %v5933
      %6319 = vmatprep.subr.bf16.mxu0 0
      %6320 = vmatpush1.bf16.msra.mxu0 %v5934
      %6321 = vmatprep.subr.bf16.mxu0 0
      %6322 = vmatpush1.bf16.msra.mxu0 %v5935
      %6323 = vmatprep.subr.bf16.mxu0 0
      %6324 = vmatpush1.bf16.msra.mxu0 %v5936
      %6325 = vmatprep.subr.bf16.mxu0 0
      %6326 = vmatpush1.bf16.msra.mxu0 %v5937
      %6327 = vmatprep.subr.bf16.mxu0 0
      %6328 = vmatpush1.bf16.msra.mxu0 %v5938
      %6329 = vmatprep.subr.bf16.mxu0 0
      %6330 = vmatpush1.bf16.msra.mxu0 %v5939
      %6331 = vmatprep.subr.bf16.mxu0 0
      %6332 = vmatpush1.bf16.msra.mxu0 %v5940
      %6333 = vmatprep.mubr.bf16.mxu0 %v5322
      %6334 = vmatmul.mubr.bf16.gmra.mrb[0].mxu0 %v5321
      %v6335 = vpop.f32.mrb[0].mxu0
      %v6336 = vadd.f32 %v6296, %v6335
      %v6337 = vpop.f32.mrb[0].mxu0
      %v6338 = vpop.f32.mrb[0].mxu0
      %v6339 = vpop.f32.mrb[0].mxu0
      %6340 = vdwg.mxu0
      %6341 = vmatprep.subr.bf16.mxu0 0
      %6342 = vmatpush1.bf16.msra.mxu0 %v5941
      %6343 = vmatprep.subr.bf16.mxu0 0
      %6344 = vmatpush1.bf16.msra.mxu0 %v5942
      %6345 = vmatprep.subr.bf16.mxu0 0
      %6346 = vmatpush1.bf16.msra.mxu0 %v5943
      %6347 = vmatprep.subr.bf16.mxu0 0
      %6348 = vmatpush1.bf16.msra.mxu0 %v5944
      %6349 = vmatprep.subr.bf16.mxu0 0
      %6350 = vmatpush1.bf16.msra.mxu0 %v5945
      %6351 = vmatprep.subr.bf16.mxu0 0
      %6352 = vmatpush1.bf16.msra.mxu0 %v5946
      %6353 = vmatprep.subr.bf16.mxu0 0
      %6354 = vmatpush1.bf16.msra.mxu0 %v5947
      %6355 = vmatprep.subr.bf16.mxu0 0
      %6356 = vmatpush1.bf16.msra.mxu0 %v5948
      %6357 = vmatprep.subr.bf16.mxu0 0
      %6358 = vmatpush1.bf16.msra.mxu0 %v5949
      %6359 = vmatprep.subr.bf16.mxu0 0
      %6360 = vmatpush1.bf16.msra.mxu0 %v5950
      %6361 = vmatprep.subr.bf16.mxu0 0
      %6362 = vmatpush1.bf16.msra.mxu0 %v5951
      %6363 = vmatprep.subr.bf16.mxu0 0
      %6364 = vmatpush1.bf16.msra.mxu0 %v5952
      %6365 = vmatprep.subr.bf16.mxu0 0
      %6366 = vmatpush1.bf16.msra.mxu0 %v5953
      %6367 = vmatprep.subr.bf16.mxu0 0
      %6368 = vmatpush1.bf16.msra.mxu0 %v5954
      %6369 = vmatprep.subr.bf16.mxu0 0
      %6370 = vmatpush1.bf16.msra.mxu0 %v5955
      %6371 = vmatprep.subr.bf16.mxu0 0
      %6372 = vmatpush1.bf16.msra.mxu0 %v5956
      %6373 = vmatprep.mubr.bf16.mxu0 %v5324
      %6374 = vmatmul.mubr.bf16.gmra.mrb[0].mxu0 %v5323
      %v6375 = vpop.f32.mrb[0].mxu0
      %v6376 = vadd.f32 %v6336, %v6375
      %v6377 = vpop.f32.mrb[0].mxu0
      %v6378 = vpop.f32.mrb[0].mxu0
      %v6379 = vpop.f32.mrb[0].mxu0
      %6380 = vdwg.mxu0
      %6381 = vmatprep.subr.bf16.mxu0 0
      %6382 = vmatpush1.bf16.msra.mxu0 %v5957
      %6383 = vmatprep.subr.bf16.mxu0 0
      %6384 = vmatpush1.bf16.msra.mxu0 %v5958
      %6385 = vmatprep.subr.bf16.mxu0 0
      %6386 = vmatpush1.bf16.msra.mxu0 %v5959
      %6387 = vmatprep.subr.bf16.mxu0 0
      %6388 = vmatpush1.bf16.msra.mxu0 %v5960
      %6389 = vmatprep.subr.bf16.mxu0 0
      %6390 = vmatpush1.bf16.msra.mxu0 %v5961
      %6391 = vmatprep.subr.bf16.mxu0 0
      %6392 = vmatpush1.bf16.msra.mxu0 %v5962
      %6393 = vmatprep.subr.bf16.mxu0 0
      %6394 = vmatpush1.bf16.msra.mxu0 %v5963
      %6395 = vmatprep.subr.bf16.mxu0 0
      %6396 = vmatpush1.bf16.msra.mxu0 %v5964
      %6397 = vmatprep.subr.bf16.mxu0 0
      %6398 = vmatpush1.bf16.msra.mxu0 %v5965
      %6399 = vmatprep.subr.bf16.mxu0 0
      %6400 = vmatpush1.bf16.msra.mxu0 %v5966
      %6401 = vmatprep.subr.bf16.mxu0 0
      %6402 = vmatpush1.bf16.msra.mxu0 %v5967
      %6403 = vmatprep.subr.bf16.mxu0 0
      %6404 = vmatpush1.bf16.msra.mxu0 %v5968
      %6405 = vmatprep.subr.bf16.mxu0 0
      %6406 = vmatpush1.bf16.msra.mxu0 %v5969
      %6407 = vmatprep.subr.bf16.mxu0 0
      %6408 = vmatpush1.bf16.msra.mxu0 %v5970
      %6409 = vmatprep.subr.bf16.mxu0 0
      %6410 = vmatpush1.bf16.msra.mxu0 %v5971
      %6411 = vmatprep.subr.bf16.mxu0 0
      %6412 = vmatpush1.bf16.msra.mxu0 %v5972
      %6413 = vmatprep.mubr.bf16.mxu0 %v5326
      %6414 = vmatmul.mubr.bf16.gmra.mrb[0].mxu0 %v5325
      %v6415 = vpop.f32.mrb[0].mxu0
      %v6416 = vadd.f32 %v6376, %v6415
      %v6417 = vpop.f32.mrb[0].mxu0
      %v6418 = vpop.f32.mrb[0].mxu0
      %v6419 = vpop.f32.mrb[0].mxu0
      %6420 = vdwg.mxu0
      %v6421 = vadd.f32 %v4720, %v6416
      %v6422 = vsel %vm1004, %v6421, 0.0
      %6423 = vadd.xlane.f32.xlu0 %v6422
      %v6424 = vpop.xlane.xlu0 %6423
      %v6425 = vmul.f32 %v6424, %v1808
      %v6426 = vsub.f32 %v6421, %v6425
      %v6427 = vmul.f32 %v6426, %v6426
      %v6428 = vsel %vm1004, %v6427, 0.0
      %6429 = vadd.xlane.f32.xlu0 %v6428
      %v6430 = vpop.xlane.xlu0 %6429
      %v6431 = vmul.f32 %v6430, %v1808
      %v6432 = vadd.f32 %v6431, 1e-05
      %v6433 = vrsqrt.pop %v6432
      %v6434 = vmul.f32 %v6426, %v6433
      %v6436 = vlaneseq
      %v6437 = vshrl.u32 %v6436, 7
      %v6438 = vsub.s32 0, %v6437
      %v6439 = vrot.slane %v3875, %v6438
      %v6441 = vmul.f32 %v6434, %v6439
      %v6443 = vlaneseq
      %v6444 = vshrl.u32 %v6443, 7
      %v6445 = vsub.s32 0, %v6444
      %v6446 = vrot.slane %v3877, %v6445
      %v6448 = vadd.f32 %v6441, %v6446
      %v6449 = vld [vmem:[%s16] sm:$0x1]
      %v6451 = vlaneseq
      %v6452 = vshrl.u32 %v6451, 7
      %v6453 = vsub.s32 0, %v6452
      %v6454 = vrot.slane %v6449, %v6453
      %v6456 = vmul.f32 %v6448, %v6454
      %v6457 = vsel %vm1004, %v6456, 0.0
      %6458 = vadd.xlane.f32.xlu0 %v6457
      %v6459 = vpop.xlane.xlu0 %6458
      %v6460 = vld [vmem:[#allocation2] sm:$0x1]
      %v6462 = vlaneseq
      %v6463 = vshrl.u32 %v6462, 7
      %v6464 = vsub.s32 0, %v6463
      %v6465 = vrot.slane %v6460, %v6464
      %v6467 = vadd.f32 %v6459, %v6465
      %vm6468 = vcmask 7168
      %6469 = vst.msk [vmem:[%s589] sm:$0xff] %vm6468, %v6467
      %p6470 = scmp.lt.s32.totalorder %s31, 1
      %s6471 = scalar_select %p6470, %s31, 1
      %s6472 = smul.addr %s6471, 8
      %s6473 = scalar_lea.vmem %s18, %s6472
      // Predicated region
      $region93: #{transformer_forward.1} parent=91 // pred_check
        %p6474 = pneg %p437
      $region94: #{transformer_forward.1} parent=91 // pred_check_branch
        %6476 = sbr.rel (%p6474) target = $region96
      $region95: #{transformer_forward.1} parent=91 // pred_region
        _
      $region96: #{transformer_forward.1} parent=91 // pred_fallthru
        _
    $region92: #{transformer_forward.1} parent=5 // pred_fallthru
      _
    %p6477 = scmp.le.s32.totalorder 2, %s26
    // Predicated region
    $region97: #{transformer_forward.1} parent=5 // pred_check
      %p6478 = pneg %p6477
    $region98: #{transformer_forward.1} parent=5 // pred_check_branch
      %6480 = sbr.rel (%p6478) target = $region100
    $region99: #{transformer_forward.1} parent=5 // pred_region
      %s6481 = ssub.s32 %s26, 2
      // Predicated region
      $region101: #{transformer_forward.1} parent=99 // pred_check
        %p6482 = pneg %p443
      $region102: #{transformer_forward.1} parent=99 // pred_check_branch
        %6484 = sbr.rel (%p6482) target = $region104
      $region103: #{transformer_forward.1} parent=99 // pred_region
        %p6485 = scmp.lt.s32.totalorder %s32, 1
        %s6486 = scalar_select %p6485, %s32, 1
        %s6487 = smul.addr %s6486, 8
        %s6488 = scalar_lea.vmem %s18, %s6487
      $region104: #{transformer_forward.1} parent=99 // pred_fallthru
        _
    $region100: #{transformer_forward.1} parent=5 // pred_fallthru
      _
  $region6: #{transformer_forward.1} parent=0 // loop_footer
    %s30 = sadd.s32 1, %s26
  $region7: #{transformer_forward.1} parent=0 // loop_footer_branch
    %25 = sbr.rel target = $region3
  $region8: #{transformer_forward.1} parent=0 // loop_exit
    _

</llo_original>
